<compile_context>
chip_gen: v6e
topology: v6e:2x2x1
jax: 0.10.0
libtpu: 0.0.40
codegen_flags: <defaults>
</compile_context>

<pallas_src>
import functools
import math

import jax
import jax.numpy as jnp
from jax.experimental import pallas as pl
from jax.experimental.pallas import tpu as pltpu

F32 = jnp.float32
KCONV = 5  # PostNet conv kernel size


# --------------------------- in-kernel helpers --------------------------------

def _layer_norm(x, g, b, eps=1e-5):
    mean = jnp.mean(x, axis=-1, keepdims=True)
    cen = x - mean
    var = jnp.mean(cen * cen, axis=-1, keepdims=True)
    return cen * jax.lax.rsqrt(var + eps) * g + b


def _mha_heads(q, k, v, add_mask, heads, scale):
    # q: [Tq, E]; k, v: [Tk, E]; add_mask broadcastable to [Tq, Tk] (additive).
    E = q.shape[-1]
    hd = E // heads
    outs = []
    for h in range(heads):                      # static unroll over heads
        sl = slice(h * hd, (h + 1) * hd)
        s = jnp.dot(q[:, sl], k[:, sl].T, preferred_element_type=jnp.float32)
        s = s * scale + add_mask
        s = s - jnp.max(s, axis=-1, keepdims=True)
        p = jnp.exp(s)
        p = p * pl.reciprocal(jnp.sum(p, axis=-1, keepdims=True), approx=True)
        outs.append(jnp.dot(p, v[:, sl], preferred_element_type=jnp.float32))
    return jnp.concatenate(outs, axis=-1)        # [Tq, E]


# --------------------------- Pallas kernels ------------------------------------

def _prenet_kernel(mel_ref, w1_ref, b1_ref, w2_ref, b2_ref, pos_ref, o_ref):
    # DecoderPreNet (dropout = identity) + positional-embedding add, fused.
    h = jnp.dot(mel_ref[0], w1_ref[...], preferred_element_type=jnp.float32)
    h = jnp.maximum(h + b1_ref[...], 0.0)
    h = jnp.dot(h, w2_ref[...], preferred_element_type=jnp.float32)
    h = jnp.maximum(h + b2_ref[...], 0.0)
    o_ref[0] = (h + pos_ref[0]).astype(o_ref.dtype)


def _decoder_layer_kernel(x_ref, enc_ref, causal_ref, src_ref,
                          wqkv_s_ref, bqkv_s_ref, wo_s_ref, bo_s_ref,
                          gdec_ref, bdec_ref,
                          wq_c_ref, bq_c_ref, wkv_c_ref, bkv_c_ref,
                          wo_c_ref, bo_c_ref, g1_ref, b1_ref,
                          ffw1_ref, ffb1_ref, ffw2_ref, ffb2_ref,
                          g2_ref, b2_ref, o_ref, *, heads, scale):
    x = x_ref[0]                                  # [T, E]
    enc = enc_ref[0]                              # [S, E]
    E = x.shape[-1]

    # --- causal masked self-attention (fused QKV matmul) ---
    qkv = jnp.dot(x, wqkv_s_ref[...], preferred_element_type=jnp.float32)
    qkv = qkv + bqkv_s_ref[...]                   # [T, 3E]
    q, k, v = qkv[:, :E], qkv[:, E:2 * E], qkv[:, 2 * E:]
    sa = _mha_heads(q, k, v, causal_ref[...], heads, scale)
    sa = jnp.dot(sa, wo_s_ref[...], preferred_element_type=jnp.float32) + bo_s_ref[...]
    x1 = _layer_norm(sa + x, gdec_ref[...], bdec_ref[...])

    # --- cross attention over encoder output (fused KV matmul) ---
    q2 = jnp.dot(x1, wq_c_ref[...], preferred_element_type=jnp.float32) + bq_c_ref[...]
    kv = jnp.dot(enc, wkv_c_ref[...], preferred_element_type=jnp.float32) + bkv_c_ref[...]
    k2, v2 = kv[:, :E], kv[:, E:]
    ca = _mha_heads(q2, k2, v2, src_ref[0], heads, scale)
    ca = jnp.dot(ca, wo_c_ref[...], preferred_element_type=jnp.float32) + bo_c_ref[...]
    x2 = _layer_norm(ca + x1, g1_ref[...], b1_ref[...])

    # --- feed-forward + LayerNorm residual ---
    hdn = jnp.dot(x2, ffw1_ref[...], preferred_element_type=jnp.float32)
    hdn = jnp.maximum(hdn + ffb1_ref[...], 0.0)
    ff = jnp.dot(hdn, ffw2_ref[...], preferred_element_type=jnp.float32) + ffb2_ref[...]
    x3 = _layer_norm(ff + x2, g2_ref[...], b2_ref[...])

    o_ref[0] = x3.astype(o_ref.dtype)


def _head_postnet_kernel(x_ref, hw_ref, hb_ref,
                         c1w_ref, c1s_ref, c1t_ref,
                         c2w_ref, c2s_ref, c2t_ref,
                         c3w_ref, c3s_ref, c3t_ref,
                         c4w_ref, c4s_ref, c4t_ref,
                         c5w_ref, c5b_ref,
                         out_ref, mel_ref, stop_ref, *, mel_dims):
    # mel/stop heads fused into one lane-denser matmul, then the full PostNet
    # (5 causal convs, im2col matmul, folded BN + tanh) and the residual add.
    x = x_ref[0]                                  # [T, E]
    T = x.shape[0]

    ms = jnp.dot(x, hw_ref[...], preferred_element_type=jnp.float32) + hb_ref[...]
    mel = ms[:, :mel_dims]                        # [T, M]
    stop = ms[:, mel_dims:]                       # [T, 1]
    mel_ref[0] = mel.astype(mel_ref.dtype)
    stop_ref[0] = stop.astype(stop_ref.dtype)

    def cconv(inp, w_ref):
        # Causal conv1d (kernel 5, left pad 4) as a single im2col matmul;
        # padding handled in VMEM (no host jnp.pad / HBM copies).
        cin = inp.shape[-1]
        xp = jnp.concatenate(
            [jnp.zeros((KCONV - 1, cin), jnp.float32), inp], axis=0)   # [T+4, Cin]
        cols = jnp.concatenate([xp[kk:kk + T, :] for kk in range(KCONV)],
                               axis=1)                                  # [T, K*Cin]
        return jnp.dot(cols, w_ref[...], preferred_element_type=jnp.float32)

    h = jnp.tanh(cconv(mel, c1w_ref) * c1s_ref[...] + c1t_ref[...])
    h = jnp.tanh(cconv(h, c2w_ref) * c2s_ref[...] + c2t_ref[...])
    h = jnp.tanh(cconv(h, c3w_ref) * c3s_ref[...] + c3t_ref[...])
    h = jnp.tanh(cconv(h, c4w_ref) * c4s_ref[...] + c4t_ref[...])
    post = cconv(h, c5w_ref) + c5b_ref[...]

    out_ref[0] = (post + mel).astype(out_ref.dtype)


# --------------------------- pallas_call wrappers -------------------------------

def prenet(mel, w1, b1, w2, b2, pos):
    B, T, M = mel.shape
    E = w1.shape[1]
    return pl.pallas_call(
        _prenet_kernel,
        out_shape=jax.ShapeDtypeStruct((B, T, E), mel.dtype),
        grid=(B,),
        in_specs=[pl.BlockSpec((1, T, M), lambda b: (b, 0, 0)),
                  pl.BlockSpec((M, E), lambda b: (0, 0)),
                  pl.BlockSpec((1, E), lambda b: (0, 0)),
                  pl.BlockSpec((E, E), lambda b: (0, 0)),
                  pl.BlockSpec((1, E), lambda b: (0, 0)),
                  pl.BlockSpec((1, T, E), lambda b: (0, 0, 0))],
        out_specs=pl.BlockSpec((1, T, E), lambda b: (b, 0, 0)),
        compiler_params=pltpu.CompilerParams(dimension_semantics=("parallel",)),
    )(mel, w1, b1, w2, b2, pos)


def decoder_layer(x, enc, causal_add, src_add, lp, heads):
    B, T, E = x.shape
    S = enc.shape[1]
    F = lp["ff_w1"].shape[1]
    scale = 1.0 / math.sqrt(E)   # matches previous implementation (1/sqrt(embed_dims))

    def full2d(shape):
        return pl.BlockSpec(shape, lambda b: (0, 0))

    in_specs = [
        pl.BlockSpec((1, T, E), lambda b: (b, 0, 0)),   # x
        pl.BlockSpec((1, S, E), lambda b: (b, 0, 0)),   # encoder output
        pl.BlockSpec((T, T), lambda b: (0, 0)),         # causal additive mask
        pl.BlockSpec((1, 1, S), lambda b: (b, 0, 0)),   # src additive mask
        full2d((E, 3 * E)), full2d((1, 3 * E)),         # self wqkv / bqkv
        full2d((E, E)), full2d((1, E)),                 # self wo / bo
        full2d((1, E)), full2d((1, E)),                 # ln_dec gamma / beta
        full2d((E, E)), full2d((1, E)),                 # cross wq / bq
        full2d((E, 2 * E)), full2d((1, 2 * E)),         # cross wkv / bkv
        full2d((E, E)), full2d((1, E)),                 # cross wo / bo
        full2d((1, E)), full2d((1, E)),                 # ln1 gamma / beta
        full2d((E, F)), full2d((1, F)),                 # ff w1 / b1
        full2d((F, E)), full2d((1, E)),                 # ff w2 / b2
        full2d((1, E)), full2d((1, E)),                 # ln2 gamma / beta
    ]
    return pl.pallas_call(
        functools.partial(_decoder_layer_kernel, heads=heads, scale=scale),
        out_shape=jax.ShapeDtypeStruct((B, T, E), x.dtype),
        grid=(B,),
        in_specs=in_specs,
        out_specs=pl.BlockSpec((1, T, E), lambda b: (b, 0, 0)),
        compiler_params=pltpu.CompilerParams(dimension_semantics=("parallel",)),
    )(x, enc, causal_add, src_add,
      lp["self_wqkv"], lp["self_bqkv"], lp["self_wo"], lp["self_bo"],
      lp["ln_dec_g"], lp["ln_dec_b"],
      lp["cross_wq"], lp["cross_bq"], lp["cross_wkv"], lp["cross_bkv"],
      lp["cross_wo"], lp["cross_bo"], lp["ln1_g"], lp["ln1_b"],
      lp["ff_w1"], lp["ff_b1"], lp["ff_w2"], lp["ff_b2"],
      lp["ln2_g"], lp["ln2_b"])


def heads_postnet(x, head_w, head_b, pn, mel_dims):
    B, T, E = x.shape
    Hc = pn["c1_w"].shape[1]                      # hidden conv channels

    def full2d(shape):
        return pl.BlockSpec(shape, lambda b: (0, 0))

    in_specs = [pl.BlockSpec((1, T, E), lambda b: (b, 0, 0)),
                full2d((E, mel_dims + 1)), full2d((1, mel_dims + 1)),
                full2d((KCONV * mel_dims, Hc)), full2d((1, Hc)), full2d((1, Hc))]
    for _ in range(3):
        in_specs += [full2d((KCONV * Hc, Hc)), full2d((1, Hc)), full2d((1, Hc))]
    in_specs += [full2d((KCONV * Hc, mel_dims)), full2d((1, mel_dims))]

    out_shapes = (jax.ShapeDtypeStruct((B, T, mel_dims), x.dtype),
                  jax.ShapeDtypeStruct((B, T, mel_dims), x.dtype),
                  jax.ShapeDtypeStruct((B, T, 1), x.dtype))
    out_specs = (pl.BlockSpec((1, T, mel_dims), lambda b: (b, 0, 0)),
                 pl.BlockSpec((1, T, mel_dims), lambda b: (b, 0, 0)),
                 pl.BlockSpec((1, T, 1), lambda b: (b, 0, 0)))

    return pl.pallas_call(
        functools.partial(_head_postnet_kernel, mel_dims=mel_dims),
        out_shape=out_shapes,
        grid=(B,),
        in_specs=in_specs,
        out_specs=out_specs,
        compiler_params=pltpu.CompilerParams(dimension_semantics=("parallel",)),
    )(x, head_w, head_b,
      pn["c1_w"], pn["c1_s"], pn["c1_t"],
      pn["c2_w"], pn["c2_s"], pn["c2_t"],
      pn["c3_w"], pn["c3_s"], pn["c3_t"],
      pn["c4_w"], pn["c4_s"], pn["c4_t"],
      pn["c5_w"], pn["c5_b"])


# --------------------------- model glue -----------------------------------------

@functools.partial(jax.jit, static_argnames=("heads",))
def decoder_forward(params, mel, encoder_output, src_mask, causal_mask, *, heads):
    B, T, M = mel.shape
    S = encoder_output.shape[1]

    pos = params["pos_embed"][:, :T, :]
    causal_add = jnp.where(causal_mask.reshape(T, T) == 0, -1e20, 0.0).astype(F32)
    src_add = jnp.where(src_mask.reshape(B, 1, S) == 0, -1e20, 0.0).astype(F32)

    # PreNet + positional embedding (dropout = identity in eval)
    x = prenet(mel, params["pre_w1"], params["pre_b1"],
               params["pre_w2"], params["pre_b2"], pos)

    # Decoder layers: each is a single fused Pallas kernel.
    for lp in params["layers"]:
        x = decoder_layer(x, encoder_output, causal_add, src_add, lp, heads)

    # mel/stop heads + PostNet + residual, fused into one kernel.
    out, mel_linear, stop_linear = heads_postnet(
        x, params["head_w"], params["head_b"], params["postnet"], M)
    return out, mel_linear, stop_linear


# --------------------------- parameter init -------------------------------------

def init_params(key, *, mel_dims, hidden_dims, heads, max_len, num_layers,
                forward_expansion):
    keys = jax.random.split(key, 512)
    ctr = [0]

    def nxt():
        k = keys[ctr[0]]
        ctr[0] += 1
        return k

    def dense(din, dout):
        w = (jax.random.normal(nxt(), (din, dout)) / math.sqrt(din)).astype(F32)
        b = (0.01 * jax.random.normal(nxt(), (1, dout))).astype(F32)
        return w, b

    def ln(d):
        g = (1.0 + 0.05 * jax.random.normal(nxt(), (1, d))).astype(F32)
        b = (0.05 * jax.random.normal(nxt(), (1, d))).astype(F32)
        return g, b

    def conv(cin, cout, k=KCONV):
        # weight stored in im2col layout [K*Cin, Cout] (tap-major rows)
        w = (jax.random.normal(nxt(), (k, cin, cout)) / math.sqrt(cin * k)).astype(F32)
        b = (0.01 * jax.random.normal(nxt(), (1, cout))).astype(F32)
        return w.reshape(k * cin, cout), b

    def bn_fold(c, conv_bias):
        # eval-mode BatchNorm folded to scale/shift; conv bias folded into shift.
        gamma = (1.0 + 0.1 * jax.random.normal(nxt(), (1, c))).astype(F32)
        beta = (0.1 * jax.random.normal(nxt(), (1, c))).astype(F32)
        mean = (0.1 * jax.random.normal(nxt(), (1, c))).astype(F32)
        var = (1.0 + 0.1 * jnp.abs(jax.random.normal(nxt(), (1, c)))).astype(F32)
        scale = gamma / jnp.sqrt(var + 1e-5)
        shift = beta - mean * scale + conv_bias * scale
        return scale, shift

    E = hidden_dims
    p = {"pos_embed": jnp.zeros((1, max_len, E), F32)}   # torch.zeros init
    p["pre_w1"], p["pre_b1"] = dense(mel_dims, E)
    p["pre_w2"], p["pre_b2"] = dense(E, E)

    layers = []
    for _ in range(num_layers):
        lp = {}
        wq, bq = dense(E, E)
        wk, bk = dense(E, E)
        wv, bv = dense(E, E)
        lp["self_wqkv"] = jnp.concatenate([wq, wk, wv], axis=1)
        lp["self_bqkv"] = jnp.concatenate([bq, bk, bv], axis=1)
        lp["self_wo"], lp["self_bo"] = dense(E, E)
        lp["ln_dec_g"], lp["ln_dec_b"] = ln(E)

        lp["cross_wq"], lp["cross_bq"] = dense(E, E)
        wk, bk = dense(E, E)
        wv, bv = dense(E, E)
        lp["cross_wkv"] = jnp.concatenate([wk, wv], axis=1)
        lp["cross_bkv"] = jnp.concatenate([bk, bv], axis=1)
        lp["cross_wo"], lp["cross_bo"] = dense(E, E)
        lp["ln1_g"], lp["ln1_b"] = ln(E)

        lp["ff_w1"], lp["ff_b1"] = dense(E, forward_expansion * E)
        lp["ff_w2"], lp["ff_b2"] = dense(forward_expansion * E, E)
        lp["ln2_g"], lp["ln2_b"] = ln(E)
        layers.append(lp)
    p["layers"] = layers

    mel_w, mel_b = dense(E, mel_dims)
    stop_w, stop_b = dense(E, 1)
    p["head_w"] = jnp.concatenate([mel_w, stop_w], axis=1)     # [E, M+1]
    p["head_b"] = jnp.concatenate([mel_b, stop_b], axis=1)     # [1, M+1]

    post = {}
    w, b = conv(mel_dims, E)
    post["c1_w"] = w
    post["c1_s"], post["c1_t"] = bn_fold(E, b)
    for i in range(3):
        w, b = conv(E, E)
        post[f"c{i + 2}_w"] = w
        post[f"c{i + 2}_s"], post[f"c{i + 2}_t"] = bn_fold(E, b)
    post["c5_w"], post["c5_b"] = conv(E, mel_dims)
    p["postnet"] = post
    return p


# --------------------------- main -------------------------------------------------

if __name__ == "__main__":
    mel_dims, hidden_dims, heads = 16, 32, 4
    max_len, num_layers, forward_expansion = 32, 2, 2
    B, T_dec, T_enc = 2, 8, 12

    key = jax.random.PRNGKey(0)
    kp, km, ke = jax.random.split(key, 3)
    params = init_params(kp, mel_dims=mel_dims, hidden_dims=hidden_dims,
                         heads=heads, max_len=max_len, num_layers=num_layers,
                         forward_expansion=forward_expansion)

    mel = jax.random.normal(km, (B, T_dec, mel_dims), F32)
    encoder_output = jax.random.normal(ke, (B, T_enc, hidden_dims), F32)
    src_mask = jnp.ones((B, 1, 1, T_enc), F32)
    causal_mask = jnp.tril(jnp.ones((T_dec, T_dec), F32))[None, None]

    out, mel_linear, stop_linear = decoder_forward(
        params, mel, encoder_output, src_mask, causal_mask, heads=heads)
    jax.block_until_ready((out, mel_linear, stop_linear))

    assert out.shape == (B, T_dec, mel_dims)
    assert mel_linear.shape == (B, T_dec, mel_dims)
    assert stop_linear.shape == (B, T_dec, 1)
    assert bool(jnp.all(jnp.isfinite(out)))
    print("KERNEL_OK")
</pallas_src>

<mosaic_0001>
module attributes {stable_mosaic.version = 11 : i64} {
  func.func @_prenet_kernel(%arg0: i32, %arg1: memref<1x8x16xf32, #tpu.memory_space<vmem>>, %arg2: memref<16x32xf32, #tpu.memory_space<vmem>>, %arg3: memref<1x32xf32, #tpu.memory_space<vmem>>, %arg4: memref<32x32xf32, #tpu.memory_space<vmem>>, %arg5: memref<1x32xf32, #tpu.memory_space<vmem>>, %arg6: memref<1x8x32xf32, #tpu.memory_space<vmem>>, %arg7: memref<1x8x32xf32, #tpu.memory_space<vmem>>) attributes {dimension_semantics = [#tpu.dimension_semantics<parallel>], iteration_bounds = array<i64: 2>, scalar_prefetch = 0 : i64, scratch_operands = 0 : i64, tpu.core_type = #tpu.core_type<tc>, window_params = [{transform_indices = @transform_0, window_bounds = array<i64: 1, 8, 16>}, {pipeline_mode = #tpu.pipeline_mode<synchronous>, transform_indices = @transform_1, window_bounds = array<i64: 16, 32>}, {pipeline_mode = #tpu.pipeline_mode<synchronous>, transform_indices = @transform_2, window_bounds = array<i64: 1, 32>}, {pipeline_mode = #tpu.pipeline_mode<synchronous>, transform_indices = @transform_3, window_bounds = array<i64: 32, 32>}, {pipeline_mode = #tpu.pipeline_mode<synchronous>, transform_indices = @transform_4, window_bounds = array<i64: 1, 32>}, {pipeline_mode = #tpu.pipeline_mode<synchronous>, transform_indices = @transform_5, window_bounds = array<i64: 1, 8, 32>}, {transform_indices = @transform_6, window_bounds = array<i64: 1, 8, 32>}]} {
    %c0 = arith.constant 0 : index
    %c0_0 = arith.constant 0 : index
    %c0_1 = arith.constant 0 : index
    %0 = vector.load %arg1[%c0, %c0_0, %c0_1] : memref<1x8x16xf32, #tpu.memory_space<vmem>>, vector<1x8x16xf32>
    %1 = vector.shape_cast %0 : vector<1x8x16xf32> to vector<8x16xf32>
    %c0_2 = arith.constant 0 : index
    %c0_3 = arith.constant 0 : index
    %2 = vector.load %arg2[%c0_2, %c0_3] : memref<16x32xf32, #tpu.memory_space<vmem>>, vector<16x32xf32>
    %cst = arith.constant dense<0.000000e+00> : vector<8x32xf32>
    %3 = tpu.matmul %1, %2, %cst {dimension_numbers = #tpu.dot_dimension_numbers<[1], [0], [0], [1], [0, 0, 1, 1], [], []>} : vector<8x16xf32>, vector<16x32xf32>, vector<8x32xf32> -> vector<8x32xf32>
    %c0_4 = arith.constant 0 : index
    %c0_5 = arith.constant 0 : index
    %4 = vector.load %arg3[%c0_4, %c0_5] : memref<1x32xf32, #tpu.memory_space<vmem>>, vector<1x32xf32>
    %5 = vector.broadcast %4 : vector<1x32xf32> to vector<8x32xf32>
    %6 = arith.addf %3, %5 : vector<8x32xf32>
    %cst_6 = arith.constant 0.000000e+00 : f32
    %7 = vector.broadcast %cst_6 : f32 to vector<8x32xf32>
    %8 = arith.maximumf %6, %7 : vector<8x32xf32>
    %c0_7 = arith.constant 0 : index
    %c0_8 = arith.constant 0 : index
    %9 = vector.load %arg4[%c0_7, %c0_8] : memref<32x32xf32, #tpu.memory_space<vmem>>, vector<32x32xf32>
    %cst_9 = arith.constant dense<0.000000e+00> : vector<8x32xf32>
    %10 = tpu.matmul %8, %9, %cst_9 {dimension_numbers = #tpu.dot_dimension_numbers<[1], [0], [0], [1], [0, 0, 1, 1], [], []>} : vector<8x32xf32>, vector<32x32xf32>, vector<8x32xf32> -> vector<8x32xf32>
    %c0_10 = arith.constant 0 : index
    %c0_11 = arith.constant 0 : index
    %11 = vector.load %arg5[%c0_10, %c0_11] : memref<1x32xf32, #tpu.memory_space<vmem>>, vector<1x32xf32>
    %12 = vector.broadcast %11 : vector<1x32xf32> to vector<8x32xf32>
    %13 = arith.addf %10, %12 : vector<8x32xf32>
    %cst_12 = arith.constant 0.000000e+00 : f32
    %14 = vector.broadcast %cst_12 : f32 to vector<8x32xf32>
    %15 = arith.maximumf %13, %14 : vector<8x32xf32>
    %c0_13 = arith.constant 0 : index
    %c0_14 = arith.constant 0 : index
    %c0_15 = arith.constant 0 : index
    %16 = vector.load %arg6[%c0_13, %c0_14, %c0_15] : memref<1x8x32xf32, #tpu.memory_space<vmem>>, vector<1x8x32xf32>
    %17 = vector.shape_cast %16 : vector<1x8x32xf32> to vector<8x32xf32>
    %18 = arith.addf %15, %17 : vector<8x32xf32>
    %c0_16 = arith.constant 0 : index
    %c0_17 = arith.constant 0 : index
    %c0_18 = arith.constant 0 : index
    %19 = vector.load %arg7[%c0_16, %c0_17, %c0_18] : memref<1x8x32xf32, #tpu.memory_space<vmem>>, vector<1x8x32xf32>
    %20 = vector.shape_cast %19 : vector<1x8x32xf32> to vector<8x32xf32>
    %21 = vector.shape_cast %18 : vector<8x32xf32> to vector<1x8x32xf32>
    tpu.vector_store %arg7[%c0_16, %c0_17, %c0_18], %21 {strides = array<i32>} : memref<1x8x32xf32, #tpu.memory_space<vmem>>, vector<1x8x32xf32>,
    return
  }
  func.func @transform_0(%arg0: i32) -> (i32, i32, i32) {
    %c0_i32 = arith.constant 0 : i32
    %c0_i32_0 = arith.constant 0 : i32
    %c0_i32_1 = arith.constant 0 : i32
    return %arg0, %c0_i32, %c0_i32_0 : i32, i32, i32
  }
  func.func @transform_1(%arg0: i32) -> (i32, i32) {
    %c0_i32 = arith.constant 0 : i32
    %c0_i32_0 = arith.constant 0 : i32
    %c0_i32_1 = arith.constant 0 : i32
    return %c0_i32, %c0_i32_0 : i32, i32
  }
  func.func @transform_2(%arg0: i32) -> (i32, i32) {
    %c0_i32 = arith.constant 0 : i32
    %c0_i32_0 = arith.constant 0 : i32
    %c0_i32_1 = arith.constant 0 : i32
    return %c0_i32, %c0_i32_0 : i32, i32
  }
  func.func @transform_3(%arg0: i32) -> (i32, i32) {
    %c0_i32 = arith.constant 0 : i32
    %c0_i32_0 = arith.constant 0 : i32
    %c0_i32_1 = arith.constant 0 : i32
    return %c0_i32, %c0_i32_0 : i32, i32
  }
  func.func @transform_4(%arg0: i32) -> (i32, i32) {
    %c0_i32 = arith.constant 0 : i32
    %c0_i32_0 = arith.constant 0 : i32
    %c0_i32_1 = arith.constant 0 : i32
    return %c0_i32, %c0_i32_0 : i32, i32
  }
  func.func @transform_5(%arg0: i32) -> (i32, i32, i32) {
    %c0_i32 = arith.constant 0 : i32
    %c0_i32_0 = arith.constant 0 : i32
    %c0_i32_1 = arith.constant 0 : i32
    %c0_i32_2 = arith.constant 0 : i32
    return %c0_i32, %c0_i32_0, %c0_i32_1 : i32, i32, i32
  }
  func.func @transform_6(%arg0: i32) -> (i32, i32, i32) {
    %c0_i32 = arith.constant 0 : i32
    %c0_i32_0 = arith.constant 0 : i32
    %c0_i32_1 = arith.constant 0 : i32
    return %arg0, %c0_i32, %c0_i32_0 : i32, i32, i32
  }
}

module attributes {stable_mosaic.version = 11 : i64} {
  func.func @_decoder_layer_kernel(%arg0: i32, %arg1: memref<1x8x32xf32, #tpu.memory_space<vmem>>, %arg2: memref<1x12x32xf32, #tpu.memory_space<vmem>>, %arg3: memref<8x8xf32, #tpu.memory_space<vmem>>, %arg4: memref<1x1x12xf32, #tpu.memory_space<vmem>>, %arg5: memref<32x96xf32, #tpu.memory_space<vmem>>, %arg6: memref<1x96xf32, #tpu.memory_space<vmem>>, %arg7: memref<32x32xf32, #tpu.memory_space<vmem>>, %arg8: memref<1x32xf32, #tpu.memory_space<vmem>>, %arg9: memref<1x32xf32, #tpu.memory_space<vmem>>, %arg10: memref<1x32xf32, #tpu.memory_space<vmem>>, %arg11: memref<32x32xf32, #tpu.memory_space<vmem>>, %arg12: memref<1x32xf32, #tpu.memory_space<vmem>>, %arg13: memref<32x64xf32, #tpu.memory_space<vmem>>, %arg14: memref<1x64xf32, #tpu.memory_space<vmem>>, %arg15: memref<32x32xf32, #tpu.memory_space<vmem>>, %arg16: memref<1x32xf32, #tpu.memory_space<vmem>>, %arg17: memref<1x32xf32, #tpu.memory_space<vmem>>, %arg18: memref<1x32xf32, #tpu.memory_space<vmem>>, %arg19: memref<32x64xf32, #tpu.memory_space<vmem>>, %arg20: memref<1x64xf32, #tpu.memory_space<vmem>>, %arg21: memref<64x32xf32, #tpu.memory_space<vmem>>, %arg22: memref<1x32xf32, #tpu.memory_space<vmem>>, %arg23: memref<1x32xf32, #tpu.memory_space<vmem>>, %arg24: memref<1x32xf32, #tpu.memory_space<vmem>>, %arg25: memref<1x8x32xf32, #tpu.memory_space<vmem>>) attributes {dimension_semantics = [#tpu.dimension_semantics<parallel>], iteration_bounds = array<i64: 2>, scalar_prefetch = 0 : i64, scratch_operands = 0 : i64, tpu.core_type = #tpu.core_type<tc>, window_params = [{transform_indices = @transform_0, window_bounds = array<i64: 1, 8, 32>}, {transform_indices = @transform_1, window_bounds = array<i64: 1, 12, 32>}, {pipeline_mode = #tpu.pipeline_mode<synchronous>, transform_indices = @transform_2, window_bounds = array<i64: 8, 8>}, {transform_indices = @transform_3, window_bounds = array<i64: 1, 1, 12>}, {pipeline_mode = #tpu.pipeline_mode<synchronous>, transform_indices = @transform_4, window_bounds = array<i64: 32, 96>}, {pipeline_mode = #tpu.pipeline_mode<synchronous>, transform_indices = @transform_5, window_bounds = array<i64: 1, 96>}, {pipeline_mode = #tpu.pipeline_mode<synchronous>, transform_indices = @transform_6, window_bounds = array<i64: 32, 32>}, {pipeline_mode = #tpu.pipeline_mode<synchronous>, transform_indices = @transform_7, window_bounds = array<i64: 1, 32>}, {pipeline_mode = #tpu.pipeline_mode<synchronous>, transform_indices = @transform_8, window_bounds = array<i64: 1, 32>}, {pipeline_mode = #tpu.pipeline_mode<synchronous>, transform_indices = @transform_9, window_bounds = array<i64: 1, 32>}, {pipeline_mode = #tpu.pipeline_mode<synchronous>, transform_indices = @transform_10, window_bounds = array<i64: 32, 32>}, {pipeline_mode = #tpu.pipeline_mode<synchronous>, transform_indices = @transform_11, window_bounds = array<i64: 1, 32>}, {pipeline_mode = #tpu.pipeline_mode<synchronous>, transform_indices = @transform_12, window_bounds = array<i64: 32, 64>}, {pipeline_mode = #tpu.pipeline_mode<synchronous>, transform_indices = @transform_13, window_bounds = array<i64: 1, 64>}, {pipeline_mode = #tpu.pipeline_mode<synchronous>, transform_indices = @transform_14, window_bounds = array<i64: 32, 32>}, {pipeline_mode = #tpu.pipeline_mode<synchronous>, transform_indices = @transform_15, window_bounds = array<i64: 1, 32>}, {pipeline_mode = #tpu.pipeline_mode<synchronous>, transform_indices = @transform_16, window_bounds = array<i64: 1, 32>}, {pipeline_mode = #tpu.pipeline_mode<synchronous>, transform_indices = @transform_17, window_bounds = array<i64: 1, 32>}, {pipeline_mode = #tpu.pipeline_mode<synchronous>, transform_indices = @transform_18, window_bounds = array<i64: 32, 64>}, {pipeline_mode = #tpu.pipeline_mode<synchronous>, transform_indices = @transform_19, window_bounds = array<i64: 1, 64>}, {pipeline_mode = #tpu.pipeline_mode<synchronous>, transform_indices = @transform_20, window_bounds = array<i64: 64, 32>}, {pipeline_mode = #tpu.pipeline_mode<synchronous>, transform_indices = @transform_21, window_bounds = array<i64: 1, 32>}, {pipeline_mode = #tpu.pipeline_mode<synchronous>, transform_indices = @transform_22, window_bounds = array<i64: 1, 32>}, {pipeline_mode = #tpu.pipeline_mode<synchronous>, transform_indices = @transform_23, window_bounds = array<i64: 1, 32>}, {transform_indices = @transform_24, window_bounds = array<i64: 1, 8, 32>}]} {
    %c0 = arith.constant 0 : index
    %c0_0 = arith.constant 0 : index
    %c0_1 = arith.constant 0 : index
    %0 = vector.load %arg1[%c0, %c0_0, %c0_1] : memref<1x8x32xf32, #tpu.memory_space<vmem>>, vector<1x8x32xf32>
    %1 = vector.shape_cast %0 : vector<1x8x32xf32> to vector<8x32xf32>
    %c0_2 = arith.constant 0 : index
    %c0_3 = arith.constant 0 : index
    %c0_4 = arith.constant 0 : index
    %2 = vector.load %arg2[%c0_2, %c0_3, %c0_4] : memref<1x12x32xf32, #tpu.memory_space<vmem>>, vector<1x12x32xf32>
    %3 = vector.shape_cast %2 : vector<1x12x32xf32> to vector<12x32xf32>
    %c0_5 = arith.constant 0 : index
    %c0_6 = arith.constant 0 : index
    %4 = vector.load %arg5[%c0_5, %c0_6] : memref<32x96xf32, #tpu.memory_space<vmem>>, vector<32x96xf32>
    %cst = arith.constant dense<0.000000e+00> : vector<8x96xf32>
    %5 = tpu.matmul %1, %4, %cst {dimension_numbers = #tpu.dot_dimension_numbers<[1], [0], [0], [1], [0, 0, 1, 1], [], []>} : vector<8x32xf32>, vector<32x96xf32>, vector<8x96xf32> -> vector<8x96xf32>
    %c0_7 = arith.constant 0 : index
    %c0_8 = arith.constant 0 : index
    %6 = vector.load %arg6[%c0_7, %c0_8] : memref<1x96xf32, #tpu.memory_space<vmem>>, vector<1x96xf32>
    %7 = vector.broadcast %6 : vector<1x96xf32> to vector<8x96xf32>
    %8 = arith.addf %5, %7 : vector<8x96xf32>
    %9 = vector.extract_strided_slice %8 {offsets = [0, 0], sizes = [8, 32], strides = [1, 1]} : vector<8x96xf32> to vector<8x32xf32>
    %10 = vector.extract_strided_slice %8 {offsets = [0, 32], sizes = [8, 32], strides = [1, 1]} : vector<8x96xf32> to vector<8x32xf32>
    %11 = vector.extract_strided_slice %8 {offsets = [0, 64], sizes = [8, 32], strides = [1, 1]} : vector<8x96xf32> to vector<8x32xf32>
    %c0_9 = arith.constant 0 : index
    %c0_10 = arith.constant 0 : index
    %12 = vector.load %arg3[%c0_9, %c0_10] : memref<8x8xf32, #tpu.memory_space<vmem>>, vector<8x8xf32>
    %13 = vector.extract_strided_slice %9 {offsets = [0, 0], sizes = [8, 8], strides = [1, 1]} : vector<8x32xf32> to vector<8x8xf32>
    %14 = vector.extract_strided_slice %10 {offsets = [0, 0], sizes = [8, 8], strides = [1, 1]} : vector<8x32xf32> to vector<8x8xf32>
    %15 = tpu.transpose %14, [1, 0] : vector<8x8xf32> -> vector<8x8xf32>
    %cst_11 = arith.constant dense<0.000000e+00> : vector<8x8xf32>
    %16 = tpu.matmul %13, %15, %cst_11 {dimension_numbers = #tpu.dot_dimension_numbers<[1], [0], [0], [1], [0, 0, 1, 1], [], []>} : vector<8x8xf32>, vector<8x8xf32>, vector<8x8xf32> -> vector<8x8xf32>
    %cst_12 = arith.constant 0.176776692 : f32
    %17 = vector.broadcast %cst_12 : f32 to vector<8x8xf32>
    %18 = arith.mulf %16, %17 : vector<8x8xf32>
    %19 = arith.addf %18, %12 : vector<8x8xf32>
    %cst_13 = arith.constant dense<0xFF800000> : vector<8xf32>
    %20 = vector.multi_reduction <maximumf>, %19, %cst_13 [1] : vector<8x8xf32> to vector<8xf32>
    %21 = vector.shape_cast %20 : vector<8xf32> to vector<8x1xf32>
    %22 = vector.broadcast %21 : vector<8x1xf32> to vector<8x8xf32>
    %23 = arith.subf %19, %22 : vector<8x8xf32>
    %24 = math.exp %23 : vector<8x8xf32>
    %cst_14 = arith.constant dense<0.000000e+00> : vector<8xf32>
    %25 = vector.multi_reduction <add>, %24, %cst_14 [1] : vector<8x8xf32> to vector<8xf32>
    %26 = vector.shape_cast %25 : vector<8xf32> to vector<8x1xf32>
    %27 = tpu.reciprocal %26 {approx = true} : vector<8x1xf32> -> vector<8x1xf32>
    %28 = vector.broadcast %27 : vector<8x1xf32> to vector<8x8xf32>
    %29 = arith.mulf %24, %28 : vector<8x8xf32>
    %30 = vector.extract_strided_slice %11 {offsets = [0, 0], sizes = [8, 8], strides = [1, 1]} : vector<8x32xf32> to vector<8x8xf32>
    %cst_15 = arith.constant dense<0.000000e+00> : vector<8x8xf32>
    %31 = tpu.matmul %29, %30, %cst_15 {dimension_numbers = #tpu.dot_dimension_numbers<[1], [0], [0], [1], [0, 0, 1, 1], [], []>} : vector<8x8xf32>, vector<8x8xf32>, vector<8x8xf32> -> vector<8x8xf32>
    %32 = vector.extract_strided_slice %9 {offsets = [0, 8], sizes = [8, 8], strides = [1, 1]} : vector<8x32xf32> to vector<8x8xf32>
    %33 = vector.extract_strided_slice %10 {offsets = [0, 8], sizes = [8, 8], strides = [1, 1]} : vector<8x32xf32> to vector<8x8xf32>
    %34 = tpu.transpose %33, [1, 0] : vector<8x8xf32> -> vector<8x8xf32>
    %cst_16 = arith.constant dense<0.000000e+00> : vector<8x8xf32>
    %35 = tpu.matmul %32, %34, %cst_16 {dimension_numbers = #tpu.dot_dimension_numbers<[1], [0], [0], [1], [0, 0, 1, 1], [], []>} : vector<8x8xf32>, vector<8x8xf32>, vector<8x8xf32> -> vector<8x8xf32>
    %cst_17 = arith.constant 0.176776692 : f32
    %36 = vector.broadcast %cst_17 : f32 to vector<8x8xf32>
    %37 = arith.mulf %35, %36 : vector<8x8xf32>
    %38 = arith.addf %37, %12 : vector<8x8xf32>
    %cst_18 = arith.constant dense<0xFF800000> : vector<8xf32>
    %39 = vector.multi_reduction <maximumf>, %38, %cst_18 [1] : vector<8x8xf32> to vector<8xf32>
    %40 = vector.shape_cast %39 : vector<8xf32> to vector<8x1xf32>
    %41 = vector.broadcast %40 : vector<8x1xf32> to vector<8x8xf32>
    %42 = arith.subf %38, %41 : vector<8x8xf32>
    %43 = math.exp %42 : vector<8x8xf32>
    %cst_19 = arith.constant dense<0.000000e+00> : vector<8xf32>
    %44 = vector.multi_reduction <add>, %43, %cst_19 [1] : vector<8x8xf32> to vector<8xf32>
    %45 = vector.shape_cast %44 : vector<8xf32> to vector<8x1xf32>
    %46 = tpu.reciprocal %45 {approx = true} : vector<8x1xf32> -> vector<8x1xf32>
    %47 = vector.broadcast %46 : vector<8x1xf32> to vector<8x8xf32>
    %48 = arith.mulf %43, %47 : vector<8x8xf32>
    %49 = vector.extract_strided_slice %11 {offsets = [0, 8], sizes = [8, 8], strides = [1, 1]} : vector<8x32xf32> to vector<8x8xf32>
    %cst_20 = arith.constant dense<0.000000e+00> : vector<8x8xf32>
    %50 = tpu.matmul %48, %49, %cst_20 {dimension_numbers = #tpu.dot_dimension_numbers<[1], [0], [0], [1], [0, 0, 1, 1], [], []>} : vector<8x8xf32>, vector<8x8xf32>, vector<8x8xf32> -> vector<8x8xf32>
    %51 = vector.extract_strided_slice %9 {offsets = [0, 16], sizes = [8, 8], strides = [1, 1]} : vector<8x32xf32> to vector<8x8xf32>
    %52 = vector.extract_strided_slice %10 {offsets = [0, 16], sizes = [8, 8], strides = [1, 1]} : vector<8x32xf32> to vector<8x8xf32>
    %53 = tpu.transpose %52, [1, 0] : vector<8x8xf32> -> vector<8x8xf32>
    %cst_21 = arith.constant dense<0.000000e+00> : vector<8x8xf32>
    %54 = tpu.matmul %51, %53, %cst_21 {dimension_numbers = #tpu.dot_dimension_numbers<[1], [0], [0], [1], [0, 0, 1, 1], [], []>} : vector<8x8xf32>, vector<8x8xf32>, vector<8x8xf32> -> vector<8x8xf32>
    %cst_22 = arith.constant 0.176776692 : f32
    %55 = vector.broadcast %cst_22 : f32 to vector<8x8xf32>
    %56 = arith.mulf %54, %55 : vector<8x8xf32>
    %57 = arith.addf %56, %12 : vector<8x8xf32>
    %cst_23 = arith.constant dense<0xFF800000> : vector<8xf32>
    %58 = vector.multi_reduction <maximumf>, %57, %cst_23 [1] : vector<8x8xf32> to vector<8xf32>
    %59 = vector.shape_cast %58 : vector<8xf32> to vector<8x1xf32>
    %60 = vector.broadcast %59 : vector<8x1xf32> to vector<8x8xf32>
    %61 = arith.subf %57, %60 : vector<8x8xf32>
    %62 = math.exp %61 : vector<8x8xf32>
    %cst_24 = arith.constant dense<0.000000e+00> : vector<8xf32>
    %63 = vector.multi_reduction <add>, %62, %cst_24 [1] : vector<8x8xf32> to vector<8xf32>
    %64 = vector.shape_cast %63 : vector<8xf32> to vector<8x1xf32>
    %65 = tpu.reciprocal %64 {approx = true} : vector<8x1xf32> -> vector<8x1xf32>
    %66 = vector.broadcast %65 : vector<8x1xf32> to vector<8x8xf32>
    %67 = arith.mulf %62, %66 : vector<8x8xf32>
    %68 = vector.extract_strided_slice %11 {offsets = [0, 16], sizes = [8, 8], strides = [1, 1]} : vector<8x32xf32> to vector<8x8xf32>
    %cst_25 = arith.constant dense<0.000000e+00> : vector<8x8xf32>
    %69 = tpu.matmul %67, %68, %cst_25 {dimension_numbers = #tpu.dot_dimension_numbers<[1], [0], [0], [1], [0, 0, 1, 1], [], []>} : vector<8x8xf32>, vector<8x8xf32>, vector<8x8xf32> -> vector<8x8xf32>
    %70 = vector.extract_strided_slice %9 {offsets = [0, 24], sizes = [8, 8], strides = [1, 1]} : vector<8x32xf32> to vector<8x8xf32>
    %71 = vector.extract_strided_slice %10 {offsets = [0, 24], sizes = [8, 8], strides = [1, 1]} : vector<8x32xf32> to vector<8x8xf32>
    %72 = tpu.transpose %71, [1, 0] : vector<8x8xf32> -> vector<8x8xf32>
    %cst_26 = arith.constant dense<0.000000e+00> : vector<8x8xf32>
    %73 = tpu.matmul %70, %72, %cst_26 {dimension_numbers = #tpu.dot_dimension_numbers<[1], [0], [0], [1], [0, 0, 1, 1], [], []>} : vector<8x8xf32>, vector<8x8xf32>, vector<8x8xf32> -> vector<8x8xf32>
    %cst_27 = arith.constant 0.176776692 : f32
    %74 = vector.broadcast %cst_27 : f32 to vector<8x8xf32>
    %75 = arith.mulf %73, %74 : vector<8x8xf32>
    %76 = arith.addf %75, %12 : vector<8x8xf32>
    %cst_28 = arith.constant dense<0xFF800000> : vector<8xf32>
    %77 = vector.multi_reduction <maximumf>, %76, %cst_28 [1] : vector<8x8xf32> to vector<8xf32>
    %78 = vector.shape_cast %77 : vector<8xf32> to vector<8x1xf32>
    %79 = vector.broadcast %78 : vector<8x1xf32> to vector<8x8xf32>
    %80 = arith.subf %76, %79 : vector<8x8xf32>
    %81 = math.exp %80 : vector<8x8xf32>
    %cst_29 = arith.constant dense<0.000000e+00> : vector<8xf32>
    %82 = vector.multi_reduction <add>, %81, %cst_29 [1] : vector<8x8xf32> to vector<8xf32>
    %83 = vector.shape_cast %82 : vector<8xf32> to vector<8x1xf32>
    %84 = tpu.reciprocal %83 {approx = true} : vector<8x1xf32> -> vector<8x1xf32>
    %85 = vector.broadcast %84 : vector<8x1xf32> to vector<8x8xf32>
    %86 = arith.mulf %81, %85 : vector<8x8xf32>
    %87 = vector.extract_strided_slice %11 {offsets = [0, 24], sizes = [8, 8], strides = [1, 1]} : vector<8x32xf32> to vector<8x8xf32>
    %cst_30 = arith.constant dense<0.000000e+00> : vector<8x8xf32>
    %88 = tpu.matmul %86, %87, %cst_30 {dimension_numbers = #tpu.dot_dimension_numbers<[1], [0], [0], [1], [0, 0, 1, 1], [], []>} : vector<8x8xf32>, vector<8x8xf32>, vector<8x8xf32> -> vector<8x8xf32>
    %89 = tpu.concatenate %31, %50, %69, %88 in 1 : vector<8x8xf32>, vector<8x8xf32>, vector<8x8xf32>, vector<8x8xf32> -> vector<8x32xf32>
    %c0_31 = arith.constant 0 : index
    %c0_32 = arith.constant 0 : index
    %90 = vector.load %arg7[%c0_31, %c0_32] : memref<32x32xf32, #tpu.memory_space<vmem>>, vector<32x32xf32>
    %cst_33 = arith.constant dense<0.000000e+00> : vector<8x32xf32>
    %91 = tpu.matmul %89, %90, %cst_33 {dimension_numbers = #tpu.dot_dimension_numbers<[1], [0], [0], [1], [0, 0, 1, 1], [], []>} : vector<8x32xf32>, vector<32x32xf32>, vector<8x32xf32> -> vector<8x32xf32>
    %c0_34 = arith.constant 0 : index
    %c0_35 = arith.constant 0 : index
    %92 = vector.load %arg8[%c0_34, %c0_35] : memref<1x32xf32, #tpu.memory_space<vmem>>, vector<1x32xf32>
    %93 = vector.broadcast %92 : vector<1x32xf32> to vector<8x32xf32>
    %94 = arith.addf %91, %93 : vector<8x32xf32>
    %95 = arith.addf %94, %1 : vector<8x32xf32>
    %c0_36 = arith.constant 0 : index
    %c0_37 = arith.constant 0 : index
    %96 = vector.load %arg9[%c0_36, %c0_37] : memref<1x32xf32, #tpu.memory_space<vmem>>, vector<1x32xf32>
    %c0_38 = arith.constant 0 : index
    %c0_39 = arith.constant 0 : index
    %97 = vector.load %arg10[%c0_38, %c0_39] : memref<1x32xf32, #tpu.memory_space<vmem>>, vector<1x32xf32>
    %cst_40 = arith.constant dense<0.000000e+00> : vector<8xf32>
    %98 = vector.multi_reduction <add>, %95, %cst_40 [1] : vector<8x32xf32> to vector<8xf32>
    %99 = vector.shape_cast %98 : vector<8xf32> to vector<8x1xf32>
    %cst_41 = arith.constant 3.200000e+01 : f32
    %100 = vector.broadcast %cst_41 : f32 to vector<8x1xf32>
    %101 = arith.divf %99, %100 : vector<8x1xf32>
    %102 = vector.broadcast %101 : vector<8x1xf32> to vector<8x32xf32>
    %103 = arith.subf %95, %102 : vector<8x32xf32>
    %104 = arith.mulf %103, %103 : vector<8x32xf32>
    %cst_42 = arith.constant dense<0.000000e+00> : vector<8xf32>
    %105 = vector.multi_reduction <add>, %104, %cst_42 [1] : vector<8x32xf32> to vector<8xf32>
    %106 = vector.shape_cast %105 : vector<8xf32> to vector<8x1xf32>
    %cst_43 = arith.constant 3.200000e+01 : f32
    %107 = vector.broadcast %cst_43 : f32 to vector<8x1xf32>
    %108 = arith.divf %106, %107 : vector<8x1xf32>
    %cst_44 = arith.constant 9.99999974E-6 : f32
    %109 = vector.broadcast %cst_44 : f32 to vector<8x1xf32>
    %110 = arith.addf %108, %109 : vector<8x1xf32>
    %111 = math.rsqrt %110 : vector<8x1xf32>
    %112 = vector.broadcast %111 : vector<8x1xf32> to vector<8x32xf32>
    %113 = arith.mulf %103, %112 : vector<8x32xf32>
    %114 = vector.broadcast %96 : vector<1x32xf32> to vector<8x32xf32>
    %115 = arith.mulf %113, %114 : vector<8x32xf32>
    %116 = vector.broadcast %97 : vector<1x32xf32> to vector<8x32xf32>
    %117 = arith.addf %115, %116 : vector<8x32xf32>
    %c0_45 = arith.constant 0 : index
    %c0_46 = arith.constant 0 : index
    %118 = vector.load %arg11[%c0_45, %c0_46] : memref<32x32xf32, #tpu.memory_space<vmem>>, vector<32x32xf32>
    %cst_47 = arith.constant dense<0.000000e+00> : vector<8x32xf32>
    %119 = tpu.matmul %117, %118, %cst_47 {dimension_numbers = #tpu.dot_dimension_numbers<[1], [0], [0], [1], [0, 0, 1, 1], [], []>} : vector<8x32xf32>, vector<32x32xf32>, vector<8x32xf32> -> vector<8x32xf32>
    %c0_48 = arith.constant 0 : index
    %c0_49 = arith.constant 0 : index
    %120 = vector.load %arg12[%c0_48, %c0_49] : memref<1x32xf32, #tpu.memory_space<vmem>>, vector<1x32xf32>
    %121 = vector.broadcast %120 : vector<1x32xf32> to vector<8x32xf32>
    %122 = arith.addf %119, %121 : vector<8x32xf32>
    %c0_50 = arith.constant 0 : index
    %c0_51 = arith.constant 0 : index
    %123 = vector.load %arg13[%c0_50, %c0_51] : memref<32x64xf32, #tpu.memory_space<vmem>>, vector<32x64xf32>
    %cst_52 = arith.constant dense<0.000000e+00> : vector<12x64xf32>
    %124 = tpu.matmul %3, %123, %cst_52 {dimension_numbers = #tpu.dot_dimension_numbers<[1], [0], [0], [1], [0, 0, 1, 1], [], []>} : vector<12x32xf32>, vector<32x64xf32>, vector<12x64xf32> -> vector<12x64xf32>
    %c0_53 = arith.constant 0 : index
    %c0_54 = arith.constant 0 : index
    %125 = vector.load %arg14[%c0_53, %c0_54] : memref<1x64xf32, #tpu.memory_space<vmem>>, vector<1x64xf32>
    %126 = vector.broadcast %125 : vector<1x64xf32> to vector<12x64xf32>
    %127 = arith.addf %124, %126 : vector<12x64xf32>
    %128 = vector.extract_strided_slice %127 {offsets = [0, 0], sizes = [12, 32], strides = [1, 1]} : vector<12x64xf32> to vector<12x32xf32>
    %129 = vector.extract_strided_slice %127 {offsets = [0, 32], sizes = [12, 32], strides = [1, 1]} : vector<12x64xf32> to vector<12x32xf32>
    %c0_55 = arith.constant 0 : index
    %c0_56 = arith.constant 0 : index
    %c0_57 = arith.constant 0 : index
    %130 = vector.load %arg4[%c0_55, %c0_56, %c0_57] : memref<1x1x12xf32, #tpu.memory_space<vmem>>, vector<1x1x12xf32>
    %131 = vector.shape_cast %130 : vector<1x1x12xf32> to vector<1x12xf32>
    %132 = vector.extract_strided_slice %122 {offsets = [0, 0], sizes = [8, 8], strides = [1, 1]} : vector<8x32xf32> to vector<8x8xf32>
    %133 = vector.extract_strided_slice %128 {offsets = [0, 0], sizes = [12, 8], strides = [1, 1]} : vector<12x32xf32> to vector<12x8xf32>
    %134 = tpu.transpose %133, [1, 0] : vector<12x8xf32> -> vector<8x12xf32>
    %cst_58 = arith.constant dense<0.000000e+00> : vector<8x12xf32>
    %135 = tpu.matmul %132, %134, %cst_58 {dimension_numbers = #tpu.dot_dimension_numbers<[1], [0], [0], [1], [0, 0, 1, 1], [], []>} : vector<8x8xf32>, vector<8x12xf32>, vector<8x12xf32> -> vector<8x12xf32>
    %cst_59 = arith.constant 0.176776692 : f32
    %136 = vector.broadcast %cst_59 : f32 to vector<8x12xf32>
    %137 = arith.mulf %135, %136 : vector<8x12xf32>
    %138 = vector.broadcast %131 : vector<1x12xf32> to vector<8x12xf32>
    %139 = arith.addf %137, %138 : vector<8x12xf32>
    %cst_60 = arith.constant dense<0xFF800000> : vector<8xf32>
    %140 = vector.multi_reduction <maximumf>, %139, %cst_60 [1] : vector<8x12xf32> to vector<8xf32>
    %141 = vector.shape_cast %140 : vector<8xf32> to vector<8x1xf32>
    %142 = vector.broadcast %141 : vector<8x1xf32> to vector<8x12xf32>
    %143 = arith.subf %139, %142 : vector<8x12xf32>
    %144 = math.exp %143 : vector<8x12xf32>
    %cst_61 = arith.constant dense<0.000000e+00> : vector<8xf32>
    %145 = vector.multi_reduction <add>, %144, %cst_61 [1] : vector<8x12xf32> to vector<8xf32>
    %146 = vector.shape_cast %145 : vector<8xf32> to vector<8x1xf32>
    %147 = tpu.reciprocal %146 {approx = true} : vector<8x1xf32> -> vector<8x1xf32>
    %148 = vector.broadcast %147 : vector<8x1xf32> to vector<8x12xf32>
    %149 = arith.mulf %144, %148 : vector<8x12xf32>
    %150 = vector.extract_strided_slice %129 {offsets = [0, 0], sizes = [12, 8], strides = [1, 1]} : vector<12x32xf32> to vector<12x8xf32>
    %cst_62 = arith.constant dense<0.000000e+00> : vector<8x8xf32>
    %151 = tpu.matmul %149, %150, %cst_62 {dimension_numbers = #tpu.dot_dimension_numbers<[1], [0], [0], [1], [0, 0, 1, 1], [], []>} : vector<8x12xf32>, vector<12x8xf32>, vector<8x8xf32> -> vector<8x8xf32>
    %152 = vector.extract_strided_slice %122 {offsets = [0, 8], sizes = [8, 8], strides = [1, 1]} : vector<8x32xf32> to vector<8x8xf32>
    %153 = vector.extract_strided_slice %128 {offsets = [0, 8], sizes = [12, 8], strides = [1, 1]} : vector<12x32xf32> to vector<12x8xf32>
    %154 = tpu.transpose %153, [1, 0] : vector<12x8xf32> -> vector<8x12xf32>
    %cst_63 = arith.constant dense<0.000000e+00> : vector<8x12xf32>
    %155 = tpu.matmul %152, %154, %cst_63 {dimension_numbers = #tpu.dot_dimension_numbers<[1], [0], [0], [1], [0, 0, 1, 1], [], []>} : vector<8x8xf32>, vector<8x12xf32>, vector<8x12xf32> -> vector<8x12xf32>
    %cst_64 = arith.constant 0.176776692 : f32
    %156 = vector.broadcast %cst_64 : f32 to vector<8x12xf32>
    %157 = arith.mulf %155, %156 : vector<8x12xf32>
    %158 = vector.broadcast %131 : vector<1x12xf32> to vector<8x12xf32>
    %159 = arith.addf %157, %158 : vector<8x12xf32>
    %cst_65 = arith.constant dense<0xFF800000> : vector<8xf32>
    %160 = vector.multi_reduction <maximumf>, %159, %cst_65 [1] : vector<8x12xf32> to vector<8xf32>
    %161 = vector.shape_cast %160 : vector<8xf32> to vector<8x1xf32>
    %162 = vector.broadcast %161 : vector<8x1xf32> to vector<8x12xf32>
    %163 = arith.subf %159, %162 : vector<8x12xf32>
    %164 = math.exp %163 : vector<8x12xf32>
    %cst_66 = arith.constant dense<0.000000e+00> : vector<8xf32>
    %165 = vector.multi_reduction <add>, %164, %cst_66 [1] : vector<8x12xf32> to vector<8xf32>
    %166 = vector.shape_cast %165 : vector<8xf32> to vector<8x1xf32>
    %167 = tpu.reciprocal %166 {approx = true} : vector<8x1xf32> -> vector<8x1xf32>
    %168 = vector.broadcast %167 : vector<8x1xf32> to vector<8x12xf32>
    %169 = arith.mulf %164, %168 : vector<8x12xf32>
    %170 = vector.extract_strided_slice %129 {offsets = [0, 8], sizes = [12, 8], strides = [1, 1]} : vector<12x32xf32> to vector<12x8xf32>
    %cst_67 = arith.constant dense<0.000000e+00> : vector<8x8xf32>
    %171 = tpu.matmul %169, %170, %cst_67 {dimension_numbers = #tpu.dot_dimension_numbers<[1], [0], [0], [1], [0, 0, 1, 1], [], []>} : vector<8x12xf32>, vector<12x8xf32>, vector<8x8xf32> -> vector<8x8xf32>
    %172 = vector.extract_strided_slice %122 {offsets = [0, 16], sizes = [8, 8], strides = [1, 1]} : vector<8x32xf32> to vector<8x8xf32>
    %173 = vector.extract_strided_slice %128 {offsets = [0, 16], sizes = [12, 8], strides = [1, 1]} : vector<12x32xf32> to vector<12x8xf32>
    %174 = tpu.transpose %173, [1, 0] : vector<12x8xf32> -> vector<8x12xf32>
    %cst_68 = arith.constant dense<0.000000e+00> : vector<8x12xf32>
    %175 = tpu.matmul %172, %174, %cst_68 {dimension_numbers = #tpu.dot_dimension_numbers<[1], [0], [0], [1], [0, 0, 1, 1], [], []>} : vector<8x8xf32>, vector<8x12xf32>, vector<8x12xf32> -> vector<8x12xf32>
    %cst_69 = arith.constant 0.176776692 : f32
    %176 = vector.broadcast %cst_69 : f32 to vector<8x12xf32>
    %177 = arith.mulf %175, %176 : vector<8x12xf32>
    %178 = vector.broadcast %131 : vector<1x12xf32> to vector<8x12xf32>
    %179 = arith.addf %177, %178 : vector<8x12xf32>
    %cst_70 = arith.constant dense<0xFF800000> : vector<8xf32>
    %180 = vector.multi_reduction <maximumf>, %179, %cst_70 [1] : vector<8x12xf32> to vector<8xf32>
    %181 = vector.shape_cast %180 : vector<8xf32> to vector<8x1xf32>
    %182 = vector.broadcast %181 : vector<8x1xf32> to vector<8x12xf32>
    %183 = arith.subf %179, %182 : vector<8x12xf32>
    %184 = math.exp %183 : vector<8x12xf32>
    %cst_71 = arith.constant dense<0.000000e+00> : vector<8xf32>
    %185 = vector.multi_reduction <add>, %184, %cst_71 [1] : vector<8x12xf32> to vector<8xf32>
    %186 = vector.shape_cast %185 : vector<8xf32> to vector<8x1xf32>
    %187 = tpu.reciprocal %186 {approx = true} : vector<8x1xf32> -> vector<8x1xf32>
    %188 = vector.broadcast %187 : vector<8x1xf32> to vector<8x12xf32>
    %189 = arith.mulf %184, %188 : vector<8x12xf32>
    %190 = vector.extract_strided_slice %129 {offsets = [0, 16], sizes = [12, 8], strides = [1, 1]} : vector<12x32xf32> to vector<12x8xf32>
    %cst_72 = arith.constant dense<0.000000e+00> : vector<8x8xf32>
    %191 = tpu.matmul %189, %190, %cst_72 {dimension_numbers = #tpu.dot_dimension_numbers<[1], [0], [0], [1], [0, 0, 1, 1], [], []>} : vector<8x12xf32>, vector<12x8xf32>, vector<8x8xf32> -> vector<8x8xf32>
    %192 = vector.extract_strided_slice %122 {offsets = [0, 24], sizes = [8, 8], strides = [1, 1]} : vector<8x32xf32> to vector<8x8xf32>
    %193 = vector.extract_strided_slice %128 {offsets = [0, 24], sizes = [12, 8], strides = [1, 1]} : vector<12x32xf32> to vector<12x8xf32>
    %194 = tpu.transpose %193, [1, 0] : vector<12x8xf32> -> vector<8x12xf32>
    %cst_73 = arith.constant dense<0.000000e+00> : vector<8x12xf32>
    %195 = tpu.matmul %192, %194, %cst_73 {dimension_numbers = #tpu.dot_dimension_numbers<[1], [0], [0], [1], [0, 0, 1, 1], [], []>} : vector<8x8xf32>, vector<8x12xf32>, vector<8x12xf32> -> vector<8x12xf32>
    %cst_74 = arith.constant 0.176776692 : f32
    %196 = vector.broadcast %cst_74 : f32 to vector<8x12xf32>
    %197 = arith.mulf %195, %196 : vector<8x12xf32>
    %198 = vector.broadcast %131 : vector<1x12xf32> to vector<8x12xf32>
    %199 = arith.addf %197, %198 : vector<8x12xf32>
    %cst_75 = arith.constant dense<0xFF800000> : vector<8xf32>
    %200 = vector.multi_reduction <maximumf>, %199, %cst_75 [1] : vector<8x12xf32> to vector<8xf32>
    %201 = vector.shape_cast %200 : vector<8xf32> to vector<8x1xf32>
    %202 = vector.broadcast %201 : vector<8x1xf32> to vector<8x12xf32>
    %203 = arith.subf %199, %202 : vector<8x12xf32>
    %204 = math.exp %203 : vector<8x12xf32>
    %cst_76 = arith.constant dense<0.000000e+00> : vector<8xf32>
    %205 = vector.multi_reduction <add>, %204, %cst_76 [1] : vector<8x12xf32> to vector<8xf32>
    %206 = vector.shape_cast %205 : vector<8xf32> to vector<8x1xf32>
    %207 = tpu.reciprocal %206 {approx = true} : vector<8x1xf32> -> vector<8x1xf32>
    %208 = vector.broadcast %207 : vector<8x1xf32> to vector<8x12xf32>
    %209 = arith.mulf %204, %208 : vector<8x12xf32>
    %210 = vector.extract_strided_slice %129 {offsets = [0, 24], sizes = [12, 8], strides = [1, 1]} : vector<12x32xf32> to vector<12x8xf32>
    %cst_77 = arith.constant dense<0.000000e+00> : vector<8x8xf32>
    %211 = tpu.matmul %209, %210, %cst_77 {dimension_numbers = #tpu.dot_dimension_numbers<[1], [0], [0], [1], [0, 0, 1, 1], [], []>} : vector<8x12xf32>, vector<12x8xf32>, vector<8x8xf32> -> vector<8x8xf32>
    %212 = tpu.concatenate %151, %171, %191, %211 in 1 : vector<8x8xf32>, vector<8x8xf32>, vector<8x8xf32>, vector<8x8xf32> -> vector<8x32xf32>
    %c0_78 = arith.constant 0 : index
    %c0_79 = arith.constant 0 : index
    %213 = vector.load %arg15[%c0_78, %c0_79] : memref<32x32xf32, #tpu.memory_space<vmem>>, vector<32x32xf32>
    %cst_80 = arith.constant dense<0.000000e+00> : vector<8x32xf32>
    %214 = tpu.matmul %212, %213, %cst_80 {dimension_numbers = #tpu.dot_dimension_numbers<[1], [0], [0], [1], [0, 0, 1, 1], [], []>} : vector<8x32xf32>, vector<32x32xf32>, vector<8x32xf32> -> vector<8x32xf32>
    %c0_81 = arith.constant 0 : index
    %c0_82 = arith.constant 0 : index
    %215 = vector.load %arg16[%c0_81, %c0_82] : memref<1x32xf32, #tpu.memory_space<vmem>>, vector<1x32xf32>
    %216 = vector.broadcast %215 : vector<1x32xf32> to vector<8x32xf32>
    %217 = arith.addf %214, %216 : vector<8x32xf32>
    %218 = arith.addf %217, %117 : vector<8x32xf32>
    %c0_83 = arith.constant 0 : index
    %c0_84 = arith.constant 0 : index
    %219 = vector.load %arg17[%c0_83, %c0_84] : memref<1x32xf32, #tpu.memory_space<vmem>>, vector<1x32xf32>
    %c0_85 = arith.constant 0 : index
    %c0_86 = arith.constant 0 : index
    %220 = vector.load %arg18[%c0_85, %c0_86] : memref<1x32xf32, #tpu.memory_space<vmem>>, vector<1x32xf32>
    %cst_87 = arith.constant dense<0.000000e+00> : vector<8xf32>
    %221 = vector.multi_reduction <add>, %218, %cst_87 [1] : vector<8x32xf32> to vector<8xf32>
    %222 = vector.shape_cast %221 : vector<8xf32> to vector<8x1xf32>
    %cst_88 = arith.constant 3.200000e+01 : f32
    %223 = vector.broadcast %cst_88 : f32 to vector<8x1xf32>
    %224 = arith.divf %222, %223 : vector<8x1xf32>
    %225 = vector.broadcast %224 : vector<8x1xf32> to vector<8x32xf32>
    %226 = arith.subf %218, %225 : vector<8x32xf32>
    %227 = arith.mulf %226, %226 : vector<8x32xf32>
    %cst_89 = arith.constant dense<0.000000e+00> : vector<8xf32>
    %228 = vector.multi_reduction <add>, %227, %cst_89 [1] : vector<8x32xf32> to vector<8xf32>
    %229 = vector.shape_cast %228 : vector<8xf32> to vector<8x1xf32>
    %cst_90 = arith.constant 3.200000e+01 : f32
    %230 = vector.broadcast %cst_90 : f32 to vector<8x1xf32>
    %231 = arith.divf %229, %230 : vector<8x1xf32>
    %cst_91 = arith.constant 9.99999974E-6 : f32
    %232 = vector.broadcast %cst_91 : f32 to vector<8x1xf32>
    %233 = arith.addf %231, %232 : vector<8x1xf32>
    %234 = math.rsqrt %233 : vector<8x1xf32>
    %235 = vector.broadcast %234 : vector<8x1xf32> to vector<8x32xf32>
    %236 = arith.mulf %226, %235 : vector<8x32xf32>
    %237 = vector.broadcast %219 : vector<1x32xf32> to vector<8x32xf32>
    %238 = arith.mulf %236, %237 : vector<8x32xf32>
    %239 = vector.broadcast %220 : vector<1x32xf32> to vector<8x32xf32>
    %240 = arith.addf %238, %239 : vector<8x32xf32>
    %c0_92 = arith.constant 0 : index
    %c0_93 = arith.constant 0 : index
    %241 = vector.load %arg19[%c0_92, %c0_93] : memref<32x64xf32, #tpu.memory_space<vmem>>, vector<32x64xf32>
    %cst_94 = arith.constant dense<0.000000e+00> : vector<8x64xf32>
    %242 = tpu.matmul %240, %241, %cst_94 {dimension_numbers = #tpu.dot_dimension_numbers<[1], [0], [0], [1], [0, 0, 1, 1], [], []>} : vector<8x32xf32>, vector<32x64xf32>, vector<8x64xf32> -> vector<8x64xf32>
    %c0_95 = arith.constant 0 : index
    %c0_96 = arith.constant 0 : index
    %243 = vector.load %arg20[%c0_95, %c0_96] : memref<1x64xf32, #tpu.memory_space<vmem>>, vector<1x64xf32>
    %244 = vector.broadcast %243 : vector<1x64xf32> to vector<8x64xf32>
    %245 = arith.addf %242, %244 : vector<8x64xf32>
    %cst_97 = arith.constant 0.000000e+00 : f32
    %246 = vector.broadcast %cst_97 : f32 to vector<8x64xf32>
    %247 = arith.maximumf %245, %246 : vector<8x64xf32>
    %c0_98 = arith.constant 0 : index
    %c0_99 = arith.constant 0 : index
    %248 = vector.load %arg21[%c0_98, %c0_99] : memref<64x32xf32, #tpu.memory_space<vmem>>, vector<64x32xf32>
    %cst_100 = arith.constant dense<0.000000e+00> : vector<8x32xf32>
    %249 = tpu.matmul %247, %248, %cst_100 {dimension_numbers = #tpu.dot_dimension_numbers<[1], [0], [0], [1], [0, 0, 1, 1], [], []>} : vector<8x64xf32>, vector<64x32xf32>, vector<8x32xf32> -> vector<8x32xf32>
    %c0_101 = arith.constant 0 : index
    %c0_102 = arith.constant 0 : index
    %250 = vector.load %arg22[%c0_101, %c0_102] : memref<1x32xf32, #tpu.memory_space<vmem>>, vector<1x32xf32>
    %251 = vector.broadcast %250 : vector<1x32xf32> to vector<8x32xf32>
    %252 = arith.addf %249, %251 : vector<8x32xf32>
    %253 = arith.addf %252, %240 : vector<8x32xf32>
    %c0_103 = arith.constant 0 : index
    %c0_104 = arith.constant 0 : index
    %254 = vector.load %arg23[%c0_103, %c0_104] : memref<1x32xf32, #tpu.memory_space<vmem>>, vector<1x32xf32>
    %c0_105 = arith.constant 0 : index
    %c0_106 = arith.constant 0 : index
    %255 = vector.load %arg24[%c0_105, %c0_106] : memref<1x32xf32, #tpu.memory_space<vmem>>, vector<1x32xf32>
    %cst_107 = arith.constant dense<0.000000e+00> : vector<8xf32>
    %256 = vector.multi_reduction <add>, %253, %cst_107 [1] : vector<8x32xf32> to vector<8xf32>
    %257 = vector.shape_cast %256 : vector<8xf32> to vector<8x1xf32>
    %cst_108 = arith.constant 3.200000e+01 : f32
    %258 = vector.broadcast %cst_108 : f32 to vector<8x1xf32>
    %259 = arith.divf %257, %258 : vector<8x1xf32>
    %260 = vector.broadcast %259 : vector<8x1xf32> to vector<8x32xf32>
    %261 = arith.subf %253, %260 : vector<8x32xf32>
    %262 = arith.mulf %261, %261 : vector<8x32xf32>
    %cst_109 = arith.constant dense<0.000000e+00> : vector<8xf32>
    %263 = vector.multi_reduction <add>, %262, %cst_109 [1] : vector<8x32xf32> to vector<8xf32>
    %264 = vector.shape_cast %263 : vector<8xf32> to vector<8x1xf32>
    %cst_110 = arith.constant 3.200000e+01 : f32
    %265 = vector.broadcast %cst_110 : f32 to vector<8x1xf32>
    %266 = arith.divf %264, %265 : vector<8x1xf32>
    %cst_111 = arith.constant 9.99999974E-6 : f32
    %267 = vector.broadcast %cst_111 : f32 to vector<8x1xf32>
    %268 = arith.addf %266, %267 : vector<8x1xf32>
    %269 = math.rsqrt %268 : vector<8x1xf32>
    %270 = vector.broadcast %269 : vector<8x1xf32> to vector<8x32xf32>
    %271 = arith.mulf %261, %270 : vector<8x32xf32>
    %272 = vector.broadcast %254 : vector<1x32xf32> to vector<8x32xf32>
    %273 = arith.mulf %271, %272 : vector<8x32xf32>
    %274 = vector.broadcast %255 : vector<1x32xf32> to vector<8x32xf32>
    %275 = arith.addf %273, %274 : vector<8x32xf32>
    %c0_112 = arith.constant 0 : index
    %c0_113 = arith.constant 0 : index
    %c0_114 = arith.constant 0 : index
    %276 = vector.load %arg25[%c0_112, %c0_113, %c0_114] : memref<1x8x32xf32, #tpu.memory_space<vmem>>, vector<1x8x32xf32>
    %277 = vector.shape_cast %276 : vector<1x8x32xf32> to vector<8x32xf32>
    %278 = vector.shape_cast %275 : vector<8x32xf32> to vector<1x8x32xf32>
    tpu.vector_store %arg25[%c0_112, %c0_113, %c0_114], %278 {strides = array<i32>} : memref<1x8x32xf32, #tpu.memory_space<vmem>>, vector<1x8x32xf32>,
    return
  }
  func.func @transform_0(%arg0: i32) -> (i32, i32, i32) {
    %c0_i32 = arith.constant 0 : i32
    %c0_i32_0 = arith.constant 0 : i32
    %c0_i32_1 = arith.constant 0 : i32
    return %arg0, %c0_i32, %c0_i32_0 : i32, i32, i32
  }
  func.func @transform_1(%arg0: i32) -> (i32, i32, i32) {
    %c0_i32 = arith.constant 0 : i32
    %c0_i32_0 = arith.constant 0 : i32
    %c0_i32_1 = arith.constant 0 : i32
    return %arg0, %c0_i32, %c0_i32_0 : i32, i32, i32
  }
  func.func @transform_2(%arg0: i32) -> (i32, i32) {
    %c0_i32 = arith.constant 0 : i32
    %c0_i32_0 = arith.constant 0 : i32
    %c0_i32_1 = arith.constant 0 : i32
    return %c0_i32, %c0_i32_0 : i32, i32
  }
  func.func @transform_3(%arg0: i32) -> (i32, i32, i32) {
    %c0_i32 = arith.constant 0 : i32
    %c0_i32_0 = arith.constant 0 : i32
    %c0_i32_1 = arith.constant 0 : i32
    return %arg0, %c0_i32, %c0_i32_0 : i32, i32, i32
  }
  func.func @transform_4(%arg0: i32) -> (i32, i32) {
    %c0_i32 = arith.constant 0 : i32
    %c0_i32_0 = arith.constant 0 : i32
    %c0_i32_1 = arith.constant 0 : i32
    return %c0_i32, %c0_i32_0 : i32, i32
  }
  func.func @transform_5(%arg0: i32) -> (i32, i32) {
    %c0_i32 = arith.constant 0 : i32
    %c0_i32_0 = arith.constant 0 : i32
    %c0_i32_1 = arith.constant 0 : i32
    return %c0_i32, %c0_i32_0 : i32, i32
  }
  func.func @transform_6(%arg0: i32) -> (i32, i32) {
    %c0_i32 = arith.constant 0 : i32
    %c0_i32_0 = arith.constant 0 : i32
    %c0_i32_1 = arith.constant 0 : i32
    return %c0_i32, %c0_i32_0 : i32, i32
  }
  func.func @transform_7(%arg0: i32) -> (i32, i32) {
    %c0_i32 = arith.constant 0 : i32
    %c0_i32_0 = arith.constant 0 : i32
    %c0_i32_1 = arith.constant 0 : i32
    return %c0_i32, %c0_i32_0 : i32, i32
  }
  func.func @transform_8(%arg0: i32) -> (i32, i32) {
    %c0_i32 = arith.constant 0 : i32
    %c0_i32_0 = arith.constant 0 : i32
    %c0_i32_1 = arith.constant 0 : i32
    return %c0_i32, %c0_i32_0 : i32, i32
  }
  func.func @transform_9(%arg0: i32) -> (i32, i32) {
    %c0_i32 = arith.constant 0 : i32
    %c0_i32_0 = arith.constant 0 : i32
    %c0_i32_1 = arith.constant 0 : i32
    return %c0_i32, %c0_i32_0 : i32, i32
  }
  func.func @transform_10(%arg0: i32) -> (i32, i32) {
    %c0_i32 = arith.constant 0 : i32
    %c0_i32_0 = arith.constant 0 : i32
    %c0_i32_1 = arith.constant 0 : i32
    return %c0_i32, %c0_i32_0 : i32, i32
  }
  func.func @transform_11(%arg0: i32) -> (i32, i32) {
    %c0_i32 = arith.constant 0 : i32
    %c0_i32_0 = arith.constant 0 : i32
    %c0_i32_1 = arith.constant 0 : i32
    return %c0_i32, %c0_i32_0 : i32, i32
  }
  func.func @transform_12(%arg0: i32) -> (i32, i32) {
    %c0_i32 = arith.constant 0 : i32
    %c0_i32_0 = arith.constant 0 : i32
    %c0_i32_1 = arith.constant 0 : i32
    return %c0_i32, %c0_i32_0 : i32, i32
  }
  func.func @transform_13(%arg0: i32) -> (i32, i32) {
    %c0_i32 = arith.constant 0 : i32
    %c0_i32_0 = arith.constant 0 : i32
    %c0_i32_1 = arith.constant 0 : i32
    return %c0_i32, %c0_i32_0 : i32, i32
  }
  func.func @transform_14(%arg0: i32) -> (i32, i32) {
    %c0_i32 = arith.constant 0 : i32
    %c0_i32_0 = arith.constant 0 : i32
    %c0_i32_1 = arith.constant 0 : i32
    return %c0_i32, %c0_i32_0 : i32, i32
  }
  func.func @transform_15(%arg0: i32) -> (i32, i32) {
    %c0_i32 = arith.constant 0 : i32
    %c0_i32_0 = arith.constant 0 : i32
    %c0_i32_1 = arith.constant 0 : i32
    return %c0_i32, %c0_i32_0 : i32, i32
  }
  func.func @transform_16(%arg0: i32) -> (i32, i32) {
    %c0_i32 = arith.constant 0 : i32
    %c0_i32_0 = arith.constant 0 : i32
    %c0_i32_1 = arith.constant 0 : i32
    return %c0_i32, %c0_i32_0 : i32, i32
  }
  func.func @transform_17(%arg0: i32) -> (i32, i32) {
    %c0_i32 = arith.constant 0 : i32
    %c0_i32_0 = arith.constant 0 : i32
    %c0_i32_1 = arith.constant 0 : i32
    return %c0_i32, %c0_i32_0 : i32, i32
  }
  func.func @transform_18(%arg0: i32) -> (i32, i32) {
    %c0_i32 = arith.constant 0 : i32
    %c0_i32_0 = arith.constant 0 : i32
    %c0_i32_1 = arith.constant 0 : i32
    return %c0_i32, %c0_i32_0 : i32, i32
  }
  func.func @transform_19(%arg0: i32) -> (i32, i32) {
    %c0_i32 = arith.constant 0 : i32
    %c0_i32_0 = arith.constant 0 : i32
    %c0_i32_1 = arith.constant 0 : i32
    return %c0_i32, %c0_i32_0 : i32, i32
  }
  func.func @transform_20(%arg0: i32) -> (i32, i32) {
    %c0_i32 = arith.constant 0 : i32
    %c0_i32_0 = arith.constant 0 : i32
    %c0_i32_1 = arith.constant 0 : i32
    return %c0_i32, %c0_i32_0 : i32, i32
  }
  func.func @transform_21(%arg0: i32) -> (i32, i32) {
    %c0_i32 = arith.constant 0 : i32
    %c0_i32_0 = arith.constant 0 : i32
    %c0_i32_1 = arith.constant 0 : i32
    return %c0_i32, %c0_i32_0 : i32, i32
  }
  func.func @transform_22(%arg0: i32) -> (i32, i32) {
    %c0_i32 = arith.constant 0 : i32
    %c0_i32_0 = arith.constant 0 : i32
    %c0_i32_1 = arith.constant 0 : i32
    return %c0_i32, %c0_i32_0 : i32, i32
  }
  func.func @transform_23(%arg0: i32) -> (i32, i32) {
    %c0_i32 = arith.constant 0 : i32
    %c0_i32_0 = arith.constant 0 : i32
    %c0_i32_1 = arith.constant 0 : i32
    return %c0_i32, %c0_i32_0 : i32, i32
  }
  func.func @transform_24(%arg0: i32) -> (i32, i32, i32) {
    %c0_i32 = arith.constant 0 : i32
    %c0_i32_0 = arith.constant 0 : i32
    %c0_i32_1 = arith.constant 0 : i32
    return %arg0, %c0_i32, %c0_i32_0 : i32, i32, i32
  }
}

module attributes {stable_mosaic.version = 11 : i64} {
  func.func @_decoder_layer_kernel(%arg0: i32, %arg1: memref<1x8x32xf32, #tpu.memory_space<vmem>>, %arg2: memref<1x12x32xf32, #tpu.memory_space<vmem>>, %arg3: memref<8x8xf32, #tpu.memory_space<vmem>>, %arg4: memref<1x1x12xf32, #tpu.memory_space<vmem>>, %arg5: memref<32x96xf32, #tpu.memory_space<vmem>>, %arg6: memref<1x96xf32, #tpu.memory_space<vmem>>, %arg7: memref<32x32xf32, #tpu.memory_space<vmem>>, %arg8: memref<1x32xf32, #tpu.memory_space<vmem>>, %arg9: memref<1x32xf32, #tpu.memory_space<vmem>>, %arg10: memref<1x32xf32, #tpu.memory_space<vmem>>, %arg11: memref<32x32xf32, #tpu.memory_space<vmem>>, %arg12: memref<1x32xf32, #tpu.memory_space<vmem>>, %arg13: memref<32x64xf32, #tpu.memory_space<vmem>>, %arg14: memref<1x64xf32, #tpu.memory_space<vmem>>, %arg15: memref<32x32xf32, #tpu.memory_space<vmem>>, %arg16: memref<1x32xf32, #tpu.memory_space<vmem>>, %arg17: memref<1x32xf32, #tpu.memory_space<vmem>>, %arg18: memref<1x32xf32, #tpu.memory_space<vmem>>, %arg19: memref<32x64xf32, #tpu.memory_space<vmem>>, %arg20: memref<1x64xf32, #tpu.memory_space<vmem>>, %arg21: memref<64x32xf32, #tpu.memory_space<vmem>>, %arg22: memref<1x32xf32, #tpu.memory_space<vmem>>, %arg23: memref<1x32xf32, #tpu.memory_space<vmem>>, %arg24: memref<1x32xf32, #tpu.memory_space<vmem>>, %arg25: memref<1x8x32xf32, #tpu.memory_space<vmem>>) attributes {dimension_semantics = [#tpu.dimension_semantics<parallel>], iteration_bounds = array<i64: 2>, scalar_prefetch = 0 : i64, scratch_operands = 0 : i64, tpu.core_type = #tpu.core_type<tc>, window_params = [{transform_indices = @transform_0, window_bounds = array<i64: 1, 8, 32>}, {transform_indices = @transform_1, window_bounds = array<i64: 1, 12, 32>}, {pipeline_mode = #tpu.pipeline_mode<synchronous>, transform_indices = @transform_2, window_bounds = array<i64: 8, 8>}, {transform_indices = @transform_3, window_bounds = array<i64: 1, 1, 12>}, {pipeline_mode = #tpu.pipeline_mode<synchronous>, transform_indices = @transform_4, window_bounds = array<i64: 32, 96>}, {pipeline_mode = #tpu.pipeline_mode<synchronous>, transform_indices = @transform_5, window_bounds = array<i64: 1, 96>}, {pipeline_mode = #tpu.pipeline_mode<synchronous>, transform_indices = @transform_6, window_bounds = array<i64: 32, 32>}, {pipeline_mode = #tpu.pipeline_mode<synchronous>, transform_indices = @transform_7, window_bounds = array<i64: 1, 32>}, {pipeline_mode = #tpu.pipeline_mode<synchronous>, transform_indices = @transform_8, window_bounds = array<i64: 1, 32>}, {pipeline_mode = #tpu.pipeline_mode<synchronous>, transform_indices = @transform_9, window_bounds = array<i64: 1, 32>}, {pipeline_mode = #tpu.pipeline_mode<synchronous>, transform_indices = @transform_10, window_bounds = array<i64: 32, 32>}, {pipeline_mode = #tpu.pipeline_mode<synchronous>, transform_indices = @transform_11, window_bounds = array<i64: 1, 32>}, {pipeline_mode = #tpu.pipeline_mode<synchronous>, transform_indices = @transform_12, window_bounds = array<i64: 32, 64>}, {pipeline_mode = #tpu.pipeline_mode<synchronous>, transform_indices = @transform_13, window_bounds = array<i64: 1, 64>}, {pipeline_mode = #tpu.pipeline_mode<synchronous>, transform_indices = @transform_14, window_bounds = array<i64: 32, 32>}, {pipeline_mode = #tpu.pipeline_mode<synchronous>, transform_indices = @transform_15, window_bounds = array<i64: 1, 32>}, {pipeline_mode = #tpu.pipeline_mode<synchronous>, transform_indices = @transform_16, window_bounds = array<i64: 1, 32>}, {pipeline_mode = #tpu.pipeline_mode<synchronous>, transform_indices = @transform_17, window_bounds = array<i64: 1, 32>}, {pipeline_mode = #tpu.pipeline_mode<synchronous>, transform_indices = @transform_18, window_bounds = array<i64: 32, 64>}, {pipeline_mode = #tpu.pipeline_mode<synchronous>, transform_indices = @transform_19, window_bounds = array<i64: 1, 64>}, {pipeline_mode = #tpu.pipeline_mode<synchronous>, transform_indices = @transform_20, window_bounds = array<i64: 64, 32>}, {pipeline_mode = #tpu.pipeline_mode<synchronous>, transform_indices = @transform_21, window_bounds = array<i64: 1, 32>}, {pipeline_mode = #tpu.pipeline_mode<synchronous>, transform_indices = @transform_22, window_bounds = array<i64: 1, 32>}, {pipeline_mode = #tpu.pipeline_mode<synchronous>, transform_indices = @transform_23, window_bounds = array<i64: 1, 32>}, {transform_indices = @transform_24, window_bounds = array<i64: 1, 8, 32>}]} {
    %c0 = arith.constant 0 : index
    %c0_0 = arith.constant 0 : index
    %c0_1 = arith.constant 0 : index
    %0 = vector.load %arg1[%c0, %c0_0, %c0_1] : memref<1x8x32xf32, #tpu.memory_space<vmem>>, vector<1x8x32xf32>
    %1 = vector.shape_cast %0 : vector<1x8x32xf32> to vector<8x32xf32>
    %c0_2 = arith.constant 0 : index
    %c0_3 = arith.constant 0 : index
    %c0_4 = arith.constant 0 : index
    %2 = vector.load %arg2[%c0_2, %c0_3, %c0_4] : memref<1x12x32xf32, #tpu.memory_space<vmem>>, vector<1x12x32xf32>
    %3 = vector.shape_cast %2 : vector<1x12x32xf32> to vector<12x32xf32>
    %c0_5 = arith.constant 0 : index
    %c0_6 = arith.constant 0 : index
    %4 = vector.load %arg5[%c0_5, %c0_6] : memref<32x96xf32, #tpu.memory_space<vmem>>, vector<32x96xf32>
    %cst = arith.constant dense<0.000000e+00> : vector<8x96xf32>
    %5 = tpu.matmul %1, %4, %cst {dimension_numbers = #tpu.dot_dimension_numbers<[1], [0], [0], [1], [0, 0, 1, 1], [], []>} : vector<8x32xf32>, vector<32x96xf32>, vector<8x96xf32> -> vector<8x96xf32>
    %c0_7 = arith.constant 0 : index
    %c0_8 = arith.constant 0 : index
    %6 = vector.load %arg6[%c0_7, %c0_8] : memref<1x96xf32, #tpu.memory_space<vmem>>, vector<1x96xf32>
    %7 = vector.broadcast %6 : vector<1x96xf32> to vector<8x96xf32>
    %8 = arith.addf %5, %7 : vector<8x96xf32>
    %9 = vector.extract_strided_slice %8 {offsets = [0, 0], sizes = [8, 32], strides = [1, 1]} : vector<8x96xf32> to vector<8x32xf32>
    %10 = vector.extract_strided_slice %8 {offsets = [0, 32], sizes = [8, 32], strides = [1, 1]} : vector<8x96xf32> to vector<8x32xf32>
    %11 = vector.extract_strided_slice %8 {offsets = [0, 64], sizes = [8, 32], strides = [1, 1]} : vector<8x96xf32> to vector<8x32xf32>
    %c0_9 = arith.constant 0 : index
    %c0_10 = arith.constant 0 : index
    %12 = vector.load %arg3[%c0_9, %c0_10] : memref<8x8xf32, #tpu.memory_space<vmem>>, vector<8x8xf32>
    %13 = vector.extract_strided_slice %9 {offsets = [0, 0], sizes = [8, 8], strides = [1, 1]} : vector<8x32xf32> to vector<8x8xf32>
    %14 = vector.extract_strided_slice %10 {offsets = [0, 0], sizes = [8, 8], strides = [1, 1]} : vector<8x32xf32> to vector<8x8xf32>
    %15 = tpu.transpose %14, [1, 0] : vector<8x8xf32> -> vector<8x8xf32>
    %cst_11 = arith.constant dense<0.000000e+00> : vector<8x8xf32>
    %16 = tpu.matmul %13, %15, %cst_11 {dimension_numbers = #tpu.dot_dimension_numbers<[1], [0], [0], [1], [0, 0, 1, 1], [], []>} : vector<8x8xf32>, vector<8x8xf32>, vector<8x8xf32> -> vector<8x8xf32>
    %cst_12 = arith.constant 0.176776692 : f32
    %17 = vector.broadcast %cst_12 : f32 to vector<8x8xf32>
    %18 = arith.mulf %16, %17 : vector<8x8xf32>
    %19 = arith.addf %18, %12 : vector<8x8xf32>
    %cst_13 = arith.constant dense<0xFF800000> : vector<8xf32>
    %20 = vector.multi_reduction <maximumf>, %19, %cst_13 [1] : vector<8x8xf32> to vector<8xf32>
    %21 = vector.shape_cast %20 : vector<8xf32> to vector<8x1xf32>
    %22 = vector.broadcast %21 : vector<8x1xf32> to vector<8x8xf32>
    %23 = arith.subf %19, %22 : vector<8x8xf32>
    %24 = math.exp %23 : vector<8x8xf32>
    %cst_14 = arith.constant dense<0.000000e+00> : vector<8xf32>
    %25 = vector.multi_reduction <add>, %24, %cst_14 [1] : vector<8x8xf32> to vector<8xf32>
    %26 = vector.shape_cast %25 : vector<8xf32> to vector<8x1xf32>
    %27 = tpu.reciprocal %26 {approx = true} : vector<8x1xf32> -> vector<8x1xf32>
    %28 = vector.broadcast %27 : vector<8x1xf32> to vector<8x8xf32>
    %29 = arith.mulf %24, %28 : vector<8x8xf32>
    %30 = vector.extract_strided_slice %11 {offsets = [0, 0], sizes = [8, 8], strides = [1, 1]} : vector<8x32xf32> to vector<8x8xf32>
    %cst_15 = arith.constant dense<0.000000e+00> : vector<8x8xf32>
    %31 = tpu.matmul %29, %30, %cst_15 {dimension_numbers = #tpu.dot_dimension_numbers<[1], [0], [0], [1], [0, 0, 1, 1], [], []>} : vector<8x8xf32>, vector<8x8xf32>, vector<8x8xf32> -> vector<8x8xf32>
    %32 = vector.extract_strided_slice %9 {offsets = [0, 8], sizes = [8, 8], strides = [1, 1]} : vector<8x32xf32> to vector<8x8xf32>
    %33 = vector.extract_strided_slice %10 {offsets = [0, 8], sizes = [8, 8], strides = [1, 1]} : vector<8x32xf32> to vector<8x8xf32>
    %34 = tpu.transpose %33, [1, 0] : vector<8x8xf32> -> vector<8x8xf32>
    %cst_16 = arith.constant dense<0.000000e+00> : vector<8x8xf32>
    %35 = tpu.matmul %32, %34, %cst_16 {dimension_numbers = #tpu.dot_dimension_numbers<[1], [0], [0], [1], [0, 0, 1, 1], [], []>} : vector<8x8xf32>, vector<8x8xf32>, vector<8x8xf32> -> vector<8x8xf32>
    %cst_17 = arith.constant 0.176776692 : f32
    %36 = vector.broadcast %cst_17 : f32 to vector<8x8xf32>
    %37 = arith.mulf %35, %36 : vector<8x8xf32>
    %38 = arith.addf %37, %12 : vector<8x8xf32>
    %cst_18 = arith.constant dense<0xFF800000> : vector<8xf32>
    %39 = vector.multi_reduction <maximumf>, %38, %cst_18 [1] : vector<8x8xf32> to vector<8xf32>
    %40 = vector.shape_cast %39 : vector<8xf32> to vector<8x1xf32>
    %41 = vector.broadcast %40 : vector<8x1xf32> to vector<8x8xf32>
    %42 = arith.subf %38, %41 : vector<8x8xf32>
    %43 = math.exp %42 : vector<8x8xf32>
    %cst_19 = arith.constant dense<0.000000e+00> : vector<8xf32>
    %44 = vector.multi_reduction <add>, %43, %cst_19 [1] : vector<8x8xf32> to vector<8xf32>
    %45 = vector.shape_cast %44 : vector<8xf32> to vector<8x1xf32>
    %46 = tpu.reciprocal %45 {approx = true} : vector<8x1xf32> -> vector<8x1xf32>
    %47 = vector.broadcast %46 : vector<8x1xf32> to vector<8x8xf32>
    %48 = arith.mulf %43, %47 : vector<8x8xf32>
    %49 = vector.extract_strided_slice %11 {offsets = [0, 8], sizes = [8, 8], strides = [1, 1]} : vector<8x32xf32> to vector<8x8xf32>
    %cst_20 = arith.constant dense<0.000000e+00> : vector<8x8xf32>
    %50 = tpu.matmul %48, %49, %cst_20 {dimension_numbers = #tpu.dot_dimension_numbers<[1], [0], [0], [1], [0, 0, 1, 1], [], []>} : vector<8x8xf32>, vector<8x8xf32>, vector<8x8xf32> -> vector<8x8xf32>
    %51 = vector.extract_strided_slice %9 {offsets = [0, 16], sizes = [8, 8], strides = [1, 1]} : vector<8x32xf32> to vector<8x8xf32>
    %52 = vector.extract_strided_slice %10 {offsets = [0, 16], sizes = [8, 8], strides = [1, 1]} : vector<8x32xf32> to vector<8x8xf32>
    %53 = tpu.transpose %52, [1, 0] : vector<8x8xf32> -> vector<8x8xf32>
    %cst_21 = arith.constant dense<0.000000e+00> : vector<8x8xf32>
    %54 = tpu.matmul %51, %53, %cst_21 {dimension_numbers = #tpu.dot_dimension_numbers<[1], [0], [0], [1], [0, 0, 1, 1], [], []>} : vector<8x8xf32>, vector<8x8xf32>, vector<8x8xf32> -> vector<8x8xf32>
    %cst_22 = arith.constant 0.176776692 : f32
    %55 = vector.broadcast %cst_22 : f32 to vector<8x8xf32>
    %56 = arith.mulf %54, %55 : vector<8x8xf32>
    %57 = arith.addf %56, %12 : vector<8x8xf32>
    %cst_23 = arith.constant dense<0xFF800000> : vector<8xf32>
    %58 = vector.multi_reduction <maximumf>, %57, %cst_23 [1] : vector<8x8xf32> to vector<8xf32>
    %59 = vector.shape_cast %58 : vector<8xf32> to vector<8x1xf32>
    %60 = vector.broadcast %59 : vector<8x1xf32> to vector<8x8xf32>
    %61 = arith.subf %57, %60 : vector<8x8xf32>
    %62 = math.exp %61 : vector<8x8xf32>
    %cst_24 = arith.constant dense<0.000000e+00> : vector<8xf32>
    %63 = vector.multi_reduction <add>, %62, %cst_24 [1] : vector<8x8xf32> to vector<8xf32>
    %64 = vector.shape_cast %63 : vector<8xf32> to vector<8x1xf32>
    %65 = tpu.reciprocal %64 {approx = true} : vector<8x1xf32> -> vector<8x1xf32>
    %66 = vector.broadcast %65 : vector<8x1xf32> to vector<8x8xf32>
    %67 = arith.mulf %62, %66 : vector<8x8xf32>
    %68 = vector.extract_strided_slice %11 {offsets = [0, 16], sizes = [8, 8], strides = [1, 1]} : vector<8x32xf32> to vector<8x8xf32>
    %cst_25 = arith.constant dense<0.000000e+00> : vector<8x8xf32>
    %69 = tpu.matmul %67, %68, %cst_25 {dimension_numbers = #tpu.dot_dimension_numbers<[1], [0], [0], [1], [0, 0, 1, 1], [], []>} : vector<8x8xf32>, vector<8x8xf32>, vector<8x8xf32> -> vector<8x8xf32>
    %70 = vector.extract_strided_slice %9 {offsets = [0, 24], sizes = [8, 8], strides = [1, 1]} : vector<8x32xf32> to vector<8x8xf32>
    %71 = vector.extract_strided_slice %10 {offsets = [0, 24], sizes = [8, 8], strides = [1, 1]} : vector<8x32xf32> to vector<8x8xf32>
    %72 = tpu.transpose %71, [1, 0] : vector<8x8xf32> -> vector<8x8xf32>
    %cst_26 = arith.constant dense<0.000000e+00> : vector<8x8xf32>
    %73 = tpu.matmul %70, %72, %cst_26 {dimension_numbers = #tpu.dot_dimension_numbers<[1], [0], [0], [1], [0, 0, 1, 1], [], []>} : vector<8x8xf32>, vector<8x8xf32>, vector<8x8xf32> -> vector<8x8xf32>
    %cst_27 = arith.constant 0.176776692 : f32
    %74 = vector.broadcast %cst_27 : f32 to vector<8x8xf32>
    %75 = arith.mulf %73, %74 : vector<8x8xf32>
    %76 = arith.addf %75, %12 : vector<8x8xf32>
    %cst_28 = arith.constant dense<0xFF800000> : vector<8xf32>
    %77 = vector.multi_reduction <maximumf>, %76, %cst_28 [1] : vector<8x8xf32> to vector<8xf32>
    %78 = vector.shape_cast %77 : vector<8xf32> to vector<8x1xf32>
    %79 = vector.broadcast %78 : vector<8x1xf32> to vector<8x8xf32>
    %80 = arith.subf %76, %79 : vector<8x8xf32>
    %81 = math.exp %80 : vector<8x8xf32>
    %cst_29 = arith.constant dense<0.000000e+00> : vector<8xf32>
    %82 = vector.multi_reduction <add>, %81, %cst_29 [1] : vector<8x8xf32> to vector<8xf32>
    %83 = vector.shape_cast %82 : vector<8xf32> to vector<8x1xf32>
    %84 = tpu.reciprocal %83 {approx = true} : vector<8x1xf32> -> vector<8x1xf32>
    %85 = vector.broadcast %84 : vector<8x1xf32> to vector<8x8xf32>
    %86 = arith.mulf %81, %85 : vector<8x8xf32>
    %87 = vector.extract_strided_slice %11 {offsets = [0, 24], sizes = [8, 8], strides = [1, 1]} : vector<8x32xf32> to vector<8x8xf32>
    %cst_30 = arith.constant dense<0.000000e+00> : vector<8x8xf32>
    %88 = tpu.matmul %86, %87, %cst_30 {dimension_numbers = #tpu.dot_dimension_numbers<[1], [0], [0], [1], [0, 0, 1, 1], [], []>} : vector<8x8xf32>, vector<8x8xf32>, vector<8x8xf32> -> vector<8x8xf32>
    %89 = tpu.concatenate %31, %50, %69, %88 in 1 : vector<8x8xf32>, vector<8x8xf32>, vector<8x8xf32>, vector<8x8xf32> -> vector<8x32xf32>
    %c0_31 = arith.constant 0 : index
    %c0_32 = arith.constant 0 : index
    %90 = vector.load %arg7[%c0_31, %c0_32] : memref<32x32xf32, #tpu.memory_space<vmem>>, vector<32x32xf32>
    %cst_33 = arith.constant dense<0.000000e+00> : vector<8x32xf32>
    %91 = tpu.matmul %89, %90, %cst_33 {dimension_numbers = #tpu.dot_dimension_numbers<[1], [0], [0], [1], [0, 0, 1, 1], [], []>} : vector<8x32xf32>, vector<32x32xf32>, vector<8x32xf32> -> vector<8x32xf32>
    %c0_34 = arith.constant 0 : index
    %c0_35 = arith.constant 0 : index
    %92 = vector.load %arg8[%c0_34, %c0_35] : memref<1x32xf32, #tpu.memory_space<vmem>>, vector<1x32xf32>
    %93 = vector.broadcast %92 : vector<1x32xf32> to vector<8x32xf32>
    %94 = arith.addf %91, %93 : vector<8x32xf32>
    %95 = arith.addf %94, %1 : vector<8x32xf32>
    %c0_36 = arith.constant 0 : index
    %c0_37 = arith.constant 0 : index
    %96 = vector.load %arg9[%c0_36, %c0_37] : memref<1x32xf32, #tpu.memory_space<vmem>>, vector<1x32xf32>
    %c0_38 = arith.constant 0 : index
    %c0_39 = arith.constant 0 : index
    %97 = vector.load %arg10[%c0_38, %c0_39] : memref<1x32xf32, #tpu.memory_space<vmem>>, vector<1x32xf32>
    %cst_40 = arith.constant dense<0.000000e+00> : vector<8xf32>
    %98 = vector.multi_reduction <add>, %95, %cst_40 [1] : vector<8x32xf32> to vector<8xf32>
    %99 = vector.shape_cast %98 : vector<8xf32> to vector<8x1xf32>
    %cst_41 = arith.constant 3.200000e+01 : f32
    %100 = vector.broadcast %cst_41 : f32 to vector<8x1xf32>
    %101 = arith.divf %99, %100 : vector<8x1xf32>
    %102 = vector.broadcast %101 : vector<8x1xf32> to vector<8x32xf32>
    %103 = arith.subf %95, %102 : vector<8x32xf32>
    %104 = arith.mulf %103, %103 : vector<8x32xf32>
    %cst_42 = arith.constant dense<0.000000e+00> : vector<8xf32>
    %105 = vector.multi_reduction <add>, %104, %cst_42 [1] : vector<8x32xf32> to vector<8xf32>
    %106 = vector.shape_cast %105 : vector<8xf32> to vector<8x1xf32>
    %cst_43 = arith.constant 3.200000e+01 : f32
    %107 = vector.broadcast %cst_43 : f32 to vector<8x1xf32>
    %108 = arith.divf %106, %107 : vector<8x1xf32>
    %cst_44 = arith.constant 9.99999974E-6 : f32
    %109 = vector.broadcast %cst_44 : f32 to vector<8x1xf32>
    %110 = arith.addf %108, %109 : vector<8x1xf32>
    %111 = math.rsqrt %110 : vector<8x1xf32>
    %112 = vector.broadcast %111 : vector<8x1xf32> to vector<8x32xf32>
    %113 = arith.mulf %103, %112 : vector<8x32xf32>
    %114 = vector.broadcast %96 : vector<1x32xf32> to vector<8x32xf32>
    %115 = arith.mulf %113, %114 : vector<8x32xf32>
    %116 = vector.broadcast %97 : vector<1x32xf32> to vector<8x32xf32>
    %117 = arith.addf %115, %116 : vector<8x32xf32>
    %c0_45 = arith.constant 0 : index
    %c0_46 = arith.constant 0 : index
    %118 = vector.load %arg11[%c0_45, %c0_46] : memref<32x32xf32, #tpu.memory_space<vmem>>, vector<32x32xf32>
    %cst_47 = arith.constant dense<0.000000e+00> : vector<8x32xf32>
    %119 = tpu.matmul %117, %118, %cst_47 {dimension_numbers = #tpu.dot_dimension_numbers<[1], [0], [0], [1], [0, 0, 1, 1], [], []>} : vector<8x32xf32>, vector<32x32xf32>, vector<8x32xf32> -> vector<8x32xf32>
    %c0_48 = arith.constant 0 : index
    %c0_49 = arith.constant 0 : index
    %120 = vector.load %arg12[%c0_48, %c0_49] : memref<1x32xf32, #tpu.memory_space<vmem>>, vector<1x32xf32>
    %121 = vector.broadcast %120 : vector<1x32xf32> to vector<8x32xf32>
    %122 = arith.addf %119, %121 : vector<8x32xf32>
    %c0_50 = arith.constant 0 : index
    %c0_51 = arith.constant 0 : index
    %123 = vector.load %arg13[%c0_50, %c0_51] : memref<32x64xf32, #tpu.memory_space<vmem>>, vector<32x64xf32>
    %cst_52 = arith.constant dense<0.000000e+00> : vector<12x64xf32>
    %124 = tpu.matmul %3, %123, %cst_52 {dimension_numbers = #tpu.dot_dimension_numbers<[1], [0], [0], [1], [0, 0, 1, 1], [], []>} : vector<12x32xf32>, vector<32x64xf32>, vector<12x64xf32> -> vector<12x64xf32>
    %c0_53 = arith.constant 0 : index
    %c0_54 = arith.constant 0 : index
    %125 = vector.load %arg14[%c0_53, %c0_54] : memref<1x64xf32, #tpu.memory_space<vmem>>, vector<1x64xf32>
    %126 = vector.broadcast %125 : vector<1x64xf32> to vector<12x64xf32>
    %127 = arith.addf %124, %126 : vector<12x64xf32>
    %128 = vector.extract_strided_slice %127 {offsets = [0, 0], sizes = [12, 32], strides = [1, 1]} : vector<12x64xf32> to vector<12x32xf32>
    %129 = vector.extract_strided_slice %127 {offsets = [0, 32], sizes = [12, 32], strides = [1, 1]} : vector<12x64xf32> to vector<12x32xf32>
    %c0_55 = arith.constant 0 : index
    %c0_56 = arith.constant 0 : index
    %c0_57 = arith.constant 0 : index
    %130 = vector.load %arg4[%c0_55, %c0_56, %c0_57] : memref<1x1x12xf32, #tpu.memory_space<vmem>>, vector<1x1x12xf32>
    %131 = vector.shape_cast %130 : vector<1x1x12xf32> to vector<1x12xf32>
    %132 = vector.extract_strided_slice %122 {offsets = [0, 0], sizes = [8, 8], strides = [1, 1]} : vector<8x32xf32> to vector<8x8xf32>
    %133 = vector.extract_strided_slice %128 {offsets = [0, 0], sizes = [12, 8], strides = [1, 1]} : vector<12x32xf32> to vector<12x8xf32>
    %134 = tpu.transpose %133, [1, 0] : vector<12x8xf32> -> vector<8x12xf32>
    %cst_58 = arith.constant dense<0.000000e+00> : vector<8x12xf32>
    %135 = tpu.matmul %132, %134, %cst_58 {dimension_numbers = #tpu.dot_dimension_numbers<[1], [0], [0], [1], [0, 0, 1, 1], [], []>} : vector<8x8xf32>, vector<8x12xf32>, vector<8x12xf32> -> vector<8x12xf32>
    %cst_59 = arith.constant 0.176776692 : f32
    %136 = vector.broadcast %cst_59 : f32 to vector<8x12xf32>
    %137 = arith.mulf %135, %136 : vector<8x12xf32>
    %138 = vector.broadcast %131 : vector<1x12xf32> to vector<8x12xf32>
    %139 = arith.addf %137, %138 : vector<8x12xf32>
    %cst_60 = arith.constant dense<0xFF800000> : vector<8xf32>
    %140 = vector.multi_reduction <maximumf>, %139, %cst_60 [1] : vector<8x12xf32> to vector<8xf32>
    %141 = vector.shape_cast %140 : vector<8xf32> to vector<8x1xf32>
    %142 = vector.broadcast %141 : vector<8x1xf32> to vector<8x12xf32>
    %143 = arith.subf %139, %142 : vector<8x12xf32>
    %144 = math.exp %143 : vector<8x12xf32>
    %cst_61 = arith.constant dense<0.000000e+00> : vector<8xf32>
    %145 = vector.multi_reduction <add>, %144, %cst_61 [1] : vector<8x12xf32> to vector<8xf32>
    %146 = vector.shape_cast %145 : vector<8xf32> to vector<8x1xf32>
    %147 = tpu.reciprocal %146 {approx = true} : vector<8x1xf32> -> vector<8x1xf32>
    %148 = vector.broadcast %147 : vector<8x1xf32> to vector<8x12xf32>
    %149 = arith.mulf %144, %148 : vector<8x12xf32>
    %150 = vector.extract_strided_slice %129 {offsets = [0, 0], sizes = [12, 8], strides = [1, 1]} : vector<12x32xf32> to vector<12x8xf32>
    %cst_62 = arith.constant dense<0.000000e+00> : vector<8x8xf32>
    %151 = tpu.matmul %149, %150, %cst_62 {dimension_numbers = #tpu.dot_dimension_numbers<[1], [0], [0], [1], [0, 0, 1, 1], [], []>} : vector<8x12xf32>, vector<12x8xf32>, vector<8x8xf32> -> vector<8x8xf32>
    %152 = vector.extract_strided_slice %122 {offsets = [0, 8], sizes = [8, 8], strides = [1, 1]} : vector<8x32xf32> to vector<8x8xf32>
    %153 = vector.extract_strided_slice %128 {offsets = [0, 8], sizes = [12, 8], strides = [1, 1]} : vector<12x32xf32> to vector<12x8xf32>
    %154 = tpu.transpose %153, [1, 0] : vector<12x8xf32> -> vector<8x12xf32>
    %cst_63 = arith.constant dense<0.000000e+00> : vector<8x12xf32>
    %155 = tpu.matmul %152, %154, %cst_63 {dimension_numbers = #tpu.dot_dimension_numbers<[1], [0], [0], [1], [0, 0, 1, 1], [], []>} : vector<8x8xf32>, vector<8x12xf32>, vector<8x12xf32> -> vector<8x12xf32>
    %cst_64 = arith.constant 0.176776692 : f32
    %156 = vector.broadcast %cst_64 : f32 to vector<8x12xf32>
    %157 = arith.mulf %155, %156 : vector<8x12xf32>
    %158 = vector.broadcast %131 : vector<1x12xf32> to vector<8x12xf32>
    %159 = arith.addf %157, %158 : vector<8x12xf32>
    %cst_65 = arith.constant dense<0xFF800000> : vector<8xf32>
    %160 = vector.multi_reduction <maximumf>, %159, %cst_65 [1] : vector<8x12xf32> to vector<8xf32>
    %161 = vector.shape_cast %160 : vector<8xf32> to vector<8x1xf32>
    %162 = vector.broadcast %161 : vector<8x1xf32> to vector<8x12xf32>
    %163 = arith.subf %159, %162 : vector<8x12xf32>
    %164 = math.exp %163 : vector<8x12xf32>
    %cst_66 = arith.constant dense<0.000000e+00> : vector<8xf32>
    %165 = vector.multi_reduction <add>, %164, %cst_66 [1] : vector<8x12xf32> to vector<8xf32>
    %166 = vector.shape_cast %165 : vector<8xf32> to vector<8x1xf32>
    %167 = tpu.reciprocal %166 {approx = true} : vector<8x1xf32> -> vector<8x1xf32>
    %168 = vector.broadcast %167 : vector<8x1xf32> to vector<8x12xf32>
    %169 = arith.mulf %164, %168 : vector<8x12xf32>
    %170 = vector.extract_strided_slice %129 {offsets = [0, 8], sizes = [12, 8], strides = [1, 1]} : vector<12x32xf32> to vector<12x8xf32>
    %cst_67 = arith.constant dense<0.000000e+00> : vector<8x8xf32>
    %171 = tpu.matmul %169, %170, %cst_67 {dimension_numbers = #tpu.dot_dimension_numbers<[1], [0], [0], [1], [0, 0, 1, 1], [], []>} : vector<8x12xf32>, vector<12x8xf32>, vector<8x8xf32> -> vector<8x8xf32>
    %172 = vector.extract_strided_slice %122 {offsets = [0, 16], sizes = [8, 8], strides = [1, 1]} : vector<8x32xf32> to vector<8x8xf32>
    %173 = vector.extract_strided_slice %128 {offsets = [0, 16], sizes = [12, 8], strides = [1, 1]} : vector<12x32xf32> to vector<12x8xf32>
    %174 = tpu.transpose %173, [1, 0] : vector<12x8xf32> -> vector<8x12xf32>
    %cst_68 = arith.constant dense<0.000000e+00> : vector<8x12xf32>
    %175 = tpu.matmul %172, %174, %cst_68 {dimension_numbers = #tpu.dot_dimension_numbers<[1], [0], [0], [1], [0, 0, 1, 1], [], []>} : vector<8x8xf32>, vector<8x12xf32>, vector<8x12xf32> -> vector<8x12xf32>
    %cst_69 = arith.constant 0.176776692 : f32
    %176 = vector.broadcast %cst_69 : f32 to vector<8x12xf32>
    %177 = arith.mulf %175, %176 : vector<8x12xf32>
    %178 = vector.broadcast %131 : vector<1x12xf32> to vector<8x12xf32>
    %179 = arith.addf %177, %178 : vector<8x12xf32>
    %cst_70 = arith.constant dense<0xFF800000> : vector<8xf32>
    %180 = vector.multi_reduction <maximumf>, %179, %cst_70 [1] : vector<8x12xf32> to vector<8xf32>
    %181 = vector.shape_cast %180 : vector<8xf32> to vector<8x1xf32>
    %182 = vector.broadcast %181 : vector<8x1xf32> to vector<8x12xf32>
    %183 = arith.subf %179, %182 : vector<8x12xf32>
    %184 = math.exp %183 : vector<8x12xf32>
    %cst_71 = arith.constant dense<0.000000e+00> : vector<8xf32>
    %185 = vector.multi_reduction <add>, %184, %cst_71 [1] : vector<8x12xf32> to vector<8xf32>
    %186 = vector.shape_cast %185 : vector<8xf32> to vector<8x1xf32>
    %187 = tpu.reciprocal %186 {approx = true} : vector<8x1xf32> -> vector<8x1xf32>
    %188 = vector.broadcast %187 : vector<8x1xf32> to vector<8x12xf32>
    %189 = arith.mulf %184, %188 : vector<8x12xf32>
    %190 = vector.extract_strided_slice %129 {offsets = [0, 16], sizes = [12, 8], strides = [1, 1]} : vector<12x32xf32> to vector<12x8xf32>
    %cst_72 = arith.constant dense<0.000000e+00> : vector<8x8xf32>
    %191 = tpu.matmul %189, %190, %cst_72 {dimension_numbers = #tpu.dot_dimension_numbers<[1], [0], [0], [1], [0, 0, 1, 1], [], []>} : vector<8x12xf32>, vector<12x8xf32>, vector<8x8xf32> -> vector<8x8xf32>
    %192 = vector.extract_strided_slice %122 {offsets = [0, 24], sizes = [8, 8], strides = [1, 1]} : vector<8x32xf32> to vector<8x8xf32>
    %193 = vector.extract_strided_slice %128 {offsets = [0, 24], sizes = [12, 8], strides = [1, 1]} : vector<12x32xf32> to vector<12x8xf32>
    %194 = tpu.transpose %193, [1, 0] : vector<12x8xf32> -> vector<8x12xf32>
    %cst_73 = arith.constant dense<0.000000e+00> : vector<8x12xf32>
    %195 = tpu.matmul %192, %194, %cst_73 {dimension_numbers = #tpu.dot_dimension_numbers<[1], [0], [0], [1], [0, 0, 1, 1], [], []>} : vector<8x8xf32>, vector<8x12xf32>, vector<8x12xf32> -> vector<8x12xf32>
    %cst_74 = arith.constant 0.176776692 : f32
    %196 = vector.broadcast %cst_74 : f32 to vector<8x12xf32>
    %197 = arith.mulf %195, %196 : vector<8x12xf32>
    %198 = vector.broadcast %131 : vector<1x12xf32> to vector<8x12xf32>
    %199 = arith.addf %197, %198 : vector<8x12xf32>
    %cst_75 = arith.constant dense<0xFF800000> : vector<8xf32>
    %200 = vector.multi_reduction <maximumf>, %199, %cst_75 [1] : vector<8x12xf32> to vector<8xf32>
    %201 = vector.shape_cast %200 : vector<8xf32> to vector<8x1xf32>
    %202 = vector.broadcast %201 : vector<8x1xf32> to vector<8x12xf32>
    %203 = arith.subf %199, %202 : vector<8x12xf32>
    %204 = math.exp %203 : vector<8x12xf32>
    %cst_76 = arith.constant dense<0.000000e+00> : vector<8xf32>
    %205 = vector.multi_reduction <add>, %204, %cst_76 [1] : vector<8x12xf32> to vector<8xf32>
    %206 = vector.shape_cast %205 : vector<8xf32> to vector<8x1xf32>
    %207 = tpu.reciprocal %206 {approx = true} : vector<8x1xf32> -> vector<8x1xf32>
    %208 = vector.broadcast %207 : vector<8x1xf32> to vector<8x12xf32>
    %209 = arith.mulf %204, %208 : vector<8x12xf32>
    %210 = vector.extract_strided_slice %129 {offsets = [0, 24], sizes = [12, 8], strides = [1, 1]} : vector<12x32xf32> to vector<12x8xf32>
    %cst_77 = arith.constant dense<0.000000e+00> : vector<8x8xf32>
    %211 = tpu.matmul %209, %210, %cst_77 {dimension_numbers = #tpu.dot_dimension_numbers<[1], [0], [0], [1], [0, 0, 1, 1], [], []>} : vector<8x12xf32>, vector<12x8xf32>, vector<8x8xf32> -> vector<8x8xf32>
    %212 = tpu.concatenate %151, %171, %191, %211 in 1 : vector<8x8xf32>, vector<8x8xf32>, vector<8x8xf32>, vector<8x8xf32> -> vector<8x32xf32>
    %c0_78 = arith.constant 0 : index
    %c0_79 = arith.constant 0 : index
    %213 = vector.load %arg15[%c0_78, %c0_79] : memref<32x32xf32, #tpu.memory_space<vmem>>, vector<32x32xf32>
    %cst_80 = arith.constant dense<0.000000e+00> : vector<8x32xf32>
    %214 = tpu.matmul %212, %213, %cst_80 {dimension_numbers = #tpu.dot_dimension_numbers<[1], [0], [0], [1], [0, 0, 1, 1], [], []>} : vector<8x32xf32>, vector<32x32xf32>, vector<8x32xf32> -> vector<8x32xf32>
    %c0_81 = arith.constant 0 : index
    %c0_82 = arith.constant 0 : index
    %215 = vector.load %arg16[%c0_81, %c0_82] : memref<1x32xf32, #tpu.memory_space<vmem>>, vector<1x32xf32>
    %216 = vector.broadcast %215 : vector<1x32xf32> to vector<8x32xf32>
    %217 = arith.addf %214, %216 : vector<8x32xf32>
    %218 = arith.addf %217, %117 : vector<8x32xf32>
    %c0_83 = arith.constant 0 : index
    %c0_84 = arith.constant 0 : index
    %219 = vector.load %arg17[%c0_83, %c0_84] : memref<1x32xf32, #tpu.memory_space<vmem>>, vector<1x32xf32>
    %c0_85 = arith.constant 0 : index
    %c0_86 = arith.constant 0 : index
    %220 = vector.load %arg18[%c0_85, %c0_86] : memref<1x32xf32, #tpu.memory_space<vmem>>, vector<1x32xf32>
    %cst_87 = arith.constant dense<0.000000e+00> : vector<8xf32>
    %221 = vector.multi_reduction <add>, %218, %cst_87 [1] : vector<8x32xf32> to vector<8xf32>
    %222 = vector.shape_cast %221 : vector<8xf32> to vector<8x1xf32>
    %cst_88 = arith.constant 3.200000e+01 : f32
    %223 = vector.broadcast %cst_88 : f32 to vector<8x1xf32>
    %224 = arith.divf %222, %223 : vector<8x1xf32>
    %225 = vector.broadcast %224 : vector<8x1xf32> to vector<8x32xf32>
    %226 = arith.subf %218, %225 : vector<8x32xf32>
    %227 = arith.mulf %226, %226 : vector<8x32xf32>
    %cst_89 = arith.constant dense<0.000000e+00> : vector<8xf32>
    %228 = vector.multi_reduction <add>, %227, %cst_89 [1] : vector<8x32xf32> to vector<8xf32>
    %229 = vector.shape_cast %228 : vector<8xf32> to vector<8x1xf32>
    %cst_90 = arith.constant 3.200000e+01 : f32
    %230 = vector.broadcast %cst_90 : f32 to vector<8x1xf32>
    %231 = arith.divf %229, %230 : vector<8x1xf32>
    %cst_91 = arith.constant 9.99999974E-6 : f32
    %232 = vector.broadcast %cst_91 : f32 to vector<8x1xf32>
    %233 = arith.addf %231, %232 : vector<8x1xf32>
    %234 = math.rsqrt %233 : vector<8x1xf32>
    %235 = vector.broadcast %234 : vector<8x1xf32> to vector<8x32xf32>
    %236 = arith.mulf %226, %235 : vector<8x32xf32>
    %237 = vector.broadcast %219 : vector<1x32xf32> to vector<8x32xf32>
    %238 = arith.mulf %236, %237 : vector<8x32xf32>
    %239 = vector.broadcast %220 : vector<1x32xf32> to vector<8x32xf32>
    %240 = arith.addf %238, %239 : vector<8x32xf32>
    %c0_92 = arith.constant 0 : index
    %c0_93 = arith.constant 0 : index
    %241 = vector.load %arg19[%c0_92, %c0_93] : memref<32x64xf32, #tpu.memory_space<vmem>>, vector<32x64xf32>
    %cst_94 = arith.constant dense<0.000000e+00> : vector<8x64xf32>
    %242 = tpu.matmul %240, %241, %cst_94 {dimension_numbers = #tpu.dot_dimension_numbers<[1], [0], [0], [1], [0, 0, 1, 1], [], []>} : vector<8x32xf32>, vector<32x64xf32>, vector<8x64xf32> -> vector<8x64xf32>
    %c0_95 = arith.constant 0 : index
    %c0_96 = arith.constant 0 : index
    %243 = vector.load %arg20[%c0_95, %c0_96] : memref<1x64xf32, #tpu.memory_space<vmem>>, vector<1x64xf32>
    %244 = vector.broadcast %243 : vector<1x64xf32> to vector<8x64xf32>
    %245 = arith.addf %242, %244 : vector<8x64xf32>
    %cst_97 = arith.constant 0.000000e+00 : f32
    %246 = vector.broadcast %cst_97 : f32 to vector<8x64xf32>
    %247 = arith.maximumf %245, %246 : vector<8x64xf32>
    %c0_98 = arith.constant 0 : index
    %c0_99 = arith.constant 0 : index
    %248 = vector.load %arg21[%c0_98, %c0_99] : memref<64x32xf32, #tpu.memory_space<vmem>>, vector<64x32xf32>
    %cst_100 = arith.constant dense<0.000000e+00> : vector<8x32xf32>
    %249 = tpu.matmul %247, %248, %cst_100 {dimension_numbers = #tpu.dot_dimension_numbers<[1], [0], [0], [1], [0, 0, 1, 1], [], []>} : vector<8x64xf32>, vector<64x32xf32>, vector<8x32xf32> -> vector<8x32xf32>
    %c0_101 = arith.constant 0 : index
    %c0_102 = arith.constant 0 : index
    %250 = vector.load %arg22[%c0_101, %c0_102] : memref<1x32xf32, #tpu.memory_space<vmem>>, vector<1x32xf32>
    %251 = vector.broadcast %250 : vector<1x32xf32> to vector<8x32xf32>
    %252 = arith.addf %249, %251 : vector<8x32xf32>
    %253 = arith.addf %252, %240 : vector<8x32xf32>
    %c0_103 = arith.constant 0 : index
    %c0_104 = arith.constant 0 : index
    %254 = vector.load %arg23[%c0_103, %c0_104] : memref<1x32xf32, #tpu.memory_space<vmem>>, vector<1x32xf32>
    %c0_105 = arith.constant 0 : index
    %c0_106 = arith.constant 0 : index
    %255 = vector.load %arg24[%c0_105, %c0_106] : memref<1x32xf32, #tpu.memory_space<vmem>>, vector<1x32xf32>
    %cst_107 = arith.constant dense<0.000000e+00> : vector<8xf32>
    %256 = vector.multi_reduction <add>, %253, %cst_107 [1] : vector<8x32xf32> to vector<8xf32>
    %257 = vector.shape_cast %256 : vector<8xf32> to vector<8x1xf32>
    %cst_108 = arith.constant 3.200000e+01 : f32
    %258 = vector.broadcast %cst_108 : f32 to vector<8x1xf32>
    %259 = arith.divf %257, %258 : vector<8x1xf32>
    %260 = vector.broadcast %259 : vector<8x1xf32> to vector<8x32xf32>
    %261 = arith.subf %253, %260 : vector<8x32xf32>
    %262 = arith.mulf %261, %261 : vector<8x32xf32>
    %cst_109 = arith.constant dense<0.000000e+00> : vector<8xf32>
    %263 = vector.multi_reduction <add>, %262, %cst_109 [1] : vector<8x32xf32> to vector<8xf32>
    %264 = vector.shape_cast %263 : vector<8xf32> to vector<8x1xf32>
    %cst_110 = arith.constant 3.200000e+01 : f32
    %265 = vector.broadcast %cst_110 : f32 to vector<8x1xf32>
    %266 = arith.divf %264, %265 : vector<8x1xf32>
    %cst_111 = arith.constant 9.99999974E-6 : f32
    %267 = vector.broadcast %cst_111 : f32 to vector<8x1xf32>
    %268 = arith.addf %266, %267 : vector<8x1xf32>
    %269 = math.rsqrt %268 : vector<8x1xf32>
    %270 = vector.broadcast %269 : vector<8x1xf32> to vector<8x32xf32>
    %271 = arith.mulf %261, %270 : vector<8x32xf32>
    %272 = vector.broadcast %254 : vector<1x32xf32> to vector<8x32xf32>
    %273 = arith.mulf %271, %272 : vector<8x32xf32>
    %274 = vector.broadcast %255 : vector<1x32xf32> to vector<8x32xf32>
    %275 = arith.addf %273, %274 : vector<8x32xf32>
    %c0_112 = arith.constant 0 : index
    %c0_113 = arith.constant 0 : index
    %c0_114 = arith.constant 0 : index
    %276 = vector.load %arg25[%c0_112, %c0_113, %c0_114] : memref<1x8x32xf32, #tpu.memory_space<vmem>>, vector<1x8x32xf32>
    %277 = vector.shape_cast %276 : vector<1x8x32xf32> to vector<8x32xf32>
    %278 = vector.shape_cast %275 : vector<8x32xf32> to vector<1x8x32xf32>
    tpu.vector_store %arg25[%c0_112, %c0_113, %c0_114], %278 {strides = array<i32>} : memref<1x8x32xf32, #tpu.memory_space<vmem>>, vector<1x8x32xf32>,
    return
  }
  func.func @transform_0(%arg0: i32) -> (i32, i32, i32) {
    %c0_i32 = arith.constant 0 : i32
    %c0_i32_0 = arith.constant 0 : i32
    %c0_i32_1 = arith.constant 0 : i32
    return %arg0, %c0_i32, %c0_i32_0 : i32, i32, i32
  }
  func.func @transform_1(%arg0: i32) -> (i32, i32, i32) {
    %c0_i32 = arith.constant 0 : i32
    %c0_i32_0 = arith.constant 0 : i32
    %c0_i32_1 = arith.constant 0 : i32
    return %arg0, %c0_i32, %c0_i32_0 : i32, i32, i32
  }
  func.func @transform_2(%arg0: i32) -> (i32, i32) {
    %c0_i32 = arith.constant 0 : i32
    %c0_i32_0 = arith.constant 0 : i32
    %c0_i32_1 = arith.constant 0 : i32
    return %c0_i32, %c0_i32_0 : i32, i32
  }
  func.func @transform_3(%arg0: i32) -> (i32, i32, i32) {
    %c0_i32 = arith.constant 0 : i32
    %c0_i32_0 = arith.constant 0 : i32
    %c0_i32_1 = arith.constant 0 : i32
    return %arg0, %c0_i32, %c0_i32_0 : i32, i32, i32
  }
  func.func @transform_4(%arg0: i32) -> (i32, i32) {
    %c0_i32 = arith.constant 0 : i32
    %c0_i32_0 = arith.constant 0 : i32
    %c0_i32_1 = arith.constant 0 : i32
    return %c0_i32, %c0_i32_0 : i32, i32
  }
  func.func @transform_5(%arg0: i32) -> (i32, i32) {
    %c0_i32 = arith.constant 0 : i32
    %c0_i32_0 = arith.constant 0 : i32
    %c0_i32_1 = arith.constant 0 : i32
    return %c0_i32, %c0_i32_0 : i32, i32
  }
  func.func @transform_6(%arg0: i32) -> (i32, i32) {
    %c0_i32 = arith.constant 0 : i32
    %c0_i32_0 = arith.constant 0 : i32
    %c0_i32_1 = arith.constant 0 : i32
    return %c0_i32, %c0_i32_0 : i32, i32
  }
  func.func @transform_7(%arg0: i32) -> (i32, i32) {
    %c0_i32 = arith.constant 0 : i32
    %c0_i32_0 = arith.constant 0 : i32
    %c0_i32_1 = arith.constant 0 : i32
    return %c0_i32, %c0_i32_0 : i32, i32
  }
  func.func @transform_8(%arg0: i32) -> (i32, i32) {
    %c0_i32 = arith.constant 0 : i32
    %c0_i32_0 = arith.constant 0 : i32
    %c0_i32_1 = arith.constant 0 : i32
    return %c0_i32, %c0_i32_0 : i32, i32
  }
  func.func @transform_9(%arg0: i32) -> (i32, i32) {
    %c0_i32 = arith.constant 0 : i32
    %c0_i32_0 = arith.constant 0 : i32
    %c0_i32_1 = arith.constant 0 : i32
    return %c0_i32, %c0_i32_0 : i32, i32
  }
  func.func @transform_10(%arg0: i32) -> (i32, i32) {
    %c0_i32 = arith.constant 0 : i32
    %c0_i32_0 = arith.constant 0 : i32
    %c0_i32_1 = arith.constant 0 : i32
    return %c0_i32, %c0_i32_0 : i32, i32
  }
  func.func @transform_11(%arg0: i32) -> (i32, i32) {
    %c0_i32 = arith.constant 0 : i32
    %c0_i32_0 = arith.constant 0 : i32
    %c0_i32_1 = arith.constant 0 : i32
    return %c0_i32, %c0_i32_0 : i32, i32
  }
  func.func @transform_12(%arg0: i32) -> (i32, i32) {
    %c0_i32 = arith.constant 0 : i32
    %c0_i32_0 = arith.constant 0 : i32
    %c0_i32_1 = arith.constant 0 : i32
    return %c0_i32, %c0_i32_0 : i32, i32
  }
  func.func @transform_13(%arg0: i32) -> (i32, i32) {
    %c0_i32 = arith.constant 0 : i32
    %c0_i32_0 = arith.constant 0 : i32
    %c0_i32_1 = arith.constant 0 : i32
    return %c0_i32, %c0_i32_0 : i32, i32
  }
  func.func @transform_14(%arg0: i32) -> (i32, i32) {
    %c0_i32 = arith.constant 0 : i32
    %c0_i32_0 = arith.constant 0 : i32
    %c0_i32_1 = arith.constant 0 : i32
    return %c0_i32, %c0_i32_0 : i32, i32
  }
  func.func @transform_15(%arg0: i32) -> (i32, i32) {
    %c0_i32 = arith.constant 0 : i32
    %c0_i32_0 = arith.constant 0 : i32
    %c0_i32_1 = arith.constant 0 : i32
    return %c0_i32, %c0_i32_0 : i32, i32
  }
  func.func @transform_16(%arg0: i32) -> (i32, i32) {
    %c0_i32 = arith.constant 0 : i32
    %c0_i32_0 = arith.constant 0 : i32
    %c0_i32_1 = arith.constant 0 : i32
    return %c0_i32, %c0_i32_0 : i32, i32
  }
  func.func @transform_17(%arg0: i32) -> (i32, i32) {
    %c0_i32 = arith.constant 0 : i32
    %c0_i32_0 = arith.constant 0 : i32
    %c0_i32_1 = arith.constant 0 : i32
    return %c0_i32, %c0_i32_0 : i32, i32
  }
  func.func @transform_18(%arg0: i32) -> (i32, i32) {
    %c0_i32 = arith.constant 0 : i32
    %c0_i32_0 = arith.constant 0 : i32
    %c0_i32_1 = arith.constant 0 : i32
    return %c0_i32, %c0_i32_0 : i32, i32
  }
  func.func @transform_19(%arg0: i32) -> (i32, i32) {
    %c0_i32 = arith.constant 0 : i32
    %c0_i32_0 = arith.constant 0 : i32
    %c0_i32_1 = arith.constant 0 : i32
    return %c0_i32, %c0_i32_0 : i32, i32
  }
  func.func @transform_20(%arg0: i32) -> (i32, i32) {
    %c0_i32 = arith.constant 0 : i32
    %c0_i32_0 = arith.constant 0 : i32
    %c0_i32_1 = arith.constant 0 : i32
    return %c0_i32, %c0_i32_0 : i32, i32
  }
  func.func @transform_21(%arg0: i32) -> (i32, i32) {
    %c0_i32 = arith.constant 0 : i32
    %c0_i32_0 = arith.constant 0 : i32
    %c0_i32_1 = arith.constant 0 : i32
    return %c0_i32, %c0_i32_0 : i32, i32
  }
  func.func @transform_22(%arg0: i32) -> (i32, i32) {
    %c0_i32 = arith.constant 0 : i32
    %c0_i32_0 = arith.constant 0 : i32
    %c0_i32_1 = arith.constant 0 : i32
    return %c0_i32, %c0_i32_0 : i32, i32
  }
  func.func @transform_23(%arg0: i32) -> (i32, i32) {
    %c0_i32 = arith.constant 0 : i32
    %c0_i32_0 = arith.constant 0 : i32
    %c0_i32_1 = arith.constant 0 : i32
    return %c0_i32, %c0_i32_0 : i32, i32
  }
  func.func @transform_24(%arg0: i32) -> (i32, i32, i32) {
    %c0_i32 = arith.constant 0 : i32
    %c0_i32_0 = arith.constant 0 : i32
    %c0_i32_1 = arith.constant 0 : i32
    return %arg0, %c0_i32, %c0_i32_0 : i32, i32, i32
  }
}

module attributes {stable_mosaic.version = 11 : i64} {
  func.func @_head_postnet_kernel(%arg0: i32, %arg1: memref<1x8x32xf32, #tpu.memory_space<vmem>>, %arg2: memref<32x17xf32, #tpu.memory_space<vmem>>, %arg3: memref<1x17xf32, #tpu.memory_space<vmem>>, %arg4: memref<80x32xf32, #tpu.memory_space<vmem>>, %arg5: memref<1x32xf32, #tpu.memory_space<vmem>>, %arg6: memref<1x32xf32, #tpu.memory_space<vmem>>, %arg7: memref<160x32xf32, #tpu.memory_space<vmem>>, %arg8: memref<1x32xf32, #tpu.memory_space<vmem>>, %arg9: memref<1x32xf32, #tpu.memory_space<vmem>>, %arg10: memref<160x32xf32, #tpu.memory_space<vmem>>, %arg11: memref<1x32xf32, #tpu.memory_space<vmem>>, %arg12: memref<1x32xf32, #tpu.memory_space<vmem>>, %arg13: memref<160x32xf32, #tpu.memory_space<vmem>>, %arg14: memref<1x32xf32, #tpu.memory_space<vmem>>, %arg15: memref<1x32xf32, #tpu.memory_space<vmem>>, %arg16: memref<160x16xf32, #tpu.memory_space<vmem>>, %arg17: memref<1x16xf32, #tpu.memory_space<vmem>>, %arg18: memref<1x8x16xf32, #tpu.memory_space<vmem>>, %arg19: memref<1x8x16xf32, #tpu.memory_space<vmem>>, %arg20: memref<1x8x1xf32, #tpu.memory_space<vmem>>) attributes {dimension_semantics = [#tpu.dimension_semantics<parallel>], iteration_bounds = array<i64: 2>, scalar_prefetch = 0 : i64, scratch_operands = 0 : i64, tpu.core_type = #tpu.core_type<tc>, window_params = [{transform_indices = @transform_0, window_bounds = array<i64: 1, 8, 32>}, {pipeline_mode = #tpu.pipeline_mode<synchronous>, transform_indices = @transform_1, window_bounds = array<i64: 32, 17>}, {pipeline_mode = #tpu.pipeline_mode<synchronous>, transform_indices = @transform_2, window_bounds = array<i64: 1, 17>}, {pipeline_mode = #tpu.pipeline_mode<synchronous>, transform_indices = @transform_3, window_bounds = array<i64: 80, 32>}, {pipeline_mode = #tpu.pipeline_mode<synchronous>, transform_indices = @transform_4, window_bounds = array<i64: 1, 32>}, {pipeline_mode = #tpu.pipeline_mode<synchronous>, transform_indices = @transform_5, window_bounds = array<i64: 1, 32>}, {pipeline_mode = #tpu.pipeline_mode<synchronous>, transform_indices = @transform_6, window_bounds = array<i64: 160, 32>}, {pipeline_mode = #tpu.pipeline_mode<synchronous>, transform_indices = @transform_7, window_bounds = array<i64: 1, 32>}, {pipeline_mode = #tpu.pipeline_mode<synchronous>, transform_indices = @transform_8, window_bounds = array<i64: 1, 32>}, {pipeline_mode = #tpu.pipeline_mode<synchronous>, transform_indices = @transform_9, window_bounds = array<i64: 160, 32>}, {pipeline_mode = #tpu.pipeline_mode<synchronous>, transform_indices = @transform_10, window_bounds = array<i64: 1, 32>}, {pipeline_mode = #tpu.pipeline_mode<synchronous>, transform_indices = @transform_11, window_bounds = array<i64: 1, 32>}, {pipeline_mode = #tpu.pipeline_mode<synchronous>, transform_indices = @transform_12, window_bounds = array<i64: 160, 32>}, {pipeline_mode = #tpu.pipeline_mode<synchronous>, transform_indices = @transform_13, window_bounds = array<i64: 1, 32>}, {pipeline_mode = #tpu.pipeline_mode<synchronous>, transform_indices = @transform_14, window_bounds = array<i64: 1, 32>}, {pipeline_mode = #tpu.pipeline_mode<synchronous>, transform_indices = @transform_15, window_bounds = array<i64: 160, 16>}, {pipeline_mode = #tpu.pipeline_mode<synchronous>, transform_indices = @transform_16, window_bounds = array<i64: 1, 16>}, {transform_indices = @transform_17, window_bounds = array<i64: 1, 8, 16>}, {transform_indices = @transform_18, window_bounds = array<i64: 1, 8, 16>}, {transform_indices = @transform_19, window_bounds = array<i64: 1, 8, 1>}]} {
    %c0 = arith.constant 0 : index
    %c0_0 = arith.constant 0 : index
    %c0_1 = arith.constant 0 : index
    %0 = vector.load %arg1[%c0, %c0_0, %c0_1] : memref<1x8x32xf32, #tpu.memory_space<vmem>>, vector<1x8x32xf32>
    %1 = vector.shape_cast %0 : vector<1x8x32xf32> to vector<8x32xf32>
    %c0_2 = arith.constant 0 : index
    %c0_3 = arith.constant 0 : index
    %2 = vector.load %arg2[%c0_2, %c0_3] : memref<32x17xf32, #tpu.memory_space<vmem>>, vector<32x17xf32>
    %cst = arith.constant dense<0.000000e+00> : vector<8x17xf32>
    %3 = tpu.matmul %1, %2, %cst {dimension_numbers = #tpu.dot_dimension_numbers<[1], [0], [0], [1], [0, 0, 1, 1], [], []>} : vector<8x32xf32>, vector<32x17xf32>, vector<8x17xf32> -> vector<8x17xf32>
    %c0_4 = arith.constant 0 : index
    %c0_5 = arith.constant 0 : index
    %4 = vector.load %arg3[%c0_4, %c0_5] : memref<1x17xf32, #tpu.memory_space<vmem>>, vector<1x17xf32>
    %5 = vector.broadcast %4 : vector<1x17xf32> to vector<8x17xf32>
    %6 = arith.addf %3, %5 : vector<8x17xf32>
    %7 = vector.extract_strided_slice %6 {offsets = [0, 0], sizes = [8, 16], strides = [1, 1]} : vector<8x17xf32> to vector<8x16xf32>
    %8 = vector.extract_strided_slice %6 {offsets = [0, 16], sizes = [8, 1], strides = [1, 1]} : vector<8x17xf32> to vector<8x1xf32>
    %c0_6 = arith.constant 0 : index
    %c0_7 = arith.constant 0 : index
    %c0_8 = arith.constant 0 : index
    %9 = vector.load %arg19[%c0_6, %c0_7, %c0_8] : memref<1x8x16xf32, #tpu.memory_space<vmem>>, vector<1x8x16xf32>
    %10 = vector.shape_cast %9 : vector<1x8x16xf32> to vector<8x16xf32>
    %11 = vector.shape_cast %7 : vector<8x16xf32> to vector<1x8x16xf32>
    tpu.vector_store %arg19[%c0_6, %c0_7, %c0_8], %11 {strides = array<i32>} : memref<1x8x16xf32, #tpu.memory_space<vmem>>, vector<1x8x16xf32>,
    %c0_9 = arith.constant 0 : index
    %c0_10 = arith.constant 0 : index
    %c0_11 = arith.constant 0 : index
    %12 = vector.load %arg20[%c0_9, %c0_10, %c0_11] : memref<1x8x1xf32, #tpu.memory_space<vmem>>, vector<1x8x1xf32>
    %13 = vector.shape_cast %12 : vector<1x8x1xf32> to vector<8x1xf32>
    %14 = vector.shape_cast %8 : vector<8x1xf32> to vector<1x8x1xf32>
    tpu.vector_store %arg20[%c0_9, %c0_10, %c0_11], %14 {strides = array<i32>} : memref<1x8x1xf32, #tpu.memory_space<vmem>>, vector<1x8x1xf32>,
    %cst_12 = arith.constant 0.000000e+00 : f32
    %15 = vector.broadcast %cst_12 : f32 to vector<4x16xf32>
    %16 = tpu.concatenate %15, %7 in 0 : vector<4x16xf32>, vector<8x16xf32> -> vector<12x16xf32>
    %17 = vector.extract_strided_slice %16 {offsets = [0, 0], sizes = [8, 16], strides = [1, 1]} : vector<12x16xf32> to vector<8x16xf32>
    %18 = vector.extract_strided_slice %16 {offsets = [1, 0], sizes = [8, 16], strides = [1, 1]} : vector<12x16xf32> to vector<8x16xf32>
    %19 = vector.extract_strided_slice %16 {offsets = [2, 0], sizes = [8, 16], strides = [1, 1]} : vector<12x16xf32> to vector<8x16xf32>
    %20 = vector.extract_strided_slice %16 {offsets = [3, 0], sizes = [8, 16], strides = [1, 1]} : vector<12x16xf32> to vector<8x16xf32>
    %21 = vector.extract_strided_slice %16 {offsets = [4, 0], sizes = [8, 16], strides = [1, 1]} : vector<12x16xf32> to vector<8x16xf32>
    %22 = tpu.concatenate %17, %18, %19, %20, %21 in 1 : vector<8x16xf32>, vector<8x16xf32>, vector<8x16xf32>, vector<8x16xf32>, vector<8x16xf32> -> vector<8x80xf32>
    %c0_13 = arith.constant 0 : index
    %c0_14 = arith.constant 0 : index
    %23 = vector.load %arg4[%c0_13, %c0_14] : memref<80x32xf32, #tpu.memory_space<vmem>>, vector<80x32xf32>
    %cst_15 = arith.constant dense<0.000000e+00> : vector<8x32xf32>
    %24 = tpu.matmul %22, %23, %cst_15 {dimension_numbers = #tpu.dot_dimension_numbers<[1], [0], [0], [1], [0, 0, 1, 1], [], []>} : vector<8x80xf32>, vector<80x32xf32>, vector<8x32xf32> -> vector<8x32xf32>
    %c0_16 = arith.constant 0 : index
    %c0_17 = arith.constant 0 : index
    %25 = vector.load %arg5[%c0_16, %c0_17] : memref<1x32xf32, #tpu.memory_space<vmem>>, vector<1x32xf32>
    %26 = vector.broadcast %25 : vector<1x32xf32> to vector<8x32xf32>
    %27 = arith.mulf %24, %26 : vector<8x32xf32>
    %c0_18 = arith.constant 0 : index
    %c0_19 = arith.constant 0 : index
    %28 = vector.load %arg6[%c0_18, %c0_19] : memref<1x32xf32, #tpu.memory_space<vmem>>, vector<1x32xf32>
    %29 = vector.broadcast %28 : vector<1x32xf32> to vector<8x32xf32>
    %30 = arith.addf %27, %29 : vector<8x32xf32>
    %31 = math.tanh %30 : vector<8x32xf32>
    %cst_20 = arith.constant 0.000000e+00 : f32
    %32 = vector.broadcast %cst_20 : f32 to vector<4x32xf32>
    %33 = tpu.concatenate %32, %31 in 0 : vector<4x32xf32>, vector<8x32xf32> -> vector<12x32xf32>
    %34 = vector.extract_strided_slice %33 {offsets = [0, 0], sizes = [8, 32], strides = [1, 1]} : vector<12x32xf32> to vector<8x32xf32>
    %35 = vector.extract_strided_slice %33 {offsets = [1, 0], sizes = [8, 32], strides = [1, 1]} : vector<12x32xf32> to vector<8x32xf32>
    %36 = vector.extract_strided_slice %33 {offsets = [2, 0], sizes = [8, 32], strides = [1, 1]} : vector<12x32xf32> to vector<8x32xf32>
    %37 = vector.extract_strided_slice %33 {offsets = [3, 0], sizes = [8, 32], strides = [1, 1]} : vector<12x32xf32> to vector<8x32xf32>
    %38 = vector.extract_strided_slice %33 {offsets = [4, 0], sizes = [8, 32], strides = [1, 1]} : vector<12x32xf32> to vector<8x32xf32>
    %39 = tpu.concatenate %34, %35, %36, %37, %38 in 1 : vector<8x32xf32>, vector<8x32xf32>, vector<8x32xf32>, vector<8x32xf32>, vector<8x32xf32> -> vector<8x160xf32>
    %c0_21 = arith.constant 0 : index
    %c0_22 = arith.constant 0 : index
    %40 = vector.load %arg7[%c0_21, %c0_22] : memref<160x32xf32, #tpu.memory_space<vmem>>, vector<160x32xf32>
    %cst_23 = arith.constant dense<0.000000e+00> : vector<8x32xf32>
    %41 = tpu.matmul %39, %40, %cst_23 {dimension_numbers = #tpu.dot_dimension_numbers<[1], [0], [0], [1], [0, 0, 1, 1], [], []>} : vector<8x160xf32>, vector<160x32xf32>, vector<8x32xf32> -> vector<8x32xf32>
    %c0_24 = arith.constant 0 : index
    %c0_25 = arith.constant 0 : index
    %42 = vector.load %arg8[%c0_24, %c0_25] : memref<1x32xf32, #tpu.memory_space<vmem>>, vector<1x32xf32>
    %43 = vector.broadcast %42 : vector<1x32xf32> to vector<8x32xf32>
    %44 = arith.mulf %41, %43 : vector<8x32xf32>
    %c0_26 = arith.constant 0 : index
    %c0_27 = arith.constant 0 : index
    %45 = vector.load %arg9[%c0_26, %c0_27] : memref<1x32xf32, #tpu.memory_space<vmem>>, vector<1x32xf32>
    %46 = vector.broadcast %45 : vector<1x32xf32> to vector<8x32xf32>
    %47 = arith.addf %44, %46 : vector<8x32xf32>
    %48 = math.tanh %47 : vector<8x32xf32>
    %cst_28 = arith.constant 0.000000e+00 : f32
    %49 = vector.broadcast %cst_28 : f32 to vector<4x32xf32>
    %50 = tpu.concatenate %49, %48 in 0 : vector<4x32xf32>, vector<8x32xf32> -> vector<12x32xf32>
    %51 = vector.extract_strided_slice %50 {offsets = [0, 0], sizes = [8, 32], strides = [1, 1]} : vector<12x32xf32> to vector<8x32xf32>
    %52 = vector.extract_strided_slice %50 {offsets = [1, 0], sizes = [8, 32], strides = [1, 1]} : vector<12x32xf32> to vector<8x32xf32>
    %53 = vector.extract_strided_slice %50 {offsets = [2, 0], sizes = [8, 32], strides = [1, 1]} : vector<12x32xf32> to vector<8x32xf32>
    %54 = vector.extract_strided_slice %50 {offsets = [3, 0], sizes = [8, 32], strides = [1, 1]} : vector<12x32xf32> to vector<8x32xf32>
    %55 = vector.extract_strided_slice %50 {offsets = [4, 0], sizes = [8, 32], strides = [1, 1]} : vector<12x32xf32> to vector<8x32xf32>
    %56 = tpu.concatenate %51, %52, %53, %54, %55 in 1 : vector<8x32xf32>, vector<8x32xf32>, vector<8x32xf32>, vector<8x32xf32>, vector<8x32xf32> -> vector<8x160xf32>
    %c0_29 = arith.constant 0 : index
    %c0_30 = arith.constant 0 : index
    %57 = vector.load %arg10[%c0_29, %c0_30] : memref<160x32xf32, #tpu.memory_space<vmem>>, vector<160x32xf32>
    %cst_31 = arith.constant dense<0.000000e+00> : vector<8x32xf32>
    %58 = tpu.matmul %56, %57, %cst_31 {dimension_numbers = #tpu.dot_dimension_numbers<[1], [0], [0], [1], [0, 0, 1, 1], [], []>} : vector<8x160xf32>, vector<160x32xf32>, vector<8x32xf32> -> vector<8x32xf32>
    %c0_32 = arith.constant 0 : index
    %c0_33 = arith.constant 0 : index
    %59 = vector.load %arg11[%c0_32, %c0_33] : memref<1x32xf32, #tpu.memory_space<vmem>>, vector<1x32xf32>
    %60 = vector.broadcast %59 : vector<1x32xf32> to vector<8x32xf32>
    %61 = arith.mulf %58, %60 : vector<8x32xf32>
    %c0_34 = arith.constant 0 : index
    %c0_35 = arith.constant 0 : index
    %62 = vector.load %arg12[%c0_34, %c0_35] : memref<1x32xf32, #tpu.memory_space<vmem>>, vector<1x32xf32>
    %63 = vector.broadcast %62 : vector<1x32xf32> to vector<8x32xf32>
    %64 = arith.addf %61, %63 : vector<8x32xf32>
    %65 = math.tanh %64 : vector<8x32xf32>
    %cst_36 = arith.constant 0.000000e+00 : f32
    %66 = vector.broadcast %cst_36 : f32 to vector<4x32xf32>
    %67 = tpu.concatenate %66, %65 in 0 : vector<4x32xf32>, vector<8x32xf32> -> vector<12x32xf32>
    %68 = vector.extract_strided_slice %67 {offsets = [0, 0], sizes = [8, 32], strides = [1, 1]} : vector<12x32xf32> to vector<8x32xf32>
    %69 = vector.extract_strided_slice %67 {offsets = [1, 0], sizes = [8, 32], strides = [1, 1]} : vector<12x32xf32> to vector<8x32xf32>
    %70 = vector.extract_strided_slice %67 {offsets = [2, 0], sizes = [8, 32], strides = [1, 1]} : vector<12x32xf32> to vector<8x32xf32>
    %71 = vector.extract_strided_slice %67 {offsets = [3, 0], sizes = [8, 32], strides = [1, 1]} : vector<12x32xf32> to vector<8x32xf32>
    %72 = vector.extract_strided_slice %67 {offsets = [4, 0], sizes = [8, 32], strides = [1, 1]} : vector<12x32xf32> to vector<8x32xf32>
    %73 = tpu.concatenate %68, %69, %70, %71, %72 in 1 : vector<8x32xf32>, vector<8x32xf32>, vector<8x32xf32>, vector<8x32xf32>, vector<8x32xf32> -> vector<8x160xf32>
    %c0_37 = arith.constant 0 : index
    %c0_38 = arith.constant 0 : index
    %74 = vector.load %arg13[%c0_37, %c0_38] : memref<160x32xf32, #tpu.memory_space<vmem>>, vector<160x32xf32>
    %cst_39 = arith.constant dense<0.000000e+00> : vector<8x32xf32>
    %75 = tpu.matmul %73, %74, %cst_39 {dimension_numbers = #tpu.dot_dimension_numbers<[1], [0], [0], [1], [0, 0, 1, 1], [], []>} : vector<8x160xf32>, vector<160x32xf32>, vector<8x32xf32> -> vector<8x32xf32>
    %c0_40 = arith.constant 0 : index
    %c0_41 = arith.constant 0 : index
    %76 = vector.load %arg14[%c0_40, %c0_41] : memref<1x32xf32, #tpu.memory_space<vmem>>, vector<1x32xf32>
    %77 = vector.broadcast %76 : vector<1x32xf32> to vector<8x32xf32>
    %78 = arith.mulf %75, %77 : vector<8x32xf32>
    %c0_42 = arith.constant 0 : index
    %c0_43 = arith.constant 0 : index
    %79 = vector.load %arg15[%c0_42, %c0_43] : memref<1x32xf32, #tpu.memory_space<vmem>>, vector<1x32xf32>
    %80 = vector.broadcast %79 : vector<1x32xf32> to vector<8x32xf32>
    %81 = arith.addf %78, %80 : vector<8x32xf32>
    %82 = math.tanh %81 : vector<8x32xf32>
    %cst_44 = arith.constant 0.000000e+00 : f32
    %83 = vector.broadcast %cst_44 : f32 to vector<4x32xf32>
    %84 = tpu.concatenate %83, %82 in 0 : vector<4x32xf32>, vector<8x32xf32> -> vector<12x32xf32>
    %85 = vector.extract_strided_slice %84 {offsets = [0, 0], sizes = [8, 32], strides = [1, 1]} : vector<12x32xf32> to vector<8x32xf32>
    %86 = vector.extract_strided_slice %84 {offsets = [1, 0], sizes = [8, 32], strides = [1, 1]} : vector<12x32xf32> to vector<8x32xf32>
    %87 = vector.extract_strided_slice %84 {offsets = [2, 0], sizes = [8, 32], strides = [1, 1]} : vector<12x32xf32> to vector<8x32xf32>
    %88 = vector.extract_strided_slice %84 {offsets = [3, 0], sizes = [8, 32], strides = [1, 1]} : vector<12x32xf32> to vector<8x32xf32>
    %89 = vector.extract_strided_slice %84 {offsets = [4, 0], sizes = [8, 32], strides = [1, 1]} : vector<12x32xf32> to vector<8x32xf32>
    %90 = tpu.concatenate %85, %86, %87, %88, %89 in 1 : vector<8x32xf32>, vector<8x32xf32>, vector<8x32xf32>, vector<8x32xf32>, vector<8x32xf32> -> vector<8x160xf32>
    %c0_45 = arith.constant 0 : index
    %c0_46 = arith.constant 0 : index
    %91 = vector.load %arg16[%c0_45, %c0_46] : memref<160x16xf32, #tpu.memory_space<vmem>>, vector<160x16xf32>
    %cst_47 = arith.constant dense<0.000000e+00> : vector<8x16xf32>
    %92 = tpu.matmul %90, %91, %cst_47 {dimension_numbers = #tpu.dot_dimension_numbers<[1], [0], [0], [1], [0, 0, 1, 1], [], []>} : vector<8x160xf32>, vector<160x16xf32>, vector<8x16xf32> -> vector<8x16xf32>
    %c0_48 = arith.constant 0 : index
    %c0_49 = arith.constant 0 : index
    %93 = vector.load %arg17[%c0_48, %c0_49] : memref<1x16xf32, #tpu.memory_space<vmem>>, vector<1x16xf32>
    %94 = vector.broadcast %93 : vector<1x16xf32> to vector<8x16xf32>
    %95 = arith.addf %92, %94 : vector<8x16xf32>
    %96 = arith.addf %95, %7 : vector<8x16xf32>
    %c0_50 = arith.constant 0 : index
    %c0_51 = arith.constant 0 : index
    %c0_52 = arith.constant 0 : index
    %97 = vector.load %arg18[%c0_50, %c0_51, %c0_52] : memref<1x8x16xf32, #tpu.memory_space<vmem>>, vector<1x8x16xf32>
    %98 = vector.shape_cast %97 : vector<1x8x16xf32> to vector<8x16xf32>
    %99 = vector.shape_cast %96 : vector<8x16xf32> to vector<1x8x16xf32>
    tpu.vector_store %arg18[%c0_50, %c0_51, %c0_52], %99 {strides = array<i32>} : memref<1x8x16xf32, #tpu.memory_space<vmem>>, vector<1x8x16xf32>,
    return
  }
  func.func @transform_0(%arg0: i32) -> (i32, i32, i32) {
    %c0_i32 = arith.constant 0 : i32
    %c0_i32_0 = arith.constant 0 : i32
    %c0_i32_1 = arith.constant 0 : i32
    return %arg0, %c0_i32, %c0_i32_0 : i32, i32, i32
  }
  func.func @transform_1(%arg0: i32) -> (i32, i32) {
    %c0_i32 = arith.constant 0 : i32
    %c0_i32_0 = arith.constant 0 : i32
    %c0_i32_1 = arith.constant 0 : i32
    return %c0_i32, %c0_i32_0 : i32, i32
  }
  func.func @transform_2(%arg0: i32) -> (i32, i32) {
    %c0_i32 = arith.constant 0 : i32
    %c0_i32_0 = arith.constant 0 : i32
    %c0_i32_1 = arith.constant 0 : i32
    return %c0_i32, %c0_i32_0 : i32, i32
  }
  func.func @transform_3(%arg0: i32) -> (i32, i32) {
    %c0_i32 = arith.constant 0 : i32
    %c0_i32_0 = arith.constant 0 : i32
    %c0_i32_1 = arith.constant 0 : i32
    return %c0_i32, %c0_i32_0 : i32, i32
  }
  func.func @transform_4(%arg0: i32) -> (i32, i32) {
    %c0_i32 = arith.constant 0 : i32
    %c0_i32_0 = arith.constant 0 : i32
    %c0_i32_1 = arith.constant 0 : i32
    return %c0_i32, %c0_i32_0 : i32, i32
  }
  func.func @transform_5(%arg0: i32) -> (i32, i32) {
    %c0_i32 = arith.constant 0 : i32
    %c0_i32_0 = arith.constant 0 : i32
    %c0_i32_1 = arith.constant 0 : i32
    return %c0_i32, %c0_i32_0 : i32, i32
  }
  func.func @transform_6(%arg0: i32) -> (i32, i32) {
    %c0_i32 = arith.constant 0 : i32
    %c0_i32_0 = arith.constant 0 : i32
    %c0_i32_1 = arith.constant 0 : i32
    return %c0_i32, %c0_i32_0 : i32, i32
  }
  func.func @transform_7(%arg0: i32) -> (i32, i32) {
    %c0_i32 = arith.constant 0 : i32
    %c0_i32_0 = arith.constant 0 : i32
    %c0_i32_1 = arith.constant 0 : i32
    return %c0_i32, %c0_i32_0 : i32, i32
  }
  func.func @transform_8(%arg0: i32) -> (i32, i32) {
    %c0_i32 = arith.constant 0 : i32
    %c0_i32_0 = arith.constant 0 : i32
    %c0_i32_1 = arith.constant 0 : i32
    return %c0_i32, %c0_i32_0 : i32, i32
  }
  func.func @transform_9(%arg0: i32) -> (i32, i32) {
    %c0_i32 = arith.constant 0 : i32
    %c0_i32_0 = arith.constant 0 : i32
    %c0_i32_1 = arith.constant 0 : i32
    return %c0_i32, %c0_i32_0 : i32, i32
  }
  func.func @transform_10(%arg0: i32) -> (i32, i32) {
    %c0_i32 = arith.constant 0 : i32
    %c0_i32_0 = arith.constant 0 : i32
    %c0_i32_1 = arith.constant 0 : i32
    return %c0_i32, %c0_i32_0 : i32, i32
  }
  func.func @transform_11(%arg0: i32) -> (i32, i32) {
    %c0_i32 = arith.constant 0 : i32
    %c0_i32_0 = arith.constant 0 : i32
    %c0_i32_1 = arith.constant 0 : i32
    return %c0_i32, %c0_i32_0 : i32, i32
  }
  func.func @transform_12(%arg0: i32) -> (i32, i32) {
    %c0_i32 = arith.constant 0 : i32
    %c0_i32_0 = arith.constant 0 : i32
    %c0_i32_1 = arith.constant 0 : i32
    return %c0_i32, %c0_i32_0 : i32, i32
  }
  func.func @transform_13(%arg0: i32) -> (i32, i32) {
    %c0_i32 = arith.constant 0 : i32
    %c0_i32_0 = arith.constant 0 : i32
    %c0_i32_1 = arith.constant 0 : i32
    return %c0_i32, %c0_i32_0 : i32, i32
  }
  func.func @transform_14(%arg0: i32) -> (i32, i32) {
    %c0_i32 = arith.constant 0 : i32
    %c0_i32_0 = arith.constant 0 : i32
    %c0_i32_1 = arith.constant 0 : i32
    return %c0_i32, %c0_i32_0 : i32, i32
  }
  func.func @transform_15(%arg0: i32) -> (i32, i32) {
    %c0_i32 = arith.constant 0 : i32
    %c0_i32_0 = arith.constant 0 : i32
    %c0_i32_1 = arith.constant 0 : i32
    return %c0_i32, %c0_i32_0 : i32, i32
  }
  func.func @transform_16(%arg0: i32) -> (i32, i32) {
    %c0_i32 = arith.constant 0 : i32
    %c0_i32_0 = arith.constant 0 : i32
    %c0_i32_1 = arith.constant 0 : i32
    return %c0_i32, %c0_i32_0 : i32, i32
  }
  func.func @transform_17(%arg0: i32) -> (i32, i32, i32) {
    %c0_i32 = arith.constant 0 : i32
    %c0_i32_0 = arith.constant 0 : i32
    %c0_i32_1 = arith.constant 0 : i32
    return %arg0, %c0_i32, %c0_i32_0 : i32, i32, i32
  }
  func.func @transform_18(%arg0: i32) -> (i32, i32, i32) {
    %c0_i32 = arith.constant 0 : i32
    %c0_i32_0 = arith.constant 0 : i32
    %c0_i32_1 = arith.constant 0 : i32
    return %arg0, %c0_i32, %c0_i32_0 : i32, i32, i32
  }
  func.func @transform_19(%arg0: i32) -> (i32, i32, i32) {
    %c0_i32 = arith.constant 0 : i32
    %c0_i32_0 = arith.constant 0 : i32
    %c0_i32_1 = arith.constant 0 : i32
    return %arg0, %c0_i32, %c0_i32_0 : i32, i32, i32
  }
}

</mosaic_0001>

<llo_original>
// kernel: decoder_forward.4
$region0: #{decoder_forward.4}
  #allocation0 [shape = 'u32[]', space=smem, size = 0x4, offset = 0x4, fixed_abs, tag = 'smem constant byte address 0x4 - core index']
  #allocation1 [shape = 'u32[144,128]{1,0:T(1,128)}', space=vmem, size = 0x12000, scoped, tag = 'internal scratch']
  %s0 = inlined_call_operand.vmem [shape: f32[2,8,16], index: 0, kind: input, shape index: {}]
  %s1 = inlined_call_operand.vmem [shape: f32[16,32], index: 1, kind: input, shape index: {}]
  %s2 = inlined_call_operand.vmem [shape: f32[1,32], index: 2, kind: input, shape index: {}]
  %s3 = inlined_call_operand.vmem [shape: f32[32,32], index: 3, kind: input, shape index: {}]
  %s4 = inlined_call_operand.vmem [shape: f32[1,32], index: 4, kind: input, shape index: {}]
  %s5 = inlined_call_operand.vmem [shape: f32[1,8,32], index: 5, kind: input, shape index: {}]
  %s6 = inlined_call_operand.vmem [shape: f32[2,8,32], index: 6, kind: output, shape index: {}]
  %s7 = sld [smem:[#allocation0]]
  $region57: #{decoder_forward.4} parent=0
    _
  %s9 = ssub.s32 1, %s7
  %s10 = scalar_select 0, %s9, %s7
  loop: start=0, step=1, limit=4
  $region2: #{decoder_forward.4} parent=0 // loop_pre_header
    _
  $region3: #{decoder_forward.4} parent=0 // loop_header
    %s12 = sphi 0, %s16
    %p13 = scmp.ge.s32.totalorder %s12, 4
    %s22 = sphi 0, %s24
    %s25 = sphi 0, %s22
    %s26 = sphi 0, %s25
    %s42 = sphi 0, %s26
    %s46 = sphi 0, %s46
    %s48 = sphi 0, %s46
    %s49 = sphi 0, %s48
    %s63 = sphi 0, %s49
    %s67 = sphi 0, %s67
    %s69 = sphi 0, %s67
    %s70 = sphi 0, %s69
    %s84 = sphi 0, %s70
    %s88 = sphi 0, %s88
    %s90 = sphi 0, %s88
    %s91 = sphi 0, %s90
    %s105 = sphi 0, %s91
    %s109 = sphi 0, %s109
    %s111 = sphi 0, %s109
    %s112 = sphi 0, %s111
    %s126 = sphi 0, %s112
    %s130 = sphi 0, %s130
    %s132 = sphi 0, %s130
    %s133 = sphi 0, %s132
    %s147 = sphi 0, %s133
    %s153 = sphi 0, %s155
    %s156 = sphi 0, %s153
    %s157 = sphi 0, %s156
    %s173 = sphi 0, %s157
  $region4: #{decoder_forward.4} parent=0 // loop_header_branch
    %15 = sbr.rel (%p13) target = $region8
  $region5: #{decoder_forward.4} parent=0 // loop_body
    %s17 = ssub.s32 %s12, 1
    %s18 = ssub.s32 %s12, 2
    %s19 = sadd.s32 %s12, 1
    %s20 = ssub.s32 %s12, %s19
    %p21 = scmp.eq.s32.totalorder %s20, 0
    %s23 = sadd.s32 %s22, 1
    %s24 = scalar_select %p21, %s22, %s23
    %p27 = pneg %p21
    %p28 = scmp.eq.s32.totalorder %s12, 1
    %p29 = por %p27, %p28
    %p30 = scmp.ne.s32.totalorder %s22, %s25
    %p31 = scmp.eq.s32.totalorder %s12, 0
    %p32 = por %p30, %p31
    %p33 = scmp.ne.s32.totalorder %s22, %s25
    %p34 = scmp.eq.s32.totalorder %s17, 1
    %p35 = por %p33, %p34
    %p36 = scmp.ne.s32.totalorder %s25, %s26
    %p37 = scmp.eq.s32.totalorder %s17, 0
    %p38 = por %p36, %p37
    %p39 = scmp.ne.s32.totalorder %s25, %s26
    %p40 = scmp.eq.s32.totalorder %s18, 1
    %p41 = por %p39, %p40
    %p43 = scmp.ne.s32.totalorder %s26, %s42
    %p44 = scmp.eq.s32.totalorder %s18, 0
    %p45 = por %p43, %p44
    %s47 = sadd.s32 %s46, 1
    %p50 = scmp.eq.s32.totalorder %s12, 1
    %p51 = scmp.ne.s32.totalorder %s46, %s48
    %p52 = scmp.eq.s32.totalorder %s12, 0
    %p53 = por %p51, %p52
    %p54 = scmp.ne.s32.totalorder %s46, %s48
    %p55 = scmp.eq.s32.totalorder %s17, 1
    %p56 = por %p54, %p55
    %p57 = scmp.ne.s32.totalorder %s48, %s49
    %p58 = scmp.eq.s32.totalorder %s17, 0
    %p59 = por %p57, %p58
    %p60 = scmp.ne.s32.totalorder %s48, %s49
    %p61 = scmp.eq.s32.totalorder %s18, 1
    %p62 = por %p60, %p61
    %p64 = scmp.ne.s32.totalorder %s49, %s63
    %p65 = scmp.eq.s32.totalorder %s18, 0
    %p66 = por %p64, %p65
    %s68 = sadd.s32 %s67, 1
    %p71 = scmp.eq.s32.totalorder %s12, 1
    %p72 = scmp.ne.s32.totalorder %s67, %s69
    %p73 = scmp.eq.s32.totalorder %s12, 0
    %p74 = por %p72, %p73
    %p75 = scmp.ne.s32.totalorder %s67, %s69
    %p76 = scmp.eq.s32.totalorder %s17, 1
    %p77 = por %p75, %p76
    %p78 = scmp.ne.s32.totalorder %s69, %s70
    %p79 = scmp.eq.s32.totalorder %s17, 0
    %p80 = por %p78, %p79
    %p81 = scmp.ne.s32.totalorder %s69, %s70
    %p82 = scmp.eq.s32.totalorder %s18, 1
    %p83 = por %p81, %p82
    %p85 = scmp.ne.s32.totalorder %s70, %s84
    %p86 = scmp.eq.s32.totalorder %s18, 0
    %p87 = por %p85, %p86
    %s89 = sadd.s32 %s88, 1
    %p92 = scmp.eq.s32.totalorder %s12, 1
    %p93 = scmp.ne.s32.totalorder %s88, %s90
    %p94 = scmp.eq.s32.totalorder %s12, 0
    %p95 = por %p93, %p94
    %p96 = scmp.ne.s32.totalorder %s88, %s90
    %p97 = scmp.eq.s32.totalorder %s17, 1
    %p98 = por %p96, %p97
    %p99 = scmp.ne.s32.totalorder %s90, %s91
    %p100 = scmp.eq.s32.totalorder %s17, 0
    %p101 = por %p99, %p100
    %p102 = scmp.ne.s32.totalorder %s90, %s91
    %p103 = scmp.eq.s32.totalorder %s18, 1
    %p104 = por %p102, %p103
    %p106 = scmp.ne.s32.totalorder %s91, %s105
    %p107 = scmp.eq.s32.totalorder %s18, 0
    %p108 = por %p106, %p107
    %s110 = sadd.s32 %s109, 1
    %p113 = scmp.eq.s32.totalorder %s12, 1
    %p114 = scmp.ne.s32.totalorder %s109, %s111
    %p115 = scmp.eq.s32.totalorder %s12, 0
    %p116 = por %p114, %p115
    %p117 = scmp.ne.s32.totalorder %s109, %s111
    %p118 = scmp.eq.s32.totalorder %s17, 1
    %p119 = por %p117, %p118
    %p120 = scmp.ne.s32.totalorder %s111, %s112
    %p121 = scmp.eq.s32.totalorder %s17, 0
    %p122 = por %p120, %p121
    %p123 = scmp.ne.s32.totalorder %s111, %s112
    %p124 = scmp.eq.s32.totalorder %s18, 1
    %p125 = por %p123, %p124
    %p127 = scmp.ne.s32.totalorder %s112, %s126
    %p128 = scmp.eq.s32.totalorder %s18, 0
    %p129 = por %p127, %p128
    %s131 = sadd.s32 %s130, 1
    %p134 = scmp.eq.s32.totalorder %s12, 1
    %p135 = scmp.ne.s32.totalorder %s130, %s132
    %p136 = scmp.eq.s32.totalorder %s12, 0
    %p137 = por %p135, %p136
    %p138 = scmp.ne.s32.totalorder %s130, %s132
    %p139 = scmp.eq.s32.totalorder %s17, 1
    %p140 = por %p138, %p139
    %p141 = scmp.ne.s32.totalorder %s132, %s133
    %p142 = scmp.eq.s32.totalorder %s17, 0
    %p143 = por %p141, %p142
    %p144 = scmp.ne.s32.totalorder %s132, %s133
    %p145 = scmp.eq.s32.totalorder %s18, 1
    %p146 = por %p144, %p145
    %p148 = scmp.ne.s32.totalorder %s133, %s147
    %p149 = scmp.eq.s32.totalorder %s18, 0
    %p150 = por %p148, %p149
    %s151 = ssub.s32 %s12, %s19
    %p152 = scmp.eq.s32.totalorder %s151, 0
    %s154 = sadd.s32 %s153, 1
    %s155 = scalar_select %p152, %s153, %s154
    %p158 = pneg %p152
    %p159 = scmp.eq.s32.totalorder %s12, 1
    %p160 = por %p158, %p159
    %p161 = scmp.ne.s32.totalorder %s153, %s156
    %p162 = scmp.eq.s32.totalorder %s12, 0
    %p163 = por %p161, %p162
    %p164 = scmp.ne.s32.totalorder %s153, %s156
    %p165 = scmp.eq.s32.totalorder %s17, 1
    %p166 = por %p164, %p165
    %p167 = scmp.ne.s32.totalorder %s156, %s157
    %p168 = scmp.eq.s32.totalorder %s17, 0
    %p169 = por %p167, %p168
    %p170 = scmp.ne.s32.totalorder %s156, %s157
    %p171 = scmp.eq.s32.totalorder %s18, 1
    %p172 = por %p170, %p171
    %p174 = scmp.ne.s32.totalorder %s157, %s173
    %p175 = scmp.eq.s32.totalorder %s18, 0
    %p176 = por %p174, %p175
    %p177 = scmp.le.s32.totalorder 1, %s12
    %p178 = scmp.lt.s32.totalorder %s12, 3
    %p179 = pnand %p177, %p178
    %p180 = pneg %p179
    // Predicated region
    $region9: #{decoder_forward.4} parent=5 // pred_check
      _
    $region10: #{decoder_forward.4} parent=5 // pred_check_branch
      %182 = sbr.rel (%p179) target = $region12
    $region11: #{decoder_forward.4} parent=5 // pred_region
      %s183 = ssub.s32 %s12, 1
      // Predicated region
      $region13: #{decoder_forward.4} parent=11 // pred_check
        %p184 = pneg %p59
      $region14: #{decoder_forward.4} parent=11 // pred_check_branch
        %186 = sbr.rel (%p184) target = $region16
      $region15: #{decoder_forward.4} parent=11 // pred_region
        _
      $region16: #{decoder_forward.4} parent=11 // pred_fallthru
        _
      // Predicated region
      $region17: #{decoder_forward.4} parent=11 // pred_check
        %p187 = pneg %p80
      $region18: #{decoder_forward.4} parent=11 // pred_check_branch
        %189 = sbr.rel (%p187) target = $region20
      $region19: #{decoder_forward.4} parent=11 // pred_region
        _
      $region20: #{decoder_forward.4} parent=11 // pred_fallthru
        _
      // Predicated region
      $region21: #{decoder_forward.4} parent=11 // pred_check
        %p190 = pneg %p101
      $region22: #{decoder_forward.4} parent=11 // pred_check_branch
        %192 = sbr.rel (%p190) target = $region24
      $region23: #{decoder_forward.4} parent=11 // pred_region
        _
      $region24: #{decoder_forward.4} parent=11 // pred_fallthru
        _
      // Predicated region
      $region25: #{decoder_forward.4} parent=11 // pred_check
        %p193 = pneg %p122
      $region26: #{decoder_forward.4} parent=11 // pred_check_branch
        %195 = sbr.rel (%p193) target = $region28
      $region27: #{decoder_forward.4} parent=11 // pred_region
        _
      $region28: #{decoder_forward.4} parent=11 // pred_fallthru
        _
      // Predicated region
      $region29: #{decoder_forward.4} parent=11 // pred_check
        %p196 = pneg %p143
      $region30: #{decoder_forward.4} parent=11 // pred_check_branch
        %198 = sbr.rel (%p196) target = $region32
      $region31: #{decoder_forward.4} parent=11 // pred_region
        _
      $region32: #{decoder_forward.4} parent=11 // pred_fallthru
        _
    $region12: #{decoder_forward.4} parent=5 // pred_fallthru
      _
    %p199 = scmp.lt.s32.totalorder %s12, 2
    // Predicated region
    $region33: #{decoder_forward.4} parent=5 // pred_check
      %p200 = pneg %p199
    $region34: #{decoder_forward.4} parent=5 // pred_check_branch
      %202 = sbr.rel (%p200) target = $region36
    $region35: #{decoder_forward.4} parent=5 // pred_region
      // Predicated region
      $region37: #{decoder_forward.4} parent=35 // pred_check
        %p203 = pneg %p32
      $region38: #{decoder_forward.4} parent=35 // pred_check_branch
        %205 = sbr.rel (%p203) target = $region40
      $region39: #{decoder_forward.4} parent=35 // pred_region
        %p206 = scmp.lt.s32.totalorder %s12, 1
        %s207 = scalar_select %p206, %s12, 1
        %s208 = smul.addr %s207, 8
        %s209 = scalar_lea.vmem %s0, %s208
      $region40: #{decoder_forward.4} parent=35 // pred_fallthru
        _
    $region36: #{decoder_forward.4} parent=5 // pred_fallthru
      _
    %p210 = scmp.le.s32.totalorder 1, %s12
    %p211 = scmp.lt.s32.totalorder %s12, 3
    %p212 = pnand %p210, %p211
    %p213 = pneg %p212
    // Predicated region
    $region41: #{decoder_forward.4} parent=5 // pred_check
      _
    $region42: #{decoder_forward.4} parent=5 // pred_check_branch
      %215 = sbr.rel (%p212) target = $region44
    $region43: #{decoder_forward.4} parent=5 // pred_region
      %s216 = ssub.s32 %s12, 1
      %p217 = scmp.lt.s32.totalorder %s17, 1
      %s218 = scalar_select %p217, %s17, 1
      %s219 = smul.addr %s218, 8
      %s220 = scalar_lea.vmem %s0, %s219
      %p221 = pneg %p38
      %p222 = pneg %p35
      %p223 = pneg %p59
      %p224 = pneg %p56
      %p225 = pneg %p80
      %p226 = pneg %p77
      %p227 = pneg %p101
      %p228 = pneg %p98
      %p229 = pneg %p122
      %p230 = pneg %p119
      %p231 = pneg %p143
      %p232 = pneg %p140
      %p233 = pneg %p169
      %p234 = pneg %p166
      %p235 = scmp.lt.s32.totalorder %s17, 1
      %s236 = scalar_select %p235, %s17, 1
      %s237 = smul.addr %s236, 8
      %s238 = scalar_lea.vmem %s6, %s237
      %p239 = scmp.lt.s32.totalorder %s17, 1
      %s240 = scalar_select %p239, %s17, 1
      %s241 = smul.addr %s240, 8
      %s242 = scalar_lea.vmem %s0, %s241
      %p243 = scmp.lt.s32.totalorder %s17, 1
      %s244 = scalar_select %p243, %s17, 1
      %s245 = smul.addr %s244, 8
      %s246 = scalar_lea.vmem %s6, %s245
      %v247 = vld [vmem:[%s242] sm:$0xff]
      %v248 = vld [vmem:[%s1] sm:$0xff]
      %v249 = vld [vmem:[%s1 + $0x8] sm:$0xff]
      %v250 = vld [vmem:[%s2] sm:$0x1]
      %v252 = vlaneseq
      %v253 = vshrl.u32 %v252, 7
      %v254 = vsub.s32 0, %v253
      %v255 = vrot.slane %v250, %v254
      %vm257 = vcmask 130048
      %v259 = vsel %vm257, %v247, 0
      %261 = vmatprep.subr.mxu0 0.0
      %262 = vmatpush1.msra.mxu0 0.0
      %263 = vmatprep.subr.mxu0 0.0
      %264 = vmatpush1.msra.mxu0 0.0
      %265 = vmatprep.subr.mxu0 0.0
      %266 = vmatpush1.msra.mxu0 0.0
      %267 = vmatprep.subr.mxu0 0.0
      %268 = vmatpush1.msra.mxu0 0.0
      %269 = vmatprep.subr.mxu0 0.0
      %270 = vmatpush1.msra.mxu0 0.0
      %271 = vmatprep.subr.mxu0 0.0
      %272 = vmatpush1.msra.mxu0 0.0
      %273 = vmatprep.subr.mxu0 0.0
      %274 = vmatpush1.msra.mxu0 0.0
      %275 = vmatprep.subr.mxu0 0.0
      %276 = vmatpush1.msra.mxu0 0.0
      %277 = vmatprep.subr.mxu0 0.0
      %278 = vmatpush1.msra.mxu0 0.0
      %279 = vmatprep.subr.mxu0 0.0
      %280 = vmatpush1.msra.mxu0 0.0
      %281 = vmatprep.subr.mxu0 0.0
      %282 = vmatpush1.msra.mxu0 0.0
      %283 = vmatprep.subr.mxu0 0.0
      %284 = vmatpush1.msra.mxu0 0.0
      %285 = vmatprep.subr.mxu0 0.0
      %286 = vmatpush1.msra.mxu0 0.0
      %287 = vmatprep.subr.mxu0 0.0
      %288 = vmatpush1.msra.mxu0 0.0
      %289 = vmatprep.subr.mxu0 0.0
      %290 = vmatpush1.msra.mxu0 %v249
      %291 = vmatprep.subr.mxu0 0.0
      %292 = vmatpush1.msra.mxu0 %v248
      %293 = vmatprep.subr.mxu0 0.0
      %294 = vmatpush2.msra.mxu0 0.0
      %295 = vmatprep.subr.mxu0 0.0
      %296 = vmatpush2.msra.mxu0 0.0
      %297 = vmatprep.subr.mxu0 0.0
      %298 = vmatpush2.msra.mxu0 0.0
      %299 = vmatprep.subr.mxu0 0.0
      %300 = vmatpush2.msra.mxu0 0.0
      %301 = vmatprep.subr.mxu0 0.0
      %302 = vmatpush2.msra.mxu0 0.0
      %303 = vmatprep.subr.mxu0 0.0
      %304 = vmatpush2.msra.mxu0 0.0
      %305 = vmatprep.subr.mxu0 0.0
      %306 = vmatpush2.msra.mxu0 0.0
      %307 = vmatprep.subr.mxu0 0.0
      %308 = vmatpush2.msra.mxu0 0.0
      %309 = vmatprep.subr.mxu0 0.0
      %310 = vmatpush2.msra.mxu0 0.0
      %311 = vmatprep.subr.mxu0 0.0
      %312 = vmatpush2.msra.mxu0 0.0
      %313 = vmatprep.subr.mxu0 0.0
      %314 = vmatpush2.msra.mxu0 0.0
      %315 = vmatprep.subr.mxu0 0.0
      %316 = vmatpush2.msra.mxu0 0.0
      %317 = vmatprep.subr.mxu0 0.0
      %318 = vmatpush2.msra.mxu0 0.0
      %319 = vmatprep.subr.mxu0 0.0
      %320 = vmatpush2.msra.mxu0 0.0
      %321 = vmatprep.subr.mxu0 0.0
      %322 = vmatpush2.msra.mxu0 0.0
      %323 = vmatprep.subr.mxu0 0.0
      %324 = vmatpush2.msra.mxu0 0.0
      %325 = vmatprep.mubr.f32.mxu0 0.0
      %326 = vmatmul.mubr.f32.gmra.mxu0 %v259
      %v327 = vpop.f32.mrf.mxu0
      %v328 = vadd.f32 %v255, %v327
      %v329 = vpop.f32.mrf.mxu0
      %330 = vdwg.mxu0
      %v331 = vmax.f32 %v328, 0.0
      %v332 = vld [vmem:[%s3] sm:$0xff]
      %v333 = vld [vmem:[%s3 + $0x8] sm:$0xff]
      %v334 = vld [vmem:[%s3 + $0x10] sm:$0xff]
      %v335 = vld [vmem:[%s3 + $0x18] sm:$0xff]
      %v336 = vld [vmem:[%s4] sm:$0x1]
      %v338 = vlaneseq
      %v339 = vshrl.u32 %v338, 7
      %v340 = vsub.s32 0, %v339
      %v341 = vrot.slane %v336, %v340
      %vm343 = vcmask 261120
      %v345 = vsel %vm343, %v331, 0
      %347 = vmatprep.subr.mxu0 0.0
      %348 = vmatpush1.msra.mxu0 0.0
      %349 = vmatprep.subr.mxu0 0.0
      %350 = vmatpush1.msra.mxu0 0.0
      %351 = vmatprep.subr.mxu0 0.0
      %352 = vmatpush1.msra.mxu0 0.0
      %353 = vmatprep.subr.mxu0 0.0
      %354 = vmatpush1.msra.mxu0 0.0
      %355 = vmatprep.subr.mxu0 0.0
      %356 = vmatpush1.msra.mxu0 0.0
      %357 = vmatprep.subr.mxu0 0.0
      %358 = vmatpush1.msra.mxu0 0.0
      %359 = vmatprep.subr.mxu0 0.0
      %360 = vmatpush1.msra.mxu0 0.0
      %361 = vmatprep.subr.mxu0 0.0
      %362 = vmatpush1.msra.mxu0 0.0
      %363 = vmatprep.subr.mxu0 0.0
      %364 = vmatpush1.msra.mxu0 0.0
      %365 = vmatprep.subr.mxu0 0.0
      %366 = vmatpush1.msra.mxu0 0.0
      %367 = vmatprep.subr.mxu0 0.0
      %368 = vmatpush1.msra.mxu0 0.0
      %369 = vmatprep.subr.mxu0 0.0
      %370 = vmatpush1.msra.mxu0 0.0
      %371 = vmatprep.subr.mxu0 0.0
      %372 = vmatpush1.msra.mxu0 %v335
      %373 = vmatprep.subr.mxu0 0.0
      %374 = vmatpush1.msra.mxu0 %v334
      %375 = vmatprep.subr.mxu0 0.0
      %376 = vmatpush1.msra.mxu0 %v333
      %377 = vmatprep.subr.mxu0 0.0
      %378 = vmatpush1.msra.mxu0 %v332
      %379 = vmatprep.subr.mxu0 0.0
      %380 = vmatpush2.msra.mxu0 0.0
      %381 = vmatprep.subr.mxu0 0.0
      %382 = vmatpush2.msra.mxu0 0.0
      %383 = vmatprep.subr.mxu0 0.0
      %384 = vmatpush2.msra.mxu0 0.0
      %385 = vmatprep.subr.mxu0 0.0
      %386 = vmatpush2.msra.mxu0 0.0
      %387 = vmatprep.subr.mxu0 0.0
      %388 = vmatpush2.msra.mxu0 0.0
      %389 = vmatprep.subr.mxu0 0.0
      %390 = vmatpush2.msra.mxu0 0.0
      %391 = vmatprep.subr.mxu0 0.0
      %392 = vmatpush2.msra.mxu0 0.0
      %393 = vmatprep.subr.mxu0 0.0
      %394 = vmatpush2.msra.mxu0 0.0
      %395 = vmatprep.subr.mxu0 0.0
      %396 = vmatpush2.msra.mxu0 0.0
      %397 = vmatprep.subr.mxu0 0.0
      %398 = vmatpush2.msra.mxu0 0.0
      %399 = vmatprep.subr.mxu0 0.0
      %400 = vmatpush2.msra.mxu0 0.0
      %401 = vmatprep.subr.mxu0 0.0
      %402 = vmatpush2.msra.mxu0 0.0
      %403 = vmatprep.subr.mxu0 0.0
      %404 = vmatpush2.msra.mxu0 0.0
      %405 = vmatprep.subr.mxu0 0.0
      %406 = vmatpush2.msra.mxu0 0.0
      %407 = vmatprep.subr.mxu0 0.0
      %408 = vmatpush2.msra.mxu0 0.0
      %409 = vmatprep.subr.mxu0 0.0
      %410 = vmatpush2.msra.mxu0 0.0
      %411 = vmatprep.mubr.f32.mxu0 0.0
      %412 = vmatmul.mubr.f32.gmra.mxu0 %v345
      %v413 = vpop.f32.mrf.mxu0
      %v414 = vadd.f32 %v341, %v413
      %v415 = vpop.f32.mrf.mxu0
      %416 = vdwg.mxu0
      %v417 = vmax.f32 %v414, 0.0
      %v418 = vld [vmem:[%s5] sm:$0xff]
      %v419 = vadd.f32 %v417, %v418
      %420 = vst.msk [vmem:[%s246] sm:$0xff] %vm343, %v419
      %p421 = scmp.lt.s32.totalorder %s17, 1
      %s422 = scalar_select %p421, %s17, 1
      %s423 = smul.addr %s422, 8
      %s424 = scalar_lea.vmem %s6, %s423
      // Predicated region
      $region45: #{decoder_forward.4} parent=43 // pred_check
        %p425 = pneg %p166
      $region46: #{decoder_forward.4} parent=43 // pred_check_branch
        %427 = sbr.rel (%p425) target = $region48
      $region47: #{decoder_forward.4} parent=43 // pred_region
        _
      $region48: #{decoder_forward.4} parent=43 // pred_fallthru
        _
    $region44: #{decoder_forward.4} parent=5 // pred_fallthru
      _
    %p428 = scmp.le.s32.totalorder 2, %s12
    // Predicated region
    $region49: #{decoder_forward.4} parent=5 // pred_check
      %p429 = pneg %p428
    $region50: #{decoder_forward.4} parent=5 // pred_check_branch
      %431 = sbr.rel (%p429) target = $region52
    $region51: #{decoder_forward.4} parent=5 // pred_region
      %s432 = ssub.s32 %s12, 2
      // Predicated region
      $region53: #{decoder_forward.4} parent=51 // pred_check
        %p433 = pneg %p172
      $region54: #{decoder_forward.4} parent=51 // pred_check_branch
        %435 = sbr.rel (%p433) target = $region56
      $region55: #{decoder_forward.4} parent=51 // pred_region
        %p436 = scmp.lt.s32.totalorder %s18, 1
        %s437 = scalar_select %p436, %s18, 1
        %s438 = smul.addr %s437, 8
        %s439 = scalar_lea.vmem %s6, %s438
      $region56: #{decoder_forward.4} parent=51 // pred_fallthru
        _
    $region52: #{decoder_forward.4} parent=5 // pred_fallthru
      _
  $region6: #{decoder_forward.4} parent=0 // loop_footer
    %s16 = sadd.s32 1, %s12
  $region7: #{decoder_forward.4} parent=0 // loop_footer_branch
    %11 = sbr.rel target = $region3
  $region8: #{decoder_forward.4} parent=0 // loop_exit
    _

// kernel: decoder_forward.5
$region0: #{decoder_forward.5}
  #allocation0 [shape = 'u32[]', space=smem, size = 0x4, offset = 0x4, fixed_abs, tag = 'smem constant byte address 0x4 - core index']
  #allocation1 [shape = 'u32[144,128]{1,0:T(1,128)}', space=vmem, size = 0x12000, scoped, tag = 'internal scratch']
  %s0 = inlined_call_operand.vmem [shape: f32[2,8,32], index: 0, kind: input, shape index: {}]
  %s1 = inlined_call_operand.vmem [shape: f32[2,12,32], index: 1, kind: input, shape index: {}]
  %s2 = inlined_call_operand.vmem [shape: f32[8,8], index: 2, kind: input, shape index: {}]
  %s3 = inlined_call_operand.vmem [shape: f32[2,1,12], index: 3, kind: input, shape index: {}]
  %s4 = inlined_call_operand.vmem [shape: f32[32,96], index: 4, kind: input, shape index: {}]
  %s5 = inlined_call_operand.vmem [shape: f32[1,96], index: 5, kind: input, shape index: {}]
  %s6 = inlined_call_operand.vmem [shape: f32[32,32], index: 6, kind: input, shape index: {}]
  %s7 = inlined_call_operand.vmem [shape: f32[1,32], index: 7, kind: input, shape index: {}]
  %s8 = inlined_call_operand.vmem [shape: f32[1,32], index: 8, kind: input, shape index: {}]
  %s9 = inlined_call_operand.vmem [shape: f32[1,32], index: 9, kind: input, shape index: {}]
  %s10 = inlined_call_operand.vmem [shape: f32[32,32], index: 10, kind: input, shape index: {}]
  %s11 = inlined_call_operand.vmem [shape: f32[1,32], index: 11, kind: input, shape index: {}]
  %s12 = inlined_call_operand.vmem [shape: f32[32,64], index: 12, kind: input, shape index: {}]
  %s13 = inlined_call_operand.vmem [shape: f32[1,64], index: 13, kind: input, shape index: {}]
  %s14 = inlined_call_operand.vmem [shape: f32[32,32], index: 14, kind: input, shape index: {}]
  %s15 = inlined_call_operand.vmem [shape: f32[1,32], index: 15, kind: input, shape index: {}]
  %s16 = inlined_call_operand.vmem [shape: f32[1,32], index: 16, kind: input, shape index: {}]
  %s17 = inlined_call_operand.vmem [shape: f32[1,32], index: 17, kind: input, shape index: {}]
  %s18 = inlined_call_operand.vmem [shape: f32[32,64], index: 18, kind: input, shape index: {}]
  %s19 = inlined_call_operand.vmem [shape: f32[1,64], index: 19, kind: input, shape index: {}]
  %s20 = inlined_call_operand.vmem [shape: f32[64,32], index: 20, kind: input, shape index: {}]
  %s21 = inlined_call_operand.vmem [shape: f32[1,32], index: 21, kind: input, shape index: {}]
  %s22 = inlined_call_operand.vmem [shape: f32[1,32], index: 22, kind: input, shape index: {}]
  %s23 = inlined_call_operand.vmem [shape: f32[1,32], index: 23, kind: input, shape index: {}]
  %s24 = inlined_call_operand.vmem [shape: f32[2,8,32], index: 24, kind: output, shape index: {}]
  %s25 = sld [smem:[#allocation0]]
  $region129: #{decoder_forward.5} parent=0
    _
  %s27 = ssub.s32 1, %s25
  %s28 = scalar_select 0, %s27, %s25
  loop: start=0, step=1, limit=4
  $region2: #{decoder_forward.5} parent=0 // loop_pre_header
    _
  $region3: #{decoder_forward.5} parent=0 // loop_header
    %s30 = sphi 0, %s34
    %p31 = scmp.ge.s32.totalorder %s30, 4
    %s40 = sphi 0, %s42
    %s43 = sphi 0, %s40
    %s44 = sphi 0, %s43
    %s60 = sphi 0, %s44
    %s66 = sphi 0, %s68
    %s69 = sphi 0, %s66
    %s70 = sphi 0, %s69
    %s86 = sphi 0, %s70
    %s90 = sphi 0, %s90
    %s92 = sphi 0, %s90
    %s93 = sphi 0, %s92
    %s107 = sphi 0, %s93
    %s113 = sphi 0, %s115
    %s116 = sphi 0, %s113
    %s117 = sphi 0, %s116
    %s133 = sphi 0, %s117
    %s137 = sphi 0, %s137
    %s139 = sphi 0, %s137
    %s140 = sphi 0, %s139
    %s154 = sphi 0, %s140
    %s158 = sphi 0, %s158
    %s160 = sphi 0, %s158
    %s161 = sphi 0, %s160
    %s175 = sphi 0, %s161
    %s179 = sphi 0, %s179
    %s181 = sphi 0, %s179
    %s182 = sphi 0, %s181
    %s196 = sphi 0, %s182
    %s200 = sphi 0, %s200
    %s202 = sphi 0, %s200
    %s203 = sphi 0, %s202
    %s217 = sphi 0, %s203
    %s221 = sphi 0, %s221
    %s223 = sphi 0, %s221
    %s224 = sphi 0, %s223
    %s238 = sphi 0, %s224
    %s242 = sphi 0, %s242
    %s244 = sphi 0, %s242
    %s245 = sphi 0, %s244
    %s259 = sphi 0, %s245
    %s263 = sphi 0, %s263
    %s265 = sphi 0, %s263
    %s266 = sphi 0, %s265
    %s280 = sphi 0, %s266
    %s284 = sphi 0, %s284
    %s286 = sphi 0, %s284
    %s287 = sphi 0, %s286
    %s301 = sphi 0, %s287
    %s305 = sphi 0, %s305
    %s307 = sphi 0, %s305
    %s308 = sphi 0, %s307
    %s322 = sphi 0, %s308
    %s326 = sphi 0, %s326
    %s328 = sphi 0, %s326
    %s329 = sphi 0, %s328
    %s343 = sphi 0, %s329
    %s347 = sphi 0, %s347
    %s349 = sphi 0, %s347
    %s350 = sphi 0, %s349
    %s364 = sphi 0, %s350
    %s368 = sphi 0, %s368
    %s370 = sphi 0, %s368
    %s371 = sphi 0, %s370
    %s385 = sphi 0, %s371
    %s389 = sphi 0, %s389
    %s391 = sphi 0, %s389
    %s392 = sphi 0, %s391
    %s406 = sphi 0, %s392
    %s410 = sphi 0, %s410
    %s412 = sphi 0, %s410
    %s413 = sphi 0, %s412
    %s427 = sphi 0, %s413
    %s431 = sphi 0, %s431
    %s433 = sphi 0, %s431
    %s434 = sphi 0, %s433
    %s448 = sphi 0, %s434
    %s452 = sphi 0, %s452
    %s454 = sphi 0, %s452
    %s455 = sphi 0, %s454
    %s469 = sphi 0, %s455
    %s473 = sphi 0, %s473
    %s475 = sphi 0, %s473
    %s476 = sphi 0, %s475
    %s490 = sphi 0, %s476
    %s494 = sphi 0, %s494
    %s496 = sphi 0, %s494
    %s497 = sphi 0, %s496
    %s511 = sphi 0, %s497
    %s515 = sphi 0, %s515
    %s517 = sphi 0, %s515
    %s518 = sphi 0, %s517
    %s532 = sphi 0, %s518
    %s536 = sphi 0, %s536
    %s538 = sphi 0, %s536
    %s539 = sphi 0, %s538
    %s553 = sphi 0, %s539
    %s559 = sphi 0, %s561
    %s562 = sphi 0, %s559
    %s563 = sphi 0, %s562
    %s579 = sphi 0, %s563
  $region4: #{decoder_forward.5} parent=0 // loop_header_branch
    %33 = sbr.rel (%p31) target = $region8
  $region5: #{decoder_forward.5} parent=0 // loop_body
    %s35 = ssub.s32 %s30, 1
    %s36 = ssub.s32 %s30, 2
    %s37 = sadd.s32 %s30, 1
    %s38 = ssub.s32 %s30, %s37
    %p39 = scmp.eq.s32.totalorder %s38, 0
    %s41 = sadd.s32 %s40, 1
    %s42 = scalar_select %p39, %s40, %s41
    %p45 = pneg %p39
    %p46 = scmp.eq.s32.totalorder %s30, 1
    %p47 = por %p45, %p46
    %p48 = scmp.ne.s32.totalorder %s40, %s43
    %p49 = scmp.eq.s32.totalorder %s30, 0
    %p50 = por %p48, %p49
    %p51 = scmp.ne.s32.totalorder %s40, %s43
    %p52 = scmp.eq.s32.totalorder %s35, 1
    %p53 = por %p51, %p52
    %p54 = scmp.ne.s32.totalorder %s43, %s44
    %p55 = scmp.eq.s32.totalorder %s35, 0
    %p56 = por %p54, %p55
    %p57 = scmp.ne.s32.totalorder %s43, %s44
    %p58 = scmp.eq.s32.totalorder %s36, 1
    %p59 = por %p57, %p58
    %p61 = scmp.ne.s32.totalorder %s44, %s60
    %p62 = scmp.eq.s32.totalorder %s36, 0
    %p63 = por %p61, %p62
    %s64 = ssub.s32 %s30, %s37
    %p65 = scmp.eq.s32.totalorder %s64, 0
    %s67 = sadd.s32 %s66, 1
    %s68 = scalar_select %p65, %s66, %s67
    %p71 = pneg %p65
    %p72 = scmp.eq.s32.totalorder %s30, 1
    %p73 = por %p71, %p72
    %p74 = scmp.ne.s32.totalorder %s66, %s69
    %p75 = scmp.eq.s32.totalorder %s30, 0
    %p76 = por %p74, %p75
    %p77 = scmp.ne.s32.totalorder %s66, %s69
    %p78 = scmp.eq.s32.totalorder %s35, 1
    %p79 = por %p77, %p78
    %p80 = scmp.ne.s32.totalorder %s69, %s70
    %p81 = scmp.eq.s32.totalorder %s35, 0
    %p82 = por %p80, %p81
    %p83 = scmp.ne.s32.totalorder %s69, %s70
    %p84 = scmp.eq.s32.totalorder %s36, 1
    %p85 = por %p83, %p84
    %p87 = scmp.ne.s32.totalorder %s70, %s86
    %p88 = scmp.eq.s32.totalorder %s36, 0
    %p89 = por %p87, %p88
    %s91 = sadd.s32 %s90, 1
    %p94 = scmp.eq.s32.totalorder %s30, 1
    %p95 = scmp.ne.s32.totalorder %s90, %s92
    %p96 = scmp.eq.s32.totalorder %s30, 0
    %p97 = por %p95, %p96
    %p98 = scmp.ne.s32.totalorder %s90, %s92
    %p99 = scmp.eq.s32.totalorder %s35, 1
    %p100 = por %p98, %p99
    %p101 = scmp.ne.s32.totalorder %s92, %s93
    %p102 = scmp.eq.s32.totalorder %s35, 0
    %p103 = por %p101, %p102
    %p104 = scmp.ne.s32.totalorder %s92, %s93
    %p105 = scmp.eq.s32.totalorder %s36, 1
    %p106 = por %p104, %p105
    %p108 = scmp.ne.s32.totalorder %s93, %s107
    %p109 = scmp.eq.s32.totalorder %s36, 0
    %p110 = por %p108, %p109
    %s111 = ssub.s32 %s30, %s37
    %p112 = scmp.eq.s32.totalorder %s111, 0
    %s114 = sadd.s32 %s113, 1
    %s115 = scalar_select %p112, %s113, %s114
    %p118 = pneg %p112
    %p119 = scmp.eq.s32.totalorder %s30, 1
    %p120 = por %p118, %p119
    %p121 = scmp.ne.s32.totalorder %s113, %s116
    %p122 = scmp.eq.s32.totalorder %s30, 0
    %p123 = por %p121, %p122
    %p124 = scmp.ne.s32.totalorder %s113, %s116
    %p125 = scmp.eq.s32.totalorder %s35, 1
    %p126 = por %p124, %p125
    %p127 = scmp.ne.s32.totalorder %s116, %s117
    %p128 = scmp.eq.s32.totalorder %s35, 0
    %p129 = por %p127, %p128
    %p130 = scmp.ne.s32.totalorder %s116, %s117
    %p131 = scmp.eq.s32.totalorder %s36, 1
    %p132 = por %p130, %p131
    %p134 = scmp.ne.s32.totalorder %s117, %s133
    %p135 = scmp.eq.s32.totalorder %s36, 0
    %p136 = por %p134, %p135
    %s138 = sadd.s32 %s137, 1
    %p141 = scmp.eq.s32.totalorder %s30, 1
    %p142 = scmp.ne.s32.totalorder %s137, %s139
    %p143 = scmp.eq.s32.totalorder %s30, 0
    %p144 = por %p142, %p143
    %p145 = scmp.ne.s32.totalorder %s137, %s139
    %p146 = scmp.eq.s32.totalorder %s35, 1
    %p147 = por %p145, %p146
    %p148 = scmp.ne.s32.totalorder %s139, %s140
    %p149 = scmp.eq.s32.totalorder %s35, 0
    %p150 = por %p148, %p149
    %p151 = scmp.ne.s32.totalorder %s139, %s140
    %p152 = scmp.eq.s32.totalorder %s36, 1
    %p153 = por %p151, %p152
    %p155 = scmp.ne.s32.totalorder %s140, %s154
    %p156 = scmp.eq.s32.totalorder %s36, 0
    %p157 = por %p155, %p156
    %s159 = sadd.s32 %s158, 1
    %p162 = scmp.eq.s32.totalorder %s30, 1
    %p163 = scmp.ne.s32.totalorder %s158, %s160
    %p164 = scmp.eq.s32.totalorder %s30, 0
    %p165 = por %p163, %p164
    %p166 = scmp.ne.s32.totalorder %s158, %s160
    %p167 = scmp.eq.s32.totalorder %s35, 1
    %p168 = por %p166, %p167
    %p169 = scmp.ne.s32.totalorder %s160, %s161
    %p170 = scmp.eq.s32.totalorder %s35, 0
    %p171 = por %p169, %p170
    %p172 = scmp.ne.s32.totalorder %s160, %s161
    %p173 = scmp.eq.s32.totalorder %s36, 1
    %p174 = por %p172, %p173
    %p176 = scmp.ne.s32.totalorder %s161, %s175
    %p177 = scmp.eq.s32.totalorder %s36, 0
    %p178 = por %p176, %p177
    %s180 = sadd.s32 %s179, 1
    %p183 = scmp.eq.s32.totalorder %s30, 1
    %p184 = scmp.ne.s32.totalorder %s179, %s181
    %p185 = scmp.eq.s32.totalorder %s30, 0
    %p186 = por %p184, %p185
    %p187 = scmp.ne.s32.totalorder %s179, %s181
    %p188 = scmp.eq.s32.totalorder %s35, 1
    %p189 = por %p187, %p188
    %p190 = scmp.ne.s32.totalorder %s181, %s182
    %p191 = scmp.eq.s32.totalorder %s35, 0
    %p192 = por %p190, %p191
    %p193 = scmp.ne.s32.totalorder %s181, %s182
    %p194 = scmp.eq.s32.totalorder %s36, 1
    %p195 = por %p193, %p194
    %p197 = scmp.ne.s32.totalorder %s182, %s196
    %p198 = scmp.eq.s32.totalorder %s36, 0
    %p199 = por %p197, %p198
    %s201 = sadd.s32 %s200, 1
    %p204 = scmp.eq.s32.totalorder %s30, 1
    %p205 = scmp.ne.s32.totalorder %s200, %s202
    %p206 = scmp.eq.s32.totalorder %s30, 0
    %p207 = por %p205, %p206
    %p208 = scmp.ne.s32.totalorder %s200, %s202
    %p209 = scmp.eq.s32.totalorder %s35, 1
    %p210 = por %p208, %p209
    %p211 = scmp.ne.s32.totalorder %s202, %s203
    %p212 = scmp.eq.s32.totalorder %s35, 0
    %p213 = por %p211, %p212
    %p214 = scmp.ne.s32.totalorder %s202, %s203
    %p215 = scmp.eq.s32.totalorder %s36, 1
    %p216 = por %p214, %p215
    %p218 = scmp.ne.s32.totalorder %s203, %s217
    %p219 = scmp.eq.s32.totalorder %s36, 0
    %p220 = por %p218, %p219
    %s222 = sadd.s32 %s221, 1
    %p225 = scmp.eq.s32.totalorder %s30, 1
    %p226 = scmp.ne.s32.totalorder %s221, %s223
    %p227 = scmp.eq.s32.totalorder %s30, 0
    %p228 = por %p226, %p227
    %p229 = scmp.ne.s32.totalorder %s221, %s223
    %p230 = scmp.eq.s32.totalorder %s35, 1
    %p231 = por %p229, %p230
    %p232 = scmp.ne.s32.totalorder %s223, %s224
    %p233 = scmp.eq.s32.totalorder %s35, 0
    %p234 = por %p232, %p233
    %p235 = scmp.ne.s32.totalorder %s223, %s224
    %p236 = scmp.eq.s32.totalorder %s36, 1
    %p237 = por %p235, %p236
    %p239 = scmp.ne.s32.totalorder %s224, %s238
    %p240 = scmp.eq.s32.totalorder %s36, 0
    %p241 = por %p239, %p240
    %s243 = sadd.s32 %s242, 1
    %p246 = scmp.eq.s32.totalorder %s30, 1
    %p247 = scmp.ne.s32.totalorder %s242, %s244
    %p248 = scmp.eq.s32.totalorder %s30, 0
    %p249 = por %p247, %p248
    %p250 = scmp.ne.s32.totalorder %s242, %s244
    %p251 = scmp.eq.s32.totalorder %s35, 1
    %p252 = por %p250, %p251
    %p253 = scmp.ne.s32.totalorder %s244, %s245
    %p254 = scmp.eq.s32.totalorder %s35, 0
    %p255 = por %p253, %p254
    %p256 = scmp.ne.s32.totalorder %s244, %s245
    %p257 = scmp.eq.s32.totalorder %s36, 1
    %p258 = por %p256, %p257
    %p260 = scmp.ne.s32.totalorder %s245, %s259
    %p261 = scmp.eq.s32.totalorder %s36, 0
    %p262 = por %p260, %p261
    %s264 = sadd.s32 %s263, 1
    %p267 = scmp.eq.s32.totalorder %s30, 1
    %p268 = scmp.ne.s32.totalorder %s263, %s265
    %p269 = scmp.eq.s32.totalorder %s30, 0
    %p270 = por %p268, %p269
    %p271 = scmp.ne.s32.totalorder %s263, %s265
    %p272 = scmp.eq.s32.totalorder %s35, 1
    %p273 = por %p271, %p272
    %p274 = scmp.ne.s32.totalorder %s265, %s266
    %p275 = scmp.eq.s32.totalorder %s35, 0
    %p276 = por %p274, %p275
    %p277 = scmp.ne.s32.totalorder %s265, %s266
    %p278 = scmp.eq.s32.totalorder %s36, 1
    %p279 = por %p277, %p278
    %p281 = scmp.ne.s32.totalorder %s266, %s280
    %p282 = scmp.eq.s32.totalorder %s36, 0
    %p283 = por %p281, %p282
    %s285 = sadd.s32 %s284, 1
    %p288 = scmp.eq.s32.totalorder %s30, 1
    %p289 = scmp.ne.s32.totalorder %s284, %s286
    %p290 = scmp.eq.s32.totalorder %s30, 0
    %p291 = por %p289, %p290
    %p292 = scmp.ne.s32.totalorder %s284, %s286
    %p293 = scmp.eq.s32.totalorder %s35, 1
    %p294 = por %p292, %p293
    %p295 = scmp.ne.s32.totalorder %s286, %s287
    %p296 = scmp.eq.s32.totalorder %s35, 0
    %p297 = por %p295, %p296
    %p298 = scmp.ne.s32.totalorder %s286, %s287
    %p299 = scmp.eq.s32.totalorder %s36, 1
    %p300 = por %p298, %p299
    %p302 = scmp.ne.s32.totalorder %s287, %s301
    %p303 = scmp.eq.s32.totalorder %s36, 0
    %p304 = por %p302, %p303
    %s306 = sadd.s32 %s305, 1
    %p309 = scmp.eq.s32.totalorder %s30, 1
    %p310 = scmp.ne.s32.totalorder %s305, %s307
    %p311 = scmp.eq.s32.totalorder %s30, 0
    %p312 = por %p310, %p311
    %p313 = scmp.ne.s32.totalorder %s305, %s307
    %p314 = scmp.eq.s32.totalorder %s35, 1
    %p315 = por %p313, %p314
    %p316 = scmp.ne.s32.totalorder %s307, %s308
    %p317 = scmp.eq.s32.totalorder %s35, 0
    %p318 = por %p316, %p317
    %p319 = scmp.ne.s32.totalorder %s307, %s308
    %p320 = scmp.eq.s32.totalorder %s36, 1
    %p321 = por %p319, %p320
    %p323 = scmp.ne.s32.totalorder %s308, %s322
    %p324 = scmp.eq.s32.totalorder %s36, 0
    %p325 = por %p323, %p324
    %s327 = sadd.s32 %s326, 1
    %p330 = scmp.eq.s32.totalorder %s30, 1
    %p331 = scmp.ne.s32.totalorder %s326, %s328
    %p332 = scmp.eq.s32.totalorder %s30, 0
    %p333 = por %p331, %p332
    %p334 = scmp.ne.s32.totalorder %s326, %s328
    %p335 = scmp.eq.s32.totalorder %s35, 1
    %p336 = por %p334, %p335
    %p337 = scmp.ne.s32.totalorder %s328, %s329
    %p338 = scmp.eq.s32.totalorder %s35, 0
    %p339 = por %p337, %p338
    %p340 = scmp.ne.s32.totalorder %s328, %s329
    %p341 = scmp.eq.s32.totalorder %s36, 1
    %p342 = por %p340, %p341
    %p344 = scmp.ne.s32.totalorder %s329, %s343
    %p345 = scmp.eq.s32.totalorder %s36, 0
    %p346 = por %p344, %p345
    %s348 = sadd.s32 %s347, 1
    %p351 = scmp.eq.s32.totalorder %s30, 1
    %p352 = scmp.ne.s32.totalorder %s347, %s349
    %p353 = scmp.eq.s32.totalorder %s30, 0
    %p354 = por %p352, %p353
    %p355 = scmp.ne.s32.totalorder %s347, %s349
    %p356 = scmp.eq.s32.totalorder %s35, 1
    %p357 = por %p355, %p356
    %p358 = scmp.ne.s32.totalorder %s349, %s350
    %p359 = scmp.eq.s32.totalorder %s35, 0
    %p360 = por %p358, %p359
    %p361 = scmp.ne.s32.totalorder %s349, %s350
    %p362 = scmp.eq.s32.totalorder %s36, 1
    %p363 = por %p361, %p362
    %p365 = scmp.ne.s32.totalorder %s350, %s364
    %p366 = scmp.eq.s32.totalorder %s36, 0
    %p367 = por %p365, %p366
    %s369 = sadd.s32 %s368, 1
    %p372 = scmp.eq.s32.totalorder %s30, 1
    %p373 = scmp.ne.s32.totalorder %s368, %s370
    %p374 = scmp.eq.s32.totalorder %s30, 0
    %p375 = por %p373, %p374
    %p376 = scmp.ne.s32.totalorder %s368, %s370
    %p377 = scmp.eq.s32.totalorder %s35, 1
    %p378 = por %p376, %p377
    %p379 = scmp.ne.s32.totalorder %s370, %s371
    %p380 = scmp.eq.s32.totalorder %s35, 0
    %p381 = por %p379, %p380
    %p382 = scmp.ne.s32.totalorder %s370, %s371
    %p383 = scmp.eq.s32.totalorder %s36, 1
    %p384 = por %p382, %p383
    %p386 = scmp.ne.s32.totalorder %s371, %s385
    %p387 = scmp.eq.s32.totalorder %s36, 0
    %p388 = por %p386, %p387
    %s390 = sadd.s32 %s389, 1
    %p393 = scmp.eq.s32.totalorder %s30, 1
    %p394 = scmp.ne.s32.totalorder %s389, %s391
    %p395 = scmp.eq.s32.totalorder %s30, 0
    %p396 = por %p394, %p395
    %p397 = scmp.ne.s32.totalorder %s389, %s391
    %p398 = scmp.eq.s32.totalorder %s35, 1
    %p399 = por %p397, %p398
    %p400 = scmp.ne.s32.totalorder %s391, %s392
    %p401 = scmp.eq.s32.totalorder %s35, 0
    %p402 = por %p400, %p401
    %p403 = scmp.ne.s32.totalorder %s391, %s392
    %p404 = scmp.eq.s32.totalorder %s36, 1
    %p405 = por %p403, %p404
    %p407 = scmp.ne.s32.totalorder %s392, %s406
    %p408 = scmp.eq.s32.totalorder %s36, 0
    %p409 = por %p407, %p408
    %s411 = sadd.s32 %s410, 1
    %p414 = scmp.eq.s32.totalorder %s30, 1
    %p415 = scmp.ne.s32.totalorder %s410, %s412
    %p416 = scmp.eq.s32.totalorder %s30, 0
    %p417 = por %p415, %p416
    %p418 = scmp.ne.s32.totalorder %s410, %s412
    %p419 = scmp.eq.s32.totalorder %s35, 1
    %p420 = por %p418, %p419
    %p421 = scmp.ne.s32.totalorder %s412, %s413
    %p422 = scmp.eq.s32.totalorder %s35, 0
    %p423 = por %p421, %p422
    %p424 = scmp.ne.s32.totalorder %s412, %s413
    %p425 = scmp.eq.s32.totalorder %s36, 1
    %p426 = por %p424, %p425
    %p428 = scmp.ne.s32.totalorder %s413, %s427
    %p429 = scmp.eq.s32.totalorder %s36, 0
    %p430 = por %p428, %p429
    %s432 = sadd.s32 %s431, 1
    %p435 = scmp.eq.s32.totalorder %s30, 1
    %p436 = scmp.ne.s32.totalorder %s431, %s433
    %p437 = scmp.eq.s32.totalorder %s30, 0
    %p438 = por %p436, %p437
    %p439 = scmp.ne.s32.totalorder %s431, %s433
    %p440 = scmp.eq.s32.totalorder %s35, 1
    %p441 = por %p439, %p440
    %p442 = scmp.ne.s32.totalorder %s433, %s434
    %p443 = scmp.eq.s32.totalorder %s35, 0
    %p444 = por %p442, %p443
    %p445 = scmp.ne.s32.totalorder %s433, %s434
    %p446 = scmp.eq.s32.totalorder %s36, 1
    %p447 = por %p445, %p446
    %p449 = scmp.ne.s32.totalorder %s434, %s448
    %p450 = scmp.eq.s32.totalorder %s36, 0
    %p451 = por %p449, %p450
    %s453 = sadd.s32 %s452, 1
    %p456 = scmp.eq.s32.totalorder %s30, 1
    %p457 = scmp.ne.s32.totalorder %s452, %s454
    %p458 = scmp.eq.s32.totalorder %s30, 0
    %p459 = por %p457, %p458
    %p460 = scmp.ne.s32.totalorder %s452, %s454
    %p461 = scmp.eq.s32.totalorder %s35, 1
    %p462 = por %p460, %p461
    %p463 = scmp.ne.s32.totalorder %s454, %s455
    %p464 = scmp.eq.s32.totalorder %s35, 0
    %p465 = por %p463, %p464
    %p466 = scmp.ne.s32.totalorder %s454, %s455
    %p467 = scmp.eq.s32.totalorder %s36, 1
    %p468 = por %p466, %p467
    %p470 = scmp.ne.s32.totalorder %s455, %s469
    %p471 = scmp.eq.s32.totalorder %s36, 0
    %p472 = por %p470, %p471
    %s474 = sadd.s32 %s473, 1
    %p477 = scmp.eq.s32.totalorder %s30, 1
    %p478 = scmp.ne.s32.totalorder %s473, %s475
    %p479 = scmp.eq.s32.totalorder %s30, 0
    %p480 = por %p478, %p479
    %p481 = scmp.ne.s32.totalorder %s473, %s475
    %p482 = scmp.eq.s32.totalorder %s35, 1
    %p483 = por %p481, %p482
    %p484 = scmp.ne.s32.totalorder %s475, %s476
    %p485 = scmp.eq.s32.totalorder %s35, 0
    %p486 = por %p484, %p485
    %p487 = scmp.ne.s32.totalorder %s475, %s476
    %p488 = scmp.eq.s32.totalorder %s36, 1
    %p489 = por %p487, %p488
    %p491 = scmp.ne.s32.totalorder %s476, %s490
    %p492 = scmp.eq.s32.totalorder %s36, 0
    %p493 = por %p491, %p492
    %s495 = sadd.s32 %s494, 1
    %p498 = scmp.eq.s32.totalorder %s30, 1
    %p499 = scmp.ne.s32.totalorder %s494, %s496
    %p500 = scmp.eq.s32.totalorder %s30, 0
    %p501 = por %p499, %p500
    %p502 = scmp.ne.s32.totalorder %s494, %s496
    %p503 = scmp.eq.s32.totalorder %s35, 1
    %p504 = por %p502, %p503
    %p505 = scmp.ne.s32.totalorder %s496, %s497
    %p506 = scmp.eq.s32.totalorder %s35, 0
    %p507 = por %p505, %p506
    %p508 = scmp.ne.s32.totalorder %s496, %s497
    %p509 = scmp.eq.s32.totalorder %s36, 1
    %p510 = por %p508, %p509
    %p512 = scmp.ne.s32.totalorder %s497, %s511
    %p513 = scmp.eq.s32.totalorder %s36, 0
    %p514 = por %p512, %p513
    %s516 = sadd.s32 %s515, 1
    %p519 = scmp.eq.s32.totalorder %s30, 1
    %p520 = scmp.ne.s32.totalorder %s515, %s517
    %p521 = scmp.eq.s32.totalorder %s30, 0
    %p522 = por %p520, %p521
    %p523 = scmp.ne.s32.totalorder %s515, %s517
    %p524 = scmp.eq.s32.totalorder %s35, 1
    %p525 = por %p523, %p524
    %p526 = scmp.ne.s32.totalorder %s517, %s518
    %p527 = scmp.eq.s32.totalorder %s35, 0
    %p528 = por %p526, %p527
    %p529 = scmp.ne.s32.totalorder %s517, %s518
    %p530 = scmp.eq.s32.totalorder %s36, 1
    %p531 = por %p529, %p530
    %p533 = scmp.ne.s32.totalorder %s518, %s532
    %p534 = scmp.eq.s32.totalorder %s36, 0
    %p535 = por %p533, %p534
    %s537 = sadd.s32 %s536, 1
    %p540 = scmp.eq.s32.totalorder %s30, 1
    %p541 = scmp.ne.s32.totalorder %s536, %s538
    %p542 = scmp.eq.s32.totalorder %s30, 0
    %p543 = por %p541, %p542
    %p544 = scmp.ne.s32.totalorder %s536, %s538
    %p545 = scmp.eq.s32.totalorder %s35, 1
    %p546 = por %p544, %p545
    %p547 = scmp.ne.s32.totalorder %s538, %s539
    %p548 = scmp.eq.s32.totalorder %s35, 0
    %p549 = por %p547, %p548
    %p550 = scmp.ne.s32.totalorder %s538, %s539
    %p551 = scmp.eq.s32.totalorder %s36, 1
    %p552 = por %p550, %p551
    %p554 = scmp.ne.s32.totalorder %s539, %s553
    %p555 = scmp.eq.s32.totalorder %s36, 0
    %p556 = por %p554, %p555
    %s557 = ssub.s32 %s30, %s37
    %p558 = scmp.eq.s32.totalorder %s557, 0
    %s560 = sadd.s32 %s559, 1
    %s561 = scalar_select %p558, %s559, %s560
    %p564 = pneg %p558
    %p565 = scmp.eq.s32.totalorder %s30, 1
    %p566 = por %p564, %p565
    %p567 = scmp.ne.s32.totalorder %s559, %s562
    %p568 = scmp.eq.s32.totalorder %s30, 0
    %p569 = por %p567, %p568
    %p570 = scmp.ne.s32.totalorder %s559, %s562
    %p571 = scmp.eq.s32.totalorder %s35, 1
    %p572 = por %p570, %p571
    %p573 = scmp.ne.s32.totalorder %s562, %s563
    %p574 = scmp.eq.s32.totalorder %s35, 0
    %p575 = por %p573, %p574
    %p576 = scmp.ne.s32.totalorder %s562, %s563
    %p577 = scmp.eq.s32.totalorder %s36, 1
    %p578 = por %p576, %p577
    %p580 = scmp.ne.s32.totalorder %s563, %s579
    %p581 = scmp.eq.s32.totalorder %s36, 0
    %p582 = por %p580, %p581
    %p583 = scmp.le.s32.totalorder 1, %s30
    %p584 = scmp.lt.s32.totalorder %s30, 3
    %p585 = pnand %p583, %p584
    %p586 = pneg %p585
    // Predicated region
    $region9: #{decoder_forward.5} parent=5 // pred_check
      _
    $region10: #{decoder_forward.5} parent=5 // pred_check_branch
      %588 = sbr.rel (%p585) target = $region12
    $region11: #{decoder_forward.5} parent=5 // pred_region
      %s589 = ssub.s32 %s30, 1
      // Predicated region
      $region13: #{decoder_forward.5} parent=11 // pred_check
        %p590 = pneg %p103
      $region14: #{decoder_forward.5} parent=11 // pred_check_branch
        %592 = sbr.rel (%p590) target = $region16
      $region15: #{decoder_forward.5} parent=11 // pred_region
        _
      $region16: #{decoder_forward.5} parent=11 // pred_fallthru
        _
      // Predicated region
      $region17: #{decoder_forward.5} parent=11 // pred_check
        %p593 = pneg %p150
      $region18: #{decoder_forward.5} parent=11 // pred_check_branch
        %595 = sbr.rel (%p593) target = $region20
      $region19: #{decoder_forward.5} parent=11 // pred_region
        _
      $region20: #{decoder_forward.5} parent=11 // pred_fallthru
        _
      // Predicated region
      $region21: #{decoder_forward.5} parent=11 // pred_check
        %p596 = pneg %p171
      $region22: #{decoder_forward.5} parent=11 // pred_check_branch
        %598 = sbr.rel (%p596) target = $region24
      $region23: #{decoder_forward.5} parent=11 // pred_region
        _
      $region24: #{decoder_forward.5} parent=11 // pred_fallthru
        _
      // Predicated region
      $region25: #{decoder_forward.5} parent=11 // pred_check
        %p599 = pneg %p192
      $region26: #{decoder_forward.5} parent=11 // pred_check_branch
        %601 = sbr.rel (%p599) target = $region28
      $region27: #{decoder_forward.5} parent=11 // pred_region
        _
      $region28: #{decoder_forward.5} parent=11 // pred_fallthru
        _
      // Predicated region
      $region29: #{decoder_forward.5} parent=11 // pred_check
        %p602 = pneg %p213
      $region30: #{decoder_forward.5} parent=11 // pred_check_branch
        %604 = sbr.rel (%p602) target = $region32
      $region31: #{decoder_forward.5} parent=11 // pred_region
        _
      $region32: #{decoder_forward.5} parent=11 // pred_fallthru
        _
      // Predicated region
      $region33: #{decoder_forward.5} parent=11 // pred_check
        %p605 = pneg %p234
      $region34: #{decoder_forward.5} parent=11 // pred_check_branch
        %607 = sbr.rel (%p605) target = $region36
      $region35: #{decoder_forward.5} parent=11 // pred_region
        _
      $region36: #{decoder_forward.5} parent=11 // pred_fallthru
        _
      // Predicated region
      $region37: #{decoder_forward.5} parent=11 // pred_check
        %p608 = pneg %p255
      $region38: #{decoder_forward.5} parent=11 // pred_check_branch
        %610 = sbr.rel (%p608) target = $region40
      $region39: #{decoder_forward.5} parent=11 // pred_region
        _
      $region40: #{decoder_forward.5} parent=11 // pred_fallthru
        _
      // Predicated region
      $region41: #{decoder_forward.5} parent=11 // pred_check
        %p611 = pneg %p276
      $region42: #{decoder_forward.5} parent=11 // pred_check_branch
        %613 = sbr.rel (%p611) target = $region44
      $region43: #{decoder_forward.5} parent=11 // pred_region
        _
      $region44: #{decoder_forward.5} parent=11 // pred_fallthru
        _
      // Predicated region
      $region45: #{decoder_forward.5} parent=11 // pred_check
        %p614 = pneg %p297
      $region46: #{decoder_forward.5} parent=11 // pred_check_branch
        %616 = sbr.rel (%p614) target = $region48
      $region47: #{decoder_forward.5} parent=11 // pred_region
        _
      $region48: #{decoder_forward.5} parent=11 // pred_fallthru
        _
      // Predicated region
      $region49: #{decoder_forward.5} parent=11 // pred_check
        %p617 = pneg %p318
      $region50: #{decoder_forward.5} parent=11 // pred_check_branch
        %619 = sbr.rel (%p617) target = $region52
      $region51: #{decoder_forward.5} parent=11 // pred_region
        _
      $region52: #{decoder_forward.5} parent=11 // pred_fallthru
        _
      // Predicated region
      $region53: #{decoder_forward.5} parent=11 // pred_check
        %p620 = pneg %p339
      $region54: #{decoder_forward.5} parent=11 // pred_check_branch
        %622 = sbr.rel (%p620) target = $region56
      $region55: #{decoder_forward.5} parent=11 // pred_region
        _
      $region56: #{decoder_forward.5} parent=11 // pred_fallthru
        _
      // Predicated region
      $region57: #{decoder_forward.5} parent=11 // pred_check
        %p623 = pneg %p360
      $region58: #{decoder_forward.5} parent=11 // pred_check_branch
        %625 = sbr.rel (%p623) target = $region60
      $region59: #{decoder_forward.5} parent=11 // pred_region
        _
      $region60: #{decoder_forward.5} parent=11 // pred_fallthru
        _
      // Predicated region
      $region61: #{decoder_forward.5} parent=11 // pred_check
        %p626 = pneg %p381
      $region62: #{decoder_forward.5} parent=11 // pred_check_branch
        %628 = sbr.rel (%p626) target = $region64
      $region63: #{decoder_forward.5} parent=11 // pred_region
        _
      $region64: #{decoder_forward.5} parent=11 // pred_fallthru
        _
      // Predicated region
      $region65: #{decoder_forward.5} parent=11 // pred_check
        %p629 = pneg %p402
      $region66: #{decoder_forward.5} parent=11 // pred_check_branch
        %631 = sbr.rel (%p629) target = $region68
      $region67: #{decoder_forward.5} parent=11 // pred_region
        _
      $region68: #{decoder_forward.5} parent=11 // pred_fallthru
        _
      // Predicated region
      $region69: #{decoder_forward.5} parent=11 // pred_check
        %p632 = pneg %p423
      $region70: #{decoder_forward.5} parent=11 // pred_check_branch
        %634 = sbr.rel (%p632) target = $region72
      $region71: #{decoder_forward.5} parent=11 // pred_region
        _
      $region72: #{decoder_forward.5} parent=11 // pred_fallthru
        _
      // Predicated region
      $region73: #{decoder_forward.5} parent=11 // pred_check
        %p635 = pneg %p444
      $region74: #{decoder_forward.5} parent=11 // pred_check_branch
        %637 = sbr.rel (%p635) target = $region76
      $region75: #{decoder_forward.5} parent=11 // pred_region
        _
      $region76: #{decoder_forward.5} parent=11 // pred_fallthru
        _
      // Predicated region
      $region77: #{decoder_forward.5} parent=11 // pred_check
        %p638 = pneg %p465
      $region78: #{decoder_forward.5} parent=11 // pred_check_branch
        %640 = sbr.rel (%p638) target = $region80
      $region79: #{decoder_forward.5} parent=11 // pred_region
        _
      $region80: #{decoder_forward.5} parent=11 // pred_fallthru
        _
      // Predicated region
      $region81: #{decoder_forward.5} parent=11 // pred_check
        %p641 = pneg %p486
      $region82: #{decoder_forward.5} parent=11 // pred_check_branch
        %643 = sbr.rel (%p641) target = $region84
      $region83: #{decoder_forward.5} parent=11 // pred_region
        _
      $region84: #{decoder_forward.5} parent=11 // pred_fallthru
        _
      // Predicated region
      $region85: #{decoder_forward.5} parent=11 // pred_check
        %p644 = pneg %p507
      $region86: #{decoder_forward.5} parent=11 // pred_check_branch
        %646 = sbr.rel (%p644) target = $region88
      $region87: #{decoder_forward.5} parent=11 // pred_region
        _
      $region88: #{decoder_forward.5} parent=11 // pred_fallthru
        _
      // Predicated region
      $region89: #{decoder_forward.5} parent=11 // pred_check
        %p647 = pneg %p528
      $region90: #{decoder_forward.5} parent=11 // pred_check_branch
        %649 = sbr.rel (%p647) target = $region92
      $region91: #{decoder_forward.5} parent=11 // pred_region
        _
      $region92: #{decoder_forward.5} parent=11 // pred_fallthru
        _
      // Predicated region
      $region93: #{decoder_forward.5} parent=11 // pred_check
        %p650 = pneg %p549
      $region94: #{decoder_forward.5} parent=11 // pred_check_branch
        %652 = sbr.rel (%p650) target = $region96
      $region95: #{decoder_forward.5} parent=11 // pred_region
        _
      $region96: #{decoder_forward.5} parent=11 // pred_fallthru
        _
    $region12: #{decoder_forward.5} parent=5 // pred_fallthru
      _
    %p653 = scmp.lt.s32.totalorder %s30, 2
    // Predicated region
    $region97: #{decoder_forward.5} parent=5 // pred_check
      %p654 = pneg %p653
    $region98: #{decoder_forward.5} parent=5 // pred_check_branch
      %656 = sbr.rel (%p654) target = $region100
    $region99: #{decoder_forward.5} parent=5 // pred_region
      // Predicated region
      $region101: #{decoder_forward.5} parent=99 // pred_check
        %p657 = pneg %p50
      $region102: #{decoder_forward.5} parent=99 // pred_check_branch
        %659 = sbr.rel (%p657) target = $region104
      $region103: #{decoder_forward.5} parent=99 // pred_region
        %p660 = scmp.lt.s32.totalorder %s30, 1
        %s661 = scalar_select %p660, %s30, 1
        %s662 = smul.addr %s661, 8
        %s663 = scalar_lea.vmem %s0, %s662
      $region104: #{decoder_forward.5} parent=99 // pred_fallthru
        _
      // Predicated region
      $region105: #{decoder_forward.5} parent=99 // pred_check
        %p664 = pneg %p76
      $region106: #{decoder_forward.5} parent=99 // pred_check_branch
        %666 = sbr.rel (%p664) target = $region108
      $region107: #{decoder_forward.5} parent=99 // pred_region
        %p667 = scmp.lt.s32.totalorder %s30, 1
        %s668 = scalar_select %p667, %s30, 1
        %s669 = smul.addr %s668, 2
        %s670 = smul.addr %s669, 8
        %s671 = scalar_lea.vmem %s1, %s670
      $region108: #{decoder_forward.5} parent=99 // pred_fallthru
        _
      // Predicated region
      $region109: #{decoder_forward.5} parent=99 // pred_check
        %p672 = pneg %p123
      $region110: #{decoder_forward.5} parent=99 // pred_check_branch
        %674 = sbr.rel (%p672) target = $region112
      $region111: #{decoder_forward.5} parent=99 // pred_region
        %p675 = scmp.lt.s32.totalorder %s30, 1
        %s676 = scalar_select %p675, %s30, 1
        %s677 = scalar_lea.vmem %s3, %s676
      $region112: #{decoder_forward.5} parent=99 // pred_fallthru
        _
    $region100: #{decoder_forward.5} parent=5 // pred_fallthru
      _
    %p678 = scmp.le.s32.totalorder 1, %s30
    %p679 = scmp.lt.s32.totalorder %s30, 3
    %p680 = pnand %p678, %p679
    %p681 = pneg %p680
    // Predicated region
    $region113: #{decoder_forward.5} parent=5 // pred_check
      _
    $region114: #{decoder_forward.5} parent=5 // pred_check_branch
      %683 = sbr.rel (%p680) target = $region116
    $region115: #{decoder_forward.5} parent=5 // pred_region
      %s684 = ssub.s32 %s30, 1
      %p685 = scmp.lt.s32.totalorder %s35, 1
      %s686 = scalar_select %p685, %s35, 1
      %s687 = smul.addr %s686, 8
      %s688 = scalar_lea.vmem %s0, %s687
      %p689 = pneg %p56
      %p690 = pneg %p53
      %p691 = scmp.lt.s32.totalorder %s35, 1
      %s692 = scalar_select %p691, %s35, 1
      %s693 = smul.addr %s692, 2
      %s694 = smul.addr %s693, 8
      %s695 = scalar_lea.vmem %s1, %s694
      %p696 = pneg %p82
      %p697 = pneg %p79
      %p698 = pneg %p103
      %p699 = pneg %p100
      %p700 = scmp.lt.s32.totalorder %s35, 1
      %s701 = scalar_select %p700, %s35, 1
      %s702 = scalar_lea.vmem %s3, %s701
      %p703 = pneg %p129
      %p704 = pneg %p126
      %p705 = pneg %p150
      %p706 = pneg %p147
      %p707 = pneg %p171
      %p708 = pneg %p168
      %p709 = pneg %p192
      %p710 = pneg %p189
      %p711 = pneg %p213
      %p712 = pneg %p210
      %p713 = pneg %p234
      %p714 = pneg %p231
      %p715 = pneg %p255
      %p716 = pneg %p252
      %p717 = pneg %p276
      %p718 = pneg %p273
      %p719 = pneg %p297
      %p720 = pneg %p294
      %p721 = pneg %p318
      %p722 = pneg %p315
      %p723 = pneg %p339
      %p724 = pneg %p336
      %p725 = pneg %p360
      %p726 = pneg %p357
      %p727 = pneg %p381
      %p728 = pneg %p378
      %p729 = pneg %p402
      %p730 = pneg %p399
      %p731 = pneg %p423
      %p732 = pneg %p420
      %p733 = pneg %p444
      %p734 = pneg %p441
      %p735 = pneg %p465
      %p736 = pneg %p462
      %p737 = pneg %p486
      %p738 = pneg %p483
      %p739 = pneg %p507
      %p740 = pneg %p504
      %p741 = pneg %p528
      %p742 = pneg %p525
      %p743 = pneg %p549
      %p744 = pneg %p546
      %p745 = pneg %p575
      %p746 = pneg %p572
      %p747 = scmp.lt.s32.totalorder %s35, 1
      %s748 = scalar_select %p747, %s35, 1
      %s749 = smul.addr %s748, 8
      %s750 = scalar_lea.vmem %s24, %s749
      %p751 = scmp.lt.s32.totalorder %s35, 1
      %s752 = scalar_select %p751, %s35, 1
      %s753 = smul.addr %s752, 8
      %s754 = scalar_lea.vmem %s0, %s753
      %p755 = scmp.lt.s32.totalorder %s35, 1
      %s756 = scalar_select %p755, %s35, 1
      %s757 = smul.addr %s756, 2
      %s758 = smul.addr %s757, 8
      %s759 = scalar_lea.vmem %s1, %s758
      %p760 = scmp.lt.s32.totalorder %s35, 1
      %s761 = scalar_select %p760, %s35, 1
      %s762 = scalar_lea.vmem %s3, %s761
      %p763 = scmp.lt.s32.totalorder %s35, 1
      %s764 = scalar_select %p763, %s35, 1
      %s765 = smul.addr %s764, 8
      %s766 = scalar_lea.vmem %s24, %s765
      %v767 = vld [vmem:[%s754] sm:$0xff]
      %v768 = vld [vmem:[%s759] sm:$0xff]
      %v769 = vld [vmem:[%s759 + $0x8] sm:$0xf]
      %v770 = vld [vmem:[%s4] sm:$0xff]
      %v771 = vld [vmem:[%s4 + $0x8] sm:$0xff]
      %v772 = vld [vmem:[%s4 + $0x10] sm:$0xff]
      %v773 = vld [vmem:[%s4 + $0x18] sm:$0xff]
      %v774 = vld [vmem:[%s5] sm:$0x1]
      %v776 = vlaneseq
      %v777 = vshrl.u32 %v776, 7
      %v778 = vsub.s32 0, %v777
      %v779 = vrot.slane %v774, %v778
      %vm781 = vcmask 261120
      %v783 = vsel %vm781, %v767, 0
      %785 = vmatprep.subr.mxu0 0.0
      %786 = vmatpush1.msra.mxu0 0.0
      %787 = vmatprep.subr.mxu0 0.0
      %788 = vmatpush1.msra.mxu0 0.0
      %789 = vmatprep.subr.mxu0 0.0
      %790 = vmatpush1.msra.mxu0 0.0
      %791 = vmatprep.subr.mxu0 0.0
      %792 = vmatpush1.msra.mxu0 0.0
      %793 = vmatprep.subr.mxu0 0.0
      %794 = vmatpush1.msra.mxu0 0.0
      %795 = vmatprep.subr.mxu0 0.0
      %796 = vmatpush1.msra.mxu0 0.0
      %797 = vmatprep.subr.mxu0 0.0
      %798 = vmatpush1.msra.mxu0 0.0
      %799 = vmatprep.subr.mxu0 0.0
      %800 = vmatpush1.msra.mxu0 0.0
      %801 = vmatprep.subr.mxu0 0.0
      %802 = vmatpush1.msra.mxu0 0.0
      %803 = vmatprep.subr.mxu0 0.0
      %804 = vmatpush1.msra.mxu0 0.0
      %805 = vmatprep.subr.mxu0 0.0
      %806 = vmatpush1.msra.mxu0 0.0
      %807 = vmatprep.subr.mxu0 0.0
      %808 = vmatpush1.msra.mxu0 0.0
      %809 = vmatprep.subr.mxu0 0.0
      %810 = vmatpush1.msra.mxu0 %v773
      %811 = vmatprep.subr.mxu0 0.0
      %812 = vmatpush1.msra.mxu0 %v772
      %813 = vmatprep.subr.mxu0 0.0
      %814 = vmatpush1.msra.mxu0 %v771
      %815 = vmatprep.subr.mxu0 0.0
      %816 = vmatpush1.msra.mxu0 %v770
      %817 = vmatprep.subr.mxu0 0.0
      %818 = vmatpush2.msra.mxu0 0.0
      %819 = vmatprep.subr.mxu0 0.0
      %820 = vmatpush2.msra.mxu0 0.0
      %821 = vmatprep.subr.mxu0 0.0
      %822 = vmatpush2.msra.mxu0 0.0
      %823 = vmatprep.subr.mxu0 0.0
      %824 = vmatpush2.msra.mxu0 0.0
      %825 = vmatprep.subr.mxu0 0.0
      %826 = vmatpush2.msra.mxu0 0.0
      %827 = vmatprep.subr.mxu0 0.0
      %828 = vmatpush2.msra.mxu0 0.0
      %829 = vmatprep.subr.mxu0 0.0
      %830 = vmatpush2.msra.mxu0 0.0
      %831 = vmatprep.subr.mxu0 0.0
      %832 = vmatpush2.msra.mxu0 0.0
      %833 = vmatprep.subr.mxu0 0.0
      %834 = vmatpush2.msra.mxu0 0.0
      %835 = vmatprep.subr.mxu0 0.0
      %836 = vmatpush2.msra.mxu0 0.0
      %837 = vmatprep.subr.mxu0 0.0
      %838 = vmatpush2.msra.mxu0 0.0
      %839 = vmatprep.subr.mxu0 0.0
      %840 = vmatpush2.msra.mxu0 0.0
      %841 = vmatprep.subr.mxu0 0.0
      %842 = vmatpush2.msra.mxu0 0.0
      %843 = vmatprep.subr.mxu0 0.0
      %844 = vmatpush2.msra.mxu0 0.0
      %845 = vmatprep.subr.mxu0 0.0
      %846 = vmatpush2.msra.mxu0 0.0
      %847 = vmatprep.subr.mxu0 0.0
      %848 = vmatpush2.msra.mxu0 0.0
      %849 = vmatprep.mubr.f32.mxu0 0.0
      %850 = vmatmul.mubr.f32.gmra.mxu0 %v783
      %v851 = vpop.f32.mrf.mxu0
      %v852 = vadd.f32 %v779, %v851
      %v853 = vpop.f32.mrf.mxu0
      %854 = vdwg.mxu0
      %v855 = vld [vmem:[%s2] sm:$0xff]
      %857 = vrot.lane.b32.xlu0 %v852, 96
      %v858 = vpop.permute.xlu0 %857
      %vm859 = vcmask 64512
      %v860 = vsel %vm859, %v852, 0
      %v862 = vsel %vm859, %v858, 0
      %864 = vmatprep.subr.mxu0 0.0
      %865 = vmatpush1.xpose.msra.mxu0 0.0
      %866 = vmatprep.subr.mxu0 0.0
      %867 = vmatpush1.xpose.msra.mxu0 0.0
      %868 = vmatprep.subr.mxu0 0.0
      %869 = vmatpush1.xpose.msra.mxu0 0.0
      %870 = vmatprep.subr.mxu0 0.0
      %871 = vmatpush1.xpose.msra.mxu0 0.0
      %872 = vmatprep.subr.mxu0 0.0
      %873 = vmatpush1.xpose.msra.mxu0 0.0
      %874 = vmatprep.subr.mxu0 0.0
      %875 = vmatpush1.xpose.msra.mxu0 0.0
      %876 = vmatprep.subr.mxu0 0.0
      %877 = vmatpush1.xpose.msra.mxu0 0.0
      %878 = vmatprep.subr.mxu0 0.0
      %879 = vmatpush1.xpose.msra.mxu0 0.0
      %880 = vmatprep.subr.mxu0 0.0
      %881 = vmatpush1.xpose.msra.mxu0 0.0
      %882 = vmatprep.subr.mxu0 0.0
      %883 = vmatpush1.xpose.msra.mxu0 0.0
      %884 = vmatprep.subr.mxu0 0.0
      %885 = vmatpush1.xpose.msra.mxu0 0.0
      %886 = vmatprep.subr.mxu0 0.0
      %887 = vmatpush1.xpose.msra.mxu0 0.0
      %888 = vmatprep.subr.mxu0 0.0
      %889 = vmatpush1.xpose.msra.mxu0 0.0
      %890 = vmatprep.subr.mxu0 0.0
      %891 = vmatpush1.xpose.msra.mxu0 0.0
      %892 = vmatprep.subr.mxu0 0.0
      %893 = vmatpush1.xpose.msra.mxu0 0.0
      %894 = vmatprep.subr.mxu0 0.0
      %895 = vmatpush1.xpose.msra.mxu0 %v862
      %896 = vmatprep.subr.mxu0 0.0
      %897 = vmatpush2.xpose.msra.mxu0 0.0
      %898 = vmatprep.subr.mxu0 0.0
      %899 = vmatpush2.xpose.msra.mxu0 0.0
      %900 = vmatprep.subr.mxu0 0.0
      %901 = vmatpush2.xpose.msra.mxu0 0.0
      %902 = vmatprep.subr.mxu0 0.0
      %903 = vmatpush2.xpose.msra.mxu0 0.0
      %904 = vmatprep.subr.mxu0 0.0
      %905 = vmatpush2.xpose.msra.mxu0 0.0
      %906 = vmatprep.subr.mxu0 0.0
      %907 = vmatpush2.xpose.msra.mxu0 0.0
      %908 = vmatprep.subr.mxu0 0.0
      %909 = vmatpush2.xpose.msra.mxu0 0.0
      %910 = vmatprep.subr.mxu0 0.0
      %911 = vmatpush2.xpose.msra.mxu0 0.0
      %912 = vmatprep.subr.mxu0 0.0
      %913 = vmatpush2.xpose.msra.mxu0 0.0
      %914 = vmatprep.subr.mxu0 0.0
      %915 = vmatpush2.xpose.msra.mxu0 0.0
      %916 = vmatprep.subr.mxu0 0.0
      %917 = vmatpush2.xpose.msra.mxu0 0.0
      %918 = vmatprep.subr.mxu0 0.0
      %919 = vmatpush2.xpose.msra.mxu0 0.0
      %920 = vmatprep.subr.mxu0 0.0
      %921 = vmatpush2.xpose.msra.mxu0 0.0
      %922 = vmatprep.subr.mxu0 0.0
      %923 = vmatpush2.xpose.msra.mxu0 0.0
      %924 = vmatprep.subr.mxu0 0.0
      %925 = vmatpush2.xpose.msra.mxu0 0.0
      %926 = vmatprep.subr.mxu0 0.0
      %927 = vmatpush2.xpose.msra.mxu0 0.0
      %928 = vmatprep.mubr.f32.mxu0 0.0
      %929 = vmatmul.mubr.f32.gmra.mxu0 %v860
      %v930 = vpop.f32.mrf.mxu0
      %v931 = vadd.f32 0.0, %v930
      %v932 = vpop.f32.mrf.mxu0
      %933 = vdwg.mxu0
      %v934 = vmul.f32 %v931, 0.17677669
      %v935 = vadd.f32 %v934, %v855
      %v936 = vsel %vm859, %v935, -inf
      %937 = vmax.xlane.f32.xlu0 %v936
      %v938 = vpop.xlane.xlu0 %937
      %v939 = vsub.f32 %v935, %v938
      %v940 = vmul.f32 %v939, 1.442695
      %v941 = vpow.pop %v940
      %v942 = vsel %vm859, %v941, 0.0
      %943 = vadd.xlane.f32.xlu0 %v942
      %v944 = vpop.xlane.xlu0 %943
      %v945 = vrcp.pop %v944
      %v946 = vmul.f32 %v941, %v945
      %947 = vrot.lane.b32.xlu0 %v852, 64
      %v948 = vpop.permute.xlu0 %947
      %v951 = vsel %vm859, %v946, 0
      %953 = vmatprep.subr.mxu0 0.0
      %954 = vmatpush1.msra.mxu0 0.0
      %955 = vmatprep.subr.mxu0 0.0
      %956 = vmatpush1.msra.mxu0 0.0
      %957 = vmatprep.subr.mxu0 0.0
      %958 = vmatpush1.msra.mxu0 0.0
      %959 = vmatprep.subr.mxu0 0.0
      %960 = vmatpush1.msra.mxu0 0.0
      %961 = vmatprep.subr.mxu0 0.0
      %962 = vmatpush1.msra.mxu0 0.0
      %963 = vmatprep.subr.mxu0 0.0
      %964 = vmatpush1.msra.mxu0 0.0
      %965 = vmatprep.subr.mxu0 0.0
      %966 = vmatpush1.msra.mxu0 0.0
      %967 = vmatprep.subr.mxu0 0.0
      %968 = vmatpush1.msra.mxu0 0.0
      %969 = vmatprep.subr.mxu0 0.0
      %970 = vmatpush1.msra.mxu0 0.0
      %971 = vmatprep.subr.mxu0 0.0
      %972 = vmatpush1.msra.mxu0 0.0
      %973 = vmatprep.subr.mxu0 0.0
      %974 = vmatpush1.msra.mxu0 0.0
      %975 = vmatprep.subr.mxu0 0.0
      %976 = vmatpush1.msra.mxu0 0.0
      %977 = vmatprep.subr.mxu0 0.0
      %978 = vmatpush1.msra.mxu0 0.0
      %979 = vmatprep.subr.mxu0 0.0
      %980 = vmatpush1.msra.mxu0 0.0
      %981 = vmatprep.subr.mxu0 0.0
      %982 = vmatpush1.msra.mxu0 0.0
      %983 = vmatprep.subr.mxu0 0.0
      %984 = vmatpush1.msra.mxu0 %v948
      %985 = vmatprep.subr.mxu0 0.0
      %986 = vmatpush2.msra.mxu0 0.0
      %987 = vmatprep.subr.mxu0 0.0
      %988 = vmatpush2.msra.mxu0 0.0
      %989 = vmatprep.subr.mxu0 0.0
      %990 = vmatpush2.msra.mxu0 0.0
      %991 = vmatprep.subr.mxu0 0.0
      %992 = vmatpush2.msra.mxu0 0.0
      %993 = vmatprep.subr.mxu0 0.0
      %994 = vmatpush2.msra.mxu0 0.0
      %995 = vmatprep.subr.mxu0 0.0
      %996 = vmatpush2.msra.mxu0 0.0
      %997 = vmatprep.subr.mxu0 0.0
      %998 = vmatpush2.msra.mxu0 0.0
      %999 = vmatprep.subr.mxu0 0.0
      %1000 = vmatpush2.msra.mxu0 0.0
      %1001 = vmatprep.subr.mxu0 0.0
      %1002 = vmatpush2.msra.mxu0 0.0
      %1003 = vmatprep.subr.mxu0 0.0
      %1004 = vmatpush2.msra.mxu0 0.0
      %1005 = vmatprep.subr.mxu0 0.0
      %1006 = vmatpush2.msra.mxu0 0.0
      %1007 = vmatprep.subr.mxu0 0.0
      %1008 = vmatpush2.msra.mxu0 0.0
      %1009 = vmatprep.subr.mxu0 0.0
      %1010 = vmatpush2.msra.mxu0 0.0
      %1011 = vmatprep.subr.mxu0 0.0
      %1012 = vmatpush2.msra.mxu0 0.0
      %1013 = vmatprep.subr.mxu0 0.0
      %1014 = vmatpush2.msra.mxu0 0.0
      %1015 = vmatprep.subr.mxu0 0.0
      %1016 = vmatpush2.msra.mxu0 0.0
      %1017 = vmatprep.mubr.f32.mxu0 0.0
      %1018 = vmatmul.mubr.f32.gmra.mxu0 %v951
      %v1019 = vpop.f32.mrf.mxu0
      %v1020 = vadd.f32 0.0, %v1019
      %v1021 = vpop.f32.mrf.mxu0
      %1022 = vdwg.mxu0
      %1023 = vrot.lane.b32.xlu0 %v852, 120
      %v1024 = vpop.permute.xlu0 %1023
      %1025 = vrot.lane.b32.xlu0 %v852, 88
      %v1026 = vpop.permute.xlu0 %1025
      %v1027 = vsel %vm859, %v1024, 0
      %v1029 = vsel %vm859, %v1026, 0
      %1031 = vmatprep.subr.mxu0 0.0
      %1032 = vmatpush1.xpose.msra.mxu0 0.0
      %1033 = vmatprep.subr.mxu0 0.0
      %1034 = vmatpush1.xpose.msra.mxu0 0.0
      %1035 = vmatprep.subr.mxu0 0.0
      %1036 = vmatpush1.xpose.msra.mxu0 0.0
      %1037 = vmatprep.subr.mxu0 0.0
      %1038 = vmatpush1.xpose.msra.mxu0 0.0
      %1039 = vmatprep.subr.mxu0 0.0
      %1040 = vmatpush1.xpose.msra.mxu0 0.0
      %1041 = vmatprep.subr.mxu0 0.0
      %1042 = vmatpush1.xpose.msra.mxu0 0.0
      %1043 = vmatprep.subr.mxu0 0.0
      %1044 = vmatpush1.xpose.msra.mxu0 0.0
      %1045 = vmatprep.subr.mxu0 0.0
      %1046 = vmatpush1.xpose.msra.mxu0 0.0
      %1047 = vmatprep.subr.mxu0 0.0
      %1048 = vmatpush1.xpose.msra.mxu0 0.0
      %1049 = vmatprep.subr.mxu0 0.0
      %1050 = vmatpush1.xpose.msra.mxu0 0.0
      %1051 = vmatprep.subr.mxu0 0.0
      %1052 = vmatpush1.xpose.msra.mxu0 0.0
      %1053 = vmatprep.subr.mxu0 0.0
      %1054 = vmatpush1.xpose.msra.mxu0 0.0
      %1055 = vmatprep.subr.mxu0 0.0
      %1056 = vmatpush1.xpose.msra.mxu0 0.0
      %1057 = vmatprep.subr.mxu0 0.0
      %1058 = vmatpush1.xpose.msra.mxu0 0.0
      %1059 = vmatprep.subr.mxu0 0.0
      %1060 = vmatpush1.xpose.msra.mxu0 0.0
      %1061 = vmatprep.subr.mxu0 0.0
      %1062 = vmatpush1.xpose.msra.mxu0 %v1029
      %1063 = vmatprep.subr.mxu0 0.0
      %1064 = vmatpush2.xpose.msra.mxu0 0.0
      %1065 = vmatprep.subr.mxu0 0.0
      %1066 = vmatpush2.xpose.msra.mxu0 0.0
      %1067 = vmatprep.subr.mxu0 0.0
      %1068 = vmatpush2.xpose.msra.mxu0 0.0
      %1069 = vmatprep.subr.mxu0 0.0
      %1070 = vmatpush2.xpose.msra.mxu0 0.0
      %1071 = vmatprep.subr.mxu0 0.0
      %1072 = vmatpush2.xpose.msra.mxu0 0.0
      %1073 = vmatprep.subr.mxu0 0.0
      %1074 = vmatpush2.xpose.msra.mxu0 0.0
      %1075 = vmatprep.subr.mxu0 0.0
      %1076 = vmatpush2.xpose.msra.mxu0 0.0
      %1077 = vmatprep.subr.mxu0 0.0
      %1078 = vmatpush2.xpose.msra.mxu0 0.0
      %1079 = vmatprep.subr.mxu0 0.0
      %1080 = vmatpush2.xpose.msra.mxu0 0.0
      %1081 = vmatprep.subr.mxu0 0.0
      %1082 = vmatpush2.xpose.msra.mxu0 0.0
      %1083 = vmatprep.subr.mxu0 0.0
      %1084 = vmatpush2.xpose.msra.mxu0 0.0
      %1085 = vmatprep.subr.mxu0 0.0
      %1086 = vmatpush2.xpose.msra.mxu0 0.0
      %1087 = vmatprep.subr.mxu0 0.0
      %1088 = vmatpush2.xpose.msra.mxu0 0.0
      %1089 = vmatprep.subr.mxu0 0.0
      %1090 = vmatpush2.xpose.msra.mxu0 0.0
      %1091 = vmatprep.subr.mxu0 0.0
      %1092 = vmatpush2.xpose.msra.mxu0 0.0
      %1093 = vmatprep.subr.mxu0 0.0
      %1094 = vmatpush2.xpose.msra.mxu0 0.0
      %1095 = vmatprep.mubr.f32.mxu0 0.0
      %1096 = vmatmul.mubr.f32.gmra.mxu0 %v1027
      %v1097 = vpop.f32.mrf.mxu0
      %v1098 = vadd.f32 0.0, %v1097
      %v1099 = vpop.f32.mrf.mxu0
      %1100 = vdwg.mxu0
      %v1101 = vmul.f32 %v1098, 0.17677669
      %v1102 = vadd.f32 %v1101, %v855
      %v1103 = vsel %vm859, %v1102, -inf
      %1104 = vmax.xlane.f32.xlu0 %v1103
      %v1105 = vpop.xlane.xlu0 %1104
      %v1106 = vsub.f32 %v1102, %v1105
      %v1107 = vmul.f32 %v1106, 1.442695
      %v1108 = vpow.pop %v1107
      %v1109 = vsel %vm859, %v1108, 0.0
      %1110 = vadd.xlane.f32.xlu0 %v1109
      %v1111 = vpop.xlane.xlu0 %1110
      %v1112 = vrcp.pop %v1111
      %v1113 = vmul.f32 %v1108, %v1112
      %1114 = vrot.lane.b32.xlu0 %v852, 56
      %v1115 = vpop.permute.xlu0 %1114
      %v1118 = vsel %vm859, %v1113, 0
      %1120 = vmatprep.subr.mxu0 0.0
      %1121 = vmatpush1.msra.mxu0 0.0
      %1122 = vmatprep.subr.mxu0 0.0
      %1123 = vmatpush1.msra.mxu0 0.0
      %1124 = vmatprep.subr.mxu0 0.0
      %1125 = vmatpush1.msra.mxu0 0.0
      %1126 = vmatprep.subr.mxu0 0.0
      %1127 = vmatpush1.msra.mxu0 0.0
      %1128 = vmatprep.subr.mxu0 0.0
      %1129 = vmatpush1.msra.mxu0 0.0
      %1130 = vmatprep.subr.mxu0 0.0
      %1131 = vmatpush1.msra.mxu0 0.0
      %1132 = vmatprep.subr.mxu0 0.0
      %1133 = vmatpush1.msra.mxu0 0.0
      %1134 = vmatprep.subr.mxu0 0.0
      %1135 = vmatpush1.msra.mxu0 0.0
      %1136 = vmatprep.subr.mxu0 0.0
      %1137 = vmatpush1.msra.mxu0 0.0
      %1138 = vmatprep.subr.mxu0 0.0
      %1139 = vmatpush1.msra.mxu0 0.0
      %1140 = vmatprep.subr.mxu0 0.0
      %1141 = vmatpush1.msra.mxu0 0.0
      %1142 = vmatprep.subr.mxu0 0.0
      %1143 = vmatpush1.msra.mxu0 0.0
      %1144 = vmatprep.subr.mxu0 0.0
      %1145 = vmatpush1.msra.mxu0 0.0
      %1146 = vmatprep.subr.mxu0 0.0
      %1147 = vmatpush1.msra.mxu0 0.0
      %1148 = vmatprep.subr.mxu0 0.0
      %1149 = vmatpush1.msra.mxu0 0.0
      %1150 = vmatprep.subr.mxu0 0.0
      %1151 = vmatpush1.msra.mxu0 %v1115
      %1152 = vmatprep.subr.mxu0 0.0
      %1153 = vmatpush2.msra.mxu0 0.0
      %1154 = vmatprep.subr.mxu0 0.0
      %1155 = vmatpush2.msra.mxu0 0.0
      %1156 = vmatprep.subr.mxu0 0.0
      %1157 = vmatpush2.msra.mxu0 0.0
      %1158 = vmatprep.subr.mxu0 0.0
      %1159 = vmatpush2.msra.mxu0 0.0
      %1160 = vmatprep.subr.mxu0 0.0
      %1161 = vmatpush2.msra.mxu0 0.0
      %1162 = vmatprep.subr.mxu0 0.0
      %1163 = vmatpush2.msra.mxu0 0.0
      %1164 = vmatprep.subr.mxu0 0.0
      %1165 = vmatpush2.msra.mxu0 0.0
      %1166 = vmatprep.subr.mxu0 0.0
      %1167 = vmatpush2.msra.mxu0 0.0
      %1168 = vmatprep.subr.mxu0 0.0
      %1169 = vmatpush2.msra.mxu0 0.0
      %1170 = vmatprep.subr.mxu0 0.0
      %1171 = vmatpush2.msra.mxu0 0.0
      %1172 = vmatprep.subr.mxu0 0.0
      %1173 = vmatpush2.msra.mxu0 0.0
      %1174 = vmatprep.subr.mxu0 0.0
      %1175 = vmatpush2.msra.mxu0 0.0
      %1176 = vmatprep.subr.mxu0 0.0
      %1177 = vmatpush2.msra.mxu0 0.0
      %1178 = vmatprep.subr.mxu0 0.0
      %1179 = vmatpush2.msra.mxu0 0.0
      %1180 = vmatprep.subr.mxu0 0.0
      %1181 = vmatpush2.msra.mxu0 0.0
      %1182 = vmatprep.subr.mxu0 0.0
      %1183 = vmatpush2.msra.mxu0 0.0
      %1184 = vmatprep.mubr.f32.mxu0 0.0
      %1185 = vmatmul.mubr.f32.gmra.mxu0 %v1118
      %v1186 = vpop.f32.mrf.mxu0
      %v1187 = vadd.f32 0.0, %v1186
      %v1188 = vpop.f32.mrf.mxu0
      %1189 = vdwg.mxu0
      %1190 = vrot.lane.b32.xlu0 %v852, 112
      %v1191 = vpop.permute.xlu0 %1190
      %1192 = vrot.lane.b32.xlu0 %v852, 80
      %v1193 = vpop.permute.xlu0 %1192
      %v1194 = vsel %vm859, %v1191, 0
      %v1196 = vsel %vm859, %v1193, 0
      %1198 = vmatprep.subr.mxu0 0.0
      %1199 = vmatpush1.xpose.msra.mxu0 0.0
      %1200 = vmatprep.subr.mxu0 0.0
      %1201 = vmatpush1.xpose.msra.mxu0 0.0
      %1202 = vmatprep.subr.mxu0 0.0
      %1203 = vmatpush1.xpose.msra.mxu0 0.0
      %1204 = vmatprep.subr.mxu0 0.0
      %1205 = vmatpush1.xpose.msra.mxu0 0.0
      %1206 = vmatprep.subr.mxu0 0.0
      %1207 = vmatpush1.xpose.msra.mxu0 0.0
      %1208 = vmatprep.subr.mxu0 0.0
      %1209 = vmatpush1.xpose.msra.mxu0 0.0
      %1210 = vmatprep.subr.mxu0 0.0
      %1211 = vmatpush1.xpose.msra.mxu0 0.0
      %1212 = vmatprep.subr.mxu0 0.0
      %1213 = vmatpush1.xpose.msra.mxu0 0.0
      %1214 = vmatprep.subr.mxu0 0.0
      %1215 = vmatpush1.xpose.msra.mxu0 0.0
      %1216 = vmatprep.subr.mxu0 0.0
      %1217 = vmatpush1.xpose.msra.mxu0 0.0
      %1218 = vmatprep.subr.mxu0 0.0
      %1219 = vmatpush1.xpose.msra.mxu0 0.0
      %1220 = vmatprep.subr.mxu0 0.0
      %1221 = vmatpush1.xpose.msra.mxu0 0.0
      %1222 = vmatprep.subr.mxu0 0.0
      %1223 = vmatpush1.xpose.msra.mxu0 0.0
      %1224 = vmatprep.subr.mxu0 0.0
      %1225 = vmatpush1.xpose.msra.mxu0 0.0
      %1226 = vmatprep.subr.mxu0 0.0
      %1227 = vmatpush1.xpose.msra.mxu0 0.0
      %1228 = vmatprep.subr.mxu0 0.0
      %1229 = vmatpush1.xpose.msra.mxu0 %v1196
      %1230 = vmatprep.subr.mxu0 0.0
      %1231 = vmatpush2.xpose.msra.mxu0 0.0
      %1232 = vmatprep.subr.mxu0 0.0
      %1233 = vmatpush2.xpose.msra.mxu0 0.0
      %1234 = vmatprep.subr.mxu0 0.0
      %1235 = vmatpush2.xpose.msra.mxu0 0.0
      %1236 = vmatprep.subr.mxu0 0.0
      %1237 = vmatpush2.xpose.msra.mxu0 0.0
      %1238 = vmatprep.subr.mxu0 0.0
      %1239 = vmatpush2.xpose.msra.mxu0 0.0
      %1240 = vmatprep.subr.mxu0 0.0
      %1241 = vmatpush2.xpose.msra.mxu0 0.0
      %1242 = vmatprep.subr.mxu0 0.0
      %1243 = vmatpush2.xpose.msra.mxu0 0.0
      %1244 = vmatprep.subr.mxu0 0.0
      %1245 = vmatpush2.xpose.msra.mxu0 0.0
      %1246 = vmatprep.subr.mxu0 0.0
      %1247 = vmatpush2.xpose.msra.mxu0 0.0
      %1248 = vmatprep.subr.mxu0 0.0
      %1249 = vmatpush2.xpose.msra.mxu0 0.0
      %1250 = vmatprep.subr.mxu0 0.0
      %1251 = vmatpush2.xpose.msra.mxu0 0.0
      %1252 = vmatprep.subr.mxu0 0.0
      %1253 = vmatpush2.xpose.msra.mxu0 0.0
      %1254 = vmatprep.subr.mxu0 0.0
      %1255 = vmatpush2.xpose.msra.mxu0 0.0
      %1256 = vmatprep.subr.mxu0 0.0
      %1257 = vmatpush2.xpose.msra.mxu0 0.0
      %1258 = vmatprep.subr.mxu0 0.0
      %1259 = vmatpush2.xpose.msra.mxu0 0.0
      %1260 = vmatprep.subr.mxu0 0.0
      %1261 = vmatpush2.xpose.msra.mxu0 0.0
      %1262 = vmatprep.mubr.f32.mxu0 0.0
      %1263 = vmatmul.mubr.f32.gmra.mxu0 %v1194
      %v1264 = vpop.f32.mrf.mxu0
      %v1265 = vadd.f32 0.0, %v1264
      %v1266 = vpop.f32.mrf.mxu0
      %1267 = vdwg.mxu0
      %v1268 = vmul.f32 %v1265, 0.17677669
      %v1269 = vadd.f32 %v1268, %v855
      %v1270 = vsel %vm859, %v1269, -inf
      %1271 = vmax.xlane.f32.xlu0 %v1270
      %v1272 = vpop.xlane.xlu0 %1271
      %v1273 = vsub.f32 %v1269, %v1272
      %v1274 = vmul.f32 %v1273, 1.442695
      %v1275 = vpow.pop %v1274
      %v1276 = vsel %vm859, %v1275, 0.0
      %1277 = vadd.xlane.f32.xlu0 %v1276
      %v1278 = vpop.xlane.xlu0 %1277
      %v1279 = vrcp.pop %v1278
      %v1280 = vmul.f32 %v1275, %v1279
      %1281 = vrot.lane.b32.xlu0 %v852, 48
      %v1282 = vpop.permute.xlu0 %1281
      %v1285 = vsel %vm859, %v1280, 0
      %1287 = vmatprep.subr.mxu0 0.0
      %1288 = vmatpush1.msra.mxu0 0.0
      %1289 = vmatprep.subr.mxu0 0.0
      %1290 = vmatpush1.msra.mxu0 0.0
      %1291 = vmatprep.subr.mxu0 0.0
      %1292 = vmatpush1.msra.mxu0 0.0
      %1293 = vmatprep.subr.mxu0 0.0
      %1294 = vmatpush1.msra.mxu0 0.0
      %1295 = vmatprep.subr.mxu0 0.0
      %1296 = vmatpush1.msra.mxu0 0.0
      %1297 = vmatprep.subr.mxu0 0.0
      %1298 = vmatpush1.msra.mxu0 0.0
      %1299 = vmatprep.subr.mxu0 0.0
      %1300 = vmatpush1.msra.mxu0 0.0
      %1301 = vmatprep.subr.mxu0 0.0
      %1302 = vmatpush1.msra.mxu0 0.0
      %1303 = vmatprep.subr.mxu0 0.0
      %1304 = vmatpush1.msra.mxu0 0.0
      %1305 = vmatprep.subr.mxu0 0.0
      %1306 = vmatpush1.msra.mxu0 0.0
      %1307 = vmatprep.subr.mxu0 0.0
      %1308 = vmatpush1.msra.mxu0 0.0
      %1309 = vmatprep.subr.mxu0 0.0
      %1310 = vmatpush1.msra.mxu0 0.0
      %1311 = vmatprep.subr.mxu0 0.0
      %1312 = vmatpush1.msra.mxu0 0.0
      %1313 = vmatprep.subr.mxu0 0.0
      %1314 = vmatpush1.msra.mxu0 0.0
      %1315 = vmatprep.subr.mxu0 0.0
      %1316 = vmatpush1.msra.mxu0 0.0
      %1317 = vmatprep.subr.mxu0 0.0
      %1318 = vmatpush1.msra.mxu0 %v1282
      %1319 = vmatprep.subr.mxu0 0.0
      %1320 = vmatpush2.msra.mxu0 0.0
      %1321 = vmatprep.subr.mxu0 0.0
      %1322 = vmatpush2.msra.mxu0 0.0
      %1323 = vmatprep.subr.mxu0 0.0
      %1324 = vmatpush2.msra.mxu0 0.0
      %1325 = vmatprep.subr.mxu0 0.0
      %1326 = vmatpush2.msra.mxu0 0.0
      %1327 = vmatprep.subr.mxu0 0.0
      %1328 = vmatpush2.msra.mxu0 0.0
      %1329 = vmatprep.subr.mxu0 0.0
      %1330 = vmatpush2.msra.mxu0 0.0
      %1331 = vmatprep.subr.mxu0 0.0
      %1332 = vmatpush2.msra.mxu0 0.0
      %1333 = vmatprep.subr.mxu0 0.0
      %1334 = vmatpush2.msra.mxu0 0.0
      %1335 = vmatprep.subr.mxu0 0.0
      %1336 = vmatpush2.msra.mxu0 0.0
      %1337 = vmatprep.subr.mxu0 0.0
      %1338 = vmatpush2.msra.mxu0 0.0
      %1339 = vmatprep.subr.mxu0 0.0
      %1340 = vmatpush2.msra.mxu0 0.0
      %1341 = vmatprep.subr.mxu0 0.0
      %1342 = vmatpush2.msra.mxu0 0.0
      %1343 = vmatprep.subr.mxu0 0.0
      %1344 = vmatpush2.msra.mxu0 0.0
      %1345 = vmatprep.subr.mxu0 0.0
      %1346 = vmatpush2.msra.mxu0 0.0
      %1347 = vmatprep.subr.mxu0 0.0
      %1348 = vmatpush2.msra.mxu0 0.0
      %1349 = vmatprep.subr.mxu0 0.0
      %1350 = vmatpush2.msra.mxu0 0.0
      %1351 = vmatprep.mubr.f32.mxu0 0.0
      %1352 = vmatmul.mubr.f32.gmra.mxu0 %v1285
      %v1353 = vpop.f32.mrf.mxu0
      %v1354 = vadd.f32 0.0, %v1353
      %v1355 = vpop.f32.mrf.mxu0
      %1356 = vdwg.mxu0
      %1357 = vrot.lane.b32.xlu0 %v852, 104
      %v1358 = vpop.permute.xlu0 %1357
      %1359 = vrot.lane.b32.xlu0 %v852, 72
      %v1360 = vpop.permute.xlu0 %1359
      %v1361 = vsel %vm859, %v1358, 0
      %v1363 = vsel %vm859, %v1360, 0
      %1365 = vmatprep.subr.mxu0 0.0
      %1366 = vmatpush1.xpose.msra.mxu0 0.0
      %1367 = vmatprep.subr.mxu0 0.0
      %1368 = vmatpush1.xpose.msra.mxu0 0.0
      %1369 = vmatprep.subr.mxu0 0.0
      %1370 = vmatpush1.xpose.msra.mxu0 0.0
      %1371 = vmatprep.subr.mxu0 0.0
      %1372 = vmatpush1.xpose.msra.mxu0 0.0
      %1373 = vmatprep.subr.mxu0 0.0
      %1374 = vmatpush1.xpose.msra.mxu0 0.0
      %1375 = vmatprep.subr.mxu0 0.0
      %1376 = vmatpush1.xpose.msra.mxu0 0.0
      %1377 = vmatprep.subr.mxu0 0.0
      %1378 = vmatpush1.xpose.msra.mxu0 0.0
      %1379 = vmatprep.subr.mxu0 0.0
      %1380 = vmatpush1.xpose.msra.mxu0 0.0
      %1381 = vmatprep.subr.mxu0 0.0
      %1382 = vmatpush1.xpose.msra.mxu0 0.0
      %1383 = vmatprep.subr.mxu0 0.0
      %1384 = vmatpush1.xpose.msra.mxu0 0.0
      %1385 = vmatprep.subr.mxu0 0.0
      %1386 = vmatpush1.xpose.msra.mxu0 0.0
      %1387 = vmatprep.subr.mxu0 0.0
      %1388 = vmatpush1.xpose.msra.mxu0 0.0
      %1389 = vmatprep.subr.mxu0 0.0
      %1390 = vmatpush1.xpose.msra.mxu0 0.0
      %1391 = vmatprep.subr.mxu0 0.0
      %1392 = vmatpush1.xpose.msra.mxu0 0.0
      %1393 = vmatprep.subr.mxu0 0.0
      %1394 = vmatpush1.xpose.msra.mxu0 0.0
      %1395 = vmatprep.subr.mxu0 0.0
      %1396 = vmatpush1.xpose.msra.mxu0 %v1363
      %1397 = vmatprep.subr.mxu0 0.0
      %1398 = vmatpush2.xpose.msra.mxu0 0.0
      %1399 = vmatprep.subr.mxu0 0.0
      %1400 = vmatpush2.xpose.msra.mxu0 0.0
      %1401 = vmatprep.subr.mxu0 0.0
      %1402 = vmatpush2.xpose.msra.mxu0 0.0
      %1403 = vmatprep.subr.mxu0 0.0
      %1404 = vmatpush2.xpose.msra.mxu0 0.0
      %1405 = vmatprep.subr.mxu0 0.0
      %1406 = vmatpush2.xpose.msra.mxu0 0.0
      %1407 = vmatprep.subr.mxu0 0.0
      %1408 = vmatpush2.xpose.msra.mxu0 0.0
      %1409 = vmatprep.subr.mxu0 0.0
      %1410 = vmatpush2.xpose.msra.mxu0 0.0
      %1411 = vmatprep.subr.mxu0 0.0
      %1412 = vmatpush2.xpose.msra.mxu0 0.0
      %1413 = vmatprep.subr.mxu0 0.0
      %1414 = vmatpush2.xpose.msra.mxu0 0.0
      %1415 = vmatprep.subr.mxu0 0.0
      %1416 = vmatpush2.xpose.msra.mxu0 0.0
      %1417 = vmatprep.subr.mxu0 0.0
      %1418 = vmatpush2.xpose.msra.mxu0 0.0
      %1419 = vmatprep.subr.mxu0 0.0
      %1420 = vmatpush2.xpose.msra.mxu0 0.0
      %1421 = vmatprep.subr.mxu0 0.0
      %1422 = vmatpush2.xpose.msra.mxu0 0.0
      %1423 = vmatprep.subr.mxu0 0.0
      %1424 = vmatpush2.xpose.msra.mxu0 0.0
      %1425 = vmatprep.subr.mxu0 0.0
      %1426 = vmatpush2.xpose.msra.mxu0 0.0
      %1427 = vmatprep.subr.mxu0 0.0
      %1428 = vmatpush2.xpose.msra.mxu0 0.0
      %1429 = vmatprep.mubr.f32.mxu0 0.0
      %1430 = vmatmul.mubr.f32.gmra.mxu0 %v1361
      %v1431 = vpop.f32.mrf.mxu0
      %v1432 = vadd.f32 0.0, %v1431
      %v1433 = vpop.f32.mrf.mxu0
      %1434 = vdwg.mxu0
      %v1435 = vmul.f32 %v1432, 0.17677669
      %v1436 = vadd.f32 %v1435, %v855
      %v1437 = vsel %vm859, %v1436, -inf
      %1438 = vmax.xlane.f32.xlu0 %v1437
      %v1439 = vpop.xlane.xlu0 %1438
      %v1440 = vsub.f32 %v1436, %v1439
      %v1441 = vmul.f32 %v1440, 1.442695
      %v1442 = vpow.pop %v1441
      %v1443 = vsel %vm859, %v1442, 0.0
      %1444 = vadd.xlane.f32.xlu0 %v1443
      %v1445 = vpop.xlane.xlu0 %1444
      %v1446 = vrcp.pop %v1445
      %v1447 = vmul.f32 %v1442, %v1446
      %1448 = vrot.lane.b32.xlu0 %v852, 40
      %v1449 = vpop.permute.xlu0 %1448
      %v1452 = vsel %vm859, %v1447, 0
      %1454 = vmatprep.subr.mxu0 0.0
      %1455 = vmatpush1.msra.mxu0 0.0
      %1456 = vmatprep.subr.mxu0 0.0
      %1457 = vmatpush1.msra.mxu0 0.0
      %1458 = vmatprep.subr.mxu0 0.0
      %1459 = vmatpush1.msra.mxu0 0.0
      %1460 = vmatprep.subr.mxu0 0.0
      %1461 = vmatpush1.msra.mxu0 0.0
      %1462 = vmatprep.subr.mxu0 0.0
      %1463 = vmatpush1.msra.mxu0 0.0
      %1464 = vmatprep.subr.mxu0 0.0
      %1465 = vmatpush1.msra.mxu0 0.0
      %1466 = vmatprep.subr.mxu0 0.0
      %1467 = vmatpush1.msra.mxu0 0.0
      %1468 = vmatprep.subr.mxu0 0.0
      %1469 = vmatpush1.msra.mxu0 0.0
      %1470 = vmatprep.subr.mxu0 0.0
      %1471 = vmatpush1.msra.mxu0 0.0
      %1472 = vmatprep.subr.mxu0 0.0
      %1473 = vmatpush1.msra.mxu0 0.0
      %1474 = vmatprep.subr.mxu0 0.0
      %1475 = vmatpush1.msra.mxu0 0.0
      %1476 = vmatprep.subr.mxu0 0.0
      %1477 = vmatpush1.msra.mxu0 0.0
      %1478 = vmatprep.subr.mxu0 0.0
      %1479 = vmatpush1.msra.mxu0 0.0
      %1480 = vmatprep.subr.mxu0 0.0
      %1481 = vmatpush1.msra.mxu0 0.0
      %1482 = vmatprep.subr.mxu0 0.0
      %1483 = vmatpush1.msra.mxu0 0.0
      %1484 = vmatprep.subr.mxu0 0.0
      %1485 = vmatpush1.msra.mxu0 %v1449
      %1486 = vmatprep.subr.mxu0 0.0
      %1487 = vmatpush2.msra.mxu0 0.0
      %1488 = vmatprep.subr.mxu0 0.0
      %1489 = vmatpush2.msra.mxu0 0.0
      %1490 = vmatprep.subr.mxu0 0.0
      %1491 = vmatpush2.msra.mxu0 0.0
      %1492 = vmatprep.subr.mxu0 0.0
      %1493 = vmatpush2.msra.mxu0 0.0
      %1494 = vmatprep.subr.mxu0 0.0
      %1495 = vmatpush2.msra.mxu0 0.0
      %1496 = vmatprep.subr.mxu0 0.0
      %1497 = vmatpush2.msra.mxu0 0.0
      %1498 = vmatprep.subr.mxu0 0.0
      %1499 = vmatpush2.msra.mxu0 0.0
      %1500 = vmatprep.subr.mxu0 0.0
      %1501 = vmatpush2.msra.mxu0 0.0
      %1502 = vmatprep.subr.mxu0 0.0
      %1503 = vmatpush2.msra.mxu0 0.0
      %1504 = vmatprep.subr.mxu0 0.0
      %1505 = vmatpush2.msra.mxu0 0.0
      %1506 = vmatprep.subr.mxu0 0.0
      %1507 = vmatpush2.msra.mxu0 0.0
      %1508 = vmatprep.subr.mxu0 0.0
      %1509 = vmatpush2.msra.mxu0 0.0
      %1510 = vmatprep.subr.mxu0 0.0
      %1511 = vmatpush2.msra.mxu0 0.0
      %1512 = vmatprep.subr.mxu0 0.0
      %1513 = vmatpush2.msra.mxu0 0.0
      %1514 = vmatprep.subr.mxu0 0.0
      %1515 = vmatpush2.msra.mxu0 0.0
      %1516 = vmatprep.subr.mxu0 0.0
      %1517 = vmatpush2.msra.mxu0 0.0
      %1518 = vmatprep.mubr.f32.mxu0 0.0
      %1519 = vmatmul.mubr.f32.gmra.mxu0 %v1452
      %v1520 = vpop.f32.mrf.mxu0
      %v1521 = vadd.f32 0.0, %v1520
      %v1522 = vpop.f32.mrf.mxu0
      %1523 = vdwg.mxu0
      %1525 = vrot.lane.b32.xlu0 %v1187, 8
      %v1526 = vpop.permute.xlu0 %1525
      %1529 = vrot.lane.b32.xlu0 %v1354, 16
      %v1530 = vpop.permute.xlu0 %1529
      %1533 = vrot.lane.b32.xlu0 %v1521, 24
      %v1534 = vpop.permute.xlu0 %1533
      %v1536 = vsel %vm859, %v1020, %v1526
      %vm1537 = vcmask 130048
      %v1538 = vsel %vm1537, %v1536, %v1530
      %vm1539 = vcmask 195584
      %v1540 = vsel %vm1539, %v1538, %v1534
      %v1541 = vld [vmem:[%s6] sm:$0xff]
      %v1542 = vld [vmem:[%s6 + $0x8] sm:$0xff]
      %v1543 = vld [vmem:[%s6 + $0x10] sm:$0xff]
      %v1544 = vld [vmem:[%s6 + $0x18] sm:$0xff]
      %v1545 = vld [vmem:[%s7] sm:$0x1]
      %v1547 = vlaneseq
      %v1548 = vshrl.u32 %v1547, 7
      %v1549 = vsub.s32 0, %v1548
      %v1550 = vrot.slane %v1545, %v1549
      %v1553 = vsel %vm781, %v1540, 0
      %1555 = vmatprep.subr.mxu0 0.0
      %1556 = vmatpush1.msra.mxu0 0.0
      %1557 = vmatprep.subr.mxu0 0.0
      %1558 = vmatpush1.msra.mxu0 0.0
      %1559 = vmatprep.subr.mxu0 0.0
      %1560 = vmatpush1.msra.mxu0 0.0
      %1561 = vmatprep.subr.mxu0 0.0
      %1562 = vmatpush1.msra.mxu0 0.0
      %1563 = vmatprep.subr.mxu0 0.0
      %1564 = vmatpush1.msra.mxu0 0.0
      %1565 = vmatprep.subr.mxu0 0.0
      %1566 = vmatpush1.msra.mxu0 0.0
      %1567 = vmatprep.subr.mxu0 0.0
      %1568 = vmatpush1.msra.mxu0 0.0
      %1569 = vmatprep.subr.mxu0 0.0
      %1570 = vmatpush1.msra.mxu0 0.0
      %1571 = vmatprep.subr.mxu0 0.0
      %1572 = vmatpush1.msra.mxu0 0.0
      %1573 = vmatprep.subr.mxu0 0.0
      %1574 = vmatpush1.msra.mxu0 0.0
      %1575 = vmatprep.subr.mxu0 0.0
      %1576 = vmatpush1.msra.mxu0 0.0
      %1577 = vmatprep.subr.mxu0 0.0
      %1578 = vmatpush1.msra.mxu0 0.0
      %1579 = vmatprep.subr.mxu0 0.0
      %1580 = vmatpush1.msra.mxu0 %v1544
      %1581 = vmatprep.subr.mxu0 0.0
      %1582 = vmatpush1.msra.mxu0 %v1543
      %1583 = vmatprep.subr.mxu0 0.0
      %1584 = vmatpush1.msra.mxu0 %v1542
      %1585 = vmatprep.subr.mxu0 0.0
      %1586 = vmatpush1.msra.mxu0 %v1541
      %1587 = vmatprep.subr.mxu0 0.0
      %1588 = vmatpush2.msra.mxu0 0.0
      %1589 = vmatprep.subr.mxu0 0.0
      %1590 = vmatpush2.msra.mxu0 0.0
      %1591 = vmatprep.subr.mxu0 0.0
      %1592 = vmatpush2.msra.mxu0 0.0
      %1593 = vmatprep.subr.mxu0 0.0
      %1594 = vmatpush2.msra.mxu0 0.0
      %1595 = vmatprep.subr.mxu0 0.0
      %1596 = vmatpush2.msra.mxu0 0.0
      %1597 = vmatprep.subr.mxu0 0.0
      %1598 = vmatpush2.msra.mxu0 0.0
      %1599 = vmatprep.subr.mxu0 0.0
      %1600 = vmatpush2.msra.mxu0 0.0
      %1601 = vmatprep.subr.mxu0 0.0
      %1602 = vmatpush2.msra.mxu0 0.0
      %1603 = vmatprep.subr.mxu0 0.0
      %1604 = vmatpush2.msra.mxu0 0.0
      %1605 = vmatprep.subr.mxu0 0.0
      %1606 = vmatpush2.msra.mxu0 0.0
      %1607 = vmatprep.subr.mxu0 0.0
      %1608 = vmatpush2.msra.mxu0 0.0
      %1609 = vmatprep.subr.mxu0 0.0
      %1610 = vmatpush2.msra.mxu0 0.0
      %1611 = vmatprep.subr.mxu0 0.0
      %1612 = vmatpush2.msra.mxu0 0.0
      %1613 = vmatprep.subr.mxu0 0.0
      %1614 = vmatpush2.msra.mxu0 0.0
      %1615 = vmatprep.subr.mxu0 0.0
      %1616 = vmatpush2.msra.mxu0 0.0
      %1617 = vmatprep.subr.mxu0 0.0
      %1618 = vmatpush2.msra.mxu0 0.0
      %1619 = vmatprep.mubr.f32.mxu0 0.0
      %1620 = vmatmul.mubr.f32.gmra.mxu0 %v1553
      %v1621 = vpop.f32.mrf.mxu0
      %v1622 = vadd.f32 %v1550, %v1621
      %v1623 = vpop.f32.mrf.mxu0
      %1624 = vdwg.mxu0
      %v1625 = vadd.f32 %v1622, %v767
      %v1626 = vld [vmem:[%s8] sm:$0x1]
      %v1627 = vld [vmem:[%s9] sm:$0x1]
      %v1628 = vsel %vm781, %v1625, 0.0
      %1629 = vadd.xlane.f32.xlu0 %v1628
      %v1630 = vpop.xlane.xlu0 %1629
      %v1631 = vrcp.pop 32.0
      %v1632 = vmul.f32 %v1630, %v1631
      %v1633 = vsub.f32 %v1625, %v1632
      %v1634 = vmul.f32 %v1633, %v1633
      %v1635 = vsel %vm781, %v1634, 0.0
      %1636 = vadd.xlane.f32.xlu0 %v1635
      %v1637 = vpop.xlane.xlu0 %1636
      %v1638 = vmul.f32 %v1637, %v1631
      %v1639 = vadd.f32 %v1638, 1e-05
      %v1640 = vrsqrt.pop %v1639
      %v1641 = vmul.f32 %v1633, %v1640
      %v1643 = vlaneseq
      %v1644 = vshrl.u32 %v1643, 7
      %v1645 = vsub.s32 0, %v1644
      %v1646 = vrot.slane %v1626, %v1645
      %v1648 = vmul.f32 %v1641, %v1646
      %v1650 = vlaneseq
      %v1651 = vshrl.u32 %v1650, 7
      %v1652 = vsub.s32 0, %v1651
      %v1653 = vrot.slane %v1627, %v1652
      %v1655 = vadd.f32 %v1648, %v1653
      %v1656 = vld [vmem:[%s10] sm:$0xff]
      %v1657 = vld [vmem:[%s10 + $0x8] sm:$0xff]
      %v1658 = vld [vmem:[%s10 + $0x10] sm:$0xff]
      %v1659 = vld [vmem:[%s10 + $0x18] sm:$0xff]
      %v1660 = vld [vmem:[%s11] sm:$0x1]
      %v1662 = vlaneseq
      %v1663 = vshrl.u32 %v1662, 7
      %v1664 = vsub.s32 0, %v1663
      %v1665 = vrot.slane %v1660, %v1664
      %v1668 = vsel %vm781, %v1655, 0
      %1670 = vmatprep.subr.mxu0 0.0
      %1671 = vmatpush1.msra.mxu0 0.0
      %1672 = vmatprep.subr.mxu0 0.0
      %1673 = vmatpush1.msra.mxu0 0.0
      %1674 = vmatprep.subr.mxu0 0.0
      %1675 = vmatpush1.msra.mxu0 0.0
      %1676 = vmatprep.subr.mxu0 0.0
      %1677 = vmatpush1.msra.mxu0 0.0
      %1678 = vmatprep.subr.mxu0 0.0
      %1679 = vmatpush1.msra.mxu0 0.0
      %1680 = vmatprep.subr.mxu0 0.0
      %1681 = vmatpush1.msra.mxu0 0.0
      %1682 = vmatprep.subr.mxu0 0.0
      %1683 = vmatpush1.msra.mxu0 0.0
      %1684 = vmatprep.subr.mxu0 0.0
      %1685 = vmatpush1.msra.mxu0 0.0
      %1686 = vmatprep.subr.mxu0 0.0
      %1687 = vmatpush1.msra.mxu0 0.0
      %1688 = vmatprep.subr.mxu0 0.0
      %1689 = vmatpush1.msra.mxu0 0.0
      %1690 = vmatprep.subr.mxu0 0.0
      %1691 = vmatpush1.msra.mxu0 0.0
      %1692 = vmatprep.subr.mxu0 0.0
      %1693 = vmatpush1.msra.mxu0 0.0
      %1694 = vmatprep.subr.mxu0 0.0
      %1695 = vmatpush1.msra.mxu0 %v1659
      %1696 = vmatprep.subr.mxu0 0.0
      %1697 = vmatpush1.msra.mxu0 %v1658
      %1698 = vmatprep.subr.mxu0 0.0
      %1699 = vmatpush1.msra.mxu0 %v1657
      %1700 = vmatprep.subr.mxu0 0.0
      %1701 = vmatpush1.msra.mxu0 %v1656
      %1702 = vmatprep.subr.mxu0 0.0
      %1703 = vmatpush2.msra.mxu0 0.0
      %1704 = vmatprep.subr.mxu0 0.0
      %1705 = vmatpush2.msra.mxu0 0.0
      %1706 = vmatprep.subr.mxu0 0.0
      %1707 = vmatpush2.msra.mxu0 0.0
      %1708 = vmatprep.subr.mxu0 0.0
      %1709 = vmatpush2.msra.mxu0 0.0
      %1710 = vmatprep.subr.mxu0 0.0
      %1711 = vmatpush2.msra.mxu0 0.0
      %1712 = vmatprep.subr.mxu0 0.0
      %1713 = vmatpush2.msra.mxu0 0.0
      %1714 = vmatprep.subr.mxu0 0.0
      %1715 = vmatpush2.msra.mxu0 0.0
      %1716 = vmatprep.subr.mxu0 0.0
      %1717 = vmatpush2.msra.mxu0 0.0
      %1718 = vmatprep.subr.mxu0 0.0
      %1719 = vmatpush2.msra.mxu0 0.0
      %1720 = vmatprep.subr.mxu0 0.0
      %1721 = vmatpush2.msra.mxu0 0.0
      %1722 = vmatprep.subr.mxu0 0.0
      %1723 = vmatpush2.msra.mxu0 0.0
      %1724 = vmatprep.subr.mxu0 0.0
      %1725 = vmatpush2.msra.mxu0 0.0
      %1726 = vmatprep.subr.mxu0 0.0
      %1727 = vmatpush2.msra.mxu0 0.0
      %1728 = vmatprep.subr.mxu0 0.0
      %1729 = vmatpush2.msra.mxu0 0.0
      %1730 = vmatprep.subr.mxu0 0.0
      %1731 = vmatpush2.msra.mxu0 0.0
      %1732 = vmatprep.subr.mxu0 0.0
      %1733 = vmatpush2.msra.mxu0 0.0
      %1734 = vmatprep.mubr.f32.mxu0 0.0
      %1735 = vmatmul.mubr.f32.gmra.mxu0 %v1668
      %v1736 = vpop.f32.mrf.mxu0
      %v1737 = vadd.f32 %v1665, %v1736
      %v1738 = vpop.f32.mrf.mxu0
      %1739 = vdwg.mxu0
      %v1740 = vld [vmem:[%s12] sm:$0xff]
      %v1741 = vld [vmem:[%s12 + $0x8] sm:$0xff]
      %v1742 = vld [vmem:[%s12 + $0x10] sm:$0xff]
      %v1743 = vld [vmem:[%s12 + $0x18] sm:$0xff]
      %v1744 = vld [vmem:[%s13] sm:$0x1]
      %v1746 = vlaneseq
      %v1747 = vshrl.u32 %v1746, 7
      %v1748 = vsub.s32 0, %v1747
      %v1749 = vrot.slane %v1744, %v1748
      %v1752 = vsel %vm781, %v768, 0
      %v1755 = vsel %vm781, %v769, 0
      %1757 = vmatprep.subr.mxu0 0.0
      %1758 = vmatpush1.msra.mxu0 0.0
      %1759 = vmatprep.subr.mxu0 0.0
      %1760 = vmatpush1.msra.mxu0 0.0
      %1761 = vmatprep.subr.mxu0 0.0
      %1762 = vmatpush1.msra.mxu0 0.0
      %1763 = vmatprep.subr.mxu0 0.0
      %1764 = vmatpush1.msra.mxu0 0.0
      %1765 = vmatprep.subr.mxu0 0.0
      %1766 = vmatpush1.msra.mxu0 0.0
      %1767 = vmatprep.subr.mxu0 0.0
      %1768 = vmatpush1.msra.mxu0 0.0
      %1769 = vmatprep.subr.mxu0 0.0
      %1770 = vmatpush1.msra.mxu0 0.0
      %1771 = vmatprep.subr.mxu0 0.0
      %1772 = vmatpush1.msra.mxu0 0.0
      %1773 = vmatprep.subr.mxu0 0.0
      %1774 = vmatpush1.msra.mxu0 0.0
      %1775 = vmatprep.subr.mxu0 0.0
      %1776 = vmatpush1.msra.mxu0 0.0
      %1777 = vmatprep.subr.mxu0 0.0
      %1778 = vmatpush1.msra.mxu0 0.0
      %1779 = vmatprep.subr.mxu0 0.0
      %1780 = vmatpush1.msra.mxu0 0.0
      %1781 = vmatprep.subr.mxu0 0.0
      %1782 = vmatpush1.msra.mxu0 %v1743
      %1783 = vmatprep.subr.mxu0 0.0
      %1784 = vmatpush1.msra.mxu0 %v1742
      %1785 = vmatprep.subr.mxu0 0.0
      %1786 = vmatpush1.msra.mxu0 %v1741
      %1787 = vmatprep.subr.mxu0 0.0
      %1788 = vmatpush1.msra.mxu0 %v1740
      %1789 = vmatprep.subr.mxu0 0.0
      %1790 = vmatpush2.msra.mxu0 0.0
      %1791 = vmatprep.subr.mxu0 0.0
      %1792 = vmatpush2.msra.mxu0 0.0
      %1793 = vmatprep.subr.mxu0 0.0
      %1794 = vmatpush2.msra.mxu0 0.0
      %1795 = vmatprep.subr.mxu0 0.0
      %1796 = vmatpush2.msra.mxu0 0.0
      %1797 = vmatprep.subr.mxu0 0.0
      %1798 = vmatpush2.msra.mxu0 0.0
      %1799 = vmatprep.subr.mxu0 0.0
      %1800 = vmatpush2.msra.mxu0 0.0
      %1801 = vmatprep.subr.mxu0 0.0
      %1802 = vmatpush2.msra.mxu0 0.0
      %1803 = vmatprep.subr.mxu0 0.0
      %1804 = vmatpush2.msra.mxu0 0.0
      %1805 = vmatprep.subr.mxu0 0.0
      %1806 = vmatpush2.msra.mxu0 0.0
      %1807 = vmatprep.subr.mxu0 0.0
      %1808 = vmatpush2.msra.mxu0 0.0
      %1809 = vmatprep.subr.mxu0 0.0
      %1810 = vmatpush2.msra.mxu0 0.0
      %1811 = vmatprep.subr.mxu0 0.0
      %1812 = vmatpush2.msra.mxu0 0.0
      %1813 = vmatprep.subr.mxu0 0.0
      %1814 = vmatpush2.msra.mxu0 0.0
      %1815 = vmatprep.subr.mxu0 0.0
      %1816 = vmatpush2.msra.mxu0 0.0
      %1817 = vmatprep.subr.mxu0 0.0
      %1818 = vmatpush2.msra.mxu0 0.0
      %1819 = vmatprep.subr.mxu0 0.0
      %1820 = vmatpush2.msra.mxu0 0.0
      %1821 = vmatprep.mubr.f32.mxu0 0.0
      %1822 = vmatmul.mubr.f32.gmra.mxu0 %v1752
      %v1823 = vpop.f32.mrf.mxu0
      %v1824 = vadd.f32 %v1749, %v1823
      %v1825 = vpop.f32.mrf.mxu0
      %1826 = vmatprep.mubr.f32.mxu0 0.0
      %1827 = vmatmul.mubr.f32.gmra.mxu0 %v1755
      %v1828 = vpop.f32.mrf.mxu0
      %v1829 = vadd.f32 %v1749, %v1828
      %v1830 = vpop.f32.mrf.mxu0
      %1831 = vdwg.mxu0
      %v1832 = vld [vmem:[%s762] sm:$0x1]
      %v1834 = vsel %vm859, %v1737, 0
      %v1837 = vsel %vm859, %v1824, 0
      %v1840 = vsel %vm859, %v1829, 0
      %1842 = vmatprep.subr.mxu0 0.0
      %1843 = vmatpush1.xpose.msra.mxu0 0.0
      %1844 = vmatprep.subr.mxu0 0.0
      %1845 = vmatpush1.xpose.msra.mxu0 0.0
      %1846 = vmatprep.subr.mxu0 0.0
      %1847 = vmatpush1.xpose.msra.mxu0 0.0
      %1848 = vmatprep.subr.mxu0 0.0
      %1849 = vmatpush1.xpose.msra.mxu0 0.0
      %1850 = vmatprep.subr.mxu0 0.0
      %1851 = vmatpush1.xpose.msra.mxu0 0.0
      %1852 = vmatprep.subr.mxu0 0.0
      %1853 = vmatpush1.xpose.msra.mxu0 0.0
      %1854 = vmatprep.subr.mxu0 0.0
      %1855 = vmatpush1.xpose.msra.mxu0 0.0
      %1856 = vmatprep.subr.mxu0 0.0
      %1857 = vmatpush1.xpose.msra.mxu0 0.0
      %1858 = vmatprep.subr.mxu0 0.0
      %1859 = vmatpush1.xpose.msra.mxu0 0.0
      %1860 = vmatprep.subr.mxu0 0.0
      %1861 = vmatpush1.xpose.msra.mxu0 0.0
      %1862 = vmatprep.subr.mxu0 0.0
      %1863 = vmatpush1.xpose.msra.mxu0 0.0
      %1864 = vmatprep.subr.mxu0 0.0
      %1865 = vmatpush1.xpose.msra.mxu0 0.0
      %1866 = vmatprep.subr.mxu0 0.0
      %1867 = vmatpush1.xpose.msra.mxu0 0.0
      %1868 = vmatprep.subr.mxu0 0.0
      %1869 = vmatpush1.xpose.msra.mxu0 0.0
      %1870 = vmatprep.subr.mxu0 0.0
      %1871 = vmatpush1.xpose.msra.mxu0 %v1840
      %1872 = vmatprep.subr.mxu0 0.0
      %1873 = vmatpush1.xpose.msra.mxu0 %v1837
      %1874 = vmatprep.subr.mxu0 0.0
      %1875 = vmatpush2.xpose.msra.mxu0 0.0
      %1876 = vmatprep.subr.mxu0 0.0
      %1877 = vmatpush2.xpose.msra.mxu0 0.0
      %1878 = vmatprep.subr.mxu0 0.0
      %1879 = vmatpush2.xpose.msra.mxu0 0.0
      %1880 = vmatprep.subr.mxu0 0.0
      %1881 = vmatpush2.xpose.msra.mxu0 0.0
      %1882 = vmatprep.subr.mxu0 0.0
      %1883 = vmatpush2.xpose.msra.mxu0 0.0
      %1884 = vmatprep.subr.mxu0 0.0
      %1885 = vmatpush2.xpose.msra.mxu0 0.0
      %1886 = vmatprep.subr.mxu0 0.0
      %1887 = vmatpush2.xpose.msra.mxu0 0.0
      %1888 = vmatprep.subr.mxu0 0.0
      %1889 = vmatpush2.xpose.msra.mxu0 0.0
      %1890 = vmatprep.subr.mxu0 0.0
      %1891 = vmatpush2.xpose.msra.mxu0 0.0
      %1892 = vmatprep.subr.mxu0 0.0
      %1893 = vmatpush2.xpose.msra.mxu0 0.0
      %1894 = vmatprep.subr.mxu0 0.0
      %1895 = vmatpush2.xpose.msra.mxu0 0.0
      %1896 = vmatprep.subr.mxu0 0.0
      %1897 = vmatpush2.xpose.msra.mxu0 0.0
      %1898 = vmatprep.subr.mxu0 0.0
      %1899 = vmatpush2.xpose.msra.mxu0 0.0
      %1900 = vmatprep.subr.mxu0 0.0
      %1901 = vmatpush2.xpose.msra.mxu0 0.0
      %1902 = vmatprep.subr.mxu0 0.0
      %1903 = vmatpush2.xpose.msra.mxu0 0.0
      %1904 = vmatprep.subr.mxu0 0.0
      %1905 = vmatpush2.xpose.msra.mxu0 0.0
      %1906 = vmatprep.mubr.f32.mxu0 0.0
      %1907 = vmatmul.mubr.f32.gmra.mxu0 %v1834
      %v1908 = vpop.f32.mrf.mxu0
      %v1909 = vadd.f32 0.0, %v1908
      %v1910 = vpop.f32.mrf.mxu0
      %1911 = vdwg.mxu0
      %v1912 = vmul.f32 %v1909, 0.17677669
      %v1914 = vlaneseq
      %v1915 = vshrl.u32 %v1914, 7
      %v1916 = vsub.s32 0, %v1915
      %v1917 = vrot.slane %v1832, %v1916
      %v1919 = vadd.f32 %v1912, %v1917
      %vm1920 = vcmask 97280
      %v1921 = vsel %vm1920, %v1919, -inf
      %1922 = vmax.xlane.f32.xlu0 %v1921
      %v1923 = vpop.xlane.xlu0 %1922
      %v1924 = vsub.f32 %v1919, %v1923
      %v1925 = vmul.f32 %v1924, 1.442695
      %v1926 = vpow.pop %v1925
      %v1927 = vsel %vm1920, %v1926, 0.0
      %1928 = vadd.xlane.f32.xlu0 %v1927
      %v1929 = vpop.xlane.xlu0 %1928
      %v1930 = vrcp.pop %v1929
      %v1931 = vmul.f32 %v1926, %v1930
      %1932 = vrot.lane.b32.xlu0 %v1824, 96
      %v1933 = vpop.permute.xlu0 %1932
      %1934 = vrot.lane.b32.xlu0 %v1829, 96
      %v1935 = vpop.permute.xlu0 %1934
      %v1938 = vsel %vm1920, %v1931, 0
      %vm1940 = vcmask 1043456
      %v1941 = vsel %vm1940, %v1935, 0
      %1943 = vmatprep.subr.mxu0 0.0
      %1944 = vmatpush1.msra.mxu0 0.0
      %1945 = vmatprep.subr.mxu0 0.0
      %1946 = vmatpush1.msra.mxu0 0.0
      %1947 = vmatprep.subr.mxu0 0.0
      %1948 = vmatpush1.msra.mxu0 0.0
      %1949 = vmatprep.subr.mxu0 0.0
      %1950 = vmatpush1.msra.mxu0 0.0
      %1951 = vmatprep.subr.mxu0 0.0
      %1952 = vmatpush1.msra.mxu0 0.0
      %1953 = vmatprep.subr.mxu0 0.0
      %1954 = vmatpush1.msra.mxu0 0.0
      %1955 = vmatprep.subr.mxu0 0.0
      %1956 = vmatpush1.msra.mxu0 0.0
      %1957 = vmatprep.subr.mxu0 0.0
      %1958 = vmatpush1.msra.mxu0 0.0
      %1959 = vmatprep.subr.mxu0 0.0
      %1960 = vmatpush1.msra.mxu0 0.0
      %1961 = vmatprep.subr.mxu0 0.0
      %1962 = vmatpush1.msra.mxu0 0.0
      %1963 = vmatprep.subr.mxu0 0.0
      %1964 = vmatpush1.msra.mxu0 0.0
      %1965 = vmatprep.subr.mxu0 0.0
      %1966 = vmatpush1.msra.mxu0 0.0
      %1967 = vmatprep.subr.mxu0 0.0
      %1968 = vmatpush1.msra.mxu0 0.0
      %1969 = vmatprep.subr.mxu0 0.0
      %1970 = vmatpush1.msra.mxu0 0.0
      %1971 = vmatprep.subr.mxu0 0.0
      %1972 = vmatpush1.msra.mxu0 %v1941
      %1973 = vmatprep.subr.mxu0 0.0
      %1974 = vmatpush1.msra.mxu0 %v1933
      %1975 = vmatprep.subr.mxu0 0.0
      %1976 = vmatpush2.msra.mxu0 0.0
      %1977 = vmatprep.subr.mxu0 0.0
      %1978 = vmatpush2.msra.mxu0 0.0
      %1979 = vmatprep.subr.mxu0 0.0
      %1980 = vmatpush2.msra.mxu0 0.0
      %1981 = vmatprep.subr.mxu0 0.0
      %1982 = vmatpush2.msra.mxu0 0.0
      %1983 = vmatprep.subr.mxu0 0.0
      %1984 = vmatpush2.msra.mxu0 0.0
      %1985 = vmatprep.subr.mxu0 0.0
      %1986 = vmatpush2.msra.mxu0 0.0
      %1987 = vmatprep.subr.mxu0 0.0
      %1988 = vmatpush2.msra.mxu0 0.0
      %1989 = vmatprep.subr.mxu0 0.0
      %1990 = vmatpush2.msra.mxu0 0.0
      %1991 = vmatprep.subr.mxu0 0.0
      %1992 = vmatpush2.msra.mxu0 0.0
      %1993 = vmatprep.subr.mxu0 0.0
      %1994 = vmatpush2.msra.mxu0 0.0
      %1995 = vmatprep.subr.mxu0 0.0
      %1996 = vmatpush2.msra.mxu0 0.0
      %1997 = vmatprep.subr.mxu0 0.0
      %1998 = vmatpush2.msra.mxu0 0.0
      %1999 = vmatprep.subr.mxu0 0.0
      %2000 = vmatpush2.msra.mxu0 0.0
      %2001 = vmatprep.subr.mxu0 0.0
      %2002 = vmatpush2.msra.mxu0 0.0
      %2003 = vmatprep.subr.mxu0 0.0
      %2004 = vmatpush2.msra.mxu0 0.0
      %2005 = vmatprep.subr.mxu0 0.0
      %2006 = vmatpush2.msra.mxu0 0.0
      %2007 = vmatprep.mubr.f32.mxu0 0.0
      %2008 = vmatmul.mubr.f32.gmra.mxu0 %v1938
      %v2009 = vpop.f32.mrf.mxu0
      %v2010 = vadd.f32 0.0, %v2009
      %v2011 = vpop.f32.mrf.mxu0
      %2012 = vdwg.mxu0
      %2013 = vrot.lane.b32.xlu0 %v1737, 120
      %v2014 = vpop.permute.xlu0 %2013
      %2015 = vrot.lane.b32.xlu0 %v1824, 120
      %v2016 = vpop.permute.xlu0 %2015
      %2017 = vrot.lane.b32.xlu0 %v1829, 120
      %v2018 = vpop.permute.xlu0 %2017
      %v2019 = vsel %vm859, %v2014, 0
      %v2021 = vsel %vm859, %v2016, 0
      %v2023 = vsel %vm859, %v2018, 0
      %2025 = vmatprep.subr.mxu0 0.0
      %2026 = vmatpush1.xpose.msra.mxu0 0.0
      %2027 = vmatprep.subr.mxu0 0.0
      %2028 = vmatpush1.xpose.msra.mxu0 0.0
      %2029 = vmatprep.subr.mxu0 0.0
      %2030 = vmatpush1.xpose.msra.mxu0 0.0
      %2031 = vmatprep.subr.mxu0 0.0
      %2032 = vmatpush1.xpose.msra.mxu0 0.0
      %2033 = vmatprep.subr.mxu0 0.0
      %2034 = vmatpush1.xpose.msra.mxu0 0.0
      %2035 = vmatprep.subr.mxu0 0.0
      %2036 = vmatpush1.xpose.msra.mxu0 0.0
      %2037 = vmatprep.subr.mxu0 0.0
      %2038 = vmatpush1.xpose.msra.mxu0 0.0
      %2039 = vmatprep.subr.mxu0 0.0
      %2040 = vmatpush1.xpose.msra.mxu0 0.0
      %2041 = vmatprep.subr.mxu0 0.0
      %2042 = vmatpush1.xpose.msra.mxu0 0.0
      %2043 = vmatprep.subr.mxu0 0.0
      %2044 = vmatpush1.xpose.msra.mxu0 0.0
      %2045 = vmatprep.subr.mxu0 0.0
      %2046 = vmatpush1.xpose.msra.mxu0 0.0
      %2047 = vmatprep.subr.mxu0 0.0
      %2048 = vmatpush1.xpose.msra.mxu0 0.0
      %2049 = vmatprep.subr.mxu0 0.0
      %2050 = vmatpush1.xpose.msra.mxu0 0.0
      %2051 = vmatprep.subr.mxu0 0.0
      %2052 = vmatpush1.xpose.msra.mxu0 0.0
      %2053 = vmatprep.subr.mxu0 0.0
      %2054 = vmatpush1.xpose.msra.mxu0 %v2023
      %2055 = vmatprep.subr.mxu0 0.0
      %2056 = vmatpush1.xpose.msra.mxu0 %v2021
      %2057 = vmatprep.subr.mxu0 0.0
      %2058 = vmatpush2.xpose.msra.mxu0 0.0
      %2059 = vmatprep.subr.mxu0 0.0
      %2060 = vmatpush2.xpose.msra.mxu0 0.0
      %2061 = vmatprep.subr.mxu0 0.0
      %2062 = vmatpush2.xpose.msra.mxu0 0.0
      %2063 = vmatprep.subr.mxu0 0.0
      %2064 = vmatpush2.xpose.msra.mxu0 0.0
      %2065 = vmatprep.subr.mxu0 0.0
      %2066 = vmatpush2.xpose.msra.mxu0 0.0
      %2067 = vmatprep.subr.mxu0 0.0
      %2068 = vmatpush2.xpose.msra.mxu0 0.0
      %2069 = vmatprep.subr.mxu0 0.0
      %2070 = vmatpush2.xpose.msra.mxu0 0.0
      %2071 = vmatprep.subr.mxu0 0.0
      %2072 = vmatpush2.xpose.msra.mxu0 0.0
      %2073 = vmatprep.subr.mxu0 0.0
      %2074 = vmatpush2.xpose.msra.mxu0 0.0
      %2075 = vmatprep.subr.mxu0 0.0
      %2076 = vmatpush2.xpose.msra.mxu0 0.0
      %2077 = vmatprep.subr.mxu0 0.0
      %2078 = vmatpush2.xpose.msra.mxu0 0.0
      %2079 = vmatprep.subr.mxu0 0.0
      %2080 = vmatpush2.xpose.msra.mxu0 0.0
      %2081 = vmatprep.subr.mxu0 0.0
      %2082 = vmatpush2.xpose.msra.mxu0 0.0
      %2083 = vmatprep.subr.mxu0 0.0
      %2084 = vmatpush2.xpose.msra.mxu0 0.0
      %2085 = vmatprep.subr.mxu0 0.0
      %2086 = vmatpush2.xpose.msra.mxu0 0.0
      %2087 = vmatprep.subr.mxu0 0.0
      %2088 = vmatpush2.xpose.msra.mxu0 0.0
      %2089 = vmatprep.mubr.f32.mxu0 0.0
      %2090 = vmatmul.mubr.f32.gmra.mxu0 %v2019
      %v2091 = vpop.f32.mrf.mxu0
      %v2092 = vadd.f32 0.0, %v2091
      %v2093 = vpop.f32.mrf.mxu0
      %2094 = vdwg.mxu0
      %v2095 = vmul.f32 %v2092, 0.17677669
      %v2096 = vadd.f32 %v2095, %v1917
      %v2097 = vsel %vm1920, %v2096, -inf
      %2098 = vmax.xlane.f32.xlu0 %v2097
      %v2099 = vpop.xlane.xlu0 %2098
      %v2100 = vsub.f32 %v2096, %v2099
      %v2101 = vmul.f32 %v2100, 1.442695
      %v2102 = vpow.pop %v2101
      %v2103 = vsel %vm1920, %v2102, 0.0
      %2104 = vadd.xlane.f32.xlu0 %v2103
      %v2105 = vpop.xlane.xlu0 %2104
      %v2106 = vrcp.pop %v2105
      %v2107 = vmul.f32 %v2102, %v2106
      %2108 = vrot.lane.b32.xlu0 %v1824, 88
      %v2109 = vpop.permute.xlu0 %2108
      %2110 = vrot.lane.b32.xlu0 %v1829, 88
      %v2111 = vpop.permute.xlu0 %2110
      %v2114 = vsel %vm1920, %v2107, 0
      %v2116 = vsel %vm1940, %v2111, 0
      %2118 = vmatprep.subr.mxu0 0.0
      %2119 = vmatpush1.msra.mxu0 0.0
      %2120 = vmatprep.subr.mxu0 0.0
      %2121 = vmatpush1.msra.mxu0 0.0
      %2122 = vmatprep.subr.mxu0 0.0
      %2123 = vmatpush1.msra.mxu0 0.0
      %2124 = vmatprep.subr.mxu0 0.0
      %2125 = vmatpush1.msra.mxu0 0.0
      %2126 = vmatprep.subr.mxu0 0.0
      %2127 = vmatpush1.msra.mxu0 0.0
      %2128 = vmatprep.subr.mxu0 0.0
      %2129 = vmatpush1.msra.mxu0 0.0
      %2130 = vmatprep.subr.mxu0 0.0
      %2131 = vmatpush1.msra.mxu0 0.0
      %2132 = vmatprep.subr.mxu0 0.0
      %2133 = vmatpush1.msra.mxu0 0.0
      %2134 = vmatprep.subr.mxu0 0.0
      %2135 = vmatpush1.msra.mxu0 0.0
      %2136 = vmatprep.subr.mxu0 0.0
      %2137 = vmatpush1.msra.mxu0 0.0
      %2138 = vmatprep.subr.mxu0 0.0
      %2139 = vmatpush1.msra.mxu0 0.0
      %2140 = vmatprep.subr.mxu0 0.0
      %2141 = vmatpush1.msra.mxu0 0.0
      %2142 = vmatprep.subr.mxu0 0.0
      %2143 = vmatpush1.msra.mxu0 0.0
      %2144 = vmatprep.subr.mxu0 0.0
      %2145 = vmatpush1.msra.mxu0 0.0
      %2146 = vmatprep.subr.mxu0 0.0
      %2147 = vmatpush1.msra.mxu0 %v2116
      %2148 = vmatprep.subr.mxu0 0.0
      %2149 = vmatpush1.msra.mxu0 %v2109
      %2150 = vmatprep.subr.mxu0 0.0
      %2151 = vmatpush2.msra.mxu0 0.0
      %2152 = vmatprep.subr.mxu0 0.0
      %2153 = vmatpush2.msra.mxu0 0.0
      %2154 = vmatprep.subr.mxu0 0.0
      %2155 = vmatpush2.msra.mxu0 0.0
      %2156 = vmatprep.subr.mxu0 0.0
      %2157 = vmatpush2.msra.mxu0 0.0
      %2158 = vmatprep.subr.mxu0 0.0
      %2159 = vmatpush2.msra.mxu0 0.0
      %2160 = vmatprep.subr.mxu0 0.0
      %2161 = vmatpush2.msra.mxu0 0.0
      %2162 = vmatprep.subr.mxu0 0.0
      %2163 = vmatpush2.msra.mxu0 0.0
      %2164 = vmatprep.subr.mxu0 0.0
      %2165 = vmatpush2.msra.mxu0 0.0
      %2166 = vmatprep.subr.mxu0 0.0
      %2167 = vmatpush2.msra.mxu0 0.0
      %2168 = vmatprep.subr.mxu0 0.0
      %2169 = vmatpush2.msra.mxu0 0.0
      %2170 = vmatprep.subr.mxu0 0.0
      %2171 = vmatpush2.msra.mxu0 0.0
      %2172 = vmatprep.subr.mxu0 0.0
      %2173 = vmatpush2.msra.mxu0 0.0
      %2174 = vmatprep.subr.mxu0 0.0
      %2175 = vmatpush2.msra.mxu0 0.0
      %2176 = vmatprep.subr.mxu0 0.0
      %2177 = vmatpush2.msra.mxu0 0.0
      %2178 = vmatprep.subr.mxu0 0.0
      %2179 = vmatpush2.msra.mxu0 0.0
      %2180 = vmatprep.subr.mxu0 0.0
      %2181 = vmatpush2.msra.mxu0 0.0
      %2182 = vmatprep.mubr.f32.mxu0 0.0
      %2183 = vmatmul.mubr.f32.gmra.mxu0 %v2114
      %v2184 = vpop.f32.mrf.mxu0
      %v2185 = vadd.f32 0.0, %v2184
      %v2186 = vpop.f32.mrf.mxu0
      %2187 = vdwg.mxu0
      %2188 = vrot.lane.b32.xlu0 %v1737, 112
      %v2189 = vpop.permute.xlu0 %2188
      %2190 = vrot.lane.b32.xlu0 %v1824, 112
      %v2191 = vpop.permute.xlu0 %2190
      %2192 = vrot.lane.b32.xlu0 %v1829, 112
      %v2193 = vpop.permute.xlu0 %2192
      %v2194 = vsel %vm859, %v2189, 0
      %v2196 = vsel %vm859, %v2191, 0
      %v2198 = vsel %vm859, %v2193, 0
      %2200 = vmatprep.subr.mxu0 0.0
      %2201 = vmatpush1.xpose.msra.mxu0 0.0
      %2202 = vmatprep.subr.mxu0 0.0
      %2203 = vmatpush1.xpose.msra.mxu0 0.0
      %2204 = vmatprep.subr.mxu0 0.0
      %2205 = vmatpush1.xpose.msra.mxu0 0.0
      %2206 = vmatprep.subr.mxu0 0.0
      %2207 = vmatpush1.xpose.msra.mxu0 0.0
      %2208 = vmatprep.subr.mxu0 0.0
      %2209 = vmatpush1.xpose.msra.mxu0 0.0
      %2210 = vmatprep.subr.mxu0 0.0
      %2211 = vmatpush1.xpose.msra.mxu0 0.0
      %2212 = vmatprep.subr.mxu0 0.0
      %2213 = vmatpush1.xpose.msra.mxu0 0.0
      %2214 = vmatprep.subr.mxu0 0.0
      %2215 = vmatpush1.xpose.msra.mxu0 0.0
      %2216 = vmatprep.subr.mxu0 0.0
      %2217 = vmatpush1.xpose.msra.mxu0 0.0
      %2218 = vmatprep.subr.mxu0 0.0
      %2219 = vmatpush1.xpose.msra.mxu0 0.0
      %2220 = vmatprep.subr.mxu0 0.0
      %2221 = vmatpush1.xpose.msra.mxu0 0.0
      %2222 = vmatprep.subr.mxu0 0.0
      %2223 = vmatpush1.xpose.msra.mxu0 0.0
      %2224 = vmatprep.subr.mxu0 0.0
      %2225 = vmatpush1.xpose.msra.mxu0 0.0
      %2226 = vmatprep.subr.mxu0 0.0
      %2227 = vmatpush1.xpose.msra.mxu0 0.0
      %2228 = vmatprep.subr.mxu0 0.0
      %2229 = vmatpush1.xpose.msra.mxu0 %v2198
      %2230 = vmatprep.subr.mxu0 0.0
      %2231 = vmatpush1.xpose.msra.mxu0 %v2196
      %2232 = vmatprep.subr.mxu0 0.0
      %2233 = vmatpush2.xpose.msra.mxu0 0.0
      %2234 = vmatprep.subr.mxu0 0.0
      %2235 = vmatpush2.xpose.msra.mxu0 0.0
      %2236 = vmatprep.subr.mxu0 0.0
      %2237 = vmatpush2.xpose.msra.mxu0 0.0
      %2238 = vmatprep.subr.mxu0 0.0
      %2239 = vmatpush2.xpose.msra.mxu0 0.0
      %2240 = vmatprep.subr.mxu0 0.0
      %2241 = vmatpush2.xpose.msra.mxu0 0.0
      %2242 = vmatprep.subr.mxu0 0.0
      %2243 = vmatpush2.xpose.msra.mxu0 0.0
      %2244 = vmatprep.subr.mxu0 0.0
      %2245 = vmatpush2.xpose.msra.mxu0 0.0
      %2246 = vmatprep.subr.mxu0 0.0
      %2247 = vmatpush2.xpose.msra.mxu0 0.0
      %2248 = vmatprep.subr.mxu0 0.0
      %2249 = vmatpush2.xpose.msra.mxu0 0.0
      %2250 = vmatprep.subr.mxu0 0.0
      %2251 = vmatpush2.xpose.msra.mxu0 0.0
      %2252 = vmatprep.subr.mxu0 0.0
      %2253 = vmatpush2.xpose.msra.mxu0 0.0
      %2254 = vmatprep.subr.mxu0 0.0
      %2255 = vmatpush2.xpose.msra.mxu0 0.0
      %2256 = vmatprep.subr.mxu0 0.0
      %2257 = vmatpush2.xpose.msra.mxu0 0.0
      %2258 = vmatprep.subr.mxu0 0.0
      %2259 = vmatpush2.xpose.msra.mxu0 0.0
      %2260 = vmatprep.subr.mxu0 0.0
      %2261 = vmatpush2.xpose.msra.mxu0 0.0
      %2262 = vmatprep.subr.mxu0 0.0
      %2263 = vmatpush2.xpose.msra.mxu0 0.0
      %2264 = vmatprep.mubr.f32.mxu0 0.0
      %2265 = vmatmul.mubr.f32.gmra.mxu0 %v2194
      %v2266 = vpop.f32.mrf.mxu0
      %v2267 = vadd.f32 0.0, %v2266
      %v2268 = vpop.f32.mrf.mxu0
      %2269 = vdwg.mxu0
      %v2270 = vmul.f32 %v2267, 0.17677669
      %v2271 = vadd.f32 %v2270, %v1917
      %v2272 = vsel %vm1920, %v2271, -inf
      %2273 = vmax.xlane.f32.xlu0 %v2272
      %v2274 = vpop.xlane.xlu0 %2273
      %v2275 = vsub.f32 %v2271, %v2274
      %v2276 = vmul.f32 %v2275, 1.442695
      %v2277 = vpow.pop %v2276
      %v2278 = vsel %vm1920, %v2277, 0.0
      %2279 = vadd.xlane.f32.xlu0 %v2278
      %v2280 = vpop.xlane.xlu0 %2279
      %v2281 = vrcp.pop %v2280
      %v2282 = vmul.f32 %v2277, %v2281
      %2283 = vrot.lane.b32.xlu0 %v1824, 80
      %v2284 = vpop.permute.xlu0 %2283
      %2285 = vrot.lane.b32.xlu0 %v1829, 80
      %v2286 = vpop.permute.xlu0 %2285
      %v2289 = vsel %vm1920, %v2282, 0
      %v2291 = vsel %vm1940, %v2286, 0
      %2293 = vmatprep.subr.mxu0 0.0
      %2294 = vmatpush1.msra.mxu0 0.0
      %2295 = vmatprep.subr.mxu0 0.0
      %2296 = vmatpush1.msra.mxu0 0.0
      %2297 = vmatprep.subr.mxu0 0.0
      %2298 = vmatpush1.msra.mxu0 0.0
      %2299 = vmatprep.subr.mxu0 0.0
      %2300 = vmatpush1.msra.mxu0 0.0
      %2301 = vmatprep.subr.mxu0 0.0
      %2302 = vmatpush1.msra.mxu0 0.0
      %2303 = vmatprep.subr.mxu0 0.0
      %2304 = vmatpush1.msra.mxu0 0.0
      %2305 = vmatprep.subr.mxu0 0.0
      %2306 = vmatpush1.msra.mxu0 0.0
      %2307 = vmatprep.subr.mxu0 0.0
      %2308 = vmatpush1.msra.mxu0 0.0
      %2309 = vmatprep.subr.mxu0 0.0
      %2310 = vmatpush1.msra.mxu0 0.0
      %2311 = vmatprep.subr.mxu0 0.0
      %2312 = vmatpush1.msra.mxu0 0.0
      %2313 = vmatprep.subr.mxu0 0.0
      %2314 = vmatpush1.msra.mxu0 0.0
      %2315 = vmatprep.subr.mxu0 0.0
      %2316 = vmatpush1.msra.mxu0 0.0
      %2317 = vmatprep.subr.mxu0 0.0
      %2318 = vmatpush1.msra.mxu0 0.0
      %2319 = vmatprep.subr.mxu0 0.0
      %2320 = vmatpush1.msra.mxu0 0.0
      %2321 = vmatprep.subr.mxu0 0.0
      %2322 = vmatpush1.msra.mxu0 %v2291
      %2323 = vmatprep.subr.mxu0 0.0
      %2324 = vmatpush1.msra.mxu0 %v2284
      %2325 = vmatprep.subr.mxu0 0.0
      %2326 = vmatpush2.msra.mxu0 0.0
      %2327 = vmatprep.subr.mxu0 0.0
      %2328 = vmatpush2.msra.mxu0 0.0
      %2329 = vmatprep.subr.mxu0 0.0
      %2330 = vmatpush2.msra.mxu0 0.0
      %2331 = vmatprep.subr.mxu0 0.0
      %2332 = vmatpush2.msra.mxu0 0.0
      %2333 = vmatprep.subr.mxu0 0.0
      %2334 = vmatpush2.msra.mxu0 0.0
      %2335 = vmatprep.subr.mxu0 0.0
      %2336 = vmatpush2.msra.mxu0 0.0
      %2337 = vmatprep.subr.mxu0 0.0
      %2338 = vmatpush2.msra.mxu0 0.0
      %2339 = vmatprep.subr.mxu0 0.0
      %2340 = vmatpush2.msra.mxu0 0.0
      %2341 = vmatprep.subr.mxu0 0.0
      %2342 = vmatpush2.msra.mxu0 0.0
      %2343 = vmatprep.subr.mxu0 0.0
      %2344 = vmatpush2.msra.mxu0 0.0
      %2345 = vmatprep.subr.mxu0 0.0
      %2346 = vmatpush2.msra.mxu0 0.0
      %2347 = vmatprep.subr.mxu0 0.0
      %2348 = vmatpush2.msra.mxu0 0.0
      %2349 = vmatprep.subr.mxu0 0.0
      %2350 = vmatpush2.msra.mxu0 0.0
      %2351 = vmatprep.subr.mxu0 0.0
      %2352 = vmatpush2.msra.mxu0 0.0
      %2353 = vmatprep.subr.mxu0 0.0
      %2354 = vmatpush2.msra.mxu0 0.0
      %2355 = vmatprep.subr.mxu0 0.0
      %2356 = vmatpush2.msra.mxu0 0.0
      %2357 = vmatprep.mubr.f32.mxu0 0.0
      %2358 = vmatmul.mubr.f32.gmra.mxu0 %v2289
      %v2359 = vpop.f32.mrf.mxu0
      %v2360 = vadd.f32 0.0, %v2359
      %v2361 = vpop.f32.mrf.mxu0
      %2362 = vdwg.mxu0
      %2363 = vrot.lane.b32.xlu0 %v1737, 104
      %v2364 = vpop.permute.xlu0 %2363
      %2365 = vrot.lane.b32.xlu0 %v1824, 104
      %v2366 = vpop.permute.xlu0 %2365
      %2367 = vrot.lane.b32.xlu0 %v1829, 104
      %v2368 = vpop.permute.xlu0 %2367
      %v2369 = vsel %vm859, %v2364, 0
      %v2371 = vsel %vm859, %v2366, 0
      %v2373 = vsel %vm859, %v2368, 0
      %2375 = vmatprep.subr.mxu0 0.0
      %2376 = vmatpush1.xpose.msra.mxu0 0.0
      %2377 = vmatprep.subr.mxu0 0.0
      %2378 = vmatpush1.xpose.msra.mxu0 0.0
      %2379 = vmatprep.subr.mxu0 0.0
      %2380 = vmatpush1.xpose.msra.mxu0 0.0
      %2381 = vmatprep.subr.mxu0 0.0
      %2382 = vmatpush1.xpose.msra.mxu0 0.0
      %2383 = vmatprep.subr.mxu0 0.0
      %2384 = vmatpush1.xpose.msra.mxu0 0.0
      %2385 = vmatprep.subr.mxu0 0.0
      %2386 = vmatpush1.xpose.msra.mxu0 0.0
      %2387 = vmatprep.subr.mxu0 0.0
      %2388 = vmatpush1.xpose.msra.mxu0 0.0
      %2389 = vmatprep.subr.mxu0 0.0
      %2390 = vmatpush1.xpose.msra.mxu0 0.0
      %2391 = vmatprep.subr.mxu0 0.0
      %2392 = vmatpush1.xpose.msra.mxu0 0.0
      %2393 = vmatprep.subr.mxu0 0.0
      %2394 = vmatpush1.xpose.msra.mxu0 0.0
      %2395 = vmatprep.subr.mxu0 0.0
      %2396 = vmatpush1.xpose.msra.mxu0 0.0
      %2397 = vmatprep.subr.mxu0 0.0
      %2398 = vmatpush1.xpose.msra.mxu0 0.0
      %2399 = vmatprep.subr.mxu0 0.0
      %2400 = vmatpush1.xpose.msra.mxu0 0.0
      %2401 = vmatprep.subr.mxu0 0.0
      %2402 = vmatpush1.xpose.msra.mxu0 0.0
      %2403 = vmatprep.subr.mxu0 0.0
      %2404 = vmatpush1.xpose.msra.mxu0 %v2373
      %2405 = vmatprep.subr.mxu0 0.0
      %2406 = vmatpush1.xpose.msra.mxu0 %v2371
      %2407 = vmatprep.subr.mxu0 0.0
      %2408 = vmatpush2.xpose.msra.mxu0 0.0
      %2409 = vmatprep.subr.mxu0 0.0
      %2410 = vmatpush2.xpose.msra.mxu0 0.0
      %2411 = vmatprep.subr.mxu0 0.0
      %2412 = vmatpush2.xpose.msra.mxu0 0.0
      %2413 = vmatprep.subr.mxu0 0.0
      %2414 = vmatpush2.xpose.msra.mxu0 0.0
      %2415 = vmatprep.subr.mxu0 0.0
      %2416 = vmatpush2.xpose.msra.mxu0 0.0
      %2417 = vmatprep.subr.mxu0 0.0
      %2418 = vmatpush2.xpose.msra.mxu0 0.0
      %2419 = vmatprep.subr.mxu0 0.0
      %2420 = vmatpush2.xpose.msra.mxu0 0.0
      %2421 = vmatprep.subr.mxu0 0.0
      %2422 = vmatpush2.xpose.msra.mxu0 0.0
      %2423 = vmatprep.subr.mxu0 0.0
      %2424 = vmatpush2.xpose.msra.mxu0 0.0
      %2425 = vmatprep.subr.mxu0 0.0
      %2426 = vmatpush2.xpose.msra.mxu0 0.0
      %2427 = vmatprep.subr.mxu0 0.0
      %2428 = vmatpush2.xpose.msra.mxu0 0.0
      %2429 = vmatprep.subr.mxu0 0.0
      %2430 = vmatpush2.xpose.msra.mxu0 0.0
      %2431 = vmatprep.subr.mxu0 0.0
      %2432 = vmatpush2.xpose.msra.mxu0 0.0
      %2433 = vmatprep.subr.mxu0 0.0
      %2434 = vmatpush2.xpose.msra.mxu0 0.0
      %2435 = vmatprep.subr.mxu0 0.0
      %2436 = vmatpush2.xpose.msra.mxu0 0.0
      %2437 = vmatprep.subr.mxu0 0.0
      %2438 = vmatpush2.xpose.msra.mxu0 0.0
      %2439 = vmatprep.mubr.f32.mxu0 0.0
      %2440 = vmatmul.mubr.f32.gmra.mxu0 %v2369
      %v2441 = vpop.f32.mrf.mxu0
      %v2442 = vadd.f32 0.0, %v2441
      %v2443 = vpop.f32.mrf.mxu0
      %2444 = vdwg.mxu0
      %v2445 = vmul.f32 %v2442, 0.17677669
      %v2446 = vadd.f32 %v2445, %v1917
      %v2447 = vsel %vm1920, %v2446, -inf
      %2448 = vmax.xlane.f32.xlu0 %v2447
      %v2449 = vpop.xlane.xlu0 %2448
      %v2450 = vsub.f32 %v2446, %v2449
      %v2451 = vmul.f32 %v2450, 1.442695
      %v2452 = vpow.pop %v2451
      %v2453 = vsel %vm1920, %v2452, 0.0
      %2454 = vadd.xlane.f32.xlu0 %v2453
      %v2455 = vpop.xlane.xlu0 %2454
      %v2456 = vrcp.pop %v2455
      %v2457 = vmul.f32 %v2452, %v2456
      %2458 = vrot.lane.b32.xlu0 %v1824, 72
      %v2459 = vpop.permute.xlu0 %2458
      %2460 = vrot.lane.b32.xlu0 %v1829, 72
      %v2461 = vpop.permute.xlu0 %2460
      %v2464 = vsel %vm1920, %v2457, 0
      %v2466 = vsel %vm1940, %v2461, 0
      %2468 = vmatprep.subr.mxu0 0.0
      %2469 = vmatpush1.msra.mxu0 0.0
      %2470 = vmatprep.subr.mxu0 0.0
      %2471 = vmatpush1.msra.mxu0 0.0
      %2472 = vmatprep.subr.mxu0 0.0
      %2473 = vmatpush1.msra.mxu0 0.0
      %2474 = vmatprep.subr.mxu0 0.0
      %2475 = vmatpush1.msra.mxu0 0.0
      %2476 = vmatprep.subr.mxu0 0.0
      %2477 = vmatpush1.msra.mxu0 0.0
      %2478 = vmatprep.subr.mxu0 0.0
      %2479 = vmatpush1.msra.mxu0 0.0
      %2480 = vmatprep.subr.mxu0 0.0
      %2481 = vmatpush1.msra.mxu0 0.0
      %2482 = vmatprep.subr.mxu0 0.0
      %2483 = vmatpush1.msra.mxu0 0.0
      %2484 = vmatprep.subr.mxu0 0.0
      %2485 = vmatpush1.msra.mxu0 0.0
      %2486 = vmatprep.subr.mxu0 0.0
      %2487 = vmatpush1.msra.mxu0 0.0
      %2488 = vmatprep.subr.mxu0 0.0
      %2489 = vmatpush1.msra.mxu0 0.0
      %2490 = vmatprep.subr.mxu0 0.0
      %2491 = vmatpush1.msra.mxu0 0.0
      %2492 = vmatprep.subr.mxu0 0.0
      %2493 = vmatpush1.msra.mxu0 0.0
      %2494 = vmatprep.subr.mxu0 0.0
      %2495 = vmatpush1.msra.mxu0 0.0
      %2496 = vmatprep.subr.mxu0 0.0
      %2497 = vmatpush1.msra.mxu0 %v2466
      %2498 = vmatprep.subr.mxu0 0.0
      %2499 = vmatpush1.msra.mxu0 %v2459
      %2500 = vmatprep.subr.mxu0 0.0
      %2501 = vmatpush2.msra.mxu0 0.0
      %2502 = vmatprep.subr.mxu0 0.0
      %2503 = vmatpush2.msra.mxu0 0.0
      %2504 = vmatprep.subr.mxu0 0.0
      %2505 = vmatpush2.msra.mxu0 0.0
      %2506 = vmatprep.subr.mxu0 0.0
      %2507 = vmatpush2.msra.mxu0 0.0
      %2508 = vmatprep.subr.mxu0 0.0
      %2509 = vmatpush2.msra.mxu0 0.0
      %2510 = vmatprep.subr.mxu0 0.0
      %2511 = vmatpush2.msra.mxu0 0.0
      %2512 = vmatprep.subr.mxu0 0.0
      %2513 = vmatpush2.msra.mxu0 0.0
      %2514 = vmatprep.subr.mxu0 0.0
      %2515 = vmatpush2.msra.mxu0 0.0
      %2516 = vmatprep.subr.mxu0 0.0
      %2517 = vmatpush2.msra.mxu0 0.0
      %2518 = vmatprep.subr.mxu0 0.0
      %2519 = vmatpush2.msra.mxu0 0.0
      %2520 = vmatprep.subr.mxu0 0.0
      %2521 = vmatpush2.msra.mxu0 0.0
      %2522 = vmatprep.subr.mxu0 0.0
      %2523 = vmatpush2.msra.mxu0 0.0
      %2524 = vmatprep.subr.mxu0 0.0
      %2525 = vmatpush2.msra.mxu0 0.0
      %2526 = vmatprep.subr.mxu0 0.0
      %2527 = vmatpush2.msra.mxu0 0.0
      %2528 = vmatprep.subr.mxu0 0.0
      %2529 = vmatpush2.msra.mxu0 0.0
      %2530 = vmatprep.subr.mxu0 0.0
      %2531 = vmatpush2.msra.mxu0 0.0
      %2532 = vmatprep.mubr.f32.mxu0 0.0
      %2533 = vmatmul.mubr.f32.gmra.mxu0 %v2464
      %v2534 = vpop.f32.mrf.mxu0
      %v2535 = vadd.f32 0.0, %v2534
      %v2536 = vpop.f32.mrf.mxu0
      %2537 = vdwg.mxu0
      %2539 = vrot.lane.b32.xlu0 %v2185, 8
      %v2540 = vpop.permute.xlu0 %2539
      %2543 = vrot.lane.b32.xlu0 %v2360, 16
      %v2544 = vpop.permute.xlu0 %2543
      %2547 = vrot.lane.b32.xlu0 %v2535, 24
      %v2548 = vpop.permute.xlu0 %2547
      %v2550 = vsel %vm859, %v2010, %v2540
      %v2551 = vsel %vm1537, %v2550, %v2544
      %v2552 = vsel %vm1539, %v2551, %v2548
      %v2553 = vld [vmem:[%s14] sm:$0xff]
      %v2554 = vld [vmem:[%s14 + $0x8] sm:$0xff]
      %v2555 = vld [vmem:[%s14 + $0x10] sm:$0xff]
      %v2556 = vld [vmem:[%s14 + $0x18] sm:$0xff]
      %v2557 = vld [vmem:[%s15] sm:$0x1]
      %v2559 = vlaneseq
      %v2560 = vshrl.u32 %v2559, 7
      %v2561 = vsub.s32 0, %v2560
      %v2562 = vrot.slane %v2557, %v2561
      %v2565 = vsel %vm781, %v2552, 0
      %2567 = vmatprep.subr.mxu0 0.0
      %2568 = vmatpush1.msra.mxu0 0.0
      %2569 = vmatprep.subr.mxu0 0.0
      %2570 = vmatpush1.msra.mxu0 0.0
      %2571 = vmatprep.subr.mxu0 0.0
      %2572 = vmatpush1.msra.mxu0 0.0
      %2573 = vmatprep.subr.mxu0 0.0
      %2574 = vmatpush1.msra.mxu0 0.0
      %2575 = vmatprep.subr.mxu0 0.0
      %2576 = vmatpush1.msra.mxu0 0.0
      %2577 = vmatprep.subr.mxu0 0.0
      %2578 = vmatpush1.msra.mxu0 0.0
      %2579 = vmatprep.subr.mxu0 0.0
      %2580 = vmatpush1.msra.mxu0 0.0
      %2581 = vmatprep.subr.mxu0 0.0
      %2582 = vmatpush1.msra.mxu0 0.0
      %2583 = vmatprep.subr.mxu0 0.0
      %2584 = vmatpush1.msra.mxu0 0.0
      %2585 = vmatprep.subr.mxu0 0.0
      %2586 = vmatpush1.msra.mxu0 0.0
      %2587 = vmatprep.subr.mxu0 0.0
      %2588 = vmatpush1.msra.mxu0 0.0
      %2589 = vmatprep.subr.mxu0 0.0
      %2590 = vmatpush1.msra.mxu0 0.0
      %2591 = vmatprep.subr.mxu0 0.0
      %2592 = vmatpush1.msra.mxu0 %v2556
      %2593 = vmatprep.subr.mxu0 0.0
      %2594 = vmatpush1.msra.mxu0 %v2555
      %2595 = vmatprep.subr.mxu0 0.0
      %2596 = vmatpush1.msra.mxu0 %v2554
      %2597 = vmatprep.subr.mxu0 0.0
      %2598 = vmatpush1.msra.mxu0 %v2553
      %2599 = vmatprep.subr.mxu0 0.0
      %2600 = vmatpush2.msra.mxu0 0.0
      %2601 = vmatprep.subr.mxu0 0.0
      %2602 = vmatpush2.msra.mxu0 0.0
      %2603 = vmatprep.subr.mxu0 0.0
      %2604 = vmatpush2.msra.mxu0 0.0
      %2605 = vmatprep.subr.mxu0 0.0
      %2606 = vmatpush2.msra.mxu0 0.0
      %2607 = vmatprep.subr.mxu0 0.0
      %2608 = vmatpush2.msra.mxu0 0.0
      %2609 = vmatprep.subr.mxu0 0.0
      %2610 = vmatpush2.msra.mxu0 0.0
      %2611 = vmatprep.subr.mxu0 0.0
      %2612 = vmatpush2.msra.mxu0 0.0
      %2613 = vmatprep.subr.mxu0 0.0
      %2614 = vmatpush2.msra.mxu0 0.0
      %2615 = vmatprep.subr.mxu0 0.0
      %2616 = vmatpush2.msra.mxu0 0.0
      %2617 = vmatprep.subr.mxu0 0.0
      %2618 = vmatpush2.msra.mxu0 0.0
      %2619 = vmatprep.subr.mxu0 0.0
      %2620 = vmatpush2.msra.mxu0 0.0
      %2621 = vmatprep.subr.mxu0 0.0
      %2622 = vmatpush2.msra.mxu0 0.0
      %2623 = vmatprep.subr.mxu0 0.0
      %2624 = vmatpush2.msra.mxu0 0.0
      %2625 = vmatprep.subr.mxu0 0.0
      %2626 = vmatpush2.msra.mxu0 0.0
      %2627 = vmatprep.subr.mxu0 0.0
      %2628 = vmatpush2.msra.mxu0 0.0
      %2629 = vmatprep.subr.mxu0 0.0
      %2630 = vmatpush2.msra.mxu0 0.0
      %2631 = vmatprep.mubr.f32.mxu0 0.0
      %2632 = vmatmul.mubr.f32.gmra.mxu0 %v2565
      %v2633 = vpop.f32.mrf.mxu0
      %v2634 = vadd.f32 %v2562, %v2633
      %v2635 = vpop.f32.mrf.mxu0
      %2636 = vdwg.mxu0
      %v2637 = vadd.f32 %v2634, %v1655
      %v2638 = vld [vmem:[%s16] sm:$0x1]
      %v2639 = vld [vmem:[%s17] sm:$0x1]
      %v2640 = vsel %vm781, %v2637, 0.0
      %2641 = vadd.xlane.f32.xlu0 %v2640
      %v2642 = vpop.xlane.xlu0 %2641
      %v2643 = vmul.f32 %v2642, %v1631
      %v2644 = vsub.f32 %v2637, %v2643
      %v2645 = vmul.f32 %v2644, %v2644
      %v2646 = vsel %vm781, %v2645, 0.0
      %2647 = vadd.xlane.f32.xlu0 %v2646
      %v2648 = vpop.xlane.xlu0 %2647
      %v2649 = vmul.f32 %v2648, %v1631
      %v2650 = vadd.f32 %v2649, 1e-05
      %v2651 = vrsqrt.pop %v2650
      %v2652 = vmul.f32 %v2644, %v2651
      %v2654 = vlaneseq
      %v2655 = vshrl.u32 %v2654, 7
      %v2656 = vsub.s32 0, %v2655
      %v2657 = vrot.slane %v2638, %v2656
      %v2659 = vmul.f32 %v2652, %v2657
      %v2661 = vlaneseq
      %v2662 = vshrl.u32 %v2661, 7
      %v2663 = vsub.s32 0, %v2662
      %v2664 = vrot.slane %v2639, %v2663
      %v2666 = vadd.f32 %v2659, %v2664
      %v2667 = vld [vmem:[%s18] sm:$0xff]
      %v2668 = vld [vmem:[%s18 + $0x8] sm:$0xff]
      %v2669 = vld [vmem:[%s18 + $0x10] sm:$0xff]
      %v2670 = vld [vmem:[%s18 + $0x18] sm:$0xff]
      %v2671 = vld [vmem:[%s19] sm:$0x1]
      %v2673 = vlaneseq
      %v2674 = vshrl.u32 %v2673, 7
      %v2675 = vsub.s32 0, %v2674
      %v2676 = vrot.slane %v2671, %v2675
      %v2679 = vsel %vm781, %v2666, 0
      %2681 = vmatprep.subr.mxu0 0.0
      %2682 = vmatpush1.msra.mxu0 0.0
      %2683 = vmatprep.subr.mxu0 0.0
      %2684 = vmatpush1.msra.mxu0 0.0
      %2685 = vmatprep.subr.mxu0 0.0
      %2686 = vmatpush1.msra.mxu0 0.0
      %2687 = vmatprep.subr.mxu0 0.0
      %2688 = vmatpush1.msra.mxu0 0.0
      %2689 = vmatprep.subr.mxu0 0.0
      %2690 = vmatpush1.msra.mxu0 0.0
      %2691 = vmatprep.subr.mxu0 0.0
      %2692 = vmatpush1.msra.mxu0 0.0
      %2693 = vmatprep.subr.mxu0 0.0
      %2694 = vmatpush1.msra.mxu0 0.0
      %2695 = vmatprep.subr.mxu0 0.0
      %2696 = vmatpush1.msra.mxu0 0.0
      %2697 = vmatprep.subr.mxu0 0.0
      %2698 = vmatpush1.msra.mxu0 0.0
      %2699 = vmatprep.subr.mxu0 0.0
      %2700 = vmatpush1.msra.mxu0 0.0
      %2701 = vmatprep.subr.mxu0 0.0
      %2702 = vmatpush1.msra.mxu0 0.0
      %2703 = vmatprep.subr.mxu0 0.0
      %2704 = vmatpush1.msra.mxu0 0.0
      %2705 = vmatprep.subr.mxu0 0.0
      %2706 = vmatpush1.msra.mxu0 %v2670
      %2707 = vmatprep.subr.mxu0 0.0
      %2708 = vmatpush1.msra.mxu0 %v2669
      %2709 = vmatprep.subr.mxu0 0.0
      %2710 = vmatpush1.msra.mxu0 %v2668
      %2711 = vmatprep.subr.mxu0 0.0
      %2712 = vmatpush1.msra.mxu0 %v2667
      %2713 = vmatprep.subr.mxu0 0.0
      %2714 = vmatpush2.msra.mxu0 0.0
      %2715 = vmatprep.subr.mxu0 0.0
      %2716 = vmatpush2.msra.mxu0 0.0
      %2717 = vmatprep.subr.mxu0 0.0
      %2718 = vmatpush2.msra.mxu0 0.0
      %2719 = vmatprep.subr.mxu0 0.0
      %2720 = vmatpush2.msra.mxu0 0.0
      %2721 = vmatprep.subr.mxu0 0.0
      %2722 = vmatpush2.msra.mxu0 0.0
      %2723 = vmatprep.subr.mxu0 0.0
      %2724 = vmatpush2.msra.mxu0 0.0
      %2725 = vmatprep.subr.mxu0 0.0
      %2726 = vmatpush2.msra.mxu0 0.0
      %2727 = vmatprep.subr.mxu0 0.0
      %2728 = vmatpush2.msra.mxu0 0.0
      %2729 = vmatprep.subr.mxu0 0.0
      %2730 = vmatpush2.msra.mxu0 0.0
      %2731 = vmatprep.subr.mxu0 0.0
      %2732 = vmatpush2.msra.mxu0 0.0
      %2733 = vmatprep.subr.mxu0 0.0
      %2734 = vmatpush2.msra.mxu0 0.0
      %2735 = vmatprep.subr.mxu0 0.0
      %2736 = vmatpush2.msra.mxu0 0.0
      %2737 = vmatprep.subr.mxu0 0.0
      %2738 = vmatpush2.msra.mxu0 0.0
      %2739 = vmatprep.subr.mxu0 0.0
      %2740 = vmatpush2.msra.mxu0 0.0
      %2741 = vmatprep.subr.mxu0 0.0
      %2742 = vmatpush2.msra.mxu0 0.0
      %2743 = vmatprep.subr.mxu0 0.0
      %2744 = vmatpush2.msra.mxu0 0.0
      %2745 = vmatprep.mubr.f32.mxu0 0.0
      %2746 = vmatmul.mubr.f32.gmra.mxu0 %v2679
      %v2747 = vpop.f32.mrf.mxu0
      %v2748 = vadd.f32 %v2676, %v2747
      %v2749 = vpop.f32.mrf.mxu0
      %2750 = vdwg.mxu0
      %v2751 = vmax.f32 %v2748, 0.0
      %v2752 = vld [vmem:[%s20] sm:$0xff]
      %v2753 = vld [vmem:[%s20 + $0x8] sm:$0xff]
      %v2754 = vld [vmem:[%s20 + $0x10] sm:$0xff]
      %v2755 = vld [vmem:[%s20 + $0x18] sm:$0xff]
      %v2756 = vld [vmem:[%s20 + $0x20] sm:$0xff]
      %v2757 = vld [vmem:[%s20 + $0x28] sm:$0xff]
      %v2758 = vld [vmem:[%s20 + $0x30] sm:$0xff]
      %v2759 = vld [vmem:[%s20 + $0x38] sm:$0xff]
      %v2760 = vld [vmem:[%s21] sm:$0x1]
      %v2762 = vlaneseq
      %v2763 = vshrl.u32 %v2762, 7
      %v2764 = vsub.s32 0, %v2763
      %v2765 = vrot.slane %v2760, %v2764
      %vm2767 = vcmask 523264
      %v2769 = vsel %vm2767, %v2751, 0
      %2771 = vmatprep.subr.mxu0 0.0
      %2772 = vmatpush1.msra.mxu0 0.0
      %2773 = vmatprep.subr.mxu0 0.0
      %2774 = vmatpush1.msra.mxu0 0.0
      %2775 = vmatprep.subr.mxu0 0.0
      %2776 = vmatpush1.msra.mxu0 0.0
      %2777 = vmatprep.subr.mxu0 0.0
      %2778 = vmatpush1.msra.mxu0 0.0
      %2779 = vmatprep.subr.mxu0 0.0
      %2780 = vmatpush1.msra.mxu0 0.0
      %2781 = vmatprep.subr.mxu0 0.0
      %2782 = vmatpush1.msra.mxu0 0.0
      %2783 = vmatprep.subr.mxu0 0.0
      %2784 = vmatpush1.msra.mxu0 0.0
      %2785 = vmatprep.subr.mxu0 0.0
      %2786 = vmatpush1.msra.mxu0 0.0
      %2787 = vmatprep.subr.mxu0 0.0
      %2788 = vmatpush1.msra.mxu0 %v2759
      %2789 = vmatprep.subr.mxu0 0.0
      %2790 = vmatpush1.msra.mxu0 %v2758
      %2791 = vmatprep.subr.mxu0 0.0
      %2792 = vmatpush1.msra.mxu0 %v2757
      %2793 = vmatprep.subr.mxu0 0.0
      %2794 = vmatpush1.msra.mxu0 %v2756
      %2795 = vmatprep.subr.mxu0 0.0
      %2796 = vmatpush1.msra.mxu0 %v2755
      %2797 = vmatprep.subr.mxu0 0.0
      %2798 = vmatpush1.msra.mxu0 %v2754
      %2799 = vmatprep.subr.mxu0 0.0
      %2800 = vmatpush1.msra.mxu0 %v2753
      %2801 = vmatprep.subr.mxu0 0.0
      %2802 = vmatpush1.msra.mxu0 %v2752
      %2803 = vmatprep.subr.mxu0 0.0
      %2804 = vmatpush2.msra.mxu0 0.0
      %2805 = vmatprep.subr.mxu0 0.0
      %2806 = vmatpush2.msra.mxu0 0.0
      %2807 = vmatprep.subr.mxu0 0.0
      %2808 = vmatpush2.msra.mxu0 0.0
      %2809 = vmatprep.subr.mxu0 0.0
      %2810 = vmatpush2.msra.mxu0 0.0
      %2811 = vmatprep.subr.mxu0 0.0
      %2812 = vmatpush2.msra.mxu0 0.0
      %2813 = vmatprep.subr.mxu0 0.0
      %2814 = vmatpush2.msra.mxu0 0.0
      %2815 = vmatprep.subr.mxu0 0.0
      %2816 = vmatpush2.msra.mxu0 0.0
      %2817 = vmatprep.subr.mxu0 0.0
      %2818 = vmatpush2.msra.mxu0 0.0
      %2819 = vmatprep.subr.mxu0 0.0
      %2820 = vmatpush2.msra.mxu0 0.0
      %2821 = vmatprep.subr.mxu0 0.0
      %2822 = vmatpush2.msra.mxu0 0.0
      %2823 = vmatprep.subr.mxu0 0.0
      %2824 = vmatpush2.msra.mxu0 0.0
      %2825 = vmatprep.subr.mxu0 0.0
      %2826 = vmatpush2.msra.mxu0 0.0
      %2827 = vmatprep.subr.mxu0 0.0
      %2828 = vmatpush2.msra.mxu0 0.0
      %2829 = vmatprep.subr.mxu0 0.0
      %2830 = vmatpush2.msra.mxu0 0.0
      %2831 = vmatprep.subr.mxu0 0.0
      %2832 = vmatpush2.msra.mxu0 0.0
      %2833 = vmatprep.subr.mxu0 0.0
      %2834 = vmatpush2.msra.mxu0 0.0
      %2835 = vmatprep.mubr.f32.mxu0 0.0
      %2836 = vmatmul.mubr.f32.gmra.mxu0 %v2769
      %v2837 = vpop.f32.mrf.mxu0
      %v2838 = vadd.f32 %v2765, %v2837
      %v2839 = vpop.f32.mrf.mxu0
      %2840 = vdwg.mxu0
      %v2841 = vadd.f32 %v2838, %v2666
      %v2842 = vld [vmem:[%s22] sm:$0x1]
      %v2843 = vld [vmem:[%s23] sm:$0x1]
      %v2844 = vsel %vm781, %v2841, 0.0
      %2845 = vadd.xlane.f32.xlu0 %v2844
      %v2846 = vpop.xlane.xlu0 %2845
      %v2847 = vmul.f32 %v2846, %v1631
      %v2848 = vsub.f32 %v2841, %v2847
      %v2849 = vmul.f32 %v2848, %v2848
      %v2850 = vsel %vm781, %v2849, 0.0
      %2851 = vadd.xlane.f32.xlu0 %v2850
      %v2852 = vpop.xlane.xlu0 %2851
      %v2853 = vmul.f32 %v2852, %v1631
      %v2854 = vadd.f32 %v2853, 1e-05
      %v2855 = vrsqrt.pop %v2854
      %v2856 = vmul.f32 %v2848, %v2855
      %v2858 = vlaneseq
      %v2859 = vshrl.u32 %v2858, 7
      %v2860 = vsub.s32 0, %v2859
      %v2861 = vrot.slane %v2842, %v2860
      %v2863 = vmul.f32 %v2856, %v2861
      %v2865 = vlaneseq
      %v2866 = vshrl.u32 %v2865, 7
      %v2867 = vsub.s32 0, %v2866
      %v2868 = vrot.slane %v2843, %v2867
      %v2870 = vadd.f32 %v2863, %v2868
      %2871 = vst.msk [vmem:[%s766] sm:$0xff] %vm781, %v2870
      %p2872 = scmp.lt.s32.totalorder %s35, 1
      %s2873 = scalar_select %p2872, %s35, 1
      %s2874 = smul.addr %s2873, 8
      %s2875 = scalar_lea.vmem %s24, %s2874
      // Predicated region
      $region117: #{decoder_forward.5} parent=115 // pred_check
        %p2876 = pneg %p572
      $region118: #{decoder_forward.5} parent=115 // pred_check_branch
        %2878 = sbr.rel (%p2876) target = $region120
      $region119: #{decoder_forward.5} parent=115 // pred_region
        _
      $region120: #{decoder_forward.5} parent=115 // pred_fallthru
        _
    $region116: #{decoder_forward.5} parent=5 // pred_fallthru
      _
    %p2879 = scmp.le.s32.totalorder 2, %s30
    // Predicated region
    $region121: #{decoder_forward.5} parent=5 // pred_check
      %p2880 = pneg %p2879
    $region122: #{decoder_forward.5} parent=5 // pred_check_branch
      %2882 = sbr.rel (%p2880) target = $region124
    $region123: #{decoder_forward.5} parent=5 // pred_region
      %s2883 = ssub.s32 %s30, 2
      // Predicated region
      $region125: #{decoder_forward.5} parent=123 // pred_check
        %p2884 = pneg %p578
      $region126: #{decoder_forward.5} parent=123 // pred_check_branch
        %2886 = sbr.rel (%p2884) target = $region128
      $region127: #{decoder_forward.5} parent=123 // pred_region
        %p2887 = scmp.lt.s32.totalorder %s36, 1
        %s2888 = scalar_select %p2887, %s36, 1
        %s2889 = smul.addr %s2888, 8
        %s2890 = scalar_lea.vmem %s24, %s2889
      $region128: #{decoder_forward.5} parent=123 // pred_fallthru
        _
    $region124: #{decoder_forward.5} parent=5 // pred_fallthru
      _
  $region6: #{decoder_forward.5} parent=0 // loop_footer
    %s34 = sadd.s32 1, %s30
  $region7: #{decoder_forward.5} parent=0 // loop_footer_branch
    %29 = sbr.rel target = $region3
  $region8: #{decoder_forward.5} parent=0 // loop_exit
    _

// kernel: decoder_forward.6
$region0: #{decoder_forward.6}
  #allocation0 [shape = 'u32[]', space=smem, size = 0x4, offset = 0x4, fixed_abs, tag = 'smem constant byte address 0x4 - core index']
  #allocation1 [shape = 'u32[144,128]{1,0:T(1,128)}', space=vmem, size = 0x12000, scoped, tag = 'internal scratch']
  %s0 = inlined_call_operand.vmem [shape: f32[2,8,32], index: 0, kind: input, shape index: {}]
  %s1 = inlined_call_operand.vmem [shape: f32[2,12,32], index: 1, kind: input, shape index: {}]
  %s2 = inlined_call_operand.vmem [shape: f32[8,8], index: 2, kind: input, shape index: {}]
  %s3 = inlined_call_operand.vmem [shape: f32[2,1,12], index: 3, kind: input, shape index: {}]
  %s4 = inlined_call_operand.vmem [shape: f32[32,96], index: 4, kind: input, shape index: {}]
  %s5 = inlined_call_operand.vmem [shape: f32[1,96], index: 5, kind: input, shape index: {}]
  %s6 = inlined_call_operand.vmem [shape: f32[32,32], index: 6, kind: input, shape index: {}]
  %s7 = inlined_call_operand.vmem [shape: f32[1,32], index: 7, kind: input, shape index: {}]
  %s8 = inlined_call_operand.vmem [shape: f32[1,32], index: 8, kind: input, shape index: {}]
  %s9 = inlined_call_operand.vmem [shape: f32[1,32], index: 9, kind: input, shape index: {}]
  %s10 = inlined_call_operand.vmem [shape: f32[32,32], index: 10, kind: input, shape index: {}]
  %s11 = inlined_call_operand.vmem [shape: f32[1,32], index: 11, kind: input, shape index: {}]
  %s12 = inlined_call_operand.vmem [shape: f32[32,64], index: 12, kind: input, shape index: {}]
  %s13 = inlined_call_operand.vmem [shape: f32[1,64], index: 13, kind: input, shape index: {}]
  %s14 = inlined_call_operand.vmem [shape: f32[32,32], index: 14, kind: input, shape index: {}]
  %s15 = inlined_call_operand.vmem [shape: f32[1,32], index: 15, kind: input, shape index: {}]
  %s16 = inlined_call_operand.vmem [shape: f32[1,32], index: 16, kind: input, shape index: {}]
  %s17 = inlined_call_operand.vmem [shape: f32[1,32], index: 17, kind: input, shape index: {}]
  %s18 = inlined_call_operand.vmem [shape: f32[32,64], index: 18, kind: input, shape index: {}]
  %s19 = inlined_call_operand.vmem [shape: f32[1,64], index: 19, kind: input, shape index: {}]
  %s20 = inlined_call_operand.vmem [shape: f32[64,32], index: 20, kind: input, shape index: {}]
  %s21 = inlined_call_operand.vmem [shape: f32[1,32], index: 21, kind: input, shape index: {}]
  %s22 = inlined_call_operand.vmem [shape: f32[1,32], index: 22, kind: input, shape index: {}]
  %s23 = inlined_call_operand.hbm [shape: f32[1,32], index: 23, kind: input, shape index: {}]
  %s24 = inlined_call_operand.vmem [shape: f32[2,8,32], index: 24, kind: output, shape index: {}]
  %s25 = sld [smem:[#allocation0]]
  $region133: #{decoder_forward.6} parent=0
    _
  %s27 = ssub.s32 1, %s25
  %s28 = scalar_select 0, %s27, %s25
  $region1: #{decoder_forward.6} parent=0
    #allocation2 [shape = 'u8[512]{0}', space=vmem, size = 0x400, scoped, tag = 'input window, operand 23, single buffered']
    #allocation3 [shape = 's32[2]{0}', space=sflag, size = 0x8, scoped, tag = 'scoped memory for decoder_forward.6']
    %29 = vsyncpa [#allocation3], 0
    loop: start=0, step=1, limit=4
    $region2: #{decoder_forward.6} parent=1 // loop_pre_header
      _
    $region3: #{decoder_forward.6} parent=1 // loop_header
      %s31 = sphi 0, %s35
      %p32 = scmp.ge.s32.totalorder %s31, 4
      %s41 = sphi 0, %s43
      %s44 = sphi 0, %s41
      %s45 = sphi 0, %s44
      %s61 = sphi 0, %s45
      %s67 = sphi 0, %s69
      %s70 = sphi 0, %s67
      %s71 = sphi 0, %s70
      %s87 = sphi 0, %s71
      %s91 = sphi 0, %s91
      %s93 = sphi 0, %s91
      %s94 = sphi 0, %s93
      %s108 = sphi 0, %s94
      %s114 = sphi 0, %s116
      %s117 = sphi 0, %s114
      %s118 = sphi 0, %s117
      %s134 = sphi 0, %s118
      %s138 = sphi 0, %s138
      %s140 = sphi 0, %s138
      %s141 = sphi 0, %s140
      %s155 = sphi 0, %s141
      %s159 = sphi 0, %s159
      %s161 = sphi 0, %s159
      %s162 = sphi 0, %s161
      %s176 = sphi 0, %s162
      %s180 = sphi 0, %s180
      %s182 = sphi 0, %s180
      %s183 = sphi 0, %s182
      %s197 = sphi 0, %s183
      %s201 = sphi 0, %s201
      %s203 = sphi 0, %s201
      %s204 = sphi 0, %s203
      %s218 = sphi 0, %s204
      %s222 = sphi 0, %s222
      %s224 = sphi 0, %s222
      %s225 = sphi 0, %s224
      %s239 = sphi 0, %s225
      %s243 = sphi 0, %s243
      %s245 = sphi 0, %s243
      %s246 = sphi 0, %s245
      %s260 = sphi 0, %s246
      %s264 = sphi 0, %s264
      %s266 = sphi 0, %s264
      %s267 = sphi 0, %s266
      %s281 = sphi 0, %s267
      %s285 = sphi 0, %s285
      %s287 = sphi 0, %s285
      %s288 = sphi 0, %s287
      %s302 = sphi 0, %s288
      %s306 = sphi 0, %s306
      %s308 = sphi 0, %s306
      %s309 = sphi 0, %s308
      %s323 = sphi 0, %s309
      %s327 = sphi 0, %s327
      %s329 = sphi 0, %s327
      %s330 = sphi 0, %s329
      %s344 = sphi 0, %s330
      %s348 = sphi 0, %s348
      %s350 = sphi 0, %s348
      %s351 = sphi 0, %s350
      %s365 = sphi 0, %s351
      %s369 = sphi 0, %s369
      %s371 = sphi 0, %s369
      %s372 = sphi 0, %s371
      %s386 = sphi 0, %s372
      %s390 = sphi 0, %s390
      %s392 = sphi 0, %s390
      %s393 = sphi 0, %s392
      %s407 = sphi 0, %s393
      %s411 = sphi 0, %s411
      %s413 = sphi 0, %s411
      %s414 = sphi 0, %s413
      %s428 = sphi 0, %s414
      %s432 = sphi 0, %s432
      %s434 = sphi 0, %s432
      %s435 = sphi 0, %s434
      %s449 = sphi 0, %s435
      %s453 = sphi 0, %s453
      %s455 = sphi 0, %s453
      %s456 = sphi 0, %s455
      %s470 = sphi 0, %s456
      %s474 = sphi 0, %s474
      %s476 = sphi 0, %s474
      %s477 = sphi 0, %s476
      %s491 = sphi 0, %s477
      %s495 = sphi 0, %s495
      %s497 = sphi 0, %s495
      %s498 = sphi 0, %s497
      %s512 = sphi 0, %s498
      %s516 = sphi 0, %s516
      %s518 = sphi 0, %s516
      %s519 = sphi 0, %s518
      %s533 = sphi 0, %s519
      %s537 = sphi 0, %s537
      %s539 = sphi 0, %s537
      %s540 = sphi 0, %s539
      %s554 = sphi 0, %s540
      %s560 = sphi 0, %s562
      %s563 = sphi 0, %s560
      %s564 = sphi 0, %s563
      %s580 = sphi 0, %s564
    $region4: #{decoder_forward.6} parent=1 // loop_header_branch
      %34 = sbr.rel (%p32) target = $region8
    $region5: #{decoder_forward.6} parent=1 // loop_body
      %s36 = ssub.s32 %s31, 1
      %s37 = ssub.s32 %s31, 2
      %s38 = sadd.s32 %s31, 1
      %s39 = ssub.s32 %s31, %s38
      %p40 = scmp.eq.s32.totalorder %s39, 0
      %s42 = sadd.s32 %s41, 1
      %s43 = scalar_select %p40, %s41, %s42
      %p46 = pneg %p40
      %p47 = scmp.eq.s32.totalorder %s31, 1
      %p48 = por %p46, %p47
      %p49 = scmp.ne.s32.totalorder %s41, %s44
      %p50 = scmp.eq.s32.totalorder %s31, 0
      %p51 = por %p49, %p50
      %p52 = scmp.ne.s32.totalorder %s41, %s44
      %p53 = scmp.eq.s32.totalorder %s36, 1
      %p54 = por %p52, %p53
      %p55 = scmp.ne.s32.totalorder %s44, %s45
      %p56 = scmp.eq.s32.totalorder %s36, 0
      %p57 = por %p55, %p56
      %p58 = scmp.ne.s32.totalorder %s44, %s45
      %p59 = scmp.eq.s32.totalorder %s37, 1
      %p60 = por %p58, %p59
      %p62 = scmp.ne.s32.totalorder %s45, %s61
      %p63 = scmp.eq.s32.totalorder %s37, 0
      %p64 = por %p62, %p63
      %s65 = ssub.s32 %s31, %s38
      %p66 = scmp.eq.s32.totalorder %s65, 0
      %s68 = sadd.s32 %s67, 1
      %s69 = scalar_select %p66, %s67, %s68
      %p72 = pneg %p66
      %p73 = scmp.eq.s32.totalorder %s31, 1
      %p74 = por %p72, %p73
      %p75 = scmp.ne.s32.totalorder %s67, %s70
      %p76 = scmp.eq.s32.totalorder %s31, 0
      %p77 = por %p75, %p76
      %p78 = scmp.ne.s32.totalorder %s67, %s70
      %p79 = scmp.eq.s32.totalorder %s36, 1
      %p80 = por %p78, %p79
      %p81 = scmp.ne.s32.totalorder %s70, %s71
      %p82 = scmp.eq.s32.totalorder %s36, 0
      %p83 = por %p81, %p82
      %p84 = scmp.ne.s32.totalorder %s70, %s71
      %p85 = scmp.eq.s32.totalorder %s37, 1
      %p86 = por %p84, %p85
      %p88 = scmp.ne.s32.totalorder %s71, %s87
      %p89 = scmp.eq.s32.totalorder %s37, 0
      %p90 = por %p88, %p89
      %s92 = sadd.s32 %s91, 1
      %p95 = scmp.eq.s32.totalorder %s31, 1
      %p96 = scmp.ne.s32.totalorder %s91, %s93
      %p97 = scmp.eq.s32.totalorder %s31, 0
      %p98 = por %p96, %p97
      %p99 = scmp.ne.s32.totalorder %s91, %s93
      %p100 = scmp.eq.s32.totalorder %s36, 1
      %p101 = por %p99, %p100
      %p102 = scmp.ne.s32.totalorder %s93, %s94
      %p103 = scmp.eq.s32.totalorder %s36, 0
      %p104 = por %p102, %p103
      %p105 = scmp.ne.s32.totalorder %s93, %s94
      %p106 = scmp.eq.s32.totalorder %s37, 1
      %p107 = por %p105, %p106
      %p109 = scmp.ne.s32.totalorder %s94, %s108
      %p110 = scmp.eq.s32.totalorder %s37, 0
      %p111 = por %p109, %p110
      %s112 = ssub.s32 %s31, %s38
      %p113 = scmp.eq.s32.totalorder %s112, 0
      %s115 = sadd.s32 %s114, 1
      %s116 = scalar_select %p113, %s114, %s115
      %p119 = pneg %p113
      %p120 = scmp.eq.s32.totalorder %s31, 1
      %p121 = por %p119, %p120
      %p122 = scmp.ne.s32.totalorder %s114, %s117
      %p123 = scmp.eq.s32.totalorder %s31, 0
      %p124 = por %p122, %p123
      %p125 = scmp.ne.s32.totalorder %s114, %s117
      %p126 = scmp.eq.s32.totalorder %s36, 1
      %p127 = por %p125, %p126
      %p128 = scmp.ne.s32.totalorder %s117, %s118
      %p129 = scmp.eq.s32.totalorder %s36, 0
      %p130 = por %p128, %p129
      %p131 = scmp.ne.s32.totalorder %s117, %s118
      %p132 = scmp.eq.s32.totalorder %s37, 1
      %p133 = por %p131, %p132
      %p135 = scmp.ne.s32.totalorder %s118, %s134
      %p136 = scmp.eq.s32.totalorder %s37, 0
      %p137 = por %p135, %p136
      %s139 = sadd.s32 %s138, 1
      %p142 = scmp.eq.s32.totalorder %s31, 1
      %p143 = scmp.ne.s32.totalorder %s138, %s140
      %p144 = scmp.eq.s32.totalorder %s31, 0
      %p145 = por %p143, %p144
      %p146 = scmp.ne.s32.totalorder %s138, %s140
      %p147 = scmp.eq.s32.totalorder %s36, 1
      %p148 = por %p146, %p147
      %p149 = scmp.ne.s32.totalorder %s140, %s141
      %p150 = scmp.eq.s32.totalorder %s36, 0
      %p151 = por %p149, %p150
      %p152 = scmp.ne.s32.totalorder %s140, %s141
      %p153 = scmp.eq.s32.totalorder %s37, 1
      %p154 = por %p152, %p153
      %p156 = scmp.ne.s32.totalorder %s141, %s155
      %p157 = scmp.eq.s32.totalorder %s37, 0
      %p158 = por %p156, %p157
      %s160 = sadd.s32 %s159, 1
      %p163 = scmp.eq.s32.totalorder %s31, 1
      %p164 = scmp.ne.s32.totalorder %s159, %s161
      %p165 = scmp.eq.s32.totalorder %s31, 0
      %p166 = por %p164, %p165
      %p167 = scmp.ne.s32.totalorder %s159, %s161
      %p168 = scmp.eq.s32.totalorder %s36, 1
      %p169 = por %p167, %p168
      %p170 = scmp.ne.s32.totalorder %s161, %s162
      %p171 = scmp.eq.s32.totalorder %s36, 0
      %p172 = por %p170, %p171
      %p173 = scmp.ne.s32.totalorder %s161, %s162
      %p174 = scmp.eq.s32.totalorder %s37, 1
      %p175 = por %p173, %p174
      %p177 = scmp.ne.s32.totalorder %s162, %s176
      %p178 = scmp.eq.s32.totalorder %s37, 0
      %p179 = por %p177, %p178
      %s181 = sadd.s32 %s180, 1
      %p184 = scmp.eq.s32.totalorder %s31, 1
      %p185 = scmp.ne.s32.totalorder %s180, %s182
      %p186 = scmp.eq.s32.totalorder %s31, 0
      %p187 = por %p185, %p186
      %p188 = scmp.ne.s32.totalorder %s180, %s182
      %p189 = scmp.eq.s32.totalorder %s36, 1
      %p190 = por %p188, %p189
      %p191 = scmp.ne.s32.totalorder %s182, %s183
      %p192 = scmp.eq.s32.totalorder %s36, 0
      %p193 = por %p191, %p192
      %p194 = scmp.ne.s32.totalorder %s182, %s183
      %p195 = scmp.eq.s32.totalorder %s37, 1
      %p196 = por %p194, %p195
      %p198 = scmp.ne.s32.totalorder %s183, %s197
      %p199 = scmp.eq.s32.totalorder %s37, 0
      %p200 = por %p198, %p199
      %s202 = sadd.s32 %s201, 1
      %p205 = scmp.eq.s32.totalorder %s31, 1
      %p206 = scmp.ne.s32.totalorder %s201, %s203
      %p207 = scmp.eq.s32.totalorder %s31, 0
      %p208 = por %p206, %p207
      %p209 = scmp.ne.s32.totalorder %s201, %s203
      %p210 = scmp.eq.s32.totalorder %s36, 1
      %p211 = por %p209, %p210
      %p212 = scmp.ne.s32.totalorder %s203, %s204
      %p213 = scmp.eq.s32.totalorder %s36, 0
      %p214 = por %p212, %p213
      %p215 = scmp.ne.s32.totalorder %s203, %s204
      %p216 = scmp.eq.s32.totalorder %s37, 1
      %p217 = por %p215, %p216
      %p219 = scmp.ne.s32.totalorder %s204, %s218
      %p220 = scmp.eq.s32.totalorder %s37, 0
      %p221 = por %p219, %p220
      %s223 = sadd.s32 %s222, 1
      %p226 = scmp.eq.s32.totalorder %s31, 1
      %p227 = scmp.ne.s32.totalorder %s222, %s224
      %p228 = scmp.eq.s32.totalorder %s31, 0
      %p229 = por %p227, %p228
      %p230 = scmp.ne.s32.totalorder %s222, %s224
      %p231 = scmp.eq.s32.totalorder %s36, 1
      %p232 = por %p230, %p231
      %p233 = scmp.ne.s32.totalorder %s224, %s225
      %p234 = scmp.eq.s32.totalorder %s36, 0
      %p235 = por %p233, %p234
      %p236 = scmp.ne.s32.totalorder %s224, %s225
      %p237 = scmp.eq.s32.totalorder %s37, 1
      %p238 = por %p236, %p237
      %p240 = scmp.ne.s32.totalorder %s225, %s239
      %p241 = scmp.eq.s32.totalorder %s37, 0
      %p242 = por %p240, %p241
      %s244 = sadd.s32 %s243, 1
      %p247 = scmp.eq.s32.totalorder %s31, 1
      %p248 = scmp.ne.s32.totalorder %s243, %s245
      %p249 = scmp.eq.s32.totalorder %s31, 0
      %p250 = por %p248, %p249
      %p251 = scmp.ne.s32.totalorder %s243, %s245
      %p252 = scmp.eq.s32.totalorder %s36, 1
      %p253 = por %p251, %p252
      %p254 = scmp.ne.s32.totalorder %s245, %s246
      %p255 = scmp.eq.s32.totalorder %s36, 0
      %p256 = por %p254, %p255
      %p257 = scmp.ne.s32.totalorder %s245, %s246
      %p258 = scmp.eq.s32.totalorder %s37, 1
      %p259 = por %p257, %p258
      %p261 = scmp.ne.s32.totalorder %s246, %s260
      %p262 = scmp.eq.s32.totalorder %s37, 0
      %p263 = por %p261, %p262
      %s265 = sadd.s32 %s264, 1
      %p268 = scmp.eq.s32.totalorder %s31, 1
      %p269 = scmp.ne.s32.totalorder %s264, %s266
      %p270 = scmp.eq.s32.totalorder %s31, 0
      %p271 = por %p269, %p270
      %p272 = scmp.ne.s32.totalorder %s264, %s266
      %p273 = scmp.eq.s32.totalorder %s36, 1
      %p274 = por %p272, %p273
      %p275 = scmp.ne.s32.totalorder %s266, %s267
      %p276 = scmp.eq.s32.totalorder %s36, 0
      %p277 = por %p275, %p276
      %p278 = scmp.ne.s32.totalorder %s266, %s267
      %p279 = scmp.eq.s32.totalorder %s37, 1
      %p280 = por %p278, %p279
      %p282 = scmp.ne.s32.totalorder %s267, %s281
      %p283 = scmp.eq.s32.totalorder %s37, 0
      %p284 = por %p282, %p283
      %s286 = sadd.s32 %s285, 1
      %p289 = scmp.eq.s32.totalorder %s31, 1
      %p290 = scmp.ne.s32.totalorder %s285, %s287
      %p291 = scmp.eq.s32.totalorder %s31, 0
      %p292 = por %p290, %p291
      %p293 = scmp.ne.s32.totalorder %s285, %s287
      %p294 = scmp.eq.s32.totalorder %s36, 1
      %p295 = por %p293, %p294
      %p296 = scmp.ne.s32.totalorder %s287, %s288
      %p297 = scmp.eq.s32.totalorder %s36, 0
      %p298 = por %p296, %p297
      %p299 = scmp.ne.s32.totalorder %s287, %s288
      %p300 = scmp.eq.s32.totalorder %s37, 1
      %p301 = por %p299, %p300
      %p303 = scmp.ne.s32.totalorder %s288, %s302
      %p304 = scmp.eq.s32.totalorder %s37, 0
      %p305 = por %p303, %p304
      %s307 = sadd.s32 %s306, 1
      %p310 = scmp.eq.s32.totalorder %s31, 1
      %p311 = scmp.ne.s32.totalorder %s306, %s308
      %p312 = scmp.eq.s32.totalorder %s31, 0
      %p313 = por %p311, %p312
      %p314 = scmp.ne.s32.totalorder %s306, %s308
      %p315 = scmp.eq.s32.totalorder %s36, 1
      %p316 = por %p314, %p315
      %p317 = scmp.ne.s32.totalorder %s308, %s309
      %p318 = scmp.eq.s32.totalorder %s36, 0
      %p319 = por %p317, %p318
      %p320 = scmp.ne.s32.totalorder %s308, %s309
      %p321 = scmp.eq.s32.totalorder %s37, 1
      %p322 = por %p320, %p321
      %p324 = scmp.ne.s32.totalorder %s309, %s323
      %p325 = scmp.eq.s32.totalorder %s37, 0
      %p326 = por %p324, %p325
      %s328 = sadd.s32 %s327, 1
      %p331 = scmp.eq.s32.totalorder %s31, 1
      %p332 = scmp.ne.s32.totalorder %s327, %s329
      %p333 = scmp.eq.s32.totalorder %s31, 0
      %p334 = por %p332, %p333
      %p335 = scmp.ne.s32.totalorder %s327, %s329
      %p336 = scmp.eq.s32.totalorder %s36, 1
      %p337 = por %p335, %p336
      %p338 = scmp.ne.s32.totalorder %s329, %s330
      %p339 = scmp.eq.s32.totalorder %s36, 0
      %p340 = por %p338, %p339
      %p341 = scmp.ne.s32.totalorder %s329, %s330
      %p342 = scmp.eq.s32.totalorder %s37, 1
      %p343 = por %p341, %p342
      %p345 = scmp.ne.s32.totalorder %s330, %s344
      %p346 = scmp.eq.s32.totalorder %s37, 0
      %p347 = por %p345, %p346
      %s349 = sadd.s32 %s348, 1
      %p352 = scmp.eq.s32.totalorder %s31, 1
      %p353 = scmp.ne.s32.totalorder %s348, %s350
      %p354 = scmp.eq.s32.totalorder %s31, 0
      %p355 = por %p353, %p354
      %p356 = scmp.ne.s32.totalorder %s348, %s350
      %p357 = scmp.eq.s32.totalorder %s36, 1
      %p358 = por %p356, %p357
      %p359 = scmp.ne.s32.totalorder %s350, %s351
      %p360 = scmp.eq.s32.totalorder %s36, 0
      %p361 = por %p359, %p360
      %p362 = scmp.ne.s32.totalorder %s350, %s351
      %p363 = scmp.eq.s32.totalorder %s37, 1
      %p364 = por %p362, %p363
      %p366 = scmp.ne.s32.totalorder %s351, %s365
      %p367 = scmp.eq.s32.totalorder %s37, 0
      %p368 = por %p366, %p367
      %s370 = sadd.s32 %s369, 1
      %p373 = scmp.eq.s32.totalorder %s31, 1
      %p374 = scmp.ne.s32.totalorder %s369, %s371
      %p375 = scmp.eq.s32.totalorder %s31, 0
      %p376 = por %p374, %p375
      %p377 = scmp.ne.s32.totalorder %s369, %s371
      %p378 = scmp.eq.s32.totalorder %s36, 1
      %p379 = por %p377, %p378
      %p380 = scmp.ne.s32.totalorder %s371, %s372
      %p381 = scmp.eq.s32.totalorder %s36, 0
      %p382 = por %p380, %p381
      %p383 = scmp.ne.s32.totalorder %s371, %s372
      %p384 = scmp.eq.s32.totalorder %s37, 1
      %p385 = por %p383, %p384
      %p387 = scmp.ne.s32.totalorder %s372, %s386
      %p388 = scmp.eq.s32.totalorder %s37, 0
      %p389 = por %p387, %p388
      %s391 = sadd.s32 %s390, 1
      %p394 = scmp.eq.s32.totalorder %s31, 1
      %p395 = scmp.ne.s32.totalorder %s390, %s392
      %p396 = scmp.eq.s32.totalorder %s31, 0
      %p397 = por %p395, %p396
      %p398 = scmp.ne.s32.totalorder %s390, %s392
      %p399 = scmp.eq.s32.totalorder %s36, 1
      %p400 = por %p398, %p399
      %p401 = scmp.ne.s32.totalorder %s392, %s393
      %p402 = scmp.eq.s32.totalorder %s36, 0
      %p403 = por %p401, %p402
      %p404 = scmp.ne.s32.totalorder %s392, %s393
      %p405 = scmp.eq.s32.totalorder %s37, 1
      %p406 = por %p404, %p405
      %p408 = scmp.ne.s32.totalorder %s393, %s407
      %p409 = scmp.eq.s32.totalorder %s37, 0
      %p410 = por %p408, %p409
      %s412 = sadd.s32 %s411, 1
      %p415 = scmp.eq.s32.totalorder %s31, 1
      %p416 = scmp.ne.s32.totalorder %s411, %s413
      %p417 = scmp.eq.s32.totalorder %s31, 0
      %p418 = por %p416, %p417
      %p419 = scmp.ne.s32.totalorder %s411, %s413
      %p420 = scmp.eq.s32.totalorder %s36, 1
      %p421 = por %p419, %p420
      %p422 = scmp.ne.s32.totalorder %s413, %s414
      %p423 = scmp.eq.s32.totalorder %s36, 0
      %p424 = por %p422, %p423
      %p425 = scmp.ne.s32.totalorder %s413, %s414
      %p426 = scmp.eq.s32.totalorder %s37, 1
      %p427 = por %p425, %p426
      %p429 = scmp.ne.s32.totalorder %s414, %s428
      %p430 = scmp.eq.s32.totalorder %s37, 0
      %p431 = por %p429, %p430
      %s433 = sadd.s32 %s432, 1
      %p436 = scmp.eq.s32.totalorder %s31, 1
      %p437 = scmp.ne.s32.totalorder %s432, %s434
      %p438 = scmp.eq.s32.totalorder %s31, 0
      %p439 = por %p437, %p438
      %p440 = scmp.ne.s32.totalorder %s432, %s434
      %p441 = scmp.eq.s32.totalorder %s36, 1
      %p442 = por %p440, %p441
      %p443 = scmp.ne.s32.totalorder %s434, %s435
      %p444 = scmp.eq.s32.totalorder %s36, 0
      %p445 = por %p443, %p444
      %p446 = scmp.ne.s32.totalorder %s434, %s435
      %p447 = scmp.eq.s32.totalorder %s37, 1
      %p448 = por %p446, %p447
      %p450 = scmp.ne.s32.totalorder %s435, %s449
      %p451 = scmp.eq.s32.totalorder %s37, 0
      %p452 = por %p450, %p451
      %s454 = sadd.s32 %s453, 1
      %p457 = scmp.eq.s32.totalorder %s31, 1
      %p458 = scmp.ne.s32.totalorder %s453, %s455
      %p459 = scmp.eq.s32.totalorder %s31, 0
      %p460 = por %p458, %p459
      %p461 = scmp.ne.s32.totalorder %s453, %s455
      %p462 = scmp.eq.s32.totalorder %s36, 1
      %p463 = por %p461, %p462
      %p464 = scmp.ne.s32.totalorder %s455, %s456
      %p465 = scmp.eq.s32.totalorder %s36, 0
      %p466 = por %p464, %p465
      %p467 = scmp.ne.s32.totalorder %s455, %s456
      %p468 = scmp.eq.s32.totalorder %s37, 1
      %p469 = por %p467, %p468
      %p471 = scmp.ne.s32.totalorder %s456, %s470
      %p472 = scmp.eq.s32.totalorder %s37, 0
      %p473 = por %p471, %p472
      %s475 = sadd.s32 %s474, 1
      %p478 = scmp.eq.s32.totalorder %s31, 1
      %p479 = scmp.ne.s32.totalorder %s474, %s476
      %p480 = scmp.eq.s32.totalorder %s31, 0
      %p481 = por %p479, %p480
      %p482 = scmp.ne.s32.totalorder %s474, %s476
      %p483 = scmp.eq.s32.totalorder %s36, 1
      %p484 = por %p482, %p483
      %p485 = scmp.ne.s32.totalorder %s476, %s477
      %p486 = scmp.eq.s32.totalorder %s36, 0
      %p487 = por %p485, %p486
      %p488 = scmp.ne.s32.totalorder %s476, %s477
      %p489 = scmp.eq.s32.totalorder %s37, 1
      %p490 = por %p488, %p489
      %p492 = scmp.ne.s32.totalorder %s477, %s491
      %p493 = scmp.eq.s32.totalorder %s37, 0
      %p494 = por %p492, %p493
      %s496 = sadd.s32 %s495, 1
      %p499 = scmp.eq.s32.totalorder %s31, 1
      %p500 = scmp.ne.s32.totalorder %s495, %s497
      %p501 = scmp.eq.s32.totalorder %s31, 0
      %p502 = por %p500, %p501
      %p503 = scmp.ne.s32.totalorder %s495, %s497
      %p504 = scmp.eq.s32.totalorder %s36, 1
      %p505 = por %p503, %p504
      %p506 = scmp.ne.s32.totalorder %s497, %s498
      %p507 = scmp.eq.s32.totalorder %s36, 0
      %p508 = por %p506, %p507
      %p509 = scmp.ne.s32.totalorder %s497, %s498
      %p510 = scmp.eq.s32.totalorder %s37, 1
      %p511 = por %p509, %p510
      %p513 = scmp.ne.s32.totalorder %s498, %s512
      %p514 = scmp.eq.s32.totalorder %s37, 0
      %p515 = por %p513, %p514
      %s517 = sadd.s32 %s516, 1
      %p520 = scmp.eq.s32.totalorder %s31, 1
      %p521 = scmp.ne.s32.totalorder %s516, %s518
      %p522 = scmp.eq.s32.totalorder %s31, 0
      %p523 = por %p521, %p522
      %p524 = scmp.ne.s32.totalorder %s516, %s518
      %p525 = scmp.eq.s32.totalorder %s36, 1
      %p526 = por %p524, %p525
      %p527 = scmp.ne.s32.totalorder %s518, %s519
      %p528 = scmp.eq.s32.totalorder %s36, 0
      %p529 = por %p527, %p528
      %p530 = scmp.ne.s32.totalorder %s518, %s519
      %p531 = scmp.eq.s32.totalorder %s37, 1
      %p532 = por %p530, %p531
      %p534 = scmp.ne.s32.totalorder %s519, %s533
      %p535 = scmp.eq.s32.totalorder %s37, 0
      %p536 = por %p534, %p535
      %s538 = sadd.s32 %s537, 1
      %p541 = scmp.eq.s32.totalorder %s31, 1
      %p542 = scmp.ne.s32.totalorder %s537, %s539
      %p543 = scmp.eq.s32.totalorder %s31, 0
      %p544 = por %p542, %p543
      %p545 = scmp.ne.s32.totalorder %s537, %s539
      %p546 = scmp.eq.s32.totalorder %s36, 1
      %p547 = por %p545, %p546
      %p548 = scmp.ne.s32.totalorder %s539, %s540
      %p549 = scmp.eq.s32.totalorder %s36, 0
      %p550 = por %p548, %p549
      %p551 = scmp.ne.s32.totalorder %s539, %s540
      %p552 = scmp.eq.s32.totalorder %s37, 1
      %p553 = por %p551, %p552
      %p555 = scmp.ne.s32.totalorder %s540, %s554
      %p556 = scmp.eq.s32.totalorder %s37, 0
      %p557 = por %p555, %p556
      %s558 = ssub.s32 %s31, %s38
      %p559 = scmp.eq.s32.totalorder %s558, 0
      %s561 = sadd.s32 %s560, 1
      %s562 = scalar_select %p559, %s560, %s561
      %p565 = pneg %p559
      %p566 = scmp.eq.s32.totalorder %s31, 1
      %p567 = por %p565, %p566
      %p568 = scmp.ne.s32.totalorder %s560, %s563
      %p569 = scmp.eq.s32.totalorder %s31, 0
      %p570 = por %p568, %p569
      %p571 = scmp.ne.s32.totalorder %s560, %s563
      %p572 = scmp.eq.s32.totalorder %s36, 1
      %p573 = por %p571, %p572
      %p574 = scmp.ne.s32.totalorder %s563, %s564
      %p575 = scmp.eq.s32.totalorder %s36, 0
      %p576 = por %p574, %p575
      %p577 = scmp.ne.s32.totalorder %s563, %s564
      %p578 = scmp.eq.s32.totalorder %s37, 1
      %p579 = por %p577, %p578
      %p581 = scmp.ne.s32.totalorder %s564, %s580
      %p582 = scmp.eq.s32.totalorder %s37, 0
      %p583 = por %p581, %p582
      %p584 = scmp.le.s32.totalorder 1, %s31
      %p585 = scmp.lt.s32.totalorder %s31, 3
      %p586 = pnand %p584, %p585
      %p587 = pneg %p586
      // Predicated region
      $region9: #{decoder_forward.6} parent=5 // pred_check
        _
      $region10: #{decoder_forward.6} parent=5 // pred_check_branch
        %589 = sbr.rel (%p586) target = $region12
      $region11: #{decoder_forward.6} parent=5 // pred_region
        %s590 = ssub.s32 %s31, 1
        // Predicated region
        $region13: #{decoder_forward.6} parent=11 // pred_check
          %p591 = pneg %p104
        $region14: #{decoder_forward.6} parent=11 // pred_check_branch
          %593 = sbr.rel (%p591) target = $region16
        $region15: #{decoder_forward.6} parent=11 // pred_region
          _
        $region16: #{decoder_forward.6} parent=11 // pred_fallthru
          _
        // Predicated region
        $region17: #{decoder_forward.6} parent=11 // pred_check
          %p594 = pneg %p151
        $region18: #{decoder_forward.6} parent=11 // pred_check_branch
          %596 = sbr.rel (%p594) target = $region20
        $region19: #{decoder_forward.6} parent=11 // pred_region
          _
        $region20: #{decoder_forward.6} parent=11 // pred_fallthru
          _
        // Predicated region
        $region21: #{decoder_forward.6} parent=11 // pred_check
          %p597 = pneg %p172
        $region22: #{decoder_forward.6} parent=11 // pred_check_branch
          %599 = sbr.rel (%p597) target = $region24
        $region23: #{decoder_forward.6} parent=11 // pred_region
          _
        $region24: #{decoder_forward.6} parent=11 // pred_fallthru
          _
        // Predicated region
        $region25: #{decoder_forward.6} parent=11 // pred_check
          %p600 = pneg %p193
        $region26: #{decoder_forward.6} parent=11 // pred_check_branch
          %602 = sbr.rel (%p600) target = $region28
        $region27: #{decoder_forward.6} parent=11 // pred_region
          _
        $region28: #{decoder_forward.6} parent=11 // pred_fallthru
          _
        // Predicated region
        $region29: #{decoder_forward.6} parent=11 // pred_check
          %p603 = pneg %p214
        $region30: #{decoder_forward.6} parent=11 // pred_check_branch
          %605 = sbr.rel (%p603) target = $region32
        $region31: #{decoder_forward.6} parent=11 // pred_region
          _
        $region32: #{decoder_forward.6} parent=11 // pred_fallthru
          _
        // Predicated region
        $region33: #{decoder_forward.6} parent=11 // pred_check
          %p606 = pneg %p235
        $region34: #{decoder_forward.6} parent=11 // pred_check_branch
          %608 = sbr.rel (%p606) target = $region36
        $region35: #{decoder_forward.6} parent=11 // pred_region
          _
        $region36: #{decoder_forward.6} parent=11 // pred_fallthru
          _
        // Predicated region
        $region37: #{decoder_forward.6} parent=11 // pred_check
          %p609 = pneg %p256
        $region38: #{decoder_forward.6} parent=11 // pred_check_branch
          %611 = sbr.rel (%p609) target = $region40
        $region39: #{decoder_forward.6} parent=11 // pred_region
          _
        $region40: #{decoder_forward.6} parent=11 // pred_fallthru
          _
        // Predicated region
        $region41: #{decoder_forward.6} parent=11 // pred_check
          %p612 = pneg %p277
        $region42: #{decoder_forward.6} parent=11 // pred_check_branch
          %614 = sbr.rel (%p612) target = $region44
        $region43: #{decoder_forward.6} parent=11 // pred_region
          _
        $region44: #{decoder_forward.6} parent=11 // pred_fallthru
          _
        // Predicated region
        $region45: #{decoder_forward.6} parent=11 // pred_check
          %p615 = pneg %p298
        $region46: #{decoder_forward.6} parent=11 // pred_check_branch
          %617 = sbr.rel (%p615) target = $region48
        $region47: #{decoder_forward.6} parent=11 // pred_region
          _
        $region48: #{decoder_forward.6} parent=11 // pred_fallthru
          _
        // Predicated region
        $region49: #{decoder_forward.6} parent=11 // pred_check
          %p618 = pneg %p319
        $region50: #{decoder_forward.6} parent=11 // pred_check_branch
          %620 = sbr.rel (%p618) target = $region52
        $region51: #{decoder_forward.6} parent=11 // pred_region
          _
        $region52: #{decoder_forward.6} parent=11 // pred_fallthru
          _
        // Predicated region
        $region53: #{decoder_forward.6} parent=11 // pred_check
          %p621 = pneg %p340
        $region54: #{decoder_forward.6} parent=11 // pred_check_branch
          %623 = sbr.rel (%p621) target = $region56
        $region55: #{decoder_forward.6} parent=11 // pred_region
          _
        $region56: #{decoder_forward.6} parent=11 // pred_fallthru
          _
        // Predicated region
        $region57: #{decoder_forward.6} parent=11 // pred_check
          %p624 = pneg %p361
        $region58: #{decoder_forward.6} parent=11 // pred_check_branch
          %626 = sbr.rel (%p624) target = $region60
        $region59: #{decoder_forward.6} parent=11 // pred_region
          _
        $region60: #{decoder_forward.6} parent=11 // pred_fallthru
          _
        // Predicated region
        $region61: #{decoder_forward.6} parent=11 // pred_check
          %p627 = pneg %p382
        $region62: #{decoder_forward.6} parent=11 // pred_check_branch
          %629 = sbr.rel (%p627) target = $region64
        $region63: #{decoder_forward.6} parent=11 // pred_region
          _
        $region64: #{decoder_forward.6} parent=11 // pred_fallthru
          _
        // Predicated region
        $region65: #{decoder_forward.6} parent=11 // pred_check
          %p630 = pneg %p403
        $region66: #{decoder_forward.6} parent=11 // pred_check_branch
          %632 = sbr.rel (%p630) target = $region68
        $region67: #{decoder_forward.6} parent=11 // pred_region
          _
        $region68: #{decoder_forward.6} parent=11 // pred_fallthru
          _
        // Predicated region
        $region69: #{decoder_forward.6} parent=11 // pred_check
          %p633 = pneg %p424
        $region70: #{decoder_forward.6} parent=11 // pred_check_branch
          %635 = sbr.rel (%p633) target = $region72
        $region71: #{decoder_forward.6} parent=11 // pred_region
          _
        $region72: #{decoder_forward.6} parent=11 // pred_fallthru
          _
        // Predicated region
        $region73: #{decoder_forward.6} parent=11 // pred_check
          %p636 = pneg %p445
        $region74: #{decoder_forward.6} parent=11 // pred_check_branch
          %638 = sbr.rel (%p636) target = $region76
        $region75: #{decoder_forward.6} parent=11 // pred_region
          _
        $region76: #{decoder_forward.6} parent=11 // pred_fallthru
          _
        // Predicated region
        $region77: #{decoder_forward.6} parent=11 // pred_check
          %p639 = pneg %p466
        $region78: #{decoder_forward.6} parent=11 // pred_check_branch
          %641 = sbr.rel (%p639) target = $region80
        $region79: #{decoder_forward.6} parent=11 // pred_region
          _
        $region80: #{decoder_forward.6} parent=11 // pred_fallthru
          _
        // Predicated region
        $region81: #{decoder_forward.6} parent=11 // pred_check
          %p642 = pneg %p487
        $region82: #{decoder_forward.6} parent=11 // pred_check_branch
          %644 = sbr.rel (%p642) target = $region84
        $region83: #{decoder_forward.6} parent=11 // pred_region
          _
        $region84: #{decoder_forward.6} parent=11 // pred_fallthru
          _
        // Predicated region
        $region85: #{decoder_forward.6} parent=11 // pred_check
          %p645 = pneg %p508
        $region86: #{decoder_forward.6} parent=11 // pred_check_branch
          %647 = sbr.rel (%p645) target = $region88
        $region87: #{decoder_forward.6} parent=11 // pred_region
          _
        $region88: #{decoder_forward.6} parent=11 // pred_fallthru
          _
        // Predicated region
        $region89: #{decoder_forward.6} parent=11 // pred_check
          %p648 = pneg %p529
        $region90: #{decoder_forward.6} parent=11 // pred_check_branch
          %650 = sbr.rel (%p648) target = $region92
        $region91: #{decoder_forward.6} parent=11 // pred_region
          _
        $region92: #{decoder_forward.6} parent=11 // pred_fallthru
          _
        // Predicated region
        $region93: #{decoder_forward.6} parent=11 // pred_check
          %p651 = pneg %p550
        $region94: #{decoder_forward.6} parent=11 // pred_check_branch
          %653 = sbr.rel (%p651) target = $region96
        $region95: #{decoder_forward.6} parent=11 // pred_region
          %s655 = ssub.s32 16, 16
          %656 = vsyncadd [#allocation3], %s655
          %s658 = sshll.u32 [#allocation2], 4
          %s659 = int_to_ptr.vmem [resolvable:$true] %s658
          %661 = dma.hbm_to_vmem [thread:$0]  %s23, 16, %s659, [#allocation3]
        $region96: #{decoder_forward.6} parent=11 // pred_fallthru
          _
      $region12: #{decoder_forward.6} parent=5 // pred_fallthru
        _
      %p662 = scmp.lt.s32.totalorder %s31, 2
      // Predicated region
      $region97: #{decoder_forward.6} parent=5 // pred_check
        %p663 = pneg %p662
      $region98: #{decoder_forward.6} parent=5 // pred_check_branch
        %665 = sbr.rel (%p663) target = $region100
      $region99: #{decoder_forward.6} parent=5 // pred_region
        // Predicated region
        $region101: #{decoder_forward.6} parent=99 // pred_check
          %p666 = pneg %p51
        $region102: #{decoder_forward.6} parent=99 // pred_check_branch
          %668 = sbr.rel (%p666) target = $region104
        $region103: #{decoder_forward.6} parent=99 // pred_region
          %p669 = scmp.lt.s32.totalorder %s31, 1
          %s670 = scalar_select %p669, %s31, 1
          %s671 = smul.addr %s670, 8
          %s672 = scalar_lea.vmem %s0, %s671
        $region104: #{decoder_forward.6} parent=99 // pred_fallthru
          _
        // Predicated region
        $region105: #{decoder_forward.6} parent=99 // pred_check
          %p673 = pneg %p77
        $region106: #{decoder_forward.6} parent=99 // pred_check_branch
          %675 = sbr.rel (%p673) target = $region108
        $region107: #{decoder_forward.6} parent=99 // pred_region
          %p676 = scmp.lt.s32.totalorder %s31, 1
          %s677 = scalar_select %p676, %s31, 1
          %s678 = smul.addr %s677, 2
          %s679 = smul.addr %s678, 8
          %s680 = scalar_lea.vmem %s1, %s679
        $region108: #{decoder_forward.6} parent=99 // pred_fallthru
          _
        // Predicated region
        $region109: #{decoder_forward.6} parent=99 // pred_check
          %p681 = pneg %p124
        $region110: #{decoder_forward.6} parent=99 // pred_check_branch
          %683 = sbr.rel (%p681) target = $region112
        $region111: #{decoder_forward.6} parent=99 // pred_region
          %p684 = scmp.lt.s32.totalorder %s31, 1
          %s685 = scalar_select %p684, %s31, 1
          %s686 = scalar_lea.vmem %s3, %s685
        $region112: #{decoder_forward.6} parent=99 // pred_fallthru
          _
      $region100: #{decoder_forward.6} parent=5 // pred_fallthru
        _
      %p687 = scmp.le.s32.totalorder 1, %s31
      %p688 = scmp.lt.s32.totalorder %s31, 3
      %p689 = pnand %p687, %p688
      %p690 = pneg %p689
      // Predicated region
      $region113: #{decoder_forward.6} parent=5 // pred_check
        _
      $region114: #{decoder_forward.6} parent=5 // pred_check_branch
        %692 = sbr.rel (%p689) target = $region116
      $region115: #{decoder_forward.6} parent=5 // pred_region
        %s693 = ssub.s32 %s31, 1
        // Predicated region
        $region117: #{decoder_forward.6} parent=115 // pred_check
          %p694 = pneg %p550
        $region118: #{decoder_forward.6} parent=115 // pred_check_branch
          %696 = sbr.rel (%p694) target = $region120
        $region119: #{decoder_forward.6} parent=115 // pred_region
          %697 = dma.done [#allocation3], 16
        $region120: #{decoder_forward.6} parent=115 // pred_fallthru
          _
        %p698 = scmp.lt.s32.totalorder %s36, 1
        %s699 = scalar_select %p698, %s36, 1
        %s700 = smul.addr %s699, 8
        %s701 = scalar_lea.vmem %s0, %s700
        %p702 = pneg %p57
        %p703 = pneg %p54
        %p704 = scmp.lt.s32.totalorder %s36, 1
        %s705 = scalar_select %p704, %s36, 1
        %s706 = smul.addr %s705, 2
        %s707 = smul.addr %s706, 8
        %s708 = scalar_lea.vmem %s1, %s707
        %p709 = pneg %p83
        %p710 = pneg %p80
        %p711 = pneg %p104
        %p712 = pneg %p101
        %p713 = scmp.lt.s32.totalorder %s36, 1
        %s714 = scalar_select %p713, %s36, 1
        %s715 = scalar_lea.vmem %s3, %s714
        %p716 = pneg %p130
        %p717 = pneg %p127
        %p718 = pneg %p151
        %p719 = pneg %p148
        %p720 = pneg %p172
        %p721 = pneg %p169
        %p722 = pneg %p193
        %p723 = pneg %p190
        %p724 = pneg %p214
        %p725 = pneg %p211
        %p726 = pneg %p235
        %p727 = pneg %p232
        %p728 = pneg %p256
        %p729 = pneg %p253
        %p730 = pneg %p277
        %p731 = pneg %p274
        %p732 = pneg %p298
        %p733 = pneg %p295
        %p734 = pneg %p319
        %p735 = pneg %p316
        %p736 = pneg %p340
        %p737 = pneg %p337
        %p738 = pneg %p361
        %p739 = pneg %p358
        %p740 = pneg %p382
        %p741 = pneg %p379
        %p742 = pneg %p403
        %p743 = pneg %p400
        %p744 = pneg %p424
        %p745 = pneg %p421
        %p746 = pneg %p445
        %p747 = pneg %p442
        %p748 = pneg %p466
        %p749 = pneg %p463
        %p750 = pneg %p487
        %p751 = pneg %p484
        %p752 = pneg %p508
        %p753 = pneg %p505
        %p754 = pneg %p529
        %p755 = pneg %p526
        %p756 = pneg %p550
        %p757 = pneg %p547
        %p758 = pneg %p576
        %p759 = pneg %p573
        %p760 = scmp.lt.s32.totalorder %s36, 1
        %s761 = scalar_select %p760, %s36, 1
        %s762 = smul.addr %s761, 8
        %s763 = scalar_lea.vmem %s24, %s762
        %p764 = scmp.lt.s32.totalorder %s36, 1
        %s765 = scalar_select %p764, %s36, 1
        %s766 = smul.addr %s765, 8
        %s767 = scalar_lea.vmem %s0, %s766
        %p768 = scmp.lt.s32.totalorder %s36, 1
        %s769 = scalar_select %p768, %s36, 1
        %s770 = smul.addr %s769, 2
        %s771 = smul.addr %s770, 8
        %s772 = scalar_lea.vmem %s1, %s771
        %p773 = scmp.lt.s32.totalorder %s36, 1
        %s774 = scalar_select %p773, %s36, 1
        %s775 = scalar_lea.vmem %s3, %s774
        %p776 = scmp.lt.s32.totalorder %s36, 1
        %s777 = scalar_select %p776, %s36, 1
        %s778 = smul.addr %s777, 8
        %s779 = scalar_lea.vmem %s24, %s778
        %v780 = vld [vmem:[%s767] sm:$0xff]
        %v781 = vld [vmem:[%s772] sm:$0xff]
        %v782 = vld [vmem:[%s772 + $0x8] sm:$0xf]
        %v783 = vld [vmem:[%s4] sm:$0xff]
        %v784 = vld [vmem:[%s4 + $0x8] sm:$0xff]
        %v785 = vld [vmem:[%s4 + $0x10] sm:$0xff]
        %v786 = vld [vmem:[%s4 + $0x18] sm:$0xff]
        %v787 = vld [vmem:[%s5] sm:$0x1]
        %v789 = vlaneseq
        %v790 = vshrl.u32 %v789, 7
        %v791 = vsub.s32 0, %v790
        %v792 = vrot.slane %v787, %v791
        %vm794 = vcmask 261120
        %v796 = vsel %vm794, %v780, 0
        %798 = vmatprep.subr.mxu0 0.0
        %799 = vmatpush1.msra.mxu0 0.0
        %800 = vmatprep.subr.mxu0 0.0
        %801 = vmatpush1.msra.mxu0 0.0
        %802 = vmatprep.subr.mxu0 0.0
        %803 = vmatpush1.msra.mxu0 0.0
        %804 = vmatprep.subr.mxu0 0.0
        %805 = vmatpush1.msra.mxu0 0.0
        %806 = vmatprep.subr.mxu0 0.0
        %807 = vmatpush1.msra.mxu0 0.0
        %808 = vmatprep.subr.mxu0 0.0
        %809 = vmatpush1.msra.mxu0 0.0
        %810 = vmatprep.subr.mxu0 0.0
        %811 = vmatpush1.msra.mxu0 0.0
        %812 = vmatprep.subr.mxu0 0.0
        %813 = vmatpush1.msra.mxu0 0.0
        %814 = vmatprep.subr.mxu0 0.0
        %815 = vmatpush1.msra.mxu0 0.0
        %816 = vmatprep.subr.mxu0 0.0
        %817 = vmatpush1.msra.mxu0 0.0
        %818 = vmatprep.subr.mxu0 0.0
        %819 = vmatpush1.msra.mxu0 0.0
        %820 = vmatprep.subr.mxu0 0.0
        %821 = vmatpush1.msra.mxu0 0.0
        %822 = vmatprep.subr.mxu0 0.0
        %823 = vmatpush1.msra.mxu0 %v786
        %824 = vmatprep.subr.mxu0 0.0
        %825 = vmatpush1.msra.mxu0 %v785
        %826 = vmatprep.subr.mxu0 0.0
        %827 = vmatpush1.msra.mxu0 %v784
        %828 = vmatprep.subr.mxu0 0.0
        %829 = vmatpush1.msra.mxu0 %v783
        %830 = vmatprep.subr.mxu0 0.0
        %831 = vmatpush2.msra.mxu0 0.0
        %832 = vmatprep.subr.mxu0 0.0
        %833 = vmatpush2.msra.mxu0 0.0
        %834 = vmatprep.subr.mxu0 0.0
        %835 = vmatpush2.msra.mxu0 0.0
        %836 = vmatprep.subr.mxu0 0.0
        %837 = vmatpush2.msra.mxu0 0.0
        %838 = vmatprep.subr.mxu0 0.0
        %839 = vmatpush2.msra.mxu0 0.0
        %840 = vmatprep.subr.mxu0 0.0
        %841 = vmatpush2.msra.mxu0 0.0
        %842 = vmatprep.subr.mxu0 0.0
        %843 = vmatpush2.msra.mxu0 0.0
        %844 = vmatprep.subr.mxu0 0.0
        %845 = vmatpush2.msra.mxu0 0.0
        %846 = vmatprep.subr.mxu0 0.0
        %847 = vmatpush2.msra.mxu0 0.0
        %848 = vmatprep.subr.mxu0 0.0
        %849 = vmatpush2.msra.mxu0 0.0
        %850 = vmatprep.subr.mxu0 0.0
        %851 = vmatpush2.msra.mxu0 0.0
        %852 = vmatprep.subr.mxu0 0.0
        %853 = vmatpush2.msra.mxu0 0.0
        %854 = vmatprep.subr.mxu0 0.0
        %855 = vmatpush2.msra.mxu0 0.0
        %856 = vmatprep.subr.mxu0 0.0
        %857 = vmatpush2.msra.mxu0 0.0
        %858 = vmatprep.subr.mxu0 0.0
        %859 = vmatpush2.msra.mxu0 0.0
        %860 = vmatprep.subr.mxu0 0.0
        %861 = vmatpush2.msra.mxu0 0.0
        %862 = vmatprep.mubr.f32.mxu0 0.0
        %863 = vmatmul.mubr.f32.gmra.mxu0 %v796
        %v864 = vpop.f32.mrf.mxu0
        %v865 = vadd.f32 %v792, %v864
        %v866 = vpop.f32.mrf.mxu0
        %867 = vdwg.mxu0
        %v868 = vld [vmem:[%s2] sm:$0xff]
        %870 = vrot.lane.b32.xlu0 %v865, 96
        %v871 = vpop.permute.xlu0 %870
        %vm872 = vcmask 64512
        %v873 = vsel %vm872, %v865, 0
        %v875 = vsel %vm872, %v871, 0
        %877 = vmatprep.subr.mxu0 0.0
        %878 = vmatpush1.xpose.msra.mxu0 0.0
        %879 = vmatprep.subr.mxu0 0.0
        %880 = vmatpush1.xpose.msra.mxu0 0.0
        %881 = vmatprep.subr.mxu0 0.0
        %882 = vmatpush1.xpose.msra.mxu0 0.0
        %883 = vmatprep.subr.mxu0 0.0
        %884 = vmatpush1.xpose.msra.mxu0 0.0
        %885 = vmatprep.subr.mxu0 0.0
        %886 = vmatpush1.xpose.msra.mxu0 0.0
        %887 = vmatprep.subr.mxu0 0.0
        %888 = vmatpush1.xpose.msra.mxu0 0.0
        %889 = vmatprep.subr.mxu0 0.0
        %890 = vmatpush1.xpose.msra.mxu0 0.0
        %891 = vmatprep.subr.mxu0 0.0
        %892 = vmatpush1.xpose.msra.mxu0 0.0
        %893 = vmatprep.subr.mxu0 0.0
        %894 = vmatpush1.xpose.msra.mxu0 0.0
        %895 = vmatprep.subr.mxu0 0.0
        %896 = vmatpush1.xpose.msra.mxu0 0.0
        %897 = vmatprep.subr.mxu0 0.0
        %898 = vmatpush1.xpose.msra.mxu0 0.0
        %899 = vmatprep.subr.mxu0 0.0
        %900 = vmatpush1.xpose.msra.mxu0 0.0
        %901 = vmatprep.subr.mxu0 0.0
        %902 = vmatpush1.xpose.msra.mxu0 0.0
        %903 = vmatprep.subr.mxu0 0.0
        %904 = vmatpush1.xpose.msra.mxu0 0.0
        %905 = vmatprep.subr.mxu0 0.0
        %906 = vmatpush1.xpose.msra.mxu0 0.0
        %907 = vmatprep.subr.mxu0 0.0
        %908 = vmatpush1.xpose.msra.mxu0 %v875
        %909 = vmatprep.subr.mxu0 0.0
        %910 = vmatpush2.xpose.msra.mxu0 0.0
        %911 = vmatprep.subr.mxu0 0.0
        %912 = vmatpush2.xpose.msra.mxu0 0.0
        %913 = vmatprep.subr.mxu0 0.0
        %914 = vmatpush2.xpose.msra.mxu0 0.0
        %915 = vmatprep.subr.mxu0 0.0
        %916 = vmatpush2.xpose.msra.mxu0 0.0
        %917 = vmatprep.subr.mxu0 0.0
        %918 = vmatpush2.xpose.msra.mxu0 0.0
        %919 = vmatprep.subr.mxu0 0.0
        %920 = vmatpush2.xpose.msra.mxu0 0.0
        %921 = vmatprep.subr.mxu0 0.0
        %922 = vmatpush2.xpose.msra.mxu0 0.0
        %923 = vmatprep.subr.mxu0 0.0
        %924 = vmatpush2.xpose.msra.mxu0 0.0
        %925 = vmatprep.subr.mxu0 0.0
        %926 = vmatpush2.xpose.msra.mxu0 0.0
        %927 = vmatprep.subr.mxu0 0.0
        %928 = vmatpush2.xpose.msra.mxu0 0.0
        %929 = vmatprep.subr.mxu0 0.0
        %930 = vmatpush2.xpose.msra.mxu0 0.0
        %931 = vmatprep.subr.mxu0 0.0
        %932 = vmatpush2.xpose.msra.mxu0 0.0
        %933 = vmatprep.subr.mxu0 0.0
        %934 = vmatpush2.xpose.msra.mxu0 0.0
        %935 = vmatprep.subr.mxu0 0.0
        %936 = vmatpush2.xpose.msra.mxu0 0.0
        %937 = vmatprep.subr.mxu0 0.0
        %938 = vmatpush2.xpose.msra.mxu0 0.0
        %939 = vmatprep.subr.mxu0 0.0
        %940 = vmatpush2.xpose.msra.mxu0 0.0
        %941 = vmatprep.mubr.f32.mxu0 0.0
        %942 = vmatmul.mubr.f32.gmra.mxu0 %v873
        %v943 = vpop.f32.mrf.mxu0
        %v944 = vadd.f32 0.0, %v943
        %v945 = vpop.f32.mrf.mxu0
        %946 = vdwg.mxu0
        %v947 = vmul.f32 %v944, 0.17677669
        %v948 = vadd.f32 %v947, %v868
        %v949 = vsel %vm872, %v948, -inf
        %950 = vmax.xlane.f32.xlu0 %v949
        %v951 = vpop.xlane.xlu0 %950
        %v952 = vsub.f32 %v948, %v951
        %v953 = vmul.f32 %v952, 1.442695
        %v954 = vpow.pop %v953
        %v955 = vsel %vm872, %v954, 0.0
        %956 = vadd.xlane.f32.xlu0 %v955
        %v957 = vpop.xlane.xlu0 %956
        %v958 = vrcp.pop %v957
        %v959 = vmul.f32 %v954, %v958
        %960 = vrot.lane.b32.xlu0 %v865, 64
        %v961 = vpop.permute.xlu0 %960
        %v964 = vsel %vm872, %v959, 0
        %966 = vmatprep.subr.mxu0 0.0
        %967 = vmatpush1.msra.mxu0 0.0
        %968 = vmatprep.subr.mxu0 0.0
        %969 = vmatpush1.msra.mxu0 0.0
        %970 = vmatprep.subr.mxu0 0.0
        %971 = vmatpush1.msra.mxu0 0.0
        %972 = vmatprep.subr.mxu0 0.0
        %973 = vmatpush1.msra.mxu0 0.0
        %974 = vmatprep.subr.mxu0 0.0
        %975 = vmatpush1.msra.mxu0 0.0
        %976 = vmatprep.subr.mxu0 0.0
        %977 = vmatpush1.msra.mxu0 0.0
        %978 = vmatprep.subr.mxu0 0.0
        %979 = vmatpush1.msra.mxu0 0.0
        %980 = vmatprep.subr.mxu0 0.0
        %981 = vmatpush1.msra.mxu0 0.0
        %982 = vmatprep.subr.mxu0 0.0
        %983 = vmatpush1.msra.mxu0 0.0
        %984 = vmatprep.subr.mxu0 0.0
        %985 = vmatpush1.msra.mxu0 0.0
        %986 = vmatprep.subr.mxu0 0.0
        %987 = vmatpush1.msra.mxu0 0.0
        %988 = vmatprep.subr.mxu0 0.0
        %989 = vmatpush1.msra.mxu0 0.0
        %990 = vmatprep.subr.mxu0 0.0
        %991 = vmatpush1.msra.mxu0 0.0
        %992 = vmatprep.subr.mxu0 0.0
        %993 = vmatpush1.msra.mxu0 0.0
        %994 = vmatprep.subr.mxu0 0.0
        %995 = vmatpush1.msra.mxu0 0.0
        %996 = vmatprep.subr.mxu0 0.0
        %997 = vmatpush1.msra.mxu0 %v961
        %998 = vmatprep.subr.mxu0 0.0
        %999 = vmatpush2.msra.mxu0 0.0
        %1000 = vmatprep.subr.mxu0 0.0
        %1001 = vmatpush2.msra.mxu0 0.0
        %1002 = vmatprep.subr.mxu0 0.0
        %1003 = vmatpush2.msra.mxu0 0.0
        %1004 = vmatprep.subr.mxu0 0.0
        %1005 = vmatpush2.msra.mxu0 0.0
        %1006 = vmatprep.subr.mxu0 0.0
        %1007 = vmatpush2.msra.mxu0 0.0
        %1008 = vmatprep.subr.mxu0 0.0
        %1009 = vmatpush2.msra.mxu0 0.0
        %1010 = vmatprep.subr.mxu0 0.0
        %1011 = vmatpush2.msra.mxu0 0.0
        %1012 = vmatprep.subr.mxu0 0.0
        %1013 = vmatpush2.msra.mxu0 0.0
        %1014 = vmatprep.subr.mxu0 0.0
        %1015 = vmatpush2.msra.mxu0 0.0
        %1016 = vmatprep.subr.mxu0 0.0
        %1017 = vmatpush2.msra.mxu0 0.0
        %1018 = vmatprep.subr.mxu0 0.0
        %1019 = vmatpush2.msra.mxu0 0.0
        %1020 = vmatprep.subr.mxu0 0.0
        %1021 = vmatpush2.msra.mxu0 0.0
        %1022 = vmatprep.subr.mxu0 0.0
        %1023 = vmatpush2.msra.mxu0 0.0
        %1024 = vmatprep.subr.mxu0 0.0
        %1025 = vmatpush2.msra.mxu0 0.0
        %1026 = vmatprep.subr.mxu0 0.0
        %1027 = vmatpush2.msra.mxu0 0.0
        %1028 = vmatprep.subr.mxu0 0.0
        %1029 = vmatpush2.msra.mxu0 0.0
        %1030 = vmatprep.mubr.f32.mxu0 0.0
        %1031 = vmatmul.mubr.f32.gmra.mxu0 %v964
        %v1032 = vpop.f32.mrf.mxu0
        %v1033 = vadd.f32 0.0, %v1032
        %v1034 = vpop.f32.mrf.mxu0
        %1035 = vdwg.mxu0
        %1036 = vrot.lane.b32.xlu0 %v865, 120
        %v1037 = vpop.permute.xlu0 %1036
        %1038 = vrot.lane.b32.xlu0 %v865, 88
        %v1039 = vpop.permute.xlu0 %1038
        %v1040 = vsel %vm872, %v1037, 0
        %v1042 = vsel %vm872, %v1039, 0
        %1044 = vmatprep.subr.mxu0 0.0
        %1045 = vmatpush1.xpose.msra.mxu0 0.0
        %1046 = vmatprep.subr.mxu0 0.0
        %1047 = vmatpush1.xpose.msra.mxu0 0.0
        %1048 = vmatprep.subr.mxu0 0.0
        %1049 = vmatpush1.xpose.msra.mxu0 0.0
        %1050 = vmatprep.subr.mxu0 0.0
        %1051 = vmatpush1.xpose.msra.mxu0 0.0
        %1052 = vmatprep.subr.mxu0 0.0
        %1053 = vmatpush1.xpose.msra.mxu0 0.0
        %1054 = vmatprep.subr.mxu0 0.0
        %1055 = vmatpush1.xpose.msra.mxu0 0.0
        %1056 = vmatprep.subr.mxu0 0.0
        %1057 = vmatpush1.xpose.msra.mxu0 0.0
        %1058 = vmatprep.subr.mxu0 0.0
        %1059 = vmatpush1.xpose.msra.mxu0 0.0
        %1060 = vmatprep.subr.mxu0 0.0
        %1061 = vmatpush1.xpose.msra.mxu0 0.0
        %1062 = vmatprep.subr.mxu0 0.0
        %1063 = vmatpush1.xpose.msra.mxu0 0.0
        %1064 = vmatprep.subr.mxu0 0.0
        %1065 = vmatpush1.xpose.msra.mxu0 0.0
        %1066 = vmatprep.subr.mxu0 0.0
        %1067 = vmatpush1.xpose.msra.mxu0 0.0
        %1068 = vmatprep.subr.mxu0 0.0
        %1069 = vmatpush1.xpose.msra.mxu0 0.0
        %1070 = vmatprep.subr.mxu0 0.0
        %1071 = vmatpush1.xpose.msra.mxu0 0.0
        %1072 = vmatprep.subr.mxu0 0.0
        %1073 = vmatpush1.xpose.msra.mxu0 0.0
        %1074 = vmatprep.subr.mxu0 0.0
        %1075 = vmatpush1.xpose.msra.mxu0 %v1042
        %1076 = vmatprep.subr.mxu0 0.0
        %1077 = vmatpush2.xpose.msra.mxu0 0.0
        %1078 = vmatprep.subr.mxu0 0.0
        %1079 = vmatpush2.xpose.msra.mxu0 0.0
        %1080 = vmatprep.subr.mxu0 0.0
        %1081 = vmatpush2.xpose.msra.mxu0 0.0
        %1082 = vmatprep.subr.mxu0 0.0
        %1083 = vmatpush2.xpose.msra.mxu0 0.0
        %1084 = vmatprep.subr.mxu0 0.0
        %1085 = vmatpush2.xpose.msra.mxu0 0.0
        %1086 = vmatprep.subr.mxu0 0.0
        %1087 = vmatpush2.xpose.msra.mxu0 0.0
        %1088 = vmatprep.subr.mxu0 0.0
        %1089 = vmatpush2.xpose.msra.mxu0 0.0
        %1090 = vmatprep.subr.mxu0 0.0
        %1091 = vmatpush2.xpose.msra.mxu0 0.0
        %1092 = vmatprep.subr.mxu0 0.0
        %1093 = vmatpush2.xpose.msra.mxu0 0.0
        %1094 = vmatprep.subr.mxu0 0.0
        %1095 = vmatpush2.xpose.msra.mxu0 0.0
        %1096 = vmatprep.subr.mxu0 0.0
        %1097 = vmatpush2.xpose.msra.mxu0 0.0
        %1098 = vmatprep.subr.mxu0 0.0
        %1099 = vmatpush2.xpose.msra.mxu0 0.0
        %1100 = vmatprep.subr.mxu0 0.0
        %1101 = vmatpush2.xpose.msra.mxu0 0.0
        %1102 = vmatprep.subr.mxu0 0.0
        %1103 = vmatpush2.xpose.msra.mxu0 0.0
        %1104 = vmatprep.subr.mxu0 0.0
        %1105 = vmatpush2.xpose.msra.mxu0 0.0
        %1106 = vmatprep.subr.mxu0 0.0
        %1107 = vmatpush2.xpose.msra.mxu0 0.0
        %1108 = vmatprep.mubr.f32.mxu0 0.0
        %1109 = vmatmul.mubr.f32.gmra.mxu0 %v1040
        %v1110 = vpop.f32.mrf.mxu0
        %v1111 = vadd.f32 0.0, %v1110
        %v1112 = vpop.f32.mrf.mxu0
        %1113 = vdwg.mxu0
        %v1114 = vmul.f32 %v1111, 0.17677669
        %v1115 = vadd.f32 %v1114, %v868
        %v1116 = vsel %vm872, %v1115, -inf
        %1117 = vmax.xlane.f32.xlu0 %v1116
        %v1118 = vpop.xlane.xlu0 %1117
        %v1119 = vsub.f32 %v1115, %v1118
        %v1120 = vmul.f32 %v1119, 1.442695
        %v1121 = vpow.pop %v1120
        %v1122 = vsel %vm872, %v1121, 0.0
        %1123 = vadd.xlane.f32.xlu0 %v1122
        %v1124 = vpop.xlane.xlu0 %1123
        %v1125 = vrcp.pop %v1124
        %v1126 = vmul.f32 %v1121, %v1125
        %1127 = vrot.lane.b32.xlu0 %v865, 56
        %v1128 = vpop.permute.xlu0 %1127
        %v1131 = vsel %vm872, %v1126, 0
        %1133 = vmatprep.subr.mxu0 0.0
        %1134 = vmatpush1.msra.mxu0 0.0
        %1135 = vmatprep.subr.mxu0 0.0
        %1136 = vmatpush1.msra.mxu0 0.0
        %1137 = vmatprep.subr.mxu0 0.0
        %1138 = vmatpush1.msra.mxu0 0.0
        %1139 = vmatprep.subr.mxu0 0.0
        %1140 = vmatpush1.msra.mxu0 0.0
        %1141 = vmatprep.subr.mxu0 0.0
        %1142 = vmatpush1.msra.mxu0 0.0
        %1143 = vmatprep.subr.mxu0 0.0
        %1144 = vmatpush1.msra.mxu0 0.0
        %1145 = vmatprep.subr.mxu0 0.0
        %1146 = vmatpush1.msra.mxu0 0.0
        %1147 = vmatprep.subr.mxu0 0.0
        %1148 = vmatpush1.msra.mxu0 0.0
        %1149 = vmatprep.subr.mxu0 0.0
        %1150 = vmatpush1.msra.mxu0 0.0
        %1151 = vmatprep.subr.mxu0 0.0
        %1152 = vmatpush1.msra.mxu0 0.0
        %1153 = vmatprep.subr.mxu0 0.0
        %1154 = vmatpush1.msra.mxu0 0.0
        %1155 = vmatprep.subr.mxu0 0.0
        %1156 = vmatpush1.msra.mxu0 0.0
        %1157 = vmatprep.subr.mxu0 0.0
        %1158 = vmatpush1.msra.mxu0 0.0
        %1159 = vmatprep.subr.mxu0 0.0
        %1160 = vmatpush1.msra.mxu0 0.0
        %1161 = vmatprep.subr.mxu0 0.0
        %1162 = vmatpush1.msra.mxu0 0.0
        %1163 = vmatprep.subr.mxu0 0.0
        %1164 = vmatpush1.msra.mxu0 %v1128
        %1165 = vmatprep.subr.mxu0 0.0
        %1166 = vmatpush2.msra.mxu0 0.0
        %1167 = vmatprep.subr.mxu0 0.0
        %1168 = vmatpush2.msra.mxu0 0.0
        %1169 = vmatprep.subr.mxu0 0.0
        %1170 = vmatpush2.msra.mxu0 0.0
        %1171 = vmatprep.subr.mxu0 0.0
        %1172 = vmatpush2.msra.mxu0 0.0
        %1173 = vmatprep.subr.mxu0 0.0
        %1174 = vmatpush2.msra.mxu0 0.0
        %1175 = vmatprep.subr.mxu0 0.0
        %1176 = vmatpush2.msra.mxu0 0.0
        %1177 = vmatprep.subr.mxu0 0.0
        %1178 = vmatpush2.msra.mxu0 0.0
        %1179 = vmatprep.subr.mxu0 0.0
        %1180 = vmatpush2.msra.mxu0 0.0
        %1181 = vmatprep.subr.mxu0 0.0
        %1182 = vmatpush2.msra.mxu0 0.0
        %1183 = vmatprep.subr.mxu0 0.0
        %1184 = vmatpush2.msra.mxu0 0.0
        %1185 = vmatprep.subr.mxu0 0.0
        %1186 = vmatpush2.msra.mxu0 0.0
        %1187 = vmatprep.subr.mxu0 0.0
        %1188 = vmatpush2.msra.mxu0 0.0
        %1189 = vmatprep.subr.mxu0 0.0
        %1190 = vmatpush2.msra.mxu0 0.0
        %1191 = vmatprep.subr.mxu0 0.0
        %1192 = vmatpush2.msra.mxu0 0.0
        %1193 = vmatprep.subr.mxu0 0.0
        %1194 = vmatpush2.msra.mxu0 0.0
        %1195 = vmatprep.subr.mxu0 0.0
        %1196 = vmatpush2.msra.mxu0 0.0
        %1197 = vmatprep.mubr.f32.mxu0 0.0
        %1198 = vmatmul.mubr.f32.gmra.mxu0 %v1131
        %v1199 = vpop.f32.mrf.mxu0
        %v1200 = vadd.f32 0.0, %v1199
        %v1201 = vpop.f32.mrf.mxu0
        %1202 = vdwg.mxu0
        %1203 = vrot.lane.b32.xlu0 %v865, 112
        %v1204 = vpop.permute.xlu0 %1203
        %1205 = vrot.lane.b32.xlu0 %v865, 80
        %v1206 = vpop.permute.xlu0 %1205
        %v1207 = vsel %vm872, %v1204, 0
        %v1209 = vsel %vm872, %v1206, 0
        %1211 = vmatprep.subr.mxu0 0.0
        %1212 = vmatpush1.xpose.msra.mxu0 0.0
        %1213 = vmatprep.subr.mxu0 0.0
        %1214 = vmatpush1.xpose.msra.mxu0 0.0
        %1215 = vmatprep.subr.mxu0 0.0
        %1216 = vmatpush1.xpose.msra.mxu0 0.0
        %1217 = vmatprep.subr.mxu0 0.0
        %1218 = vmatpush1.xpose.msra.mxu0 0.0
        %1219 = vmatprep.subr.mxu0 0.0
        %1220 = vmatpush1.xpose.msra.mxu0 0.0
        %1221 = vmatprep.subr.mxu0 0.0
        %1222 = vmatpush1.xpose.msra.mxu0 0.0
        %1223 = vmatprep.subr.mxu0 0.0
        %1224 = vmatpush1.xpose.msra.mxu0 0.0
        %1225 = vmatprep.subr.mxu0 0.0
        %1226 = vmatpush1.xpose.msra.mxu0 0.0
        %1227 = vmatprep.subr.mxu0 0.0
        %1228 = vmatpush1.xpose.msra.mxu0 0.0
        %1229 = vmatprep.subr.mxu0 0.0
        %1230 = vmatpush1.xpose.msra.mxu0 0.0
        %1231 = vmatprep.subr.mxu0 0.0
        %1232 = vmatpush1.xpose.msra.mxu0 0.0
        %1233 = vmatprep.subr.mxu0 0.0
        %1234 = vmatpush1.xpose.msra.mxu0 0.0
        %1235 = vmatprep.subr.mxu0 0.0
        %1236 = vmatpush1.xpose.msra.mxu0 0.0
        %1237 = vmatprep.subr.mxu0 0.0
        %1238 = vmatpush1.xpose.msra.mxu0 0.0
        %1239 = vmatprep.subr.mxu0 0.0
        %1240 = vmatpush1.xpose.msra.mxu0 0.0
        %1241 = vmatprep.subr.mxu0 0.0
        %1242 = vmatpush1.xpose.msra.mxu0 %v1209
        %1243 = vmatprep.subr.mxu0 0.0
        %1244 = vmatpush2.xpose.msra.mxu0 0.0
        %1245 = vmatprep.subr.mxu0 0.0
        %1246 = vmatpush2.xpose.msra.mxu0 0.0
        %1247 = vmatprep.subr.mxu0 0.0
        %1248 = vmatpush2.xpose.msra.mxu0 0.0
        %1249 = vmatprep.subr.mxu0 0.0
        %1250 = vmatpush2.xpose.msra.mxu0 0.0
        %1251 = vmatprep.subr.mxu0 0.0
        %1252 = vmatpush2.xpose.msra.mxu0 0.0
        %1253 = vmatprep.subr.mxu0 0.0
        %1254 = vmatpush2.xpose.msra.mxu0 0.0
        %1255 = vmatprep.subr.mxu0 0.0
        %1256 = vmatpush2.xpose.msra.mxu0 0.0
        %1257 = vmatprep.subr.mxu0 0.0
        %1258 = vmatpush2.xpose.msra.mxu0 0.0
        %1259 = vmatprep.subr.mxu0 0.0
        %1260 = vmatpush2.xpose.msra.mxu0 0.0
        %1261 = vmatprep.subr.mxu0 0.0
        %1262 = vmatpush2.xpose.msra.mxu0 0.0
        %1263 = vmatprep.subr.mxu0 0.0
        %1264 = vmatpush2.xpose.msra.mxu0 0.0
        %1265 = vmatprep.subr.mxu0 0.0
        %1266 = vmatpush2.xpose.msra.mxu0 0.0
        %1267 = vmatprep.subr.mxu0 0.0
        %1268 = vmatpush2.xpose.msra.mxu0 0.0
        %1269 = vmatprep.subr.mxu0 0.0
        %1270 = vmatpush2.xpose.msra.mxu0 0.0
        %1271 = vmatprep.subr.mxu0 0.0
        %1272 = vmatpush2.xpose.msra.mxu0 0.0
        %1273 = vmatprep.subr.mxu0 0.0
        %1274 = vmatpush2.xpose.msra.mxu0 0.0
        %1275 = vmatprep.mubr.f32.mxu0 0.0
        %1276 = vmatmul.mubr.f32.gmra.mxu0 %v1207
        %v1277 = vpop.f32.mrf.mxu0
        %v1278 = vadd.f32 0.0, %v1277
        %v1279 = vpop.f32.mrf.mxu0
        %1280 = vdwg.mxu0
        %v1281 = vmul.f32 %v1278, 0.17677669
        %v1282 = vadd.f32 %v1281, %v868
        %v1283 = vsel %vm872, %v1282, -inf
        %1284 = vmax.xlane.f32.xlu0 %v1283
        %v1285 = vpop.xlane.xlu0 %1284
        %v1286 = vsub.f32 %v1282, %v1285
        %v1287 = vmul.f32 %v1286, 1.442695
        %v1288 = vpow.pop %v1287
        %v1289 = vsel %vm872, %v1288, 0.0
        %1290 = vadd.xlane.f32.xlu0 %v1289
        %v1291 = vpop.xlane.xlu0 %1290
        %v1292 = vrcp.pop %v1291
        %v1293 = vmul.f32 %v1288, %v1292
        %1294 = vrot.lane.b32.xlu0 %v865, 48
        %v1295 = vpop.permute.xlu0 %1294
        %v1298 = vsel %vm872, %v1293, 0
        %1300 = vmatprep.subr.mxu0 0.0
        %1301 = vmatpush1.msra.mxu0 0.0
        %1302 = vmatprep.subr.mxu0 0.0
        %1303 = vmatpush1.msra.mxu0 0.0
        %1304 = vmatprep.subr.mxu0 0.0
        %1305 = vmatpush1.msra.mxu0 0.0
        %1306 = vmatprep.subr.mxu0 0.0
        %1307 = vmatpush1.msra.mxu0 0.0
        %1308 = vmatprep.subr.mxu0 0.0
        %1309 = vmatpush1.msra.mxu0 0.0
        %1310 = vmatprep.subr.mxu0 0.0
        %1311 = vmatpush1.msra.mxu0 0.0
        %1312 = vmatprep.subr.mxu0 0.0
        %1313 = vmatpush1.msra.mxu0 0.0
        %1314 = vmatprep.subr.mxu0 0.0
        %1315 = vmatpush1.msra.mxu0 0.0
        %1316 = vmatprep.subr.mxu0 0.0
        %1317 = vmatpush1.msra.mxu0 0.0
        %1318 = vmatprep.subr.mxu0 0.0
        %1319 = vmatpush1.msra.mxu0 0.0
        %1320 = vmatprep.subr.mxu0 0.0
        %1321 = vmatpush1.msra.mxu0 0.0
        %1322 = vmatprep.subr.mxu0 0.0
        %1323 = vmatpush1.msra.mxu0 0.0
        %1324 = vmatprep.subr.mxu0 0.0
        %1325 = vmatpush1.msra.mxu0 0.0
        %1326 = vmatprep.subr.mxu0 0.0
        %1327 = vmatpush1.msra.mxu0 0.0
        %1328 = vmatprep.subr.mxu0 0.0
        %1329 = vmatpush1.msra.mxu0 0.0
        %1330 = vmatprep.subr.mxu0 0.0
        %1331 = vmatpush1.msra.mxu0 %v1295
        %1332 = vmatprep.subr.mxu0 0.0
        %1333 = vmatpush2.msra.mxu0 0.0
        %1334 = vmatprep.subr.mxu0 0.0
        %1335 = vmatpush2.msra.mxu0 0.0
        %1336 = vmatprep.subr.mxu0 0.0
        %1337 = vmatpush2.msra.mxu0 0.0
        %1338 = vmatprep.subr.mxu0 0.0
        %1339 = vmatpush2.msra.mxu0 0.0
        %1340 = vmatprep.subr.mxu0 0.0
        %1341 = vmatpush2.msra.mxu0 0.0
        %1342 = vmatprep.subr.mxu0 0.0
        %1343 = vmatpush2.msra.mxu0 0.0
        %1344 = vmatprep.subr.mxu0 0.0
        %1345 = vmatpush2.msra.mxu0 0.0
        %1346 = vmatprep.subr.mxu0 0.0
        %1347 = vmatpush2.msra.mxu0 0.0
        %1348 = vmatprep.subr.mxu0 0.0
        %1349 = vmatpush2.msra.mxu0 0.0
        %1350 = vmatprep.subr.mxu0 0.0
        %1351 = vmatpush2.msra.mxu0 0.0
        %1352 = vmatprep.subr.mxu0 0.0
        %1353 = vmatpush2.msra.mxu0 0.0
        %1354 = vmatprep.subr.mxu0 0.0
        %1355 = vmatpush2.msra.mxu0 0.0
        %1356 = vmatprep.subr.mxu0 0.0
        %1357 = vmatpush2.msra.mxu0 0.0
        %1358 = vmatprep.subr.mxu0 0.0
        %1359 = vmatpush2.msra.mxu0 0.0
        %1360 = vmatprep.subr.mxu0 0.0
        %1361 = vmatpush2.msra.mxu0 0.0
        %1362 = vmatprep.subr.mxu0 0.0
        %1363 = vmatpush2.msra.mxu0 0.0
        %1364 = vmatprep.mubr.f32.mxu0 0.0
        %1365 = vmatmul.mubr.f32.gmra.mxu0 %v1298
        %v1366 = vpop.f32.mrf.mxu0
        %v1367 = vadd.f32 0.0, %v1366
        %v1368 = vpop.f32.mrf.mxu0
        %1369 = vdwg.mxu0
        %1370 = vrot.lane.b32.xlu0 %v865, 104
        %v1371 = vpop.permute.xlu0 %1370
        %1372 = vrot.lane.b32.xlu0 %v865, 72
        %v1373 = vpop.permute.xlu0 %1372
        %v1374 = vsel %vm872, %v1371, 0
        %v1376 = vsel %vm872, %v1373, 0
        %1378 = vmatprep.subr.mxu0 0.0
        %1379 = vmatpush1.xpose.msra.mxu0 0.0
        %1380 = vmatprep.subr.mxu0 0.0
        %1381 = vmatpush1.xpose.msra.mxu0 0.0
        %1382 = vmatprep.subr.mxu0 0.0
        %1383 = vmatpush1.xpose.msra.mxu0 0.0
        %1384 = vmatprep.subr.mxu0 0.0
        %1385 = vmatpush1.xpose.msra.mxu0 0.0
        %1386 = vmatprep.subr.mxu0 0.0
        %1387 = vmatpush1.xpose.msra.mxu0 0.0
        %1388 = vmatprep.subr.mxu0 0.0
        %1389 = vmatpush1.xpose.msra.mxu0 0.0
        %1390 = vmatprep.subr.mxu0 0.0
        %1391 = vmatpush1.xpose.msra.mxu0 0.0
        %1392 = vmatprep.subr.mxu0 0.0
        %1393 = vmatpush1.xpose.msra.mxu0 0.0
        %1394 = vmatprep.subr.mxu0 0.0
        %1395 = vmatpush1.xpose.msra.mxu0 0.0
        %1396 = vmatprep.subr.mxu0 0.0
        %1397 = vmatpush1.xpose.msra.mxu0 0.0
        %1398 = vmatprep.subr.mxu0 0.0
        %1399 = vmatpush1.xpose.msra.mxu0 0.0
        %1400 = vmatprep.subr.mxu0 0.0
        %1401 = vmatpush1.xpose.msra.mxu0 0.0
        %1402 = vmatprep.subr.mxu0 0.0
        %1403 = vmatpush1.xpose.msra.mxu0 0.0
        %1404 = vmatprep.subr.mxu0 0.0
        %1405 = vmatpush1.xpose.msra.mxu0 0.0
        %1406 = vmatprep.subr.mxu0 0.0
        %1407 = vmatpush1.xpose.msra.mxu0 0.0
        %1408 = vmatprep.subr.mxu0 0.0
        %1409 = vmatpush1.xpose.msra.mxu0 %v1376
        %1410 = vmatprep.subr.mxu0 0.0
        %1411 = vmatpush2.xpose.msra.mxu0 0.0
        %1412 = vmatprep.subr.mxu0 0.0
        %1413 = vmatpush2.xpose.msra.mxu0 0.0
        %1414 = vmatprep.subr.mxu0 0.0
        %1415 = vmatpush2.xpose.msra.mxu0 0.0
        %1416 = vmatprep.subr.mxu0 0.0
        %1417 = vmatpush2.xpose.msra.mxu0 0.0
        %1418 = vmatprep.subr.mxu0 0.0
        %1419 = vmatpush2.xpose.msra.mxu0 0.0
        %1420 = vmatprep.subr.mxu0 0.0
        %1421 = vmatpush2.xpose.msra.mxu0 0.0
        %1422 = vmatprep.subr.mxu0 0.0
        %1423 = vmatpush2.xpose.msra.mxu0 0.0
        %1424 = vmatprep.subr.mxu0 0.0
        %1425 = vmatpush2.xpose.msra.mxu0 0.0
        %1426 = vmatprep.subr.mxu0 0.0
        %1427 = vmatpush2.xpose.msra.mxu0 0.0
        %1428 = vmatprep.subr.mxu0 0.0
        %1429 = vmatpush2.xpose.msra.mxu0 0.0
        %1430 = vmatprep.subr.mxu0 0.0
        %1431 = vmatpush2.xpose.msra.mxu0 0.0
        %1432 = vmatprep.subr.mxu0 0.0
        %1433 = vmatpush2.xpose.msra.mxu0 0.0
        %1434 = vmatprep.subr.mxu0 0.0
        %1435 = vmatpush2.xpose.msra.mxu0 0.0
        %1436 = vmatprep.subr.mxu0 0.0
        %1437 = vmatpush2.xpose.msra.mxu0 0.0
        %1438 = vmatprep.subr.mxu0 0.0
        %1439 = vmatpush2.xpose.msra.mxu0 0.0
        %1440 = vmatprep.subr.mxu0 0.0
        %1441 = vmatpush2.xpose.msra.mxu0 0.0
        %1442 = vmatprep.mubr.f32.mxu0 0.0
        %1443 = vmatmul.mubr.f32.gmra.mxu0 %v1374
        %v1444 = vpop.f32.mrf.mxu0
        %v1445 = vadd.f32 0.0, %v1444
        %v1446 = vpop.f32.mrf.mxu0
        %1447 = vdwg.mxu0
        %v1448 = vmul.f32 %v1445, 0.17677669
        %v1449 = vadd.f32 %v1448, %v868
        %v1450 = vsel %vm872, %v1449, -inf
        %1451 = vmax.xlane.f32.xlu0 %v1450
        %v1452 = vpop.xlane.xlu0 %1451
        %v1453 = vsub.f32 %v1449, %v1452
        %v1454 = vmul.f32 %v1453, 1.442695
        %v1455 = vpow.pop %v1454
        %v1456 = vsel %vm872, %v1455, 0.0
        %1457 = vadd.xlane.f32.xlu0 %v1456
        %v1458 = vpop.xlane.xlu0 %1457
        %v1459 = vrcp.pop %v1458
        %v1460 = vmul.f32 %v1455, %v1459
        %1461 = vrot.lane.b32.xlu0 %v865, 40
        %v1462 = vpop.permute.xlu0 %1461
        %v1465 = vsel %vm872, %v1460, 0
        %1467 = vmatprep.subr.mxu0 0.0
        %1468 = vmatpush1.msra.mxu0 0.0
        %1469 = vmatprep.subr.mxu0 0.0
        %1470 = vmatpush1.msra.mxu0 0.0
        %1471 = vmatprep.subr.mxu0 0.0
        %1472 = vmatpush1.msra.mxu0 0.0
        %1473 = vmatprep.subr.mxu0 0.0
        %1474 = vmatpush1.msra.mxu0 0.0
        %1475 = vmatprep.subr.mxu0 0.0
        %1476 = vmatpush1.msra.mxu0 0.0
        %1477 = vmatprep.subr.mxu0 0.0
        %1478 = vmatpush1.msra.mxu0 0.0
        %1479 = vmatprep.subr.mxu0 0.0
        %1480 = vmatpush1.msra.mxu0 0.0
        %1481 = vmatprep.subr.mxu0 0.0
        %1482 = vmatpush1.msra.mxu0 0.0
        %1483 = vmatprep.subr.mxu0 0.0
        %1484 = vmatpush1.msra.mxu0 0.0
        %1485 = vmatprep.subr.mxu0 0.0
        %1486 = vmatpush1.msra.mxu0 0.0
        %1487 = vmatprep.subr.mxu0 0.0
        %1488 = vmatpush1.msra.mxu0 0.0
        %1489 = vmatprep.subr.mxu0 0.0
        %1490 = vmatpush1.msra.mxu0 0.0
        %1491 = vmatprep.subr.mxu0 0.0
        %1492 = vmatpush1.msra.mxu0 0.0
        %1493 = vmatprep.subr.mxu0 0.0
        %1494 = vmatpush1.msra.mxu0 0.0
        %1495 = vmatprep.subr.mxu0 0.0
        %1496 = vmatpush1.msra.mxu0 0.0
        %1497 = vmatprep.subr.mxu0 0.0
        %1498 = vmatpush1.msra.mxu0 %v1462
        %1499 = vmatprep.subr.mxu0 0.0
        %1500 = vmatpush2.msra.mxu0 0.0
        %1501 = vmatprep.subr.mxu0 0.0
        %1502 = vmatpush2.msra.mxu0 0.0
        %1503 = vmatprep.subr.mxu0 0.0
        %1504 = vmatpush2.msra.mxu0 0.0
        %1505 = vmatprep.subr.mxu0 0.0
        %1506 = vmatpush2.msra.mxu0 0.0
        %1507 = vmatprep.subr.mxu0 0.0
        %1508 = vmatpush2.msra.mxu0 0.0
        %1509 = vmatprep.subr.mxu0 0.0
        %1510 = vmatpush2.msra.mxu0 0.0
        %1511 = vmatprep.subr.mxu0 0.0
        %1512 = vmatpush2.msra.mxu0 0.0
        %1513 = vmatprep.subr.mxu0 0.0
        %1514 = vmatpush2.msra.mxu0 0.0
        %1515 = vmatprep.subr.mxu0 0.0
        %1516 = vmatpush2.msra.mxu0 0.0
        %1517 = vmatprep.subr.mxu0 0.0
        %1518 = vmatpush2.msra.mxu0 0.0
        %1519 = vmatprep.subr.mxu0 0.0
        %1520 = vmatpush2.msra.mxu0 0.0
        %1521 = vmatprep.subr.mxu0 0.0
        %1522 = vmatpush2.msra.mxu0 0.0
        %1523 = vmatprep.subr.mxu0 0.0
        %1524 = vmatpush2.msra.mxu0 0.0
        %1525 = vmatprep.subr.mxu0 0.0
        %1526 = vmatpush2.msra.mxu0 0.0
        %1527 = vmatprep.subr.mxu0 0.0
        %1528 = vmatpush2.msra.mxu0 0.0
        %1529 = vmatprep.subr.mxu0 0.0
        %1530 = vmatpush2.msra.mxu0 0.0
        %1531 = vmatprep.mubr.f32.mxu0 0.0
        %1532 = vmatmul.mubr.f32.gmra.mxu0 %v1465
        %v1533 = vpop.f32.mrf.mxu0
        %v1534 = vadd.f32 0.0, %v1533
        %v1535 = vpop.f32.mrf.mxu0
        %1536 = vdwg.mxu0
        %1538 = vrot.lane.b32.xlu0 %v1200, 8
        %v1539 = vpop.permute.xlu0 %1538
        %1542 = vrot.lane.b32.xlu0 %v1367, 16
        %v1543 = vpop.permute.xlu0 %1542
        %1546 = vrot.lane.b32.xlu0 %v1534, 24
        %v1547 = vpop.permute.xlu0 %1546
        %v1549 = vsel %vm872, %v1033, %v1539
        %vm1550 = vcmask 130048
        %v1551 = vsel %vm1550, %v1549, %v1543
        %vm1552 = vcmask 195584
        %v1553 = vsel %vm1552, %v1551, %v1547
        %v1554 = vld [vmem:[%s6] sm:$0xff]
        %v1555 = vld [vmem:[%s6 + $0x8] sm:$0xff]
        %v1556 = vld [vmem:[%s6 + $0x10] sm:$0xff]
        %v1557 = vld [vmem:[%s6 + $0x18] sm:$0xff]
        %v1558 = vld [vmem:[%s7] sm:$0x1]
        %v1560 = vlaneseq
        %v1561 = vshrl.u32 %v1560, 7
        %v1562 = vsub.s32 0, %v1561
        %v1563 = vrot.slane %v1558, %v1562
        %v1566 = vsel %vm794, %v1553, 0
        %1568 = vmatprep.subr.mxu0 0.0
        %1569 = vmatpush1.msra.mxu0 0.0
        %1570 = vmatprep.subr.mxu0 0.0
        %1571 = vmatpush1.msra.mxu0 0.0
        %1572 = vmatprep.subr.mxu0 0.0
        %1573 = vmatpush1.msra.mxu0 0.0
        %1574 = vmatprep.subr.mxu0 0.0
        %1575 = vmatpush1.msra.mxu0 0.0
        %1576 = vmatprep.subr.mxu0 0.0
        %1577 = vmatpush1.msra.mxu0 0.0
        %1578 = vmatprep.subr.mxu0 0.0
        %1579 = vmatpush1.msra.mxu0 0.0
        %1580 = vmatprep.subr.mxu0 0.0
        %1581 = vmatpush1.msra.mxu0 0.0
        %1582 = vmatprep.subr.mxu0 0.0
        %1583 = vmatpush1.msra.mxu0 0.0
        %1584 = vmatprep.subr.mxu0 0.0
        %1585 = vmatpush1.msra.mxu0 0.0
        %1586 = vmatprep.subr.mxu0 0.0
        %1587 = vmatpush1.msra.mxu0 0.0
        %1588 = vmatprep.subr.mxu0 0.0
        %1589 = vmatpush1.msra.mxu0 0.0
        %1590 = vmatprep.subr.mxu0 0.0
        %1591 = vmatpush1.msra.mxu0 0.0
        %1592 = vmatprep.subr.mxu0 0.0
        %1593 = vmatpush1.msra.mxu0 %v1557
        %1594 = vmatprep.subr.mxu0 0.0
        %1595 = vmatpush1.msra.mxu0 %v1556
        %1596 = vmatprep.subr.mxu0 0.0
        %1597 = vmatpush1.msra.mxu0 %v1555
        %1598 = vmatprep.subr.mxu0 0.0
        %1599 = vmatpush1.msra.mxu0 %v1554
        %1600 = vmatprep.subr.mxu0 0.0
        %1601 = vmatpush2.msra.mxu0 0.0
        %1602 = vmatprep.subr.mxu0 0.0
        %1603 = vmatpush2.msra.mxu0 0.0
        %1604 = vmatprep.subr.mxu0 0.0
        %1605 = vmatpush2.msra.mxu0 0.0
        %1606 = vmatprep.subr.mxu0 0.0
        %1607 = vmatpush2.msra.mxu0 0.0
        %1608 = vmatprep.subr.mxu0 0.0
        %1609 = vmatpush2.msra.mxu0 0.0
        %1610 = vmatprep.subr.mxu0 0.0
        %1611 = vmatpush2.msra.mxu0 0.0
        %1612 = vmatprep.subr.mxu0 0.0
        %1613 = vmatpush2.msra.mxu0 0.0
        %1614 = vmatprep.subr.mxu0 0.0
        %1615 = vmatpush2.msra.mxu0 0.0
        %1616 = vmatprep.subr.mxu0 0.0
        %1617 = vmatpush2.msra.mxu0 0.0
        %1618 = vmatprep.subr.mxu0 0.0
        %1619 = vmatpush2.msra.mxu0 0.0
        %1620 = vmatprep.subr.mxu0 0.0
        %1621 = vmatpush2.msra.mxu0 0.0
        %1622 = vmatprep.subr.mxu0 0.0
        %1623 = vmatpush2.msra.mxu0 0.0
        %1624 = vmatprep.subr.mxu0 0.0
        %1625 = vmatpush2.msra.mxu0 0.0
        %1626 = vmatprep.subr.mxu0 0.0
        %1627 = vmatpush2.msra.mxu0 0.0
        %1628 = vmatprep.subr.mxu0 0.0
        %1629 = vmatpush2.msra.mxu0 0.0
        %1630 = vmatprep.subr.mxu0 0.0
        %1631 = vmatpush2.msra.mxu0 0.0
        %1632 = vmatprep.mubr.f32.mxu0 0.0
        %1633 = vmatmul.mubr.f32.gmra.mxu0 %v1566
        %v1634 = vpop.f32.mrf.mxu0
        %v1635 = vadd.f32 %v1563, %v1634
        %v1636 = vpop.f32.mrf.mxu0
        %1637 = vdwg.mxu0
        %v1638 = vadd.f32 %v1635, %v780
        %v1639 = vld [vmem:[%s8] sm:$0x1]
        %v1640 = vld [vmem:[%s9] sm:$0x1]
        %v1641 = vsel %vm794, %v1638, 0.0
        %1642 = vadd.xlane.f32.xlu0 %v1641
        %v1643 = vpop.xlane.xlu0 %1642
        %v1644 = vrcp.pop 32.0
        %v1645 = vmul.f32 %v1643, %v1644
        %v1646 = vsub.f32 %v1638, %v1645
        %v1647 = vmul.f32 %v1646, %v1646
        %v1648 = vsel %vm794, %v1647, 0.0
        %1649 = vadd.xlane.f32.xlu0 %v1648
        %v1650 = vpop.xlane.xlu0 %1649
        %v1651 = vmul.f32 %v1650, %v1644
        %v1652 = vadd.f32 %v1651, 1e-05
        %v1653 = vrsqrt.pop %v1652
        %v1654 = vmul.f32 %v1646, %v1653
        %v1656 = vlaneseq
        %v1657 = vshrl.u32 %v1656, 7
        %v1658 = vsub.s32 0, %v1657
        %v1659 = vrot.slane %v1639, %v1658
        %v1661 = vmul.f32 %v1654, %v1659
        %v1663 = vlaneseq
        %v1664 = vshrl.u32 %v1663, 7
        %v1665 = vsub.s32 0, %v1664
        %v1666 = vrot.slane %v1640, %v1665
        %v1668 = vadd.f32 %v1661, %v1666
        %v1669 = vld [vmem:[%s10] sm:$0xff]
        %v1670 = vld [vmem:[%s10 + $0x8] sm:$0xff]
        %v1671 = vld [vmem:[%s10 + $0x10] sm:$0xff]
        %v1672 = vld [vmem:[%s10 + $0x18] sm:$0xff]
        %v1673 = vld [vmem:[%s11] sm:$0x1]
        %v1675 = vlaneseq
        %v1676 = vshrl.u32 %v1675, 7
        %v1677 = vsub.s32 0, %v1676
        %v1678 = vrot.slane %v1673, %v1677
        %v1681 = vsel %vm794, %v1668, 0
        %1683 = vmatprep.subr.mxu0 0.0
        %1684 = vmatpush1.msra.mxu0 0.0
        %1685 = vmatprep.subr.mxu0 0.0
        %1686 = vmatpush1.msra.mxu0 0.0
        %1687 = vmatprep.subr.mxu0 0.0
        %1688 = vmatpush1.msra.mxu0 0.0
        %1689 = vmatprep.subr.mxu0 0.0
        %1690 = vmatpush1.msra.mxu0 0.0
        %1691 = vmatprep.subr.mxu0 0.0
        %1692 = vmatpush1.msra.mxu0 0.0
        %1693 = vmatprep.subr.mxu0 0.0
        %1694 = vmatpush1.msra.mxu0 0.0
        %1695 = vmatprep.subr.mxu0 0.0
        %1696 = vmatpush1.msra.mxu0 0.0
        %1697 = vmatprep.subr.mxu0 0.0
        %1698 = vmatpush1.msra.mxu0 0.0
        %1699 = vmatprep.subr.mxu0 0.0
        %1700 = vmatpush1.msra.mxu0 0.0
        %1701 = vmatprep.subr.mxu0 0.0
        %1702 = vmatpush1.msra.mxu0 0.0
        %1703 = vmatprep.subr.mxu0 0.0
        %1704 = vmatpush1.msra.mxu0 0.0
        %1705 = vmatprep.subr.mxu0 0.0
        %1706 = vmatpush1.msra.mxu0 0.0
        %1707 = vmatprep.subr.mxu0 0.0
        %1708 = vmatpush1.msra.mxu0 %v1672
        %1709 = vmatprep.subr.mxu0 0.0
        %1710 = vmatpush1.msra.mxu0 %v1671
        %1711 = vmatprep.subr.mxu0 0.0
        %1712 = vmatpush1.msra.mxu0 %v1670
        %1713 = vmatprep.subr.mxu0 0.0
        %1714 = vmatpush1.msra.mxu0 %v1669
        %1715 = vmatprep.subr.mxu0 0.0
        %1716 = vmatpush2.msra.mxu0 0.0
        %1717 = vmatprep.subr.mxu0 0.0
        %1718 = vmatpush2.msra.mxu0 0.0
        %1719 = vmatprep.subr.mxu0 0.0
        %1720 = vmatpush2.msra.mxu0 0.0
        %1721 = vmatprep.subr.mxu0 0.0
        %1722 = vmatpush2.msra.mxu0 0.0
        %1723 = vmatprep.subr.mxu0 0.0
        %1724 = vmatpush2.msra.mxu0 0.0
        %1725 = vmatprep.subr.mxu0 0.0
        %1726 = vmatpush2.msra.mxu0 0.0
        %1727 = vmatprep.subr.mxu0 0.0
        %1728 = vmatpush2.msra.mxu0 0.0
        %1729 = vmatprep.subr.mxu0 0.0
        %1730 = vmatpush2.msra.mxu0 0.0
        %1731 = vmatprep.subr.mxu0 0.0
        %1732 = vmatpush2.msra.mxu0 0.0
        %1733 = vmatprep.subr.mxu0 0.0
        %1734 = vmatpush2.msra.mxu0 0.0
        %1735 = vmatprep.subr.mxu0 0.0
        %1736 = vmatpush2.msra.mxu0 0.0
        %1737 = vmatprep.subr.mxu0 0.0
        %1738 = vmatpush2.msra.mxu0 0.0
        %1739 = vmatprep.subr.mxu0 0.0
        %1740 = vmatpush2.msra.mxu0 0.0
        %1741 = vmatprep.subr.mxu0 0.0
        %1742 = vmatpush2.msra.mxu0 0.0
        %1743 = vmatprep.subr.mxu0 0.0
        %1744 = vmatpush2.msra.mxu0 0.0
        %1745 = vmatprep.subr.mxu0 0.0
        %1746 = vmatpush2.msra.mxu0 0.0
        %1747 = vmatprep.mubr.f32.mxu0 0.0
        %1748 = vmatmul.mubr.f32.gmra.mxu0 %v1681
        %v1749 = vpop.f32.mrf.mxu0
        %v1750 = vadd.f32 %v1678, %v1749
        %v1751 = vpop.f32.mrf.mxu0
        %1752 = vdwg.mxu0
        %v1753 = vld [vmem:[%s12] sm:$0xff]
        %v1754 = vld [vmem:[%s12 + $0x8] sm:$0xff]
        %v1755 = vld [vmem:[%s12 + $0x10] sm:$0xff]
        %v1756 = vld [vmem:[%s12 + $0x18] sm:$0xff]
        %v1757 = vld [vmem:[%s13] sm:$0x1]
        %v1759 = vlaneseq
        %v1760 = vshrl.u32 %v1759, 7
        %v1761 = vsub.s32 0, %v1760
        %v1762 = vrot.slane %v1757, %v1761
        %v1765 = vsel %vm794, %v781, 0
        %v1768 = vsel %vm794, %v782, 0
        %1770 = vmatprep.subr.mxu0 0.0
        %1771 = vmatpush1.msra.mxu0 0.0
        %1772 = vmatprep.subr.mxu0 0.0
        %1773 = vmatpush1.msra.mxu0 0.0
        %1774 = vmatprep.subr.mxu0 0.0
        %1775 = vmatpush1.msra.mxu0 0.0
        %1776 = vmatprep.subr.mxu0 0.0
        %1777 = vmatpush1.msra.mxu0 0.0
        %1778 = vmatprep.subr.mxu0 0.0
        %1779 = vmatpush1.msra.mxu0 0.0
        %1780 = vmatprep.subr.mxu0 0.0
        %1781 = vmatpush1.msra.mxu0 0.0
        %1782 = vmatprep.subr.mxu0 0.0
        %1783 = vmatpush1.msra.mxu0 0.0
        %1784 = vmatprep.subr.mxu0 0.0
        %1785 = vmatpush1.msra.mxu0 0.0
        %1786 = vmatprep.subr.mxu0 0.0
        %1787 = vmatpush1.msra.mxu0 0.0
        %1788 = vmatprep.subr.mxu0 0.0
        %1789 = vmatpush1.msra.mxu0 0.0
        %1790 = vmatprep.subr.mxu0 0.0
        %1791 = vmatpush1.msra.mxu0 0.0
        %1792 = vmatprep.subr.mxu0 0.0
        %1793 = vmatpush1.msra.mxu0 0.0
        %1794 = vmatprep.subr.mxu0 0.0
        %1795 = vmatpush1.msra.mxu0 %v1756
        %1796 = vmatprep.subr.mxu0 0.0
        %1797 = vmatpush1.msra.mxu0 %v1755
        %1798 = vmatprep.subr.mxu0 0.0
        %1799 = vmatpush1.msra.mxu0 %v1754
        %1800 = vmatprep.subr.mxu0 0.0
        %1801 = vmatpush1.msra.mxu0 %v1753
        %1802 = vmatprep.subr.mxu0 0.0
        %1803 = vmatpush2.msra.mxu0 0.0
        %1804 = vmatprep.subr.mxu0 0.0
        %1805 = vmatpush2.msra.mxu0 0.0
        %1806 = vmatprep.subr.mxu0 0.0
        %1807 = vmatpush2.msra.mxu0 0.0
        %1808 = vmatprep.subr.mxu0 0.0
        %1809 = vmatpush2.msra.mxu0 0.0
        %1810 = vmatprep.subr.mxu0 0.0
        %1811 = vmatpush2.msra.mxu0 0.0
        %1812 = vmatprep.subr.mxu0 0.0
        %1813 = vmatpush2.msra.mxu0 0.0
        %1814 = vmatprep.subr.mxu0 0.0
        %1815 = vmatpush2.msra.mxu0 0.0
        %1816 = vmatprep.subr.mxu0 0.0
        %1817 = vmatpush2.msra.mxu0 0.0
        %1818 = vmatprep.subr.mxu0 0.0
        %1819 = vmatpush2.msra.mxu0 0.0
        %1820 = vmatprep.subr.mxu0 0.0
        %1821 = vmatpush2.msra.mxu0 0.0
        %1822 = vmatprep.subr.mxu0 0.0
        %1823 = vmatpush2.msra.mxu0 0.0
        %1824 = vmatprep.subr.mxu0 0.0
        %1825 = vmatpush2.msra.mxu0 0.0
        %1826 = vmatprep.subr.mxu0 0.0
        %1827 = vmatpush2.msra.mxu0 0.0
        %1828 = vmatprep.subr.mxu0 0.0
        %1829 = vmatpush2.msra.mxu0 0.0
        %1830 = vmatprep.subr.mxu0 0.0
        %1831 = vmatpush2.msra.mxu0 0.0
        %1832 = vmatprep.subr.mxu0 0.0
        %1833 = vmatpush2.msra.mxu0 0.0
        %1834 = vmatprep.mubr.f32.mxu0 0.0
        %1835 = vmatmul.mubr.f32.gmra.mxu0 %v1765
        %v1836 = vpop.f32.mrf.mxu0
        %v1837 = vadd.f32 %v1762, %v1836
        %v1838 = vpop.f32.mrf.mxu0
        %1839 = vmatprep.mubr.f32.mxu0 0.0
        %1840 = vmatmul.mubr.f32.gmra.mxu0 %v1768
        %v1841 = vpop.f32.mrf.mxu0
        %v1842 = vadd.f32 %v1762, %v1841
        %v1843 = vpop.f32.mrf.mxu0
        %1844 = vdwg.mxu0
        %v1845 = vld [vmem:[%s775] sm:$0x1]
        %v1847 = vsel %vm872, %v1750, 0
        %v1850 = vsel %vm872, %v1837, 0
        %v1853 = vsel %vm872, %v1842, 0
        %1855 = vmatprep.subr.mxu0 0.0
        %1856 = vmatpush1.xpose.msra.mxu0 0.0
        %1857 = vmatprep.subr.mxu0 0.0
        %1858 = vmatpush1.xpose.msra.mxu0 0.0
        %1859 = vmatprep.subr.mxu0 0.0
        %1860 = vmatpush1.xpose.msra.mxu0 0.0
        %1861 = vmatprep.subr.mxu0 0.0
        %1862 = vmatpush1.xpose.msra.mxu0 0.0
        %1863 = vmatprep.subr.mxu0 0.0
        %1864 = vmatpush1.xpose.msra.mxu0 0.0
        %1865 = vmatprep.subr.mxu0 0.0
        %1866 = vmatpush1.xpose.msra.mxu0 0.0
        %1867 = vmatprep.subr.mxu0 0.0
        %1868 = vmatpush1.xpose.msra.mxu0 0.0
        %1869 = vmatprep.subr.mxu0 0.0
        %1870 = vmatpush1.xpose.msra.mxu0 0.0
        %1871 = vmatprep.subr.mxu0 0.0
        %1872 = vmatpush1.xpose.msra.mxu0 0.0
        %1873 = vmatprep.subr.mxu0 0.0
        %1874 = vmatpush1.xpose.msra.mxu0 0.0
        %1875 = vmatprep.subr.mxu0 0.0
        %1876 = vmatpush1.xpose.msra.mxu0 0.0
        %1877 = vmatprep.subr.mxu0 0.0
        %1878 = vmatpush1.xpose.msra.mxu0 0.0
        %1879 = vmatprep.subr.mxu0 0.0
        %1880 = vmatpush1.xpose.msra.mxu0 0.0
        %1881 = vmatprep.subr.mxu0 0.0
        %1882 = vmatpush1.xpose.msra.mxu0 0.0
        %1883 = vmatprep.subr.mxu0 0.0
        %1884 = vmatpush1.xpose.msra.mxu0 %v1853
        %1885 = vmatprep.subr.mxu0 0.0
        %1886 = vmatpush1.xpose.msra.mxu0 %v1850
        %1887 = vmatprep.subr.mxu0 0.0
        %1888 = vmatpush2.xpose.msra.mxu0 0.0
        %1889 = vmatprep.subr.mxu0 0.0
        %1890 = vmatpush2.xpose.msra.mxu0 0.0
        %1891 = vmatprep.subr.mxu0 0.0
        %1892 = vmatpush2.xpose.msra.mxu0 0.0
        %1893 = vmatprep.subr.mxu0 0.0
        %1894 = vmatpush2.xpose.msra.mxu0 0.0
        %1895 = vmatprep.subr.mxu0 0.0
        %1896 = vmatpush2.xpose.msra.mxu0 0.0
        %1897 = vmatprep.subr.mxu0 0.0
        %1898 = vmatpush2.xpose.msra.mxu0 0.0
        %1899 = vmatprep.subr.mxu0 0.0
        %1900 = vmatpush2.xpose.msra.mxu0 0.0
        %1901 = vmatprep.subr.mxu0 0.0
        %1902 = vmatpush2.xpose.msra.mxu0 0.0
        %1903 = vmatprep.subr.mxu0 0.0
        %1904 = vmatpush2.xpose.msra.mxu0 0.0
        %1905 = vmatprep.subr.mxu0 0.0
        %1906 = vmatpush2.xpose.msra.mxu0 0.0
        %1907 = vmatprep.subr.mxu0 0.0
        %1908 = vmatpush2.xpose.msra.mxu0 0.0
        %1909 = vmatprep.subr.mxu0 0.0
        %1910 = vmatpush2.xpose.msra.mxu0 0.0
        %1911 = vmatprep.subr.mxu0 0.0
        %1912 = vmatpush2.xpose.msra.mxu0 0.0
        %1913 = vmatprep.subr.mxu0 0.0
        %1914 = vmatpush2.xpose.msra.mxu0 0.0
        %1915 = vmatprep.subr.mxu0 0.0
        %1916 = vmatpush2.xpose.msra.mxu0 0.0
        %1917 = vmatprep.subr.mxu0 0.0
        %1918 = vmatpush2.xpose.msra.mxu0 0.0
        %1919 = vmatprep.mubr.f32.mxu0 0.0
        %1920 = vmatmul.mubr.f32.gmra.mxu0 %v1847
        %v1921 = vpop.f32.mrf.mxu0
        %v1922 = vadd.f32 0.0, %v1921
        %v1923 = vpop.f32.mrf.mxu0
        %1924 = vdwg.mxu0
        %v1925 = vmul.f32 %v1922, 0.17677669
        %v1927 = vlaneseq
        %v1928 = vshrl.u32 %v1927, 7
        %v1929 = vsub.s32 0, %v1928
        %v1930 = vrot.slane %v1845, %v1929
        %v1932 = vadd.f32 %v1925, %v1930
        %vm1933 = vcmask 97280
        %v1934 = vsel %vm1933, %v1932, -inf
        %1935 = vmax.xlane.f32.xlu0 %v1934
        %v1936 = vpop.xlane.xlu0 %1935
        %v1937 = vsub.f32 %v1932, %v1936
        %v1938 = vmul.f32 %v1937, 1.442695
        %v1939 = vpow.pop %v1938
        %v1940 = vsel %vm1933, %v1939, 0.0
        %1941 = vadd.xlane.f32.xlu0 %v1940
        %v1942 = vpop.xlane.xlu0 %1941
        %v1943 = vrcp.pop %v1942
        %v1944 = vmul.f32 %v1939, %v1943
        %1945 = vrot.lane.b32.xlu0 %v1837, 96
        %v1946 = vpop.permute.xlu0 %1945
        %1947 = vrot.lane.b32.xlu0 %v1842, 96
        %v1948 = vpop.permute.xlu0 %1947
        %v1951 = vsel %vm1933, %v1944, 0
        %vm1953 = vcmask 1043456
        %v1954 = vsel %vm1953, %v1948, 0
        %1956 = vmatprep.subr.mxu0 0.0
        %1957 = vmatpush1.msra.mxu0 0.0
        %1958 = vmatprep.subr.mxu0 0.0
        %1959 = vmatpush1.msra.mxu0 0.0
        %1960 = vmatprep.subr.mxu0 0.0
        %1961 = vmatpush1.msra.mxu0 0.0
        %1962 = vmatprep.subr.mxu0 0.0
        %1963 = vmatpush1.msra.mxu0 0.0
        %1964 = vmatprep.subr.mxu0 0.0
        %1965 = vmatpush1.msra.mxu0 0.0
        %1966 = vmatprep.subr.mxu0 0.0
        %1967 = vmatpush1.msra.mxu0 0.0
        %1968 = vmatprep.subr.mxu0 0.0
        %1969 = vmatpush1.msra.mxu0 0.0
        %1970 = vmatprep.subr.mxu0 0.0
        %1971 = vmatpush1.msra.mxu0 0.0
        %1972 = vmatprep.subr.mxu0 0.0
        %1973 = vmatpush1.msra.mxu0 0.0
        %1974 = vmatprep.subr.mxu0 0.0
        %1975 = vmatpush1.msra.mxu0 0.0
        %1976 = vmatprep.subr.mxu0 0.0
        %1977 = vmatpush1.msra.mxu0 0.0
        %1978 = vmatprep.subr.mxu0 0.0
        %1979 = vmatpush1.msra.mxu0 0.0
        %1980 = vmatprep.subr.mxu0 0.0
        %1981 = vmatpush1.msra.mxu0 0.0
        %1982 = vmatprep.subr.mxu0 0.0
        %1983 = vmatpush1.msra.mxu0 0.0
        %1984 = vmatprep.subr.mxu0 0.0
        %1985 = vmatpush1.msra.mxu0 %v1954
        %1986 = vmatprep.subr.mxu0 0.0
        %1987 = vmatpush1.msra.mxu0 %v1946
        %1988 = vmatprep.subr.mxu0 0.0
        %1989 = vmatpush2.msra.mxu0 0.0
        %1990 = vmatprep.subr.mxu0 0.0
        %1991 = vmatpush2.msra.mxu0 0.0
        %1992 = vmatprep.subr.mxu0 0.0
        %1993 = vmatpush2.msra.mxu0 0.0
        %1994 = vmatprep.subr.mxu0 0.0
        %1995 = vmatpush2.msra.mxu0 0.0
        %1996 = vmatprep.subr.mxu0 0.0
        %1997 = vmatpush2.msra.mxu0 0.0
        %1998 = vmatprep.subr.mxu0 0.0
        %1999 = vmatpush2.msra.mxu0 0.0
        %2000 = vmatprep.subr.mxu0 0.0
        %2001 = vmatpush2.msra.mxu0 0.0
        %2002 = vmatprep.subr.mxu0 0.0
        %2003 = vmatpush2.msra.mxu0 0.0
        %2004 = vmatprep.subr.mxu0 0.0
        %2005 = vmatpush2.msra.mxu0 0.0
        %2006 = vmatprep.subr.mxu0 0.0
        %2007 = vmatpush2.msra.mxu0 0.0
        %2008 = vmatprep.subr.mxu0 0.0
        %2009 = vmatpush2.msra.mxu0 0.0
        %2010 = vmatprep.subr.mxu0 0.0
        %2011 = vmatpush2.msra.mxu0 0.0
        %2012 = vmatprep.subr.mxu0 0.0
        %2013 = vmatpush2.msra.mxu0 0.0
        %2014 = vmatprep.subr.mxu0 0.0
        %2015 = vmatpush2.msra.mxu0 0.0
        %2016 = vmatprep.subr.mxu0 0.0
        %2017 = vmatpush2.msra.mxu0 0.0
        %2018 = vmatprep.subr.mxu0 0.0
        %2019 = vmatpush2.msra.mxu0 0.0
        %2020 = vmatprep.mubr.f32.mxu0 0.0
        %2021 = vmatmul.mubr.f32.gmra.mxu0 %v1951
        %v2022 = vpop.f32.mrf.mxu0
        %v2023 = vadd.f32 0.0, %v2022
        %v2024 = vpop.f32.mrf.mxu0
        %2025 = vdwg.mxu0
        %2026 = vrot.lane.b32.xlu0 %v1750, 120
        %v2027 = vpop.permute.xlu0 %2026
        %2028 = vrot.lane.b32.xlu0 %v1837, 120
        %v2029 = vpop.permute.xlu0 %2028
        %2030 = vrot.lane.b32.xlu0 %v1842, 120
        %v2031 = vpop.permute.xlu0 %2030
        %v2032 = vsel %vm872, %v2027, 0
        %v2034 = vsel %vm872, %v2029, 0
        %v2036 = vsel %vm872, %v2031, 0
        %2038 = vmatprep.subr.mxu0 0.0
        %2039 = vmatpush1.xpose.msra.mxu0 0.0
        %2040 = vmatprep.subr.mxu0 0.0
        %2041 = vmatpush1.xpose.msra.mxu0 0.0
        %2042 = vmatprep.subr.mxu0 0.0
        %2043 = vmatpush1.xpose.msra.mxu0 0.0
        %2044 = vmatprep.subr.mxu0 0.0
        %2045 = vmatpush1.xpose.msra.mxu0 0.0
        %2046 = vmatprep.subr.mxu0 0.0
        %2047 = vmatpush1.xpose.msra.mxu0 0.0
        %2048 = vmatprep.subr.mxu0 0.0
        %2049 = vmatpush1.xpose.msra.mxu0 0.0
        %2050 = vmatprep.subr.mxu0 0.0
        %2051 = vmatpush1.xpose.msra.mxu0 0.0
        %2052 = vmatprep.subr.mxu0 0.0
        %2053 = vmatpush1.xpose.msra.mxu0 0.0
        %2054 = vmatprep.subr.mxu0 0.0
        %2055 = vmatpush1.xpose.msra.mxu0 0.0
        %2056 = vmatprep.subr.mxu0 0.0
        %2057 = vmatpush1.xpose.msra.mxu0 0.0
        %2058 = vmatprep.subr.mxu0 0.0
        %2059 = vmatpush1.xpose.msra.mxu0 0.0
        %2060 = vmatprep.subr.mxu0 0.0
        %2061 = vmatpush1.xpose.msra.mxu0 0.0
        %2062 = vmatprep.subr.mxu0 0.0
        %2063 = vmatpush1.xpose.msra.mxu0 0.0
        %2064 = vmatprep.subr.mxu0 0.0
        %2065 = vmatpush1.xpose.msra.mxu0 0.0
        %2066 = vmatprep.subr.mxu0 0.0
        %2067 = vmatpush1.xpose.msra.mxu0 %v2036
        %2068 = vmatprep.subr.mxu0 0.0
        %2069 = vmatpush1.xpose.msra.mxu0 %v2034
        %2070 = vmatprep.subr.mxu0 0.0
        %2071 = vmatpush2.xpose.msra.mxu0 0.0
        %2072 = vmatprep.subr.mxu0 0.0
        %2073 = vmatpush2.xpose.msra.mxu0 0.0
        %2074 = vmatprep.subr.mxu0 0.0
        %2075 = vmatpush2.xpose.msra.mxu0 0.0
        %2076 = vmatprep.subr.mxu0 0.0
        %2077 = vmatpush2.xpose.msra.mxu0 0.0
        %2078 = vmatprep.subr.mxu0 0.0
        %2079 = vmatpush2.xpose.msra.mxu0 0.0
        %2080 = vmatprep.subr.mxu0 0.0
        %2081 = vmatpush2.xpose.msra.mxu0 0.0
        %2082 = vmatprep.subr.mxu0 0.0
        %2083 = vmatpush2.xpose.msra.mxu0 0.0
        %2084 = vmatprep.subr.mxu0 0.0
        %2085 = vmatpush2.xpose.msra.mxu0 0.0
        %2086 = vmatprep.subr.mxu0 0.0
        %2087 = vmatpush2.xpose.msra.mxu0 0.0
        %2088 = vmatprep.subr.mxu0 0.0
        %2089 = vmatpush2.xpose.msra.mxu0 0.0
        %2090 = vmatprep.subr.mxu0 0.0
        %2091 = vmatpush2.xpose.msra.mxu0 0.0
        %2092 = vmatprep.subr.mxu0 0.0
        %2093 = vmatpush2.xpose.msra.mxu0 0.0
        %2094 = vmatprep.subr.mxu0 0.0
        %2095 = vmatpush2.xpose.msra.mxu0 0.0
        %2096 = vmatprep.subr.mxu0 0.0
        %2097 = vmatpush2.xpose.msra.mxu0 0.0
        %2098 = vmatprep.subr.mxu0 0.0
        %2099 = vmatpush2.xpose.msra.mxu0 0.0
        %2100 = vmatprep.subr.mxu0 0.0
        %2101 = vmatpush2.xpose.msra.mxu0 0.0
        %2102 = vmatprep.mubr.f32.mxu0 0.0
        %2103 = vmatmul.mubr.f32.gmra.mxu0 %v2032
        %v2104 = vpop.f32.mrf.mxu0
        %v2105 = vadd.f32 0.0, %v2104
        %v2106 = vpop.f32.mrf.mxu0
        %2107 = vdwg.mxu0
        %v2108 = vmul.f32 %v2105, 0.17677669
        %v2109 = vadd.f32 %v2108, %v1930
        %v2110 = vsel %vm1933, %v2109, -inf
        %2111 = vmax.xlane.f32.xlu0 %v2110
        %v2112 = vpop.xlane.xlu0 %2111
        %v2113 = vsub.f32 %v2109, %v2112
        %v2114 = vmul.f32 %v2113, 1.442695
        %v2115 = vpow.pop %v2114
        %v2116 = vsel %vm1933, %v2115, 0.0
        %2117 = vadd.xlane.f32.xlu0 %v2116
        %v2118 = vpop.xlane.xlu0 %2117
        %v2119 = vrcp.pop %v2118
        %v2120 = vmul.f32 %v2115, %v2119
        %2121 = vrot.lane.b32.xlu0 %v1837, 88
        %v2122 = vpop.permute.xlu0 %2121
        %2123 = vrot.lane.b32.xlu0 %v1842, 88
        %v2124 = vpop.permute.xlu0 %2123
        %v2127 = vsel %vm1933, %v2120, 0
        %v2129 = vsel %vm1953, %v2124, 0
        %2131 = vmatprep.subr.mxu0 0.0
        %2132 = vmatpush1.msra.mxu0 0.0
        %2133 = vmatprep.subr.mxu0 0.0
        %2134 = vmatpush1.msra.mxu0 0.0
        %2135 = vmatprep.subr.mxu0 0.0
        %2136 = vmatpush1.msra.mxu0 0.0
        %2137 = vmatprep.subr.mxu0 0.0
        %2138 = vmatpush1.msra.mxu0 0.0
        %2139 = vmatprep.subr.mxu0 0.0
        %2140 = vmatpush1.msra.mxu0 0.0
        %2141 = vmatprep.subr.mxu0 0.0
        %2142 = vmatpush1.msra.mxu0 0.0
        %2143 = vmatprep.subr.mxu0 0.0
        %2144 = vmatpush1.msra.mxu0 0.0
        %2145 = vmatprep.subr.mxu0 0.0
        %2146 = vmatpush1.msra.mxu0 0.0
        %2147 = vmatprep.subr.mxu0 0.0
        %2148 = vmatpush1.msra.mxu0 0.0
        %2149 = vmatprep.subr.mxu0 0.0
        %2150 = vmatpush1.msra.mxu0 0.0
        %2151 = vmatprep.subr.mxu0 0.0
        %2152 = vmatpush1.msra.mxu0 0.0
        %2153 = vmatprep.subr.mxu0 0.0
        %2154 = vmatpush1.msra.mxu0 0.0
        %2155 = vmatprep.subr.mxu0 0.0
        %2156 = vmatpush1.msra.mxu0 0.0
        %2157 = vmatprep.subr.mxu0 0.0
        %2158 = vmatpush1.msra.mxu0 0.0
        %2159 = vmatprep.subr.mxu0 0.0
        %2160 = vmatpush1.msra.mxu0 %v2129
        %2161 = vmatprep.subr.mxu0 0.0
        %2162 = vmatpush1.msra.mxu0 %v2122
        %2163 = vmatprep.subr.mxu0 0.0
        %2164 = vmatpush2.msra.mxu0 0.0
        %2165 = vmatprep.subr.mxu0 0.0
        %2166 = vmatpush2.msra.mxu0 0.0
        %2167 = vmatprep.subr.mxu0 0.0
        %2168 = vmatpush2.msra.mxu0 0.0
        %2169 = vmatprep.subr.mxu0 0.0
        %2170 = vmatpush2.msra.mxu0 0.0
        %2171 = vmatprep.subr.mxu0 0.0
        %2172 = vmatpush2.msra.mxu0 0.0
        %2173 = vmatprep.subr.mxu0 0.0
        %2174 = vmatpush2.msra.mxu0 0.0
        %2175 = vmatprep.subr.mxu0 0.0
        %2176 = vmatpush2.msra.mxu0 0.0
        %2177 = vmatprep.subr.mxu0 0.0
        %2178 = vmatpush2.msra.mxu0 0.0
        %2179 = vmatprep.subr.mxu0 0.0
        %2180 = vmatpush2.msra.mxu0 0.0
        %2181 = vmatprep.subr.mxu0 0.0
        %2182 = vmatpush2.msra.mxu0 0.0
        %2183 = vmatprep.subr.mxu0 0.0
        %2184 = vmatpush2.msra.mxu0 0.0
        %2185 = vmatprep.subr.mxu0 0.0
        %2186 = vmatpush2.msra.mxu0 0.0
        %2187 = vmatprep.subr.mxu0 0.0
        %2188 = vmatpush2.msra.mxu0 0.0
        %2189 = vmatprep.subr.mxu0 0.0
        %2190 = vmatpush2.msra.mxu0 0.0
        %2191 = vmatprep.subr.mxu0 0.0
        %2192 = vmatpush2.msra.mxu0 0.0
        %2193 = vmatprep.subr.mxu0 0.0
        %2194 = vmatpush2.msra.mxu0 0.0
        %2195 = vmatprep.mubr.f32.mxu0 0.0
        %2196 = vmatmul.mubr.f32.gmra.mxu0 %v2127
        %v2197 = vpop.f32.mrf.mxu0
        %v2198 = vadd.f32 0.0, %v2197
        %v2199 = vpop.f32.mrf.mxu0
        %2200 = vdwg.mxu0
        %2201 = vrot.lane.b32.xlu0 %v1750, 112
        %v2202 = vpop.permute.xlu0 %2201
        %2203 = vrot.lane.b32.xlu0 %v1837, 112
        %v2204 = vpop.permute.xlu0 %2203
        %2205 = vrot.lane.b32.xlu0 %v1842, 112
        %v2206 = vpop.permute.xlu0 %2205
        %v2207 = vsel %vm872, %v2202, 0
        %v2209 = vsel %vm872, %v2204, 0
        %v2211 = vsel %vm872, %v2206, 0
        %2213 = vmatprep.subr.mxu0 0.0
        %2214 = vmatpush1.xpose.msra.mxu0 0.0
        %2215 = vmatprep.subr.mxu0 0.0
        %2216 = vmatpush1.xpose.msra.mxu0 0.0
        %2217 = vmatprep.subr.mxu0 0.0
        %2218 = vmatpush1.xpose.msra.mxu0 0.0
        %2219 = vmatprep.subr.mxu0 0.0
        %2220 = vmatpush1.xpose.msra.mxu0 0.0
        %2221 = vmatprep.subr.mxu0 0.0
        %2222 = vmatpush1.xpose.msra.mxu0 0.0
        %2223 = vmatprep.subr.mxu0 0.0
        %2224 = vmatpush1.xpose.msra.mxu0 0.0
        %2225 = vmatprep.subr.mxu0 0.0
        %2226 = vmatpush1.xpose.msra.mxu0 0.0
        %2227 = vmatprep.subr.mxu0 0.0
        %2228 = vmatpush1.xpose.msra.mxu0 0.0
        %2229 = vmatprep.subr.mxu0 0.0
        %2230 = vmatpush1.xpose.msra.mxu0 0.0
        %2231 = vmatprep.subr.mxu0 0.0
        %2232 = vmatpush1.xpose.msra.mxu0 0.0
        %2233 = vmatprep.subr.mxu0 0.0
        %2234 = vmatpush1.xpose.msra.mxu0 0.0
        %2235 = vmatprep.subr.mxu0 0.0
        %2236 = vmatpush1.xpose.msra.mxu0 0.0
        %2237 = vmatprep.subr.mxu0 0.0
        %2238 = vmatpush1.xpose.msra.mxu0 0.0
        %2239 = vmatprep.subr.mxu0 0.0
        %2240 = vmatpush1.xpose.msra.mxu0 0.0
        %2241 = vmatprep.subr.mxu0 0.0
        %2242 = vmatpush1.xpose.msra.mxu0 %v2211
        %2243 = vmatprep.subr.mxu0 0.0
        %2244 = vmatpush1.xpose.msra.mxu0 %v2209
        %2245 = vmatprep.subr.mxu0 0.0
        %2246 = vmatpush2.xpose.msra.mxu0 0.0
        %2247 = vmatprep.subr.mxu0 0.0
        %2248 = vmatpush2.xpose.msra.mxu0 0.0
        %2249 = vmatprep.subr.mxu0 0.0
        %2250 = vmatpush2.xpose.msra.mxu0 0.0
        %2251 = vmatprep.subr.mxu0 0.0
        %2252 = vmatpush2.xpose.msra.mxu0 0.0
        %2253 = vmatprep.subr.mxu0 0.0
        %2254 = vmatpush2.xpose.msra.mxu0 0.0
        %2255 = vmatprep.subr.mxu0 0.0
        %2256 = vmatpush2.xpose.msra.mxu0 0.0
        %2257 = vmatprep.subr.mxu0 0.0
        %2258 = vmatpush2.xpose.msra.mxu0 0.0
        %2259 = vmatprep.subr.mxu0 0.0
        %2260 = vmatpush2.xpose.msra.mxu0 0.0
        %2261 = vmatprep.subr.mxu0 0.0
        %2262 = vmatpush2.xpose.msra.mxu0 0.0
        %2263 = vmatprep.subr.mxu0 0.0
        %2264 = vmatpush2.xpose.msra.mxu0 0.0
        %2265 = vmatprep.subr.mxu0 0.0
        %2266 = vmatpush2.xpose.msra.mxu0 0.0
        %2267 = vmatprep.subr.mxu0 0.0
        %2268 = vmatpush2.xpose.msra.mxu0 0.0
        %2269 = vmatprep.subr.mxu0 0.0
        %2270 = vmatpush2.xpose.msra.mxu0 0.0
        %2271 = vmatprep.subr.mxu0 0.0
        %2272 = vmatpush2.xpose.msra.mxu0 0.0
        %2273 = vmatprep.subr.mxu0 0.0
        %2274 = vmatpush2.xpose.msra.mxu0 0.0
        %2275 = vmatprep.subr.mxu0 0.0
        %2276 = vmatpush2.xpose.msra.mxu0 0.0
        %2277 = vmatprep.mubr.f32.mxu0 0.0
        %2278 = vmatmul.mubr.f32.gmra.mxu0 %v2207
        %v2279 = vpop.f32.mrf.mxu0
        %v2280 = vadd.f32 0.0, %v2279
        %v2281 = vpop.f32.mrf.mxu0
        %2282 = vdwg.mxu0
        %v2283 = vmul.f32 %v2280, 0.17677669
        %v2284 = vadd.f32 %v2283, %v1930
        %v2285 = vsel %vm1933, %v2284, -inf
        %2286 = vmax.xlane.f32.xlu0 %v2285
        %v2287 = vpop.xlane.xlu0 %2286
        %v2288 = vsub.f32 %v2284, %v2287
        %v2289 = vmul.f32 %v2288, 1.442695
        %v2290 = vpow.pop %v2289
        %v2291 = vsel %vm1933, %v2290, 0.0
        %2292 = vadd.xlane.f32.xlu0 %v2291
        %v2293 = vpop.xlane.xlu0 %2292
        %v2294 = vrcp.pop %v2293
        %v2295 = vmul.f32 %v2290, %v2294
        %2296 = vrot.lane.b32.xlu0 %v1837, 80
        %v2297 = vpop.permute.xlu0 %2296
        %2298 = vrot.lane.b32.xlu0 %v1842, 80
        %v2299 = vpop.permute.xlu0 %2298
        %v2302 = vsel %vm1933, %v2295, 0
        %v2304 = vsel %vm1953, %v2299, 0
        %2306 = vmatprep.subr.mxu0 0.0
        %2307 = vmatpush1.msra.mxu0 0.0
        %2308 = vmatprep.subr.mxu0 0.0
        %2309 = vmatpush1.msra.mxu0 0.0
        %2310 = vmatprep.subr.mxu0 0.0
        %2311 = vmatpush1.msra.mxu0 0.0
        %2312 = vmatprep.subr.mxu0 0.0
        %2313 = vmatpush1.msra.mxu0 0.0
        %2314 = vmatprep.subr.mxu0 0.0
        %2315 = vmatpush1.msra.mxu0 0.0
        %2316 = vmatprep.subr.mxu0 0.0
        %2317 = vmatpush1.msra.mxu0 0.0
        %2318 = vmatprep.subr.mxu0 0.0
        %2319 = vmatpush1.msra.mxu0 0.0
        %2320 = vmatprep.subr.mxu0 0.0
        %2321 = vmatpush1.msra.mxu0 0.0
        %2322 = vmatprep.subr.mxu0 0.0
        %2323 = vmatpush1.msra.mxu0 0.0
        %2324 = vmatprep.subr.mxu0 0.0
        %2325 = vmatpush1.msra.mxu0 0.0
        %2326 = vmatprep.subr.mxu0 0.0
        %2327 = vmatpush1.msra.mxu0 0.0
        %2328 = vmatprep.subr.mxu0 0.0
        %2329 = vmatpush1.msra.mxu0 0.0
        %2330 = vmatprep.subr.mxu0 0.0
        %2331 = vmatpush1.msra.mxu0 0.0
        %2332 = vmatprep.subr.mxu0 0.0
        %2333 = vmatpush1.msra.mxu0 0.0
        %2334 = vmatprep.subr.mxu0 0.0
        %2335 = vmatpush1.msra.mxu0 %v2304
        %2336 = vmatprep.subr.mxu0 0.0
        %2337 = vmatpush1.msra.mxu0 %v2297
        %2338 = vmatprep.subr.mxu0 0.0
        %2339 = vmatpush2.msra.mxu0 0.0
        %2340 = vmatprep.subr.mxu0 0.0
        %2341 = vmatpush2.msra.mxu0 0.0
        %2342 = vmatprep.subr.mxu0 0.0
        %2343 = vmatpush2.msra.mxu0 0.0
        %2344 = vmatprep.subr.mxu0 0.0
        %2345 = vmatpush2.msra.mxu0 0.0
        %2346 = vmatprep.subr.mxu0 0.0
        %2347 = vmatpush2.msra.mxu0 0.0
        %2348 = vmatprep.subr.mxu0 0.0
        %2349 = vmatpush2.msra.mxu0 0.0
        %2350 = vmatprep.subr.mxu0 0.0
        %2351 = vmatpush2.msra.mxu0 0.0
        %2352 = vmatprep.subr.mxu0 0.0
        %2353 = vmatpush2.msra.mxu0 0.0
        %2354 = vmatprep.subr.mxu0 0.0
        %2355 = vmatpush2.msra.mxu0 0.0
        %2356 = vmatprep.subr.mxu0 0.0
        %2357 = vmatpush2.msra.mxu0 0.0
        %2358 = vmatprep.subr.mxu0 0.0
        %2359 = vmatpush2.msra.mxu0 0.0
        %2360 = vmatprep.subr.mxu0 0.0
        %2361 = vmatpush2.msra.mxu0 0.0
        %2362 = vmatprep.subr.mxu0 0.0
        %2363 = vmatpush2.msra.mxu0 0.0
        %2364 = vmatprep.subr.mxu0 0.0
        %2365 = vmatpush2.msra.mxu0 0.0
        %2366 = vmatprep.subr.mxu0 0.0
        %2367 = vmatpush2.msra.mxu0 0.0
        %2368 = vmatprep.subr.mxu0 0.0
        %2369 = vmatpush2.msra.mxu0 0.0
        %2370 = vmatprep.mubr.f32.mxu0 0.0
        %2371 = vmatmul.mubr.f32.gmra.mxu0 %v2302
        %v2372 = vpop.f32.mrf.mxu0
        %v2373 = vadd.f32 0.0, %v2372
        %v2374 = vpop.f32.mrf.mxu0
        %2375 = vdwg.mxu0
        %2376 = vrot.lane.b32.xlu0 %v1750, 104
        %v2377 = vpop.permute.xlu0 %2376
        %2378 = vrot.lane.b32.xlu0 %v1837, 104
        %v2379 = vpop.permute.xlu0 %2378
        %2380 = vrot.lane.b32.xlu0 %v1842, 104
        %v2381 = vpop.permute.xlu0 %2380
        %v2382 = vsel %vm872, %v2377, 0
        %v2384 = vsel %vm872, %v2379, 0
        %v2386 = vsel %vm872, %v2381, 0
        %2388 = vmatprep.subr.mxu0 0.0
        %2389 = vmatpush1.xpose.msra.mxu0 0.0
        %2390 = vmatprep.subr.mxu0 0.0
        %2391 = vmatpush1.xpose.msra.mxu0 0.0
        %2392 = vmatprep.subr.mxu0 0.0
        %2393 = vmatpush1.xpose.msra.mxu0 0.0
        %2394 = vmatprep.subr.mxu0 0.0
        %2395 = vmatpush1.xpose.msra.mxu0 0.0
        %2396 = vmatprep.subr.mxu0 0.0
        %2397 = vmatpush1.xpose.msra.mxu0 0.0
        %2398 = vmatprep.subr.mxu0 0.0
        %2399 = vmatpush1.xpose.msra.mxu0 0.0
        %2400 = vmatprep.subr.mxu0 0.0
        %2401 = vmatpush1.xpose.msra.mxu0 0.0
        %2402 = vmatprep.subr.mxu0 0.0
        %2403 = vmatpush1.xpose.msra.mxu0 0.0
        %2404 = vmatprep.subr.mxu0 0.0
        %2405 = vmatpush1.xpose.msra.mxu0 0.0
        %2406 = vmatprep.subr.mxu0 0.0
        %2407 = vmatpush1.xpose.msra.mxu0 0.0
        %2408 = vmatprep.subr.mxu0 0.0
        %2409 = vmatpush1.xpose.msra.mxu0 0.0
        %2410 = vmatprep.subr.mxu0 0.0
        %2411 = vmatpush1.xpose.msra.mxu0 0.0
        %2412 = vmatprep.subr.mxu0 0.0
        %2413 = vmatpush1.xpose.msra.mxu0 0.0
        %2414 = vmatprep.subr.mxu0 0.0
        %2415 = vmatpush1.xpose.msra.mxu0 0.0
        %2416 = vmatprep.subr.mxu0 0.0
        %2417 = vmatpush1.xpose.msra.mxu0 %v2386
        %2418 = vmatprep.subr.mxu0 0.0
        %2419 = vmatpush1.xpose.msra.mxu0 %v2384
        %2420 = vmatprep.subr.mxu0 0.0
        %2421 = vmatpush2.xpose.msra.mxu0 0.0
        %2422 = vmatprep.subr.mxu0 0.0
        %2423 = vmatpush2.xpose.msra.mxu0 0.0
        %2424 = vmatprep.subr.mxu0 0.0
        %2425 = vmatpush2.xpose.msra.mxu0 0.0
        %2426 = vmatprep.subr.mxu0 0.0
        %2427 = vmatpush2.xpose.msra.mxu0 0.0
        %2428 = vmatprep.subr.mxu0 0.0
        %2429 = vmatpush2.xpose.msra.mxu0 0.0
        %2430 = vmatprep.subr.mxu0 0.0
        %2431 = vmatpush2.xpose.msra.mxu0 0.0
        %2432 = vmatprep.subr.mxu0 0.0
        %2433 = vmatpush2.xpose.msra.mxu0 0.0
        %2434 = vmatprep.subr.mxu0 0.0
        %2435 = vmatpush2.xpose.msra.mxu0 0.0
        %2436 = vmatprep.subr.mxu0 0.0
        %2437 = vmatpush2.xpose.msra.mxu0 0.0
        %2438 = vmatprep.subr.mxu0 0.0
        %2439 = vmatpush2.xpose.msra.mxu0 0.0
        %2440 = vmatprep.subr.mxu0 0.0
        %2441 = vmatpush2.xpose.msra.mxu0 0.0
        %2442 = vmatprep.subr.mxu0 0.0
        %2443 = vmatpush2.xpose.msra.mxu0 0.0
        %2444 = vmatprep.subr.mxu0 0.0
        %2445 = vmatpush2.xpose.msra.mxu0 0.0
        %2446 = vmatprep.subr.mxu0 0.0
        %2447 = vmatpush2.xpose.msra.mxu0 0.0
        %2448 = vmatprep.subr.mxu0 0.0
        %2449 = vmatpush2.xpose.msra.mxu0 0.0
        %2450 = vmatprep.subr.mxu0 0.0
        %2451 = vmatpush2.xpose.msra.mxu0 0.0
        %2452 = vmatprep.mubr.f32.mxu0 0.0
        %2453 = vmatmul.mubr.f32.gmra.mxu0 %v2382
        %v2454 = vpop.f32.mrf.mxu0
        %v2455 = vadd.f32 0.0, %v2454
        %v2456 = vpop.f32.mrf.mxu0
        %2457 = vdwg.mxu0
        %v2458 = vmul.f32 %v2455, 0.17677669
        %v2459 = vadd.f32 %v2458, %v1930
        %v2460 = vsel %vm1933, %v2459, -inf
        %2461 = vmax.xlane.f32.xlu0 %v2460
        %v2462 = vpop.xlane.xlu0 %2461
        %v2463 = vsub.f32 %v2459, %v2462
        %v2464 = vmul.f32 %v2463, 1.442695
        %v2465 = vpow.pop %v2464
        %v2466 = vsel %vm1933, %v2465, 0.0
        %2467 = vadd.xlane.f32.xlu0 %v2466
        %v2468 = vpop.xlane.xlu0 %2467
        %v2469 = vrcp.pop %v2468
        %v2470 = vmul.f32 %v2465, %v2469
        %2471 = vrot.lane.b32.xlu0 %v1837, 72
        %v2472 = vpop.permute.xlu0 %2471
        %2473 = vrot.lane.b32.xlu0 %v1842, 72
        %v2474 = vpop.permute.xlu0 %2473
        %v2477 = vsel %vm1933, %v2470, 0
        %v2479 = vsel %vm1953, %v2474, 0
        %2481 = vmatprep.subr.mxu0 0.0
        %2482 = vmatpush1.msra.mxu0 0.0
        %2483 = vmatprep.subr.mxu0 0.0
        %2484 = vmatpush1.msra.mxu0 0.0
        %2485 = vmatprep.subr.mxu0 0.0
        %2486 = vmatpush1.msra.mxu0 0.0
        %2487 = vmatprep.subr.mxu0 0.0
        %2488 = vmatpush1.msra.mxu0 0.0
        %2489 = vmatprep.subr.mxu0 0.0
        %2490 = vmatpush1.msra.mxu0 0.0
        %2491 = vmatprep.subr.mxu0 0.0
        %2492 = vmatpush1.msra.mxu0 0.0
        %2493 = vmatprep.subr.mxu0 0.0
        %2494 = vmatpush1.msra.mxu0 0.0
        %2495 = vmatprep.subr.mxu0 0.0
        %2496 = vmatpush1.msra.mxu0 0.0
        %2497 = vmatprep.subr.mxu0 0.0
        %2498 = vmatpush1.msra.mxu0 0.0
        %2499 = vmatprep.subr.mxu0 0.0
        %2500 = vmatpush1.msra.mxu0 0.0
        %2501 = vmatprep.subr.mxu0 0.0
        %2502 = vmatpush1.msra.mxu0 0.0
        %2503 = vmatprep.subr.mxu0 0.0
        %2504 = vmatpush1.msra.mxu0 0.0
        %2505 = vmatprep.subr.mxu0 0.0
        %2506 = vmatpush1.msra.mxu0 0.0
        %2507 = vmatprep.subr.mxu0 0.0
        %2508 = vmatpush1.msra.mxu0 0.0
        %2509 = vmatprep.subr.mxu0 0.0
        %2510 = vmatpush1.msra.mxu0 %v2479
        %2511 = vmatprep.subr.mxu0 0.0
        %2512 = vmatpush1.msra.mxu0 %v2472
        %2513 = vmatprep.subr.mxu0 0.0
        %2514 = vmatpush2.msra.mxu0 0.0
        %2515 = vmatprep.subr.mxu0 0.0
        %2516 = vmatpush2.msra.mxu0 0.0
        %2517 = vmatprep.subr.mxu0 0.0
        %2518 = vmatpush2.msra.mxu0 0.0
        %2519 = vmatprep.subr.mxu0 0.0
        %2520 = vmatpush2.msra.mxu0 0.0
        %2521 = vmatprep.subr.mxu0 0.0
        %2522 = vmatpush2.msra.mxu0 0.0
        %2523 = vmatprep.subr.mxu0 0.0
        %2524 = vmatpush2.msra.mxu0 0.0
        %2525 = vmatprep.subr.mxu0 0.0
        %2526 = vmatpush2.msra.mxu0 0.0
        %2527 = vmatprep.subr.mxu0 0.0
        %2528 = vmatpush2.msra.mxu0 0.0
        %2529 = vmatprep.subr.mxu0 0.0
        %2530 = vmatpush2.msra.mxu0 0.0
        %2531 = vmatprep.subr.mxu0 0.0
        %2532 = vmatpush2.msra.mxu0 0.0
        %2533 = vmatprep.subr.mxu0 0.0
        %2534 = vmatpush2.msra.mxu0 0.0
        %2535 = vmatprep.subr.mxu0 0.0
        %2536 = vmatpush2.msra.mxu0 0.0
        %2537 = vmatprep.subr.mxu0 0.0
        %2538 = vmatpush2.msra.mxu0 0.0
        %2539 = vmatprep.subr.mxu0 0.0
        %2540 = vmatpush2.msra.mxu0 0.0
        %2541 = vmatprep.subr.mxu0 0.0
        %2542 = vmatpush2.msra.mxu0 0.0
        %2543 = vmatprep.subr.mxu0 0.0
        %2544 = vmatpush2.msra.mxu0 0.0
        %2545 = vmatprep.mubr.f32.mxu0 0.0
        %2546 = vmatmul.mubr.f32.gmra.mxu0 %v2477
        %v2547 = vpop.f32.mrf.mxu0
        %v2548 = vadd.f32 0.0, %v2547
        %v2549 = vpop.f32.mrf.mxu0
        %2550 = vdwg.mxu0
        %2552 = vrot.lane.b32.xlu0 %v2198, 8
        %v2553 = vpop.permute.xlu0 %2552
        %2556 = vrot.lane.b32.xlu0 %v2373, 16
        %v2557 = vpop.permute.xlu0 %2556
        %2560 = vrot.lane.b32.xlu0 %v2548, 24
        %v2561 = vpop.permute.xlu0 %2560
        %v2563 = vsel %vm872, %v2023, %v2553
        %v2564 = vsel %vm1550, %v2563, %v2557
        %v2565 = vsel %vm1552, %v2564, %v2561
        %v2566 = vld [vmem:[%s14] sm:$0xff]
        %v2567 = vld [vmem:[%s14 + $0x8] sm:$0xff]
        %v2568 = vld [vmem:[%s14 + $0x10] sm:$0xff]
        %v2569 = vld [vmem:[%s14 + $0x18] sm:$0xff]
        %v2570 = vld [vmem:[%s15] sm:$0x1]
        %v2572 = vlaneseq
        %v2573 = vshrl.u32 %v2572, 7
        %v2574 = vsub.s32 0, %v2573
        %v2575 = vrot.slane %v2570, %v2574
        %v2578 = vsel %vm794, %v2565, 0
        %2580 = vmatprep.subr.mxu0 0.0
        %2581 = vmatpush1.msra.mxu0 0.0
        %2582 = vmatprep.subr.mxu0 0.0
        %2583 = vmatpush1.msra.mxu0 0.0
        %2584 = vmatprep.subr.mxu0 0.0
        %2585 = vmatpush1.msra.mxu0 0.0
        %2586 = vmatprep.subr.mxu0 0.0
        %2587 = vmatpush1.msra.mxu0 0.0
        %2588 = vmatprep.subr.mxu0 0.0
        %2589 = vmatpush1.msra.mxu0 0.0
        %2590 = vmatprep.subr.mxu0 0.0
        %2591 = vmatpush1.msra.mxu0 0.0
        %2592 = vmatprep.subr.mxu0 0.0
        %2593 = vmatpush1.msra.mxu0 0.0
        %2594 = vmatprep.subr.mxu0 0.0
        %2595 = vmatpush1.msra.mxu0 0.0
        %2596 = vmatprep.subr.mxu0 0.0
        %2597 = vmatpush1.msra.mxu0 0.0
        %2598 = vmatprep.subr.mxu0 0.0
        %2599 = vmatpush1.msra.mxu0 0.0
        %2600 = vmatprep.subr.mxu0 0.0
        %2601 = vmatpush1.msra.mxu0 0.0
        %2602 = vmatprep.subr.mxu0 0.0
        %2603 = vmatpush1.msra.mxu0 0.0
        %2604 = vmatprep.subr.mxu0 0.0
        %2605 = vmatpush1.msra.mxu0 %v2569
        %2606 = vmatprep.subr.mxu0 0.0
        %2607 = vmatpush1.msra.mxu0 %v2568
        %2608 = vmatprep.subr.mxu0 0.0
        %2609 = vmatpush1.msra.mxu0 %v2567
        %2610 = vmatprep.subr.mxu0 0.0
        %2611 = vmatpush1.msra.mxu0 %v2566
        %2612 = vmatprep.subr.mxu0 0.0
        %2613 = vmatpush2.msra.mxu0 0.0
        %2614 = vmatprep.subr.mxu0 0.0
        %2615 = vmatpush2.msra.mxu0 0.0
        %2616 = vmatprep.subr.mxu0 0.0
        %2617 = vmatpush2.msra.mxu0 0.0
        %2618 = vmatprep.subr.mxu0 0.0
        %2619 = vmatpush2.msra.mxu0 0.0
        %2620 = vmatprep.subr.mxu0 0.0
        %2621 = vmatpush2.msra.mxu0 0.0
        %2622 = vmatprep.subr.mxu0 0.0
        %2623 = vmatpush2.msra.mxu0 0.0
        %2624 = vmatprep.subr.mxu0 0.0
        %2625 = vmatpush2.msra.mxu0 0.0
        %2626 = vmatprep.subr.mxu0 0.0
        %2627 = vmatpush2.msra.mxu0 0.0
        %2628 = vmatprep.subr.mxu0 0.0
        %2629 = vmatpush2.msra.mxu0 0.0
        %2630 = vmatprep.subr.mxu0 0.0
        %2631 = vmatpush2.msra.mxu0 0.0
        %2632 = vmatprep.subr.mxu0 0.0
        %2633 = vmatpush2.msra.mxu0 0.0
        %2634 = vmatprep.subr.mxu0 0.0
        %2635 = vmatpush2.msra.mxu0 0.0
        %2636 = vmatprep.subr.mxu0 0.0
        %2637 = vmatpush2.msra.mxu0 0.0
        %2638 = vmatprep.subr.mxu0 0.0
        %2639 = vmatpush2.msra.mxu0 0.0
        %2640 = vmatprep.subr.mxu0 0.0
        %2641 = vmatpush2.msra.mxu0 0.0
        %2642 = vmatprep.subr.mxu0 0.0
        %2643 = vmatpush2.msra.mxu0 0.0
        %2644 = vmatprep.mubr.f32.mxu0 0.0
        %2645 = vmatmul.mubr.f32.gmra.mxu0 %v2578
        %v2646 = vpop.f32.mrf.mxu0
        %v2647 = vadd.f32 %v2575, %v2646
        %v2648 = vpop.f32.mrf.mxu0
        %2649 = vdwg.mxu0
        %v2650 = vadd.f32 %v2647, %v1668
        %v2651 = vld [vmem:[%s16] sm:$0x1]
        %v2652 = vld [vmem:[%s17] sm:$0x1]
        %v2653 = vsel %vm794, %v2650, 0.0
        %2654 = vadd.xlane.f32.xlu0 %v2653
        %v2655 = vpop.xlane.xlu0 %2654
        %v2656 = vmul.f32 %v2655, %v1644
        %v2657 = vsub.f32 %v2650, %v2656
        %v2658 = vmul.f32 %v2657, %v2657
        %v2659 = vsel %vm794, %v2658, 0.0
        %2660 = vadd.xlane.f32.xlu0 %v2659
        %v2661 = vpop.xlane.xlu0 %2660
        %v2662 = vmul.f32 %v2661, %v1644
        %v2663 = vadd.f32 %v2662, 1e-05
        %v2664 = vrsqrt.pop %v2663
        %v2665 = vmul.f32 %v2657, %v2664
        %v2667 = vlaneseq
        %v2668 = vshrl.u32 %v2667, 7
        %v2669 = vsub.s32 0, %v2668
        %v2670 = vrot.slane %v2651, %v2669
        %v2672 = vmul.f32 %v2665, %v2670
        %v2674 = vlaneseq
        %v2675 = vshrl.u32 %v2674, 7
        %v2676 = vsub.s32 0, %v2675
        %v2677 = vrot.slane %v2652, %v2676
        %v2679 = vadd.f32 %v2672, %v2677
        %v2680 = vld [vmem:[%s18] sm:$0xff]
        %v2681 = vld [vmem:[%s18 + $0x8] sm:$0xff]
        %v2682 = vld [vmem:[%s18 + $0x10] sm:$0xff]
        %v2683 = vld [vmem:[%s18 + $0x18] sm:$0xff]
        %v2684 = vld [vmem:[%s19] sm:$0x1]
        %v2686 = vlaneseq
        %v2687 = vshrl.u32 %v2686, 7
        %v2688 = vsub.s32 0, %v2687
        %v2689 = vrot.slane %v2684, %v2688
        %v2692 = vsel %vm794, %v2679, 0
        %2694 = vmatprep.subr.mxu0 0.0
        %2695 = vmatpush1.msra.mxu0 0.0
        %2696 = vmatprep.subr.mxu0 0.0
        %2697 = vmatpush1.msra.mxu0 0.0
        %2698 = vmatprep.subr.mxu0 0.0
        %2699 = vmatpush1.msra.mxu0 0.0
        %2700 = vmatprep.subr.mxu0 0.0
        %2701 = vmatpush1.msra.mxu0 0.0
        %2702 = vmatprep.subr.mxu0 0.0
        %2703 = vmatpush1.msra.mxu0 0.0
        %2704 = vmatprep.subr.mxu0 0.0
        %2705 = vmatpush1.msra.mxu0 0.0
        %2706 = vmatprep.subr.mxu0 0.0
        %2707 = vmatpush1.msra.mxu0 0.0
        %2708 = vmatprep.subr.mxu0 0.0
        %2709 = vmatpush1.msra.mxu0 0.0
        %2710 = vmatprep.subr.mxu0 0.0
        %2711 = vmatpush1.msra.mxu0 0.0
        %2712 = vmatprep.subr.mxu0 0.0
        %2713 = vmatpush1.msra.mxu0 0.0
        %2714 = vmatprep.subr.mxu0 0.0
        %2715 = vmatpush1.msra.mxu0 0.0
        %2716 = vmatprep.subr.mxu0 0.0
        %2717 = vmatpush1.msra.mxu0 0.0
        %2718 = vmatprep.subr.mxu0 0.0
        %2719 = vmatpush1.msra.mxu0 %v2683
        %2720 = vmatprep.subr.mxu0 0.0
        %2721 = vmatpush1.msra.mxu0 %v2682
        %2722 = vmatprep.subr.mxu0 0.0
        %2723 = vmatpush1.msra.mxu0 %v2681
        %2724 = vmatprep.subr.mxu0 0.0
        %2725 = vmatpush1.msra.mxu0 %v2680
        %2726 = vmatprep.subr.mxu0 0.0
        %2727 = vmatpush2.msra.mxu0 0.0
        %2728 = vmatprep.subr.mxu0 0.0
        %2729 = vmatpush2.msra.mxu0 0.0
        %2730 = vmatprep.subr.mxu0 0.0
        %2731 = vmatpush2.msra.mxu0 0.0
        %2732 = vmatprep.subr.mxu0 0.0
        %2733 = vmatpush2.msra.mxu0 0.0
        %2734 = vmatprep.subr.mxu0 0.0
        %2735 = vmatpush2.msra.mxu0 0.0
        %2736 = vmatprep.subr.mxu0 0.0
        %2737 = vmatpush2.msra.mxu0 0.0
        %2738 = vmatprep.subr.mxu0 0.0
        %2739 = vmatpush2.msra.mxu0 0.0
        %2740 = vmatprep.subr.mxu0 0.0
        %2741 = vmatpush2.msra.mxu0 0.0
        %2742 = vmatprep.subr.mxu0 0.0
        %2743 = vmatpush2.msra.mxu0 0.0
        %2744 = vmatprep.subr.mxu0 0.0
        %2745 = vmatpush2.msra.mxu0 0.0
        %2746 = vmatprep.subr.mxu0 0.0
        %2747 = vmatpush2.msra.mxu0 0.0
        %2748 = vmatprep.subr.mxu0 0.0
        %2749 = vmatpush2.msra.mxu0 0.0
        %2750 = vmatprep.subr.mxu0 0.0
        %2751 = vmatpush2.msra.mxu0 0.0
        %2752 = vmatprep.subr.mxu0 0.0
        %2753 = vmatpush2.msra.mxu0 0.0
        %2754 = vmatprep.subr.mxu0 0.0
        %2755 = vmatpush2.msra.mxu0 0.0
        %2756 = vmatprep.subr.mxu0 0.0
        %2757 = vmatpush2.msra.mxu0 0.0
        %2758 = vmatprep.mubr.f32.mxu0 0.0
        %2759 = vmatmul.mubr.f32.gmra.mxu0 %v2692
        %v2760 = vpop.f32.mrf.mxu0
        %v2761 = vadd.f32 %v2689, %v2760
        %v2762 = vpop.f32.mrf.mxu0
        %2763 = vdwg.mxu0
        %v2764 = vmax.f32 %v2761, 0.0
        %v2765 = vld [vmem:[%s20] sm:$0xff]
        %v2766 = vld [vmem:[%s20 + $0x8] sm:$0xff]
        %v2767 = vld [vmem:[%s20 + $0x10] sm:$0xff]
        %v2768 = vld [vmem:[%s20 + $0x18] sm:$0xff]
        %v2769 = vld [vmem:[%s20 + $0x20] sm:$0xff]
        %v2770 = vld [vmem:[%s20 + $0x28] sm:$0xff]
        %v2771 = vld [vmem:[%s20 + $0x30] sm:$0xff]
        %v2772 = vld [vmem:[%s20 + $0x38] sm:$0xff]
        %v2773 = vld [vmem:[%s21] sm:$0x1]
        %v2775 = vlaneseq
        %v2776 = vshrl.u32 %v2775, 7
        %v2777 = vsub.s32 0, %v2776
        %v2778 = vrot.slane %v2773, %v2777
        %vm2780 = vcmask 523264
        %v2782 = vsel %vm2780, %v2764, 0
        %2784 = vmatprep.subr.mxu0 0.0
        %2785 = vmatpush1.msra.mxu0 0.0
        %2786 = vmatprep.subr.mxu0 0.0
        %2787 = vmatpush1.msra.mxu0 0.0
        %2788 = vmatprep.subr.mxu0 0.0
        %2789 = vmatpush1.msra.mxu0 0.0
        %2790 = vmatprep.subr.mxu0 0.0
        %2791 = vmatpush1.msra.mxu0 0.0
        %2792 = vmatprep.subr.mxu0 0.0
        %2793 = vmatpush1.msra.mxu0 0.0
        %2794 = vmatprep.subr.mxu0 0.0
        %2795 = vmatpush1.msra.mxu0 0.0
        %2796 = vmatprep.subr.mxu0 0.0
        %2797 = vmatpush1.msra.mxu0 0.0
        %2798 = vmatprep.subr.mxu0 0.0
        %2799 = vmatpush1.msra.mxu0 0.0
        %2800 = vmatprep.subr.mxu0 0.0
        %2801 = vmatpush1.msra.mxu0 %v2772
        %2802 = vmatprep.subr.mxu0 0.0
        %2803 = vmatpush1.msra.mxu0 %v2771
        %2804 = vmatprep.subr.mxu0 0.0
        %2805 = vmatpush1.msra.mxu0 %v2770
        %2806 = vmatprep.subr.mxu0 0.0
        %2807 = vmatpush1.msra.mxu0 %v2769
        %2808 = vmatprep.subr.mxu0 0.0
        %2809 = vmatpush1.msra.mxu0 %v2768
        %2810 = vmatprep.subr.mxu0 0.0
        %2811 = vmatpush1.msra.mxu0 %v2767
        %2812 = vmatprep.subr.mxu0 0.0
        %2813 = vmatpush1.msra.mxu0 %v2766
        %2814 = vmatprep.subr.mxu0 0.0
        %2815 = vmatpush1.msra.mxu0 %v2765
        %2816 = vmatprep.subr.mxu0 0.0
        %2817 = vmatpush2.msra.mxu0 0.0
        %2818 = vmatprep.subr.mxu0 0.0
        %2819 = vmatpush2.msra.mxu0 0.0
        %2820 = vmatprep.subr.mxu0 0.0
        %2821 = vmatpush2.msra.mxu0 0.0
        %2822 = vmatprep.subr.mxu0 0.0
        %2823 = vmatpush2.msra.mxu0 0.0
        %2824 = vmatprep.subr.mxu0 0.0
        %2825 = vmatpush2.msra.mxu0 0.0
        %2826 = vmatprep.subr.mxu0 0.0
        %2827 = vmatpush2.msra.mxu0 0.0
        %2828 = vmatprep.subr.mxu0 0.0
        %2829 = vmatpush2.msra.mxu0 0.0
        %2830 = vmatprep.subr.mxu0 0.0
        %2831 = vmatpush2.msra.mxu0 0.0
        %2832 = vmatprep.subr.mxu0 0.0
        %2833 = vmatpush2.msra.mxu0 0.0
        %2834 = vmatprep.subr.mxu0 0.0
        %2835 = vmatpush2.msra.mxu0 0.0
        %2836 = vmatprep.subr.mxu0 0.0
        %2837 = vmatpush2.msra.mxu0 0.0
        %2838 = vmatprep.subr.mxu0 0.0
        %2839 = vmatpush2.msra.mxu0 0.0
        %2840 = vmatprep.subr.mxu0 0.0
        %2841 = vmatpush2.msra.mxu0 0.0
        %2842 = vmatprep.subr.mxu0 0.0
        %2843 = vmatpush2.msra.mxu0 0.0
        %2844 = vmatprep.subr.mxu0 0.0
        %2845 = vmatpush2.msra.mxu0 0.0
        %2846 = vmatprep.subr.mxu0 0.0
        %2847 = vmatpush2.msra.mxu0 0.0
        %2848 = vmatprep.mubr.f32.mxu0 0.0
        %2849 = vmatmul.mubr.f32.gmra.mxu0 %v2782
        %v2850 = vpop.f32.mrf.mxu0
        %v2851 = vadd.f32 %v2778, %v2850
        %v2852 = vpop.f32.mrf.mxu0
        %2853 = vdwg.mxu0
        %v2854 = vadd.f32 %v2851, %v2679
        %v2855 = vld [vmem:[%s22] sm:$0x1]
        %v2856 = vld [vmem:[#allocation2] sm:$0x1]
        %v2857 = vsel %vm794, %v2854, 0.0
        %2858 = vadd.xlane.f32.xlu0 %v2857
        %v2859 = vpop.xlane.xlu0 %2858
        %v2860 = vmul.f32 %v2859, %v1644
        %v2861 = vsub.f32 %v2854, %v2860
        %v2862 = vmul.f32 %v2861, %v2861
        %v2863 = vsel %vm794, %v2862, 0.0
        %2864 = vadd.xlane.f32.xlu0 %v2863
        %v2865 = vpop.xlane.xlu0 %2864
        %v2866 = vmul.f32 %v2865, %v1644
        %v2867 = vadd.f32 %v2866, 1e-05
        %v2868 = vrsqrt.pop %v2867
        %v2869 = vmul.f32 %v2861, %v2868
        %v2871 = vlaneseq
        %v2872 = vshrl.u32 %v2871, 7
        %v2873 = vsub.s32 0, %v2872
        %v2874 = vrot.slane %v2855, %v2873
        %v2876 = vmul.f32 %v2869, %v2874
        %v2878 = vlaneseq
        %v2879 = vshrl.u32 %v2878, 7
        %v2880 = vsub.s32 0, %v2879
        %v2881 = vrot.slane %v2856, %v2880
        %v2883 = vadd.f32 %v2876, %v2881
        %2884 = vst.msk [vmem:[%s779] sm:$0xff] %vm794, %v2883
        %p2885 = scmp.lt.s32.totalorder %s36, 1
        %s2886 = scalar_select %p2885, %s36, 1
        %s2887 = smul.addr %s2886, 8
        %s2888 = scalar_lea.vmem %s24, %s2887
        // Predicated region
        $region121: #{decoder_forward.6} parent=115 // pred_check
          %p2889 = pneg %p573
        $region122: #{decoder_forward.6} parent=115 // pred_check_branch
          %2891 = sbr.rel (%p2889) target = $region124
        $region123: #{decoder_forward.6} parent=115 // pred_region
          _
        $region124: #{decoder_forward.6} parent=115 // pred_fallthru
          _
      $region116: #{decoder_forward.6} parent=5 // pred_fallthru
        _
      %p2892 = scmp.le.s32.totalorder 2, %s31
      // Predicated region
      $region125: #{decoder_forward.6} parent=5 // pred_check
        %p2893 = pneg %p2892
      $region126: #{decoder_forward.6} parent=5 // pred_check_branch
        %2895 = sbr.rel (%p2893) target = $region128
      $region127: #{decoder_forward.6} parent=5 // pred_region
        %s2896 = ssub.s32 %s31, 2
        // Predicated region
        $region129: #{decoder_forward.6} parent=127 // pred_check
          %p2897 = pneg %p579
        $region130: #{decoder_forward.6} parent=127 // pred_check_branch
          %2899 = sbr.rel (%p2897) target = $region132
        $region131: #{decoder_forward.6} parent=127 // pred_region
          %p2900 = scmp.lt.s32.totalorder %s37, 1
          %s2901 = scalar_select %p2900, %s37, 1
          %s2902 = smul.addr %s2901, 8
          %s2903 = scalar_lea.vmem %s24, %s2902
        $region132: #{decoder_forward.6} parent=127 // pred_fallthru
          _
      $region128: #{decoder_forward.6} parent=5 // pred_fallthru
        _
    $region6: #{decoder_forward.6} parent=1 // loop_footer
      %s35 = sadd.s32 1, %s31
    $region7: #{decoder_forward.6} parent=1 // loop_footer_branch
      %30 = sbr.rel target = $region3
    $region8: #{decoder_forward.6} parent=1 // loop_exit
      _
    %2904 = vsyncpa [#allocation3], 1
    %s2905 = scalar_lea.sflag [#allocation3], 1
    %2906 = vsyncpa %s2905, 1

// kernel: decoder_forward.7
$region0: #{decoder_forward.7}
  #allocation0 [shape = 'u32[]', space=smem, size = 0x4, offset = 0x4, fixed_abs, tag = 'smem constant byte address 0x4 - core index']
  #allocation1 [shape = 'u32[144,128]{1,0:T(1,128)}', space=vmem, size = 0x12000, scoped, tag = 'internal scratch']
  %s0 = inlined_call_operand.vmem [shape: f32[2,8,32], index: 0, kind: input, shape index: {}]
  %s1 = inlined_call_operand.vmem [shape: f32[32,17], index: 1, kind: input, shape index: {}]
  %s2 = inlined_call_operand.vmem [shape: f32[1,17], index: 2, kind: input, shape index: {}]
  %s3 = inlined_call_operand.vmem [shape: f32[80,32], index: 3, kind: input, shape index: {}]
  %s4 = inlined_call_operand.vmem [shape: f32[1,32], index: 4, kind: input, shape index: {}]
  %s5 = inlined_call_operand.vmem [shape: f32[1,32], index: 5, kind: input, shape index: {}]
  %s6 = inlined_call_operand.vmem [shape: f32[160,32], index: 6, kind: input, shape index: {}]
  %s7 = inlined_call_operand.vmem [shape: f32[1,32], index: 7, kind: input, shape index: {}]
  %s8 = inlined_call_operand.vmem [shape: f32[1,32], index: 8, kind: input, shape index: {}]
  %s9 = inlined_call_operand.vmem [shape: f32[160,32], index: 9, kind: input, shape index: {}]
  %s10 = inlined_call_operand.vmem [shape: f32[1,32], index: 10, kind: input, shape index: {}]
  %s11 = inlined_call_operand.vmem [shape: f32[1,32], index: 11, kind: input, shape index: {}]
  %s12 = inlined_call_operand.vmem [shape: f32[160,32], index: 12, kind: input, shape index: {}]
  %s13 = inlined_call_operand.vmem [shape: f32[1,32], index: 13, kind: input, shape index: {}]
  %s14 = inlined_call_operand.vmem [shape: f32[1,32], index: 14, kind: input, shape index: {}]
  %s15 = inlined_call_operand.vmem [shape: f32[160,16], index: 15, kind: input, shape index: {}]
  %s16 = inlined_call_operand.vmem [shape: f32[1,16], index: 16, kind: input, shape index: {}]
  %s17 = inlined_call_operand.hbm [shape: f32[2,8,16], index: 17, kind: output, shape index: {0}]
  %s18 = inlined_call_operand.hbm [shape: f32[2,8,16], index: 18, kind: output, shape index: {1}]
  %s19 = inlined_call_operand.vmem [shape: f32[2,8,1], index: 19, kind: output, shape index: {2}]
  %20 = xla_tuple %s17, %s18, %s19
  %s21 = sld [smem:[#allocation0]]
  $region117: #{decoder_forward.7} parent=0
    _
  %s23 = ssub.s32 1, %s21
  %s24 = scalar_select 0, %s23, %s21
  $region1: #{decoder_forward.7} parent=0
    #allocation2 [shape = 'u8[8192]{0}', space=vmem, size = 0x2000, scoped, tag = 'output window, operand 0']
    #allocation3 [shape = 's32[2]{0}', space=sflag, size = 0x8, scoped, tag = 'scoped memory for decoder_forward.7']
    #allocation4 [shape = 'u8[8192]{0}', space=vmem, size = 0x2000, scoped, tag = 'output window, operand 1']
    #allocation5 [shape = 's32[2]{0}', space=sflag, size = 0x8, scoped, tag = 'scoped memory for decoder_forward.7']
    %25 = vsyncpa [#allocation3], 0
    %s26 = scalar_lea.sflag [#allocation3], 1
    %27 = vsyncpa %s26, 0
    %28 = vsyncpa [#allocation5], 0
    %s29 = scalar_lea.sflag [#allocation5], 1
    %30 = vsyncpa %s29, 0
    loop: start=0, step=1, limit=4
    $region2: #{decoder_forward.7} parent=1 // loop_pre_header
      _
    $region3: #{decoder_forward.7} parent=1 // loop_header
      %s32 = sphi 0, %s36
      %p33 = scmp.ge.s32.totalorder %s32, 4
      %s42 = sphi 0, %s44
      %s45 = sphi 0, %s42
      %s46 = sphi 0, %s45
      %s62 = sphi 0, %s46
      %s66 = sphi 0, %s66
      %s68 = sphi 0, %s66
      %s69 = sphi 0, %s68
      %s83 = sphi 0, %s69
      %s87 = sphi 0, %s87
      %s89 = sphi 0, %s87
      %s90 = sphi 0, %s89
      %s104 = sphi 0, %s90
      %s108 = sphi 0, %s108
      %s110 = sphi 0, %s108
      %s111 = sphi 0, %s110
      %s125 = sphi 0, %s111
      %s129 = sphi 0, %s129
      %s131 = sphi 0, %s129
      %s132 = sphi 0, %s131
      %s146 = sphi 0, %s132
      %s150 = sphi 0, %s150
      %s152 = sphi 0, %s150
      %s153 = sphi 0, %s152
      %s167 = sphi 0, %s153
      %s171 = sphi 0, %s171
      %s173 = sphi 0, %s171
      %s174 = sphi 0, %s173
      %s188 = sphi 0, %s174
      %s192 = sphi 0, %s192
      %s194 = sphi 0, %s192
      %s195 = sphi 0, %s194
      %s209 = sphi 0, %s195
      %s213 = sphi 0, %s213
      %s215 = sphi 0, %s213
      %s216 = sphi 0, %s215
      %s230 = sphi 0, %s216
      %s234 = sphi 0, %s234
      %s236 = sphi 0, %s234
      %s237 = sphi 0, %s236
      %s251 = sphi 0, %s237
      %s255 = sphi 0, %s255
      %s257 = sphi 0, %s255
      %s258 = sphi 0, %s257
      %s272 = sphi 0, %s258
      %s276 = sphi 0, %s276
      %s278 = sphi 0, %s276
      %s279 = sphi 0, %s278
      %s293 = sphi 0, %s279
      %s297 = sphi 0, %s297
      %s299 = sphi 0, %s297
      %s300 = sphi 0, %s299
      %s314 = sphi 0, %s300
      %s318 = sphi 0, %s318
      %s320 = sphi 0, %s318
      %s321 = sphi 0, %s320
      %s335 = sphi 0, %s321
      %s339 = sphi 0, %s339
      %s341 = sphi 0, %s339
      %s342 = sphi 0, %s341
      %s356 = sphi 0, %s342
      %s360 = sphi 0, %s360
      %s362 = sphi 0, %s360
      %s363 = sphi 0, %s362
      %s377 = sphi 0, %s363
      %s381 = sphi 0, %s381
      %s383 = sphi 0, %s381
      %s384 = sphi 0, %s383
      %s398 = sphi 0, %s384
      %s404 = sphi 0, %s406
      %s407 = sphi 0, %s404
      %s408 = sphi 0, %s407
      %s424 = sphi 0, %s408
      %s430 = sphi 0, %s432
      %s433 = sphi 0, %s430
      %s434 = sphi 0, %s433
      %s450 = sphi 0, %s434
      %s456 = sphi 0, %s458
      %s459 = sphi 0, %s456
      %s460 = sphi 0, %s459
      %s476 = sphi 0, %s460
    $region4: #{decoder_forward.7} parent=1 // loop_header_branch
      %35 = sbr.rel (%p33) target = $region8
    $region5: #{decoder_forward.7} parent=1 // loop_body
      %s37 = ssub.s32 %s32, 1
      %s38 = ssub.s32 %s32, 2
      %s39 = sadd.s32 %s32, 1
      %s40 = ssub.s32 %s32, %s39
      %p41 = scmp.eq.s32.totalorder %s40, 0
      %s43 = sadd.s32 %s42, 1
      %s44 = scalar_select %p41, %s42, %s43
      %p47 = pneg %p41
      %p48 = scmp.eq.s32.totalorder %s32, 1
      %p49 = por %p47, %p48
      %p50 = scmp.ne.s32.totalorder %s42, %s45
      %p51 = scmp.eq.s32.totalorder %s32, 0
      %p52 = por %p50, %p51
      %p53 = scmp.ne.s32.totalorder %s42, %s45
      %p54 = scmp.eq.s32.totalorder %s37, 1
      %p55 = por %p53, %p54
      %p56 = scmp.ne.s32.totalorder %s45, %s46
      %p57 = scmp.eq.s32.totalorder %s37, 0
      %p58 = por %p56, %p57
      %p59 = scmp.ne.s32.totalorder %s45, %s46
      %p60 = scmp.eq.s32.totalorder %s38, 1
      %p61 = por %p59, %p60
      %p63 = scmp.ne.s32.totalorder %s46, %s62
      %p64 = scmp.eq.s32.totalorder %s38, 0
      %p65 = por %p63, %p64
      %s67 = sadd.s32 %s66, 1
      %p70 = scmp.eq.s32.totalorder %s32, 1
      %p71 = scmp.ne.s32.totalorder %s66, %s68
      %p72 = scmp.eq.s32.totalorder %s32, 0
      %p73 = por %p71, %p72
      %p74 = scmp.ne.s32.totalorder %s66, %s68
      %p75 = scmp.eq.s32.totalorder %s37, 1
      %p76 = por %p74, %p75
      %p77 = scmp.ne.s32.totalorder %s68, %s69
      %p78 = scmp.eq.s32.totalorder %s37, 0
      %p79 = por %p77, %p78
      %p80 = scmp.ne.s32.totalorder %s68, %s69
      %p81 = scmp.eq.s32.totalorder %s38, 1
      %p82 = por %p80, %p81
      %p84 = scmp.ne.s32.totalorder %s69, %s83
      %p85 = scmp.eq.s32.totalorder %s38, 0
      %p86 = por %p84, %p85
      %s88 = sadd.s32 %s87, 1
      %p91 = scmp.eq.s32.totalorder %s32, 1
      %p92 = scmp.ne.s32.totalorder %s87, %s89
      %p93 = scmp.eq.s32.totalorder %s32, 0
      %p94 = por %p92, %p93
      %p95 = scmp.ne.s32.totalorder %s87, %s89
      %p96 = scmp.eq.s32.totalorder %s37, 1
      %p97 = por %p95, %p96
      %p98 = scmp.ne.s32.totalorder %s89, %s90
      %p99 = scmp.eq.s32.totalorder %s37, 0
      %p100 = por %p98, %p99
      %p101 = scmp.ne.s32.totalorder %s89, %s90
      %p102 = scmp.eq.s32.totalorder %s38, 1
      %p103 = por %p101, %p102
      %p105 = scmp.ne.s32.totalorder %s90, %s104
      %p106 = scmp.eq.s32.totalorder %s38, 0
      %p107 = por %p105, %p106
      %s109 = sadd.s32 %s108, 1
      %p112 = scmp.eq.s32.totalorder %s32, 1
      %p113 = scmp.ne.s32.totalorder %s108, %s110
      %p114 = scmp.eq.s32.totalorder %s32, 0
      %p115 = por %p113, %p114
      %p116 = scmp.ne.s32.totalorder %s108, %s110
      %p117 = scmp.eq.s32.totalorder %s37, 1
      %p118 = por %p116, %p117
      %p119 = scmp.ne.s32.totalorder %s110, %s111
      %p120 = scmp.eq.s32.totalorder %s37, 0
      %p121 = por %p119, %p120
      %p122 = scmp.ne.s32.totalorder %s110, %s111
      %p123 = scmp.eq.s32.totalorder %s38, 1
      %p124 = por %p122, %p123
      %p126 = scmp.ne.s32.totalorder %s111, %s125
      %p127 = scmp.eq.s32.totalorder %s38, 0
      %p128 = por %p126, %p127
      %s130 = sadd.s32 %s129, 1
      %p133 = scmp.eq.s32.totalorder %s32, 1
      %p134 = scmp.ne.s32.totalorder %s129, %s131
      %p135 = scmp.eq.s32.totalorder %s32, 0
      %p136 = por %p134, %p135
      %p137 = scmp.ne.s32.totalorder %s129, %s131
      %p138 = scmp.eq.s32.totalorder %s37, 1
      %p139 = por %p137, %p138
      %p140 = scmp.ne.s32.totalorder %s131, %s132
      %p141 = scmp.eq.s32.totalorder %s37, 0
      %p142 = por %p140, %p141
      %p143 = scmp.ne.s32.totalorder %s131, %s132
      %p144 = scmp.eq.s32.totalorder %s38, 1
      %p145 = por %p143, %p144
      %p147 = scmp.ne.s32.totalorder %s132, %s146
      %p148 = scmp.eq.s32.totalorder %s38, 0
      %p149 = por %p147, %p148
      %s151 = sadd.s32 %s150, 1
      %p154 = scmp.eq.s32.totalorder %s32, 1
      %p155 = scmp.ne.s32.totalorder %s150, %s152
      %p156 = scmp.eq.s32.totalorder %s32, 0
      %p157 = por %p155, %p156
      %p158 = scmp.ne.s32.totalorder %s150, %s152
      %p159 = scmp.eq.s32.totalorder %s37, 1
      %p160 = por %p158, %p159
      %p161 = scmp.ne.s32.totalorder %s152, %s153
      %p162 = scmp.eq.s32.totalorder %s37, 0
      %p163 = por %p161, %p162
      %p164 = scmp.ne.s32.totalorder %s152, %s153
      %p165 = scmp.eq.s32.totalorder %s38, 1
      %p166 = por %p164, %p165
      %p168 = scmp.ne.s32.totalorder %s153, %s167
      %p169 = scmp.eq.s32.totalorder %s38, 0
      %p170 = por %p168, %p169
      %s172 = sadd.s32 %s171, 1
      %p175 = scmp.eq.s32.totalorder %s32, 1
      %p176 = scmp.ne.s32.totalorder %s171, %s173
      %p177 = scmp.eq.s32.totalorder %s32, 0
      %p178 = por %p176, %p177
      %p179 = scmp.ne.s32.totalorder %s171, %s173
      %p180 = scmp.eq.s32.totalorder %s37, 1
      %p181 = por %p179, %p180
      %p182 = scmp.ne.s32.totalorder %s173, %s174
      %p183 = scmp.eq.s32.totalorder %s37, 0
      %p184 = por %p182, %p183
      %p185 = scmp.ne.s32.totalorder %s173, %s174
      %p186 = scmp.eq.s32.totalorder %s38, 1
      %p187 = por %p185, %p186
      %p189 = scmp.ne.s32.totalorder %s174, %s188
      %p190 = scmp.eq.s32.totalorder %s38, 0
      %p191 = por %p189, %p190
      %s193 = sadd.s32 %s192, 1
      %p196 = scmp.eq.s32.totalorder %s32, 1
      %p197 = scmp.ne.s32.totalorder %s192, %s194
      %p198 = scmp.eq.s32.totalorder %s32, 0
      %p199 = por %p197, %p198
      %p200 = scmp.ne.s32.totalorder %s192, %s194
      %p201 = scmp.eq.s32.totalorder %s37, 1
      %p202 = por %p200, %p201
      %p203 = scmp.ne.s32.totalorder %s194, %s195
      %p204 = scmp.eq.s32.totalorder %s37, 0
      %p205 = por %p203, %p204
      %p206 = scmp.ne.s32.totalorder %s194, %s195
      %p207 = scmp.eq.s32.totalorder %s38, 1
      %p208 = por %p206, %p207
      %p210 = scmp.ne.s32.totalorder %s195, %s209
      %p211 = scmp.eq.s32.totalorder %s38, 0
      %p212 = por %p210, %p211
      %s214 = sadd.s32 %s213, 1
      %p217 = scmp.eq.s32.totalorder %s32, 1
      %p218 = scmp.ne.s32.totalorder %s213, %s215
      %p219 = scmp.eq.s32.totalorder %s32, 0
      %p220 = por %p218, %p219
      %p221 = scmp.ne.s32.totalorder %s213, %s215
      %p222 = scmp.eq.s32.totalorder %s37, 1
      %p223 = por %p221, %p222
      %p224 = scmp.ne.s32.totalorder %s215, %s216
      %p225 = scmp.eq.s32.totalorder %s37, 0
      %p226 = por %p224, %p225
      %p227 = scmp.ne.s32.totalorder %s215, %s216
      %p228 = scmp.eq.s32.totalorder %s38, 1
      %p229 = por %p227, %p228
      %p231 = scmp.ne.s32.totalorder %s216, %s230
      %p232 = scmp.eq.s32.totalorder %s38, 0
      %p233 = por %p231, %p232
      %s235 = sadd.s32 %s234, 1
      %p238 = scmp.eq.s32.totalorder %s32, 1
      %p239 = scmp.ne.s32.totalorder %s234, %s236
      %p240 = scmp.eq.s32.totalorder %s32, 0
      %p241 = por %p239, %p240
      %p242 = scmp.ne.s32.totalorder %s234, %s236
      %p243 = scmp.eq.s32.totalorder %s37, 1
      %p244 = por %p242, %p243
      %p245 = scmp.ne.s32.totalorder %s236, %s237
      %p246 = scmp.eq.s32.totalorder %s37, 0
      %p247 = por %p245, %p246
      %p248 = scmp.ne.s32.totalorder %s236, %s237
      %p249 = scmp.eq.s32.totalorder %s38, 1
      %p250 = por %p248, %p249
      %p252 = scmp.ne.s32.totalorder %s237, %s251
      %p253 = scmp.eq.s32.totalorder %s38, 0
      %p254 = por %p252, %p253
      %s256 = sadd.s32 %s255, 1
      %p259 = scmp.eq.s32.totalorder %s32, 1
      %p260 = scmp.ne.s32.totalorder %s255, %s257
      %p261 = scmp.eq.s32.totalorder %s32, 0
      %p262 = por %p260, %p261
      %p263 = scmp.ne.s32.totalorder %s255, %s257
      %p264 = scmp.eq.s32.totalorder %s37, 1
      %p265 = por %p263, %p264
      %p266 = scmp.ne.s32.totalorder %s257, %s258
      %p267 = scmp.eq.s32.totalorder %s37, 0
      %p268 = por %p266, %p267
      %p269 = scmp.ne.s32.totalorder %s257, %s258
      %p270 = scmp.eq.s32.totalorder %s38, 1
      %p271 = por %p269, %p270
      %p273 = scmp.ne.s32.totalorder %s258, %s272
      %p274 = scmp.eq.s32.totalorder %s38, 0
      %p275 = por %p273, %p274
      %s277 = sadd.s32 %s276, 1
      %p280 = scmp.eq.s32.totalorder %s32, 1
      %p281 = scmp.ne.s32.totalorder %s276, %s278
      %p282 = scmp.eq.s32.totalorder %s32, 0
      %p283 = por %p281, %p282
      %p284 = scmp.ne.s32.totalorder %s276, %s278
      %p285 = scmp.eq.s32.totalorder %s37, 1
      %p286 = por %p284, %p285
      %p287 = scmp.ne.s32.totalorder %s278, %s279
      %p288 = scmp.eq.s32.totalorder %s37, 0
      %p289 = por %p287, %p288
      %p290 = scmp.ne.s32.totalorder %s278, %s279
      %p291 = scmp.eq.s32.totalorder %s38, 1
      %p292 = por %p290, %p291
      %p294 = scmp.ne.s32.totalorder %s279, %s293
      %p295 = scmp.eq.s32.totalorder %s38, 0
      %p296 = por %p294, %p295
      %s298 = sadd.s32 %s297, 1
      %p301 = scmp.eq.s32.totalorder %s32, 1
      %p302 = scmp.ne.s32.totalorder %s297, %s299
      %p303 = scmp.eq.s32.totalorder %s32, 0
      %p304 = por %p302, %p303
      %p305 = scmp.ne.s32.totalorder %s297, %s299
      %p306 = scmp.eq.s32.totalorder %s37, 1
      %p307 = por %p305, %p306
      %p308 = scmp.ne.s32.totalorder %s299, %s300
      %p309 = scmp.eq.s32.totalorder %s37, 0
      %p310 = por %p308, %p309
      %p311 = scmp.ne.s32.totalorder %s299, %s300
      %p312 = scmp.eq.s32.totalorder %s38, 1
      %p313 = por %p311, %p312
      %p315 = scmp.ne.s32.totalorder %s300, %s314
      %p316 = scmp.eq.s32.totalorder %s38, 0
      %p317 = por %p315, %p316
      %s319 = sadd.s32 %s318, 1
      %p322 = scmp.eq.s32.totalorder %s32, 1
      %p323 = scmp.ne.s32.totalorder %s318, %s320
      %p324 = scmp.eq.s32.totalorder %s32, 0
      %p325 = por %p323, %p324
      %p326 = scmp.ne.s32.totalorder %s318, %s320
      %p327 = scmp.eq.s32.totalorder %s37, 1
      %p328 = por %p326, %p327
      %p329 = scmp.ne.s32.totalorder %s320, %s321
      %p330 = scmp.eq.s32.totalorder %s37, 0
      %p331 = por %p329, %p330
      %p332 = scmp.ne.s32.totalorder %s320, %s321
      %p333 = scmp.eq.s32.totalorder %s38, 1
      %p334 = por %p332, %p333
      %p336 = scmp.ne.s32.totalorder %s321, %s335
      %p337 = scmp.eq.s32.totalorder %s38, 0
      %p338 = por %p336, %p337
      %s340 = sadd.s32 %s339, 1
      %p343 = scmp.eq.s32.totalorder %s32, 1
      %p344 = scmp.ne.s32.totalorder %s339, %s341
      %p345 = scmp.eq.s32.totalorder %s32, 0
      %p346 = por %p344, %p345
      %p347 = scmp.ne.s32.totalorder %s339, %s341
      %p348 = scmp.eq.s32.totalorder %s37, 1
      %p349 = por %p347, %p348
      %p350 = scmp.ne.s32.totalorder %s341, %s342
      %p351 = scmp.eq.s32.totalorder %s37, 0
      %p352 = por %p350, %p351
      %p353 = scmp.ne.s32.totalorder %s341, %s342
      %p354 = scmp.eq.s32.totalorder %s38, 1
      %p355 = por %p353, %p354
      %p357 = scmp.ne.s32.totalorder %s342, %s356
      %p358 = scmp.eq.s32.totalorder %s38, 0
      %p359 = por %p357, %p358
      %s361 = sadd.s32 %s360, 1
      %p364 = scmp.eq.s32.totalorder %s32, 1
      %p365 = scmp.ne.s32.totalorder %s360, %s362
      %p366 = scmp.eq.s32.totalorder %s32, 0
      %p367 = por %p365, %p366
      %p368 = scmp.ne.s32.totalorder %s360, %s362
      %p369 = scmp.eq.s32.totalorder %s37, 1
      %p370 = por %p368, %p369
      %p371 = scmp.ne.s32.totalorder %s362, %s363
      %p372 = scmp.eq.s32.totalorder %s37, 0
      %p373 = por %p371, %p372
      %p374 = scmp.ne.s32.totalorder %s362, %s363
      %p375 = scmp.eq.s32.totalorder %s38, 1
      %p376 = por %p374, %p375
      %p378 = scmp.ne.s32.totalorder %s363, %s377
      %p379 = scmp.eq.s32.totalorder %s38, 0
      %p380 = por %p378, %p379
      %s382 = sadd.s32 %s381, 1
      %p385 = scmp.eq.s32.totalorder %s32, 1
      %p386 = scmp.ne.s32.totalorder %s381, %s383
      %p387 = scmp.eq.s32.totalorder %s32, 0
      %p388 = por %p386, %p387
      %p389 = scmp.ne.s32.totalorder %s381, %s383
      %p390 = scmp.eq.s32.totalorder %s37, 1
      %p391 = por %p389, %p390
      %p392 = scmp.ne.s32.totalorder %s383, %s384
      %p393 = scmp.eq.s32.totalorder %s37, 0
      %p394 = por %p392, %p393
      %p395 = scmp.ne.s32.totalorder %s383, %s384
      %p396 = scmp.eq.s32.totalorder %s38, 1
      %p397 = por %p395, %p396
      %p399 = scmp.ne.s32.totalorder %s384, %s398
      %p400 = scmp.eq.s32.totalorder %s38, 0
      %p401 = por %p399, %p400
      %s402 = ssub.s32 %s32, %s39
      %p403 = scmp.eq.s32.totalorder %s402, 0
      %s405 = sadd.s32 %s404, 1
      %s406 = scalar_select %p403, %s404, %s405
      %p409 = pneg %p403
      %p410 = scmp.eq.s32.totalorder %s32, 1
      %p411 = por %p409, %p410
      %p412 = scmp.ne.s32.totalorder %s404, %s407
      %p413 = scmp.eq.s32.totalorder %s32, 0
      %p414 = por %p412, %p413
      %p415 = scmp.ne.s32.totalorder %s404, %s407
      %p416 = scmp.eq.s32.totalorder %s37, 1
      %p417 = por %p415, %p416
      %p418 = scmp.ne.s32.totalorder %s407, %s408
      %p419 = scmp.eq.s32.totalorder %s37, 0
      %p420 = por %p418, %p419
      %p421 = scmp.ne.s32.totalorder %s407, %s408
      %p422 = scmp.eq.s32.totalorder %s38, 1
      %p423 = por %p421, %p422
      %p425 = scmp.ne.s32.totalorder %s408, %s424
      %p426 = scmp.eq.s32.totalorder %s38, 0
      %p427 = por %p425, %p426
      %s428 = ssub.s32 %s32, %s39
      %p429 = scmp.eq.s32.totalorder %s428, 0
      %s431 = sadd.s32 %s430, 1
      %s432 = scalar_select %p429, %s430, %s431
      %p435 = pneg %p429
      %p436 = scmp.eq.s32.totalorder %s32, 1
      %p437 = por %p435, %p436
      %p438 = scmp.ne.s32.totalorder %s430, %s433
      %p439 = scmp.eq.s32.totalorder %s32, 0
      %p440 = por %p438, %p439
      %p441 = scmp.ne.s32.totalorder %s430, %s433
      %p442 = scmp.eq.s32.totalorder %s37, 1
      %p443 = por %p441, %p442
      %p444 = scmp.ne.s32.totalorder %s433, %s434
      %p445 = scmp.eq.s32.totalorder %s37, 0
      %p446 = por %p444, %p445
      %p447 = scmp.ne.s32.totalorder %s433, %s434
      %p448 = scmp.eq.s32.totalorder %s38, 1
      %p449 = por %p447, %p448
      %p451 = scmp.ne.s32.totalorder %s434, %s450
      %p452 = scmp.eq.s32.totalorder %s38, 0
      %p453 = por %p451, %p452
      %s454 = ssub.s32 %s32, %s39
      %p455 = scmp.eq.s32.totalorder %s454, 0
      %s457 = sadd.s32 %s456, 1
      %s458 = scalar_select %p455, %s456, %s457
      %p461 = pneg %p455
      %p462 = scmp.eq.s32.totalorder %s32, 1
      %p463 = por %p461, %p462
      %p464 = scmp.ne.s32.totalorder %s456, %s459
      %p465 = scmp.eq.s32.totalorder %s32, 0
      %p466 = por %p464, %p465
      %p467 = scmp.ne.s32.totalorder %s456, %s459
      %p468 = scmp.eq.s32.totalorder %s37, 1
      %p469 = por %p467, %p468
      %p470 = scmp.ne.s32.totalorder %s459, %s460
      %p471 = scmp.eq.s32.totalorder %s37, 0
      %p472 = por %p470, %p471
      %p473 = scmp.ne.s32.totalorder %s459, %s460
      %p474 = scmp.eq.s32.totalorder %s38, 1
      %p475 = por %p473, %p474
      %p477 = scmp.ne.s32.totalorder %s460, %s476
      %p478 = scmp.eq.s32.totalorder %s38, 0
      %p479 = por %p477, %p478
      %p480 = scmp.le.s32.totalorder 1, %s32
      %p481 = scmp.lt.s32.totalorder %s32, 3
      %p482 = pnand %p480, %p481
      %p483 = pneg %p482
      // Predicated region
      $region9: #{decoder_forward.7} parent=5 // pred_check
        _
      $region10: #{decoder_forward.7} parent=5 // pred_check_branch
        %485 = sbr.rel (%p482) target = $region12
      $region11: #{decoder_forward.7} parent=5 // pred_region
        %s486 = ssub.s32 %s32, 1
        // Predicated region
        $region13: #{decoder_forward.7} parent=11 // pred_check
          %p487 = pneg %p79
        $region14: #{decoder_forward.7} parent=11 // pred_check_branch
          %489 = sbr.rel (%p487) target = $region16
        $region15: #{decoder_forward.7} parent=11 // pred_region
          _
        $region16: #{decoder_forward.7} parent=11 // pred_fallthru
          _
        // Predicated region
        $region17: #{decoder_forward.7} parent=11 // pred_check
          %p490 = pneg %p100
        $region18: #{decoder_forward.7} parent=11 // pred_check_branch
          %492 = sbr.rel (%p490) target = $region20
        $region19: #{decoder_forward.7} parent=11 // pred_region
          _
        $region20: #{decoder_forward.7} parent=11 // pred_fallthru
          _
        // Predicated region
        $region21: #{decoder_forward.7} parent=11 // pred_check
          %p493 = pneg %p121
        $region22: #{decoder_forward.7} parent=11 // pred_check_branch
          %495 = sbr.rel (%p493) target = $region24
        $region23: #{decoder_forward.7} parent=11 // pred_region
          _
        $region24: #{decoder_forward.7} parent=11 // pred_fallthru
          _
        // Predicated region
        $region25: #{decoder_forward.7} parent=11 // pred_check
          %p496 = pneg %p142
        $region26: #{decoder_forward.7} parent=11 // pred_check_branch
          %498 = sbr.rel (%p496) target = $region28
        $region27: #{decoder_forward.7} parent=11 // pred_region
          _
        $region28: #{decoder_forward.7} parent=11 // pred_fallthru
          _
        // Predicated region
        $region29: #{decoder_forward.7} parent=11 // pred_check
          %p499 = pneg %p163
        $region30: #{decoder_forward.7} parent=11 // pred_check_branch
          %501 = sbr.rel (%p499) target = $region32
        $region31: #{decoder_forward.7} parent=11 // pred_region
          _
        $region32: #{decoder_forward.7} parent=11 // pred_fallthru
          _
        // Predicated region
        $region33: #{decoder_forward.7} parent=11 // pred_check
          %p502 = pneg %p184
        $region34: #{decoder_forward.7} parent=11 // pred_check_branch
          %504 = sbr.rel (%p502) target = $region36
        $region35: #{decoder_forward.7} parent=11 // pred_region
          _
        $region36: #{decoder_forward.7} parent=11 // pred_fallthru
          _
        // Predicated region
        $region37: #{decoder_forward.7} parent=11 // pred_check
          %p505 = pneg %p205
        $region38: #{decoder_forward.7} parent=11 // pred_check_branch
          %507 = sbr.rel (%p505) target = $region40
        $region39: #{decoder_forward.7} parent=11 // pred_region
          _
        $region40: #{decoder_forward.7} parent=11 // pred_fallthru
          _
        // Predicated region
        $region41: #{decoder_forward.7} parent=11 // pred_check
          %p508 = pneg %p226
        $region42: #{decoder_forward.7} parent=11 // pred_check_branch
          %510 = sbr.rel (%p508) target = $region44
        $region43: #{decoder_forward.7} parent=11 // pred_region
          _
        $region44: #{decoder_forward.7} parent=11 // pred_fallthru
          _
        // Predicated region
        $region45: #{decoder_forward.7} parent=11 // pred_check
          %p511 = pneg %p247
        $region46: #{decoder_forward.7} parent=11 // pred_check_branch
          %513 = sbr.rel (%p511) target = $region48
        $region47: #{decoder_forward.7} parent=11 // pred_region
          _
        $region48: #{decoder_forward.7} parent=11 // pred_fallthru
          _
        // Predicated region
        $region49: #{decoder_forward.7} parent=11 // pred_check
          %p514 = pneg %p268
        $region50: #{decoder_forward.7} parent=11 // pred_check_branch
          %516 = sbr.rel (%p514) target = $region52
        $region51: #{decoder_forward.7} parent=11 // pred_region
          _
        $region52: #{decoder_forward.7} parent=11 // pred_fallthru
          _
        // Predicated region
        $region53: #{decoder_forward.7} parent=11 // pred_check
          %p517 = pneg %p289
        $region54: #{decoder_forward.7} parent=11 // pred_check_branch
          %519 = sbr.rel (%p517) target = $region56
        $region55: #{decoder_forward.7} parent=11 // pred_region
          _
        $region56: #{decoder_forward.7} parent=11 // pred_fallthru
          _
        // Predicated region
        $region57: #{decoder_forward.7} parent=11 // pred_check
          %p520 = pneg %p310
        $region58: #{decoder_forward.7} parent=11 // pred_check_branch
          %522 = sbr.rel (%p520) target = $region60
        $region59: #{decoder_forward.7} parent=11 // pred_region
          _
        $region60: #{decoder_forward.7} parent=11 // pred_fallthru
          _
        // Predicated region
        $region61: #{decoder_forward.7} parent=11 // pred_check
          %p523 = pneg %p331
        $region62: #{decoder_forward.7} parent=11 // pred_check_branch
          %525 = sbr.rel (%p523) target = $region64
        $region63: #{decoder_forward.7} parent=11 // pred_region
          _
        $region64: #{decoder_forward.7} parent=11 // pred_fallthru
          _
        // Predicated region
        $region65: #{decoder_forward.7} parent=11 // pred_check
          %p526 = pneg %p352
        $region66: #{decoder_forward.7} parent=11 // pred_check_branch
          %528 = sbr.rel (%p526) target = $region68
        $region67: #{decoder_forward.7} parent=11 // pred_region
          _
        $region68: #{decoder_forward.7} parent=11 // pred_fallthru
          _
        // Predicated region
        $region69: #{decoder_forward.7} parent=11 // pred_check
          %p529 = pneg %p373
        $region70: #{decoder_forward.7} parent=11 // pred_check_branch
          %531 = sbr.rel (%p529) target = $region72
        $region71: #{decoder_forward.7} parent=11 // pred_region
          _
        $region72: #{decoder_forward.7} parent=11 // pred_fallthru
          _
        // Predicated region
        $region73: #{decoder_forward.7} parent=11 // pred_check
          %p532 = pneg %p394
        $region74: #{decoder_forward.7} parent=11 // pred_check_branch
          %534 = sbr.rel (%p532) target = $region76
        $region75: #{decoder_forward.7} parent=11 // pred_region
          _
        $region76: #{decoder_forward.7} parent=11 // pred_fallthru
          _
      $region12: #{decoder_forward.7} parent=5 // pred_fallthru
        _
      %p535 = scmp.lt.s32.totalorder %s32, 2
      // Predicated region
      $region77: #{decoder_forward.7} parent=5 // pred_check
        %p536 = pneg %p535
      $region78: #{decoder_forward.7} parent=5 // pred_check_branch
        %538 = sbr.rel (%p536) target = $region80
      $region79: #{decoder_forward.7} parent=5 // pred_region
        // Predicated region
        $region81: #{decoder_forward.7} parent=79 // pred_check
          %p539 = pneg %p52
        $region82: #{decoder_forward.7} parent=79 // pred_check_branch
          %541 = sbr.rel (%p539) target = $region84
        $region83: #{decoder_forward.7} parent=79 // pred_region
          %p542 = scmp.lt.s32.totalorder %s32, 1
          %s543 = scalar_select %p542, %s32, 1
          %s544 = smul.addr %s543, 8
          %s545 = scalar_lea.vmem %s0, %s544
        $region84: #{decoder_forward.7} parent=79 // pred_fallthru
          _
      $region80: #{decoder_forward.7} parent=5 // pred_fallthru
        _
      %p546 = scmp.le.s32.totalorder 1, %s32
      %p547 = scmp.lt.s32.totalorder %s32, 3
      %p548 = pnand %p546, %p547
      %p549 = pneg %p548
      // Predicated region
      $region85: #{decoder_forward.7} parent=5 // pred_check
        _
      $region86: #{decoder_forward.7} parent=5 // pred_check_branch
        %551 = sbr.rel (%p548) target = $region88
      $region87: #{decoder_forward.7} parent=5 // pred_region
        %s552 = ssub.s32 %s32, 1
        %p553 = scmp.lt.s32.totalorder %s37, 1
        %s554 = scalar_select %p553, %s37, 1
        %s555 = smul.addr %s554, 8
        %s556 = scalar_lea.vmem %s0, %s555
        %p557 = pneg %p58
        %p558 = pneg %p55
        %p559 = pneg %p79
        %p560 = pneg %p76
        %p561 = pneg %p100
        %p562 = pneg %p97
        %p563 = pneg %p121
        %p564 = pneg %p118
        %p565 = pneg %p142
        %p566 = pneg %p139
        %p567 = pneg %p163
        %p568 = pneg %p160
        %p569 = pneg %p184
        %p570 = pneg %p181
        %p571 = pneg %p205
        %p572 = pneg %p202
        %p573 = pneg %p226
        %p574 = pneg %p223
        %p575 = pneg %p247
        %p576 = pneg %p244
        %p577 = pneg %p268
        %p578 = pneg %p265
        %p579 = pneg %p289
        %p580 = pneg %p286
        %p581 = pneg %p310
        %p582 = pneg %p307
        %p583 = pneg %p331
        %p584 = pneg %p328
        %p585 = pneg %p352
        %p586 = pneg %p349
        %p587 = pneg %p373
        %p588 = pneg %p370
        %p589 = pneg %p394
        %p590 = pneg %p391
        %p591 = pneg %p420
        %p592 = pneg %p417
        %s593 = sand.u32 %s407, 1
        %s594 = scalar_lea.sflag [#allocation3], %s593
        %s595 = sand.u32 %s407, 1
        %s596 = smul.addr %s595, 8
        %s597 = scalar_lea.vmem [#allocation2], %s596
        %p598 = pneg %p446
        %p599 = pneg %p443
        %s600 = sand.u32 %s433, 1
        %s601 = scalar_lea.sflag [#allocation5], %s600
        %s602 = sand.u32 %s433, 1
        %s603 = smul.addr %s602, 8
        %s604 = scalar_lea.vmem [#allocation4], %s603
        %p605 = pneg %p472
        %p606 = pneg %p469
        %p607 = scmp.lt.s32.totalorder %s37, 1
        %s608 = scalar_select %p607, %s37, 1
        %s609 = smul.addr %s608, 8
        %s610 = scalar_lea.vmem %s19, %s609
        %p611 = scmp.lt.s32.totalorder %s37, 1
        %s612 = scalar_select %p611, %s37, 1
        %s613 = smul.addr %s612, 8
        %s614 = scalar_lea.vmem %s0, %s613
        %p615 = scmp.lt.s32.totalorder %s37, 1
        %s616 = scalar_select %p615, %s37, 1
        %s617 = smul.addr %s616, 8
        %s618 = scalar_lea.vmem %s19, %s617
        %v619 = vld [vmem:[%s614] sm:$0xff]
        %v620 = vld [vmem:[%s1] sm:$0xff]
        %v621 = vld [vmem:[%s1 + $0x8] sm:$0xff]
        %v622 = vld [vmem:[%s1 + $0x10] sm:$0xff]
        %v623 = vld [vmem:[%s1 + $0x18] sm:$0xff]
        %v624 = vld [vmem:[%s2] sm:$0x1]
        %v626 = vlaneseq
        %v627 = vshrl.u32 %v626, 7
        %v628 = vsub.s32 0, %v627
        %v629 = vrot.slane %v624, %v628
        %vm631 = vcmask 261120
        %v633 = vsel %vm631, %v619, 0
        %635 = vmatprep.subr.mxu0 0.0
        %636 = vmatpush1.msra.mxu0 0.0
        %637 = vmatprep.subr.mxu0 0.0
        %638 = vmatpush1.msra.mxu0 0.0
        %639 = vmatprep.subr.mxu0 0.0
        %640 = vmatpush1.msra.mxu0 0.0
        %641 = vmatprep.subr.mxu0 0.0
        %642 = vmatpush1.msra.mxu0 0.0
        %643 = vmatprep.subr.mxu0 0.0
        %644 = vmatpush1.msra.mxu0 0.0
        %645 = vmatprep.subr.mxu0 0.0
        %646 = vmatpush1.msra.mxu0 0.0
        %647 = vmatprep.subr.mxu0 0.0
        %648 = vmatpush1.msra.mxu0 0.0
        %649 = vmatprep.subr.mxu0 0.0
        %650 = vmatpush1.msra.mxu0 0.0
        %651 = vmatprep.subr.mxu0 0.0
        %652 = vmatpush1.msra.mxu0 0.0
        %653 = vmatprep.subr.mxu0 0.0
        %654 = vmatpush1.msra.mxu0 0.0
        %655 = vmatprep.subr.mxu0 0.0
        %656 = vmatpush1.msra.mxu0 0.0
        %657 = vmatprep.subr.mxu0 0.0
        %658 = vmatpush1.msra.mxu0 0.0
        %659 = vmatprep.subr.mxu0 0.0
        %660 = vmatpush1.msra.mxu0 %v623
        %661 = vmatprep.subr.mxu0 0.0
        %662 = vmatpush1.msra.mxu0 %v622
        %663 = vmatprep.subr.mxu0 0.0
        %664 = vmatpush1.msra.mxu0 %v621
        %665 = vmatprep.subr.mxu0 0.0
        %666 = vmatpush1.msra.mxu0 %v620
        %667 = vmatprep.subr.mxu0 0.0
        %668 = vmatpush2.msra.mxu0 0.0
        %669 = vmatprep.subr.mxu0 0.0
        %670 = vmatpush2.msra.mxu0 0.0
        %671 = vmatprep.subr.mxu0 0.0
        %672 = vmatpush2.msra.mxu0 0.0
        %673 = vmatprep.subr.mxu0 0.0
        %674 = vmatpush2.msra.mxu0 0.0
        %675 = vmatprep.subr.mxu0 0.0
        %676 = vmatpush2.msra.mxu0 0.0
        %677 = vmatprep.subr.mxu0 0.0
        %678 = vmatpush2.msra.mxu0 0.0
        %679 = vmatprep.subr.mxu0 0.0
        %680 = vmatpush2.msra.mxu0 0.0
        %681 = vmatprep.subr.mxu0 0.0
        %682 = vmatpush2.msra.mxu0 0.0
        %683 = vmatprep.subr.mxu0 0.0
        %684 = vmatpush2.msra.mxu0 0.0
        %685 = vmatprep.subr.mxu0 0.0
        %686 = vmatpush2.msra.mxu0 0.0
        %687 = vmatprep.subr.mxu0 0.0
        %688 = vmatpush2.msra.mxu0 0.0
        %689 = vmatprep.subr.mxu0 0.0
        %690 = vmatpush2.msra.mxu0 0.0
        %691 = vmatprep.subr.mxu0 0.0
        %692 = vmatpush2.msra.mxu0 0.0
        %693 = vmatprep.subr.mxu0 0.0
        %694 = vmatpush2.msra.mxu0 0.0
        %695 = vmatprep.subr.mxu0 0.0
        %696 = vmatpush2.msra.mxu0 0.0
        %697 = vmatprep.subr.mxu0 0.0
        %698 = vmatpush2.msra.mxu0 0.0
        %699 = vmatprep.mubr.f32.mxu0 0.0
        %700 = vmatmul.mubr.f32.gmra.mxu0 %v633
        %v701 = vpop.f32.mrf.mxu0
        %v702 = vadd.f32 %v629, %v701
        %v703 = vpop.f32.mrf.mxu0
        %704 = vdwg.mxu0
        %vm705 = vcmask 130048
        %706 = vst.msk [vmem:[%s604] sm:$0xff] %vm705, %v702
        %708 = vrot.lane.b32.xlu0 %v702, 112
        %v709 = vpop.permute.xlu0 %708
        %vm711 = vcmask 7168
        %712 = vst.msk [vmem:[%s618] sm:$0xff] %vm711, %v709
        %v713 = vrot.slane %v702, 4
        %vm715 = vcmask 1043456
        %v716 = vsel %vm715, 0.0, %v713
        %vm718 = vcmask 1046528
        %v719 = vrot.slane %v716, 1
        %v720 = vrot.slane %v713, 1
        %v721 = vsel %vm718, %v719, %v720
        %722 = vrot.lane.b32.xlu0 %v721, 16
        %v723 = vpop.permute.xlu0 %722
        %vm725 = vcmask 1045504
        %v726 = vrot.slane %v716, 2
        %v727 = vrot.slane %v713, 2
        %v728 = vsel %vm725, %v726, %v727
        %729 = vrot.lane.b32.xlu0 %v728, 32
        %v730 = vpop.permute.xlu0 %729
        %vm732 = vcmask 1044480
        %v733 = vrot.slane %v716, 3
        %v734 = vrot.slane %v713, 3
        %v735 = vsel %vm732, %v733, %v734
        %736 = vrot.lane.b32.xlu0 %v735, 48
        %v737 = vpop.permute.xlu0 %736
        %v739 = vrot.slane %v716, 4
        %v740 = vrot.slane %v713, 4
        %v741 = vsel %vm715, %v739, %v740
        %742 = vrot.lane.b32.xlu0 %v741, 64
        %v743 = vpop.permute.xlu0 %742
        %v745 = vsel %vm705, %v716, %v723
        %v746 = vsel %vm631, %v745, %v730
        %vm747 = vcmask 392192
        %v748 = vsel %vm747, %v746, %v737
        %vm749 = vcmask 523264
        %v750 = vsel %vm749, %v748, %v743
        %v751 = vld [vmem:[%s3] sm:$0xff]
        %v752 = vld [vmem:[%s3 + $0x8] sm:$0xff]
        %v753 = vld [vmem:[%s3 + $0x10] sm:$0xff]
        %v754 = vld [vmem:[%s3 + $0x18] sm:$0xff]
        %v755 = vld [vmem:[%s3 + $0x20] sm:$0xff]
        %v756 = vld [vmem:[%s3 + $0x28] sm:$0xff]
        %v757 = vld [vmem:[%s3 + $0x30] sm:$0xff]
        %v758 = vld [vmem:[%s3 + $0x38] sm:$0xff]
        %v759 = vld [vmem:[%s3 + $0x40] sm:$0xff]
        %v760 = vld [vmem:[%s3 + $0x48] sm:$0xff]
        %vm761 = vcmask 654336
        %v763 = vsel %vm761, %v750, 0
        %765 = vmatprep.subr.mxu0 0.0
        %766 = vmatpush1.msra.mxu0 0.0
        %767 = vmatprep.subr.mxu0 0.0
        %768 = vmatpush1.msra.mxu0 0.0
        %769 = vmatprep.subr.mxu0 0.0
        %770 = vmatpush1.msra.mxu0 0.0
        %771 = vmatprep.subr.mxu0 0.0
        %772 = vmatpush1.msra.mxu0 0.0
        %773 = vmatprep.subr.mxu0 0.0
        %774 = vmatpush1.msra.mxu0 0.0
        %775 = vmatprep.subr.mxu0 0.0
        %776 = vmatpush1.msra.mxu0 0.0
        %777 = vmatprep.subr.mxu0 0.0
        %778 = vmatpush1.msra.mxu0 %v760
        %779 = vmatprep.subr.mxu0 0.0
        %780 = vmatpush1.msra.mxu0 %v759
        %781 = vmatprep.subr.mxu0 0.0
        %782 = vmatpush1.msra.mxu0 %v758
        %783 = vmatprep.subr.mxu0 0.0
        %784 = vmatpush1.msra.mxu0 %v757
        %785 = vmatprep.subr.mxu0 0.0
        %786 = vmatpush1.msra.mxu0 %v756
        %787 = vmatprep.subr.mxu0 0.0
        %788 = vmatpush1.msra.mxu0 %v755
        %789 = vmatprep.subr.mxu0 0.0
        %790 = vmatpush1.msra.mxu0 %v754
        %791 = vmatprep.subr.mxu0 0.0
        %792 = vmatpush1.msra.mxu0 %v753
        %793 = vmatprep.subr.mxu0 0.0
        %794 = vmatpush1.msra.mxu0 %v752
        %795 = vmatprep.subr.mxu0 0.0
        %796 = vmatpush1.msra.mxu0 %v751
        %797 = vmatprep.subr.mxu0 0.0
        %798 = vmatpush2.msra.mxu0 0.0
        %799 = vmatprep.subr.mxu0 0.0
        %800 = vmatpush2.msra.mxu0 0.0
        %801 = vmatprep.subr.mxu0 0.0
        %802 = vmatpush2.msra.mxu0 0.0
        %803 = vmatprep.subr.mxu0 0.0
        %804 = vmatpush2.msra.mxu0 0.0
        %805 = vmatprep.subr.mxu0 0.0
        %806 = vmatpush2.msra.mxu0 0.0
        %807 = vmatprep.subr.mxu0 0.0
        %808 = vmatpush2.msra.mxu0 0.0
        %809 = vmatprep.subr.mxu0 0.0
        %810 = vmatpush2.msra.mxu0 0.0
        %811 = vmatprep.subr.mxu0 0.0
        %812 = vmatpush2.msra.mxu0 0.0
        %813 = vmatprep.subr.mxu0 0.0
        %814 = vmatpush2.msra.mxu0 0.0
        %815 = vmatprep.subr.mxu0 0.0
        %816 = vmatpush2.msra.mxu0 0.0
        %817 = vmatprep.subr.mxu0 0.0
        %818 = vmatpush2.msra.mxu0 0.0
        %819 = vmatprep.subr.mxu0 0.0
        %820 = vmatpush2.msra.mxu0 0.0
        %821 = vmatprep.subr.mxu0 0.0
        %822 = vmatpush2.msra.mxu0 0.0
        %823 = vmatprep.subr.mxu0 0.0
        %824 = vmatpush2.msra.mxu0 0.0
        %825 = vmatprep.subr.mxu0 0.0
        %826 = vmatpush2.msra.mxu0 0.0
        %827 = vmatprep.subr.mxu0 0.0
        %828 = vmatpush2.msra.mxu0 0.0
        %829 = vmatprep.mubr.f32.mxu0 0.0
        %830 = vmatmul.mubr.f32.gmra.mxu0 %v763
        %v831 = vpop.f32.mrf.mxu0
        %v832 = vadd.f32 0.0, %v831
        %v833 = vpop.f32.mrf.mxu0
        %834 = vdwg.mxu0
        %v835 = vld [vmem:[%s4] sm:$0x1]
        %v837 = vlaneseq
        %v838 = vshrl.u32 %v837, 7
        %v839 = vsub.s32 0, %v838
        %v840 = vrot.slane %v835, %v839
        %v842 = vmul.f32 %v832, %v840
        %v843 = vld [vmem:[%s5] sm:$0x1]
        %v845 = vlaneseq
        %v846 = vshrl.u32 %v845, 7
        %v847 = vsub.s32 0, %v846
        %v848 = vrot.slane %v843, %v847
        %v850 = vadd.f32 %v842, %v848
        %v851 = vtanh.pop %v850
        %v853 = vrot.slane %v851, 4
        %v855 = vsel %vm715, 0.0, %v853
        %v857 = vrot.slane %v855, 1
        %v858 = vrot.slane %v853, 1
        %v859 = vsel %vm718, %v857, %v858
        %860 = vrot.lane.b32.xlu0 %v859, 32
        %v861 = vpop.permute.xlu0 %860
        %v863 = vrot.slane %v855, 2
        %v864 = vrot.slane %v853, 2
        %v865 = vsel %vm725, %v863, %v864
        %866 = vrot.lane.b32.xlu0 %v865, 64
        %v867 = vpop.permute.xlu0 %866
        %v869 = vrot.slane %v855, 3
        %v870 = vrot.slane %v853, 3
        %v871 = vsel %vm732, %v869, %v870
        %872 = vrot.lane.b32.xlu0 %v871, 96
        %v873 = vpop.permute.xlu0 %872
        %v875 = vrot.slane %v855, 4
        %v876 = vrot.slane %v853, 4
        %v877 = vsel %vm715, %v875, %v876
        %v878 = vsel %vm631, %v855, %v861
        %v879 = vsel %vm749, %v878, %v867
        %vm880 = vcmask 785408
        %v881 = vsel %vm880, %v879, %v873
        %v882 = vld [vmem:[%s6] sm:$0xff]
        %v883 = vld [vmem:[%s6 + $0x8] sm:$0xff]
        %v884 = vld [vmem:[%s6 + $0x10] sm:$0xff]
        %v885 = vld [vmem:[%s6 + $0x18] sm:$0xff]
        %v886 = vld [vmem:[%s6 + $0x20] sm:$0xff]
        %v887 = vld [vmem:[%s6 + $0x28] sm:$0xff]
        %v888 = vld [vmem:[%s6 + $0x30] sm:$0xff]
        %v889 = vld [vmem:[%s6 + $0x38] sm:$0xff]
        %v890 = vld [vmem:[%s6 + $0x40] sm:$0xff]
        %v891 = vld [vmem:[%s6 + $0x48] sm:$0xff]
        %v892 = vld [vmem:[%s6 + $0x50] sm:$0xff]
        %v893 = vld [vmem:[%s6 + $0x58] sm:$0xff]
        %v894 = vld [vmem:[%s6 + $0x60] sm:$0xff]
        %v895 = vld [vmem:[%s6 + $0x68] sm:$0xff]
        %v896 = vld [vmem:[%s6 + $0x70] sm:$0xff]
        %v897 = vld [vmem:[%s6 + $0x78] sm:$0xff]
        %v898 = vld [vmem:[%s6 + $0x80] sm:$0xff]
        %v899 = vld [vmem:[%s6 + $0x88] sm:$0xff]
        %v900 = vld [vmem:[%s6 + $0x90] sm:$0xff]
        %v901 = vld [vmem:[%s6 + $0x98] sm:$0xff]
        %v902 = vsel %vm631, %v877, 0
        %904 = vmatprep.subr.mxu0 0.0
        %905 = vmatpush1.msra.mxu0 %v897
        %906 = vmatprep.subr.mxu0 0.0
        %907 = vmatpush1.msra.mxu0 %v896
        %908 = vmatprep.subr.mxu0 0.0
        %909 = vmatpush1.msra.mxu0 %v895
        %910 = vmatprep.subr.mxu0 0.0
        %911 = vmatpush1.msra.mxu0 %v894
        %912 = vmatprep.subr.mxu0 0.0
        %913 = vmatpush1.msra.mxu0 %v893
        %914 = vmatprep.subr.mxu0 0.0
        %915 = vmatpush1.msra.mxu0 %v892
        %916 = vmatprep.subr.mxu0 0.0
        %917 = vmatpush1.msra.mxu0 %v891
        %918 = vmatprep.subr.mxu0 0.0
        %919 = vmatpush1.msra.mxu0 %v890
        %920 = vmatprep.subr.mxu0 0.0
        %921 = vmatpush1.msra.mxu0 %v889
        %922 = vmatprep.subr.mxu0 0.0
        %923 = vmatpush1.msra.mxu0 %v888
        %924 = vmatprep.subr.mxu0 0.0
        %925 = vmatpush1.msra.mxu0 %v887
        %926 = vmatprep.subr.mxu0 0.0
        %927 = vmatpush1.msra.mxu0 %v886
        %928 = vmatprep.subr.mxu0 0.0
        %929 = vmatpush1.msra.mxu0 %v885
        %930 = vmatprep.subr.mxu0 0.0
        %931 = vmatpush1.msra.mxu0 %v884
        %932 = vmatprep.subr.mxu0 0.0
        %933 = vmatpush1.msra.mxu0 %v883
        %934 = vmatprep.subr.mxu0 0.0
        %935 = vmatpush1.msra.mxu0 %v882
        %936 = vmatprep.subr.mxu0 0.0
        %937 = vmatpush2.msra.mxu0 0.0
        %938 = vmatprep.subr.mxu0 0.0
        %939 = vmatpush2.msra.mxu0 0.0
        %940 = vmatprep.subr.mxu0 0.0
        %941 = vmatpush2.msra.mxu0 0.0
        %942 = vmatprep.subr.mxu0 0.0
        %943 = vmatpush2.msra.mxu0 0.0
        %944 = vmatprep.subr.mxu0 0.0
        %945 = vmatpush2.msra.mxu0 0.0
        %946 = vmatprep.subr.mxu0 0.0
        %947 = vmatpush2.msra.mxu0 0.0
        %948 = vmatprep.subr.mxu0 0.0
        %949 = vmatpush2.msra.mxu0 0.0
        %950 = vmatprep.subr.mxu0 0.0
        %951 = vmatpush2.msra.mxu0 0.0
        %952 = vmatprep.subr.mxu0 0.0
        %953 = vmatpush2.msra.mxu0 0.0
        %954 = vmatprep.subr.mxu0 0.0
        %955 = vmatpush2.msra.mxu0 0.0
        %956 = vmatprep.subr.mxu0 0.0
        %957 = vmatpush2.msra.mxu0 0.0
        %958 = vmatprep.subr.mxu0 0.0
        %959 = vmatpush2.msra.mxu0 0.0
        %960 = vmatprep.subr.mxu0 0.0
        %961 = vmatpush2.msra.mxu0 %v901
        %962 = vmatprep.subr.mxu0 0.0
        %963 = vmatpush2.msra.mxu0 %v900
        %964 = vmatprep.subr.mxu0 0.0
        %965 = vmatpush2.msra.mxu0 %v899
        %966 = vmatprep.subr.mxu0 0.0
        %967 = vmatpush2.msra.mxu0 %v898
        %968 = vmatprep.mubr.f32.mxu0 %v902
        %969 = vmatmul.mubr.f32.gmra.mxu0 %v881
        %v970 = vpop.f32.mrf.mxu0
        %v971 = vadd.f32 0.0, %v970
        %v972 = vpop.f32.mrf.mxu0
        %973 = vdwg.mxu0
        %v974 = vld [vmem:[%s7] sm:$0x1]
        %v976 = vlaneseq
        %v977 = vshrl.u32 %v976, 7
        %v978 = vsub.s32 0, %v977
        %v979 = vrot.slane %v974, %v978
        %v981 = vmul.f32 %v971, %v979
        %v982 = vld [vmem:[%s8] sm:$0x1]
        %v984 = vlaneseq
        %v985 = vshrl.u32 %v984, 7
        %v986 = vsub.s32 0, %v985
        %v987 = vrot.slane %v982, %v986
        %v989 = vadd.f32 %v981, %v987
        %v990 = vtanh.pop %v989
        %v992 = vrot.slane %v990, 4
        %v994 = vsel %vm715, 0.0, %v992
        %v996 = vrot.slane %v994, 1
        %v997 = vrot.slane %v992, 1
        %v998 = vsel %vm718, %v996, %v997
        %999 = vrot.lane.b32.xlu0 %v998, 32
        %v1000 = vpop.permute.xlu0 %999
        %v1002 = vrot.slane %v994, 2
        %v1003 = vrot.slane %v992, 2
        %v1004 = vsel %vm725, %v1002, %v1003
        %1005 = vrot.lane.b32.xlu0 %v1004, 64
        %v1006 = vpop.permute.xlu0 %1005
        %v1008 = vrot.slane %v994, 3
        %v1009 = vrot.slane %v992, 3
        %v1010 = vsel %vm732, %v1008, %v1009
        %1011 = vrot.lane.b32.xlu0 %v1010, 96
        %v1012 = vpop.permute.xlu0 %1011
        %v1014 = vrot.slane %v994, 4
        %v1015 = vrot.slane %v992, 4
        %v1016 = vsel %vm715, %v1014, %v1015
        %v1017 = vsel %vm631, %v994, %v1000
        %v1018 = vsel %vm749, %v1017, %v1006
        %v1019 = vsel %vm880, %v1018, %v1012
        %v1020 = vld [vmem:[%s9] sm:$0xff]
        %v1021 = vld [vmem:[%s9 + $0x8] sm:$0xff]
        %v1022 = vld [vmem:[%s9 + $0x10] sm:$0xff]
        %v1023 = vld [vmem:[%s9 + $0x18] sm:$0xff]
        %v1024 = vld [vmem:[%s9 + $0x20] sm:$0xff]
        %v1025 = vld [vmem:[%s9 + $0x28] sm:$0xff]
        %v1026 = vld [vmem:[%s9 + $0x30] sm:$0xff]
        %v1027 = vld [vmem:[%s9 + $0x38] sm:$0xff]
        %v1028 = vld [vmem:[%s9 + $0x40] sm:$0xff]
        %v1029 = vld [vmem:[%s9 + $0x48] sm:$0xff]
        %v1030 = vld [vmem:[%s9 + $0x50] sm:$0xff]
        %v1031 = vld [vmem:[%s9 + $0x58] sm:$0xff]
        %v1032 = vld [vmem:[%s9 + $0x60] sm:$0xff]
        %v1033 = vld [vmem:[%s9 + $0x68] sm:$0xff]
        %v1034 = vld [vmem:[%s9 + $0x70] sm:$0xff]
        %v1035 = vld [vmem:[%s9 + $0x78] sm:$0xff]
        %v1036 = vld [vmem:[%s9 + $0x80] sm:$0xff]
        %v1037 = vld [vmem:[%s9 + $0x88] sm:$0xff]
        %v1038 = vld [vmem:[%s9 + $0x90] sm:$0xff]
        %v1039 = vld [vmem:[%s9 + $0x98] sm:$0xff]
        %v1040 = vsel %vm631, %v1016, 0
        %1042 = vmatprep.subr.mxu0 0.0
        %1043 = vmatpush1.msra.mxu0 %v1035
        %1044 = vmatprep.subr.mxu0 0.0
        %1045 = vmatpush1.msra.mxu0 %v1034
        %1046 = vmatprep.subr.mxu0 0.0
        %1047 = vmatpush1.msra.mxu0 %v1033
        %1048 = vmatprep.subr.mxu0 0.0
        %1049 = vmatpush1.msra.mxu0 %v1032
        %1050 = vmatprep.subr.mxu0 0.0
        %1051 = vmatpush1.msra.mxu0 %v1031
        %1052 = vmatprep.subr.mxu0 0.0
        %1053 = vmatpush1.msra.mxu0 %v1030
        %1054 = vmatprep.subr.mxu0 0.0
        %1055 = vmatpush1.msra.mxu0 %v1029
        %1056 = vmatprep.subr.mxu0 0.0
        %1057 = vmatpush1.msra.mxu0 %v1028
        %1058 = vmatprep.subr.mxu0 0.0
        %1059 = vmatpush1.msra.mxu0 %v1027
        %1060 = vmatprep.subr.mxu0 0.0
        %1061 = vmatpush1.msra.mxu0 %v1026
        %1062 = vmatprep.subr.mxu0 0.0
        %1063 = vmatpush1.msra.mxu0 %v1025
        %1064 = vmatprep.subr.mxu0 0.0
        %1065 = vmatpush1.msra.mxu0 %v1024
        %1066 = vmatprep.subr.mxu0 0.0
        %1067 = vmatpush1.msra.mxu0 %v1023
        %1068 = vmatprep.subr.mxu0 0.0
        %1069 = vmatpush1.msra.mxu0 %v1022
        %1070 = vmatprep.subr.mxu0 0.0
        %1071 = vmatpush1.msra.mxu0 %v1021
        %1072 = vmatprep.subr.mxu0 0.0
        %1073 = vmatpush1.msra.mxu0 %v1020
        %1074 = vmatprep.subr.mxu0 0.0
        %1075 = vmatpush2.msra.mxu0 0.0
        %1076 = vmatprep.subr.mxu0 0.0
        %1077 = vmatpush2.msra.mxu0 0.0
        %1078 = vmatprep.subr.mxu0 0.0
        %1079 = vmatpush2.msra.mxu0 0.0
        %1080 = vmatprep.subr.mxu0 0.0
        %1081 = vmatpush2.msra.mxu0 0.0
        %1082 = vmatprep.subr.mxu0 0.0
        %1083 = vmatpush2.msra.mxu0 0.0
        %1084 = vmatprep.subr.mxu0 0.0
        %1085 = vmatpush2.msra.mxu0 0.0
        %1086 = vmatprep.subr.mxu0 0.0
        %1087 = vmatpush2.msra.mxu0 0.0
        %1088 = vmatprep.subr.mxu0 0.0
        %1089 = vmatpush2.msra.mxu0 0.0
        %1090 = vmatprep.subr.mxu0 0.0
        %1091 = vmatpush2.msra.mxu0 0.0
        %1092 = vmatprep.subr.mxu0 0.0
        %1093 = vmatpush2.msra.mxu0 0.0
        %1094 = vmatprep.subr.mxu0 0.0
        %1095 = vmatpush2.msra.mxu0 0.0
        %1096 = vmatprep.subr.mxu0 0.0
        %1097 = vmatpush2.msra.mxu0 0.0
        %1098 = vmatprep.subr.mxu0 0.0
        %1099 = vmatpush2.msra.mxu0 %v1039
        %1100 = vmatprep.subr.mxu0 0.0
        %1101 = vmatpush2.msra.mxu0 %v1038
        %1102 = vmatprep.subr.mxu0 0.0
        %1103 = vmatpush2.msra.mxu0 %v1037
        %1104 = vmatprep.subr.mxu0 0.0
        %1105 = vmatpush2.msra.mxu0 %v1036
        %1106 = vmatprep.mubr.f32.mxu0 %v1040
        %1107 = vmatmul.mubr.f32.gmra.mxu0 %v1019
        %v1108 = vpop.f32.mrf.mxu0
        %v1109 = vadd.f32 0.0, %v1108
        %v1110 = vpop.f32.mrf.mxu0
        %1111 = vdwg.mxu0
        %v1112 = vld [vmem:[%s10] sm:$0x1]
        %v1114 = vlaneseq
        %v1115 = vshrl.u32 %v1114, 7
        %v1116 = vsub.s32 0, %v1115
        %v1117 = vrot.slane %v1112, %v1116
        %v1119 = vmul.f32 %v1109, %v1117
        %v1120 = vld [vmem:[%s11] sm:$0x1]
        %v1122 = vlaneseq
        %v1123 = vshrl.u32 %v1122, 7
        %v1124 = vsub.s32 0, %v1123
        %v1125 = vrot.slane %v1120, %v1124
        %v1127 = vadd.f32 %v1119, %v1125
        %v1128 = vtanh.pop %v1127
        %v1130 = vrot.slane %v1128, 4
        %v1132 = vsel %vm715, 0.0, %v1130
        %v1134 = vrot.slane %v1132, 1
        %v1135 = vrot.slane %v1130, 1
        %v1136 = vsel %vm718, %v1134, %v1135
        %1137 = vrot.lane.b32.xlu0 %v1136, 32
        %v1138 = vpop.permute.xlu0 %1137
        %v1140 = vrot.slane %v1132, 2
        %v1141 = vrot.slane %v1130, 2
        %v1142 = vsel %vm725, %v1140, %v1141
        %1143 = vrot.lane.b32.xlu0 %v1142, 64
        %v1144 = vpop.permute.xlu0 %1143
        %v1146 = vrot.slane %v1132, 3
        %v1147 = vrot.slane %v1130, 3
        %v1148 = vsel %vm732, %v1146, %v1147
        %1149 = vrot.lane.b32.xlu0 %v1148, 96
        %v1150 = vpop.permute.xlu0 %1149
        %v1152 = vrot.slane %v1132, 4
        %v1153 = vrot.slane %v1130, 4
        %v1154 = vsel %vm715, %v1152, %v1153
        %v1155 = vsel %vm631, %v1132, %v1138
        %v1156 = vsel %vm749, %v1155, %v1144
        %v1157 = vsel %vm880, %v1156, %v1150
        %v1158 = vld [vmem:[%s12] sm:$0xff]
        %v1159 = vld [vmem:[%s12 + $0x8] sm:$0xff]
        %v1160 = vld [vmem:[%s12 + $0x10] sm:$0xff]
        %v1161 = vld [vmem:[%s12 + $0x18] sm:$0xff]
        %v1162 = vld [vmem:[%s12 + $0x20] sm:$0xff]
        %v1163 = vld [vmem:[%s12 + $0x28] sm:$0xff]
        %v1164 = vld [vmem:[%s12 + $0x30] sm:$0xff]
        %v1165 = vld [vmem:[%s12 + $0x38] sm:$0xff]
        %v1166 = vld [vmem:[%s12 + $0x40] sm:$0xff]
        %v1167 = vld [vmem:[%s12 + $0x48] sm:$0xff]
        %v1168 = vld [vmem:[%s12 + $0x50] sm:$0xff]
        %v1169 = vld [vmem:[%s12 + $0x58] sm:$0xff]
        %v1170 = vld [vmem:[%s12 + $0x60] sm:$0xff]
        %v1171 = vld [vmem:[%s12 + $0x68] sm:$0xff]
        %v1172 = vld [vmem:[%s12 + $0x70] sm:$0xff]
        %v1173 = vld [vmem:[%s12 + $0x78] sm:$0xff]
        %v1174 = vld [vmem:[%s12 + $0x80] sm:$0xff]
        %v1175 = vld [vmem:[%s12 + $0x88] sm:$0xff]
        %v1176 = vld [vmem:[%s12 + $0x90] sm:$0xff]
        %v1177 = vld [vmem:[%s12 + $0x98] sm:$0xff]
        %v1178 = vsel %vm631, %v1154, 0
        %1180 = vmatprep.subr.mxu0 0.0
        %1181 = vmatpush1.msra.mxu0 %v1173
        %1182 = vmatprep.subr.mxu0 0.0
        %1183 = vmatpush1.msra.mxu0 %v1172
        %1184 = vmatprep.subr.mxu0 0.0
        %1185 = vmatpush1.msra.mxu0 %v1171
        %1186 = vmatprep.subr.mxu0 0.0
        %1187 = vmatpush1.msra.mxu0 %v1170
        %1188 = vmatprep.subr.mxu0 0.0
        %1189 = vmatpush1.msra.mxu0 %v1169
        %1190 = vmatprep.subr.mxu0 0.0
        %1191 = vmatpush1.msra.mxu0 %v1168
        %1192 = vmatprep.subr.mxu0 0.0
        %1193 = vmatpush1.msra.mxu0 %v1167
        %1194 = vmatprep.subr.mxu0 0.0
        %1195 = vmatpush1.msra.mxu0 %v1166
        %1196 = vmatprep.subr.mxu0 0.0
        %1197 = vmatpush1.msra.mxu0 %v1165
        %1198 = vmatprep.subr.mxu0 0.0
        %1199 = vmatpush1.msra.mxu0 %v1164
        %1200 = vmatprep.subr.mxu0 0.0
        %1201 = vmatpush1.msra.mxu0 %v1163
        %1202 = vmatprep.subr.mxu0 0.0
        %1203 = vmatpush1.msra.mxu0 %v1162
        %1204 = vmatprep.subr.mxu0 0.0
        %1205 = vmatpush1.msra.mxu0 %v1161
        %1206 = vmatprep.subr.mxu0 0.0
        %1207 = vmatpush1.msra.mxu0 %v1160
        %1208 = vmatprep.subr.mxu0 0.0
        %1209 = vmatpush1.msra.mxu0 %v1159
        %1210 = vmatprep.subr.mxu0 0.0
        %1211 = vmatpush1.msra.mxu0 %v1158
        %1212 = vmatprep.subr.mxu0 0.0
        %1213 = vmatpush2.msra.mxu0 0.0
        %1214 = vmatprep.subr.mxu0 0.0
        %1215 = vmatpush2.msra.mxu0 0.0
        %1216 = vmatprep.subr.mxu0 0.0
        %1217 = vmatpush2.msra.mxu0 0.0
        %1218 = vmatprep.subr.mxu0 0.0
        %1219 = vmatpush2.msra.mxu0 0.0
        %1220 = vmatprep.subr.mxu0 0.0
        %1221 = vmatpush2.msra.mxu0 0.0
        %1222 = vmatprep.subr.mxu0 0.0
        %1223 = vmatpush2.msra.mxu0 0.0
        %1224 = vmatprep.subr.mxu0 0.0
        %1225 = vmatpush2.msra.mxu0 0.0
        %1226 = vmatprep.subr.mxu0 0.0
        %1227 = vmatpush2.msra.mxu0 0.0
        %1228 = vmatprep.subr.mxu0 0.0
        %1229 = vmatpush2.msra.mxu0 0.0
        %1230 = vmatprep.subr.mxu0 0.0
        %1231 = vmatpush2.msra.mxu0 0.0
        %1232 = vmatprep.subr.mxu0 0.0
        %1233 = vmatpush2.msra.mxu0 0.0
        %1234 = vmatprep.subr.mxu0 0.0
        %1235 = vmatpush2.msra.mxu0 0.0
        %1236 = vmatprep.subr.mxu0 0.0
        %1237 = vmatpush2.msra.mxu0 %v1177
        %1238 = vmatprep.subr.mxu0 0.0
        %1239 = vmatpush2.msra.mxu0 %v1176
        %1240 = vmatprep.subr.mxu0 0.0
        %1241 = vmatpush2.msra.mxu0 %v1175
        %1242 = vmatprep.subr.mxu0 0.0
        %1243 = vmatpush2.msra.mxu0 %v1174
        %1244 = vmatprep.mubr.f32.mxu0 %v1178
        %1245 = vmatmul.mubr.f32.gmra.mxu0 %v1157
        %v1246 = vpop.f32.mrf.mxu0
        %v1247 = vadd.f32 0.0, %v1246
        %v1248 = vpop.f32.mrf.mxu0
        %1249 = vdwg.mxu0
        %v1250 = vld [vmem:[%s13] sm:$0x1]
        %v1252 = vlaneseq
        %v1253 = vshrl.u32 %v1252, 7
        %v1254 = vsub.s32 0, %v1253
        %v1255 = vrot.slane %v1250, %v1254
        %v1257 = vmul.f32 %v1247, %v1255
        %v1258 = vld [vmem:[%s14] sm:$0x1]
        %v1260 = vlaneseq
        %v1261 = vshrl.u32 %v1260, 7
        %v1262 = vsub.s32 0, %v1261
        %v1263 = vrot.slane %v1258, %v1262
        %v1265 = vadd.f32 %v1257, %v1263
        %v1266 = vtanh.pop %v1265
        %v1268 = vrot.slane %v1266, 4
        %v1270 = vsel %vm715, 0.0, %v1268
        %v1272 = vrot.slane %v1270, 1
        %v1273 = vrot.slane %v1268, 1
        %v1274 = vsel %vm718, %v1272, %v1273
        %1275 = vrot.lane.b32.xlu0 %v1274, 32
        %v1276 = vpop.permute.xlu0 %1275
        %v1278 = vrot.slane %v1270, 2
        %v1279 = vrot.slane %v1268, 2
        %v1280 = vsel %vm725, %v1278, %v1279
        %1281 = vrot.lane.b32.xlu0 %v1280, 64
        %v1282 = vpop.permute.xlu0 %1281
        %v1284 = vrot.slane %v1270, 3
        %v1285 = vrot.slane %v1268, 3
        %v1286 = vsel %vm732, %v1284, %v1285
        %1287 = vrot.lane.b32.xlu0 %v1286, 96
        %v1288 = vpop.permute.xlu0 %1287
        %v1290 = vrot.slane %v1270, 4
        %v1291 = vrot.slane %v1268, 4
        %v1292 = vsel %vm715, %v1290, %v1291
        %v1293 = vsel %vm631, %v1270, %v1276
        %v1294 = vsel %vm749, %v1293, %v1282
        %v1295 = vsel %vm880, %v1294, %v1288
        %v1296 = vld [vmem:[%s15] sm:$0xff]
        %v1297 = vld [vmem:[%s15 + $0x8] sm:$0xff]
        %v1298 = vld [vmem:[%s15 + $0x10] sm:$0xff]
        %v1299 = vld [vmem:[%s15 + $0x18] sm:$0xff]
        %v1300 = vld [vmem:[%s15 + $0x20] sm:$0xff]
        %v1301 = vld [vmem:[%s15 + $0x28] sm:$0xff]
        %v1302 = vld [vmem:[%s15 + $0x30] sm:$0xff]
        %v1303 = vld [vmem:[%s15 + $0x38] sm:$0xff]
        %v1304 = vld [vmem:[%s15 + $0x40] sm:$0xff]
        %v1305 = vld [vmem:[%s15 + $0x48] sm:$0xff]
        %v1306 = vld [vmem:[%s15 + $0x50] sm:$0xff]
        %v1307 = vld [vmem:[%s15 + $0x58] sm:$0xff]
        %v1308 = vld [vmem:[%s15 + $0x60] sm:$0xff]
        %v1309 = vld [vmem:[%s15 + $0x68] sm:$0xff]
        %v1310 = vld [vmem:[%s15 + $0x70] sm:$0xff]
        %v1311 = vld [vmem:[%s15 + $0x78] sm:$0xff]
        %v1312 = vld [vmem:[%s15 + $0x80] sm:$0xff]
        %v1313 = vld [vmem:[%s15 + $0x88] sm:$0xff]
        %v1314 = vld [vmem:[%s15 + $0x90] sm:$0xff]
        %v1315 = vld [vmem:[%s15 + $0x98] sm:$0xff]
        %v1316 = vld [vmem:[%s16] sm:$0x1]
        %v1318 = vlaneseq
        %v1319 = vshrl.u32 %v1318, 7
        %v1320 = vsub.s32 0, %v1319
        %v1321 = vrot.slane %v1316, %v1320
        %v1323 = vsel %vm631, %v1292, 0
        %1325 = vmatprep.subr.mxu0 0.0
        %1326 = vmatpush1.msra.mxu0 %v1311
        %1327 = vmatprep.subr.mxu0 0.0
        %1328 = vmatpush1.msra.mxu0 %v1310
        %1329 = vmatprep.subr.mxu0 0.0
        %1330 = vmatpush1.msra.mxu0 %v1309
        %1331 = vmatprep.subr.mxu0 0.0
        %1332 = vmatpush1.msra.mxu0 %v1308
        %1333 = vmatprep.subr.mxu0 0.0
        %1334 = vmatpush1.msra.mxu0 %v1307
        %1335 = vmatprep.subr.mxu0 0.0
        %1336 = vmatpush1.msra.mxu0 %v1306
        %1337 = vmatprep.subr.mxu0 0.0
        %1338 = vmatpush1.msra.mxu0 %v1305
        %1339 = vmatprep.subr.mxu0 0.0
        %1340 = vmatpush1.msra.mxu0 %v1304
        %1341 = vmatprep.subr.mxu0 0.0
        %1342 = vmatpush1.msra.mxu0 %v1303
        %1343 = vmatprep.subr.mxu0 0.0
        %1344 = vmatpush1.msra.mxu0 %v1302
        %1345 = vmatprep.subr.mxu0 0.0
        %1346 = vmatpush1.msra.mxu0 %v1301
        %1347 = vmatprep.subr.mxu0 0.0
        %1348 = vmatpush1.msra.mxu0 %v1300
        %1349 = vmatprep.subr.mxu0 0.0
        %1350 = vmatpush1.msra.mxu0 %v1299
        %1351 = vmatprep.subr.mxu0 0.0
        %1352 = vmatpush1.msra.mxu0 %v1298
        %1353 = vmatprep.subr.mxu0 0.0
        %1354 = vmatpush1.msra.mxu0 %v1297
        %1355 = vmatprep.subr.mxu0 0.0
        %1356 = vmatpush1.msra.mxu0 %v1296
        %1357 = vmatprep.subr.mxu0 0.0
        %1358 = vmatpush2.msra.mxu0 0.0
        %1359 = vmatprep.subr.mxu0 0.0
        %1360 = vmatpush2.msra.mxu0 0.0
        %1361 = vmatprep.subr.mxu0 0.0
        %1362 = vmatpush2.msra.mxu0 0.0
        %1363 = vmatprep.subr.mxu0 0.0
        %1364 = vmatpush2.msra.mxu0 0.0
        %1365 = vmatprep.subr.mxu0 0.0
        %1366 = vmatpush2.msra.mxu0 0.0
        %1367 = vmatprep.subr.mxu0 0.0
        %1368 = vmatpush2.msra.mxu0 0.0
        %1369 = vmatprep.subr.mxu0 0.0
        %1370 = vmatpush2.msra.mxu0 0.0
        %1371 = vmatprep.subr.mxu0 0.0
        %1372 = vmatpush2.msra.mxu0 0.0
        %1373 = vmatprep.subr.mxu0 0.0
        %1374 = vmatpush2.msra.mxu0 0.0
        %1375 = vmatprep.subr.mxu0 0.0
        %1376 = vmatpush2.msra.mxu0 0.0
        %1377 = vmatprep.subr.mxu0 0.0
        %1378 = vmatpush2.msra.mxu0 0.0
        %1379 = vmatprep.subr.mxu0 0.0
        %1380 = vmatpush2.msra.mxu0 0.0
        %1381 = vmatprep.subr.mxu0 0.0
        %1382 = vmatpush2.msra.mxu0 %v1315
        %1383 = vmatprep.subr.mxu0 0.0
        %1384 = vmatpush2.msra.mxu0 %v1314
        %1385 = vmatprep.subr.mxu0 0.0
        %1386 = vmatpush2.msra.mxu0 %v1313
        %1387 = vmatprep.subr.mxu0 0.0
        %1388 = vmatpush2.msra.mxu0 %v1312
        %1389 = vmatprep.mubr.f32.mxu0 %v1323
        %1390 = vmatmul.mubr.f32.gmra.mxu0 %v1295
        %v1391 = vpop.f32.mrf.mxu0
        %v1392 = vadd.f32 %v1321, %v1391
        %v1393 = vpop.f32.mrf.mxu0
        %1394 = vdwg.mxu0
        %v1395 = vadd.f32 %v1392, %v702
        %1396 = vst.msk [vmem:[%s597] sm:$0xff] %vm705, %v1395
        %s1397 = sand.u32 %s407, 1
        %s1398 = scalar_lea.sflag [#allocation3], %s1397
        %s1399 = sand.u32 %s407, 1
        %s1400 = smul.addr %s1399, 8
        %s1401 = scalar_lea.vmem [#allocation2], %s1400
        %s1402 = sand.u32 %s433, 1
        %s1403 = scalar_lea.sflag [#allocation5], %s1402
        %s1404 = sand.u32 %s433, 1
        %s1405 = smul.addr %s1404, 8
        %s1406 = scalar_lea.vmem [#allocation4], %s1405
        %p1407 = scmp.lt.s32.totalorder %s37, 1
        %s1408 = scalar_select %p1407, %s37, 1
        %s1409 = smul.addr %s1408, 8
        %s1410 = scalar_lea.vmem %s19, %s1409
        // Predicated region
        $region89: #{decoder_forward.7} parent=87 // pred_check
          %p1411 = pneg %p417
        $region90: #{decoder_forward.7} parent=87 // pred_check_branch
          %1413 = sbr.rel (%p1411) target = $region92
        $region91: #{decoder_forward.7} parent=87 // pred_region
          %s1415 = ssub.s32 128, 128
          %1416 = vsyncadd %s1398, %s1415
          %s1417 = smul.addr %s37, 128
          %s1418 = scalar_lea.hbm %s17, %s1417
          %s1420 = sshll.u32 %s1401, 4
          %s1421 = int_to_ptr.vmem [resolvable:$true] %s1420
          %1423 = dma.vmem_to_hbm [thread:$0]  %s1421, 128, %s1418, %s1398
        $region92: #{decoder_forward.7} parent=87 // pred_fallthru
          _
        // Predicated region
        $region93: #{decoder_forward.7} parent=87 // pred_check
          %p1424 = pneg %p443
        $region94: #{decoder_forward.7} parent=87 // pred_check_branch
          %1426 = sbr.rel (%p1424) target = $region96
        $region95: #{decoder_forward.7} parent=87 // pred_region
          %s1428 = ssub.s32 128, 128
          %1429 = vsyncadd %s1403, %s1428
          %s1430 = smul.addr %s37, 128
          %s1431 = scalar_lea.hbm %s18, %s1430
          %s1433 = sshll.u32 %s1406, 4
          %s1434 = int_to_ptr.vmem [resolvable:$true] %s1433
          %1436 = dma.vmem_to_hbm [thread:$0]  %s1434, 128, %s1431, %s1403
        $region96: #{decoder_forward.7} parent=87 // pred_fallthru
          _
        // Predicated region
        $region97: #{decoder_forward.7} parent=87 // pred_check
          %p1437 = pneg %p469
        $region98: #{decoder_forward.7} parent=87 // pred_check_branch
          %1439 = sbr.rel (%p1437) target = $region100
        $region99: #{decoder_forward.7} parent=87 // pred_region
          _
        $region100: #{decoder_forward.7} parent=87 // pred_fallthru
          _
      $region88: #{decoder_forward.7} parent=5 // pred_fallthru
        _
      %p1440 = scmp.le.s32.totalorder 2, %s32
      // Predicated region
      $region101: #{decoder_forward.7} parent=5 // pred_check
        %p1441 = pneg %p1440
      $region102: #{decoder_forward.7} parent=5 // pred_check_branch
        %1443 = sbr.rel (%p1441) target = $region104
      $region103: #{decoder_forward.7} parent=5 // pred_region
        %s1444 = ssub.s32 %s32, 2
        // Predicated region
        $region105: #{decoder_forward.7} parent=103 // pred_check
          %p1445 = pneg %p423
        $region106: #{decoder_forward.7} parent=103 // pred_check_branch
          %1447 = sbr.rel (%p1445) target = $region108
        $region107: #{decoder_forward.7} parent=103 // pred_region
          %s1448 = sand.u32 %s408, 1
          %s1449 = scalar_lea.sflag [#allocation3], %s1448
          %s1450 = sand.u32 %s408, 1
          %s1451 = smul.addr %s1450, 8
          %s1452 = scalar_lea.vmem [#allocation2], %s1451
          %1453 = dma.done %s1449, 128
        $region108: #{decoder_forward.7} parent=103 // pred_fallthru
          _
        // Predicated region
        $region109: #{decoder_forward.7} parent=103 // pred_check
          %p1454 = pneg %p449
        $region110: #{decoder_forward.7} parent=103 // pred_check_branch
          %1456 = sbr.rel (%p1454) target = $region112
        $region111: #{decoder_forward.7} parent=103 // pred_region
          %s1457 = sand.u32 %s434, 1
          %s1458 = scalar_lea.sflag [#allocation5], %s1457
          %s1459 = sand.u32 %s434, 1
          %s1460 = smul.addr %s1459, 8
          %s1461 = scalar_lea.vmem [#allocation4], %s1460
          %1462 = dma.done %s1458, 128
        $region112: #{decoder_forward.7} parent=103 // pred_fallthru
          _
        // Predicated region
        $region113: #{decoder_forward.7} parent=103 // pred_check
          %p1463 = pneg %p475
        $region114: #{decoder_forward.7} parent=103 // pred_check_branch
          %1465 = sbr.rel (%p1463) target = $region116
        $region115: #{decoder_forward.7} parent=103 // pred_region
          %p1466 = scmp.lt.s32.totalorder %s38, 1
          %s1467 = scalar_select %p1466, %s38, 1
          %s1468 = smul.addr %s1467, 8
          %s1469 = scalar_lea.vmem %s19, %s1468
        $region116: #{decoder_forward.7} parent=103 // pred_fallthru
          _
      $region104: #{decoder_forward.7} parent=5 // pred_fallthru
        _
    $region6: #{decoder_forward.7} parent=1 // loop_footer
      %s36 = sadd.s32 1, %s32
    $region7: #{decoder_forward.7} parent=1 // loop_footer_branch
      %31 = sbr.rel target = $region3
    $region8: #{decoder_forward.7} parent=1 // loop_exit
      _
    %1470 = vsyncpa [#allocation3], 1
    %s1471 = scalar_lea.sflag [#allocation3], 1
    %1472 = vsyncpa %s1471, 1
    %1473 = vsyncpa [#allocation5], 1
    %s1474 = scalar_lea.sflag [#allocation5], 1
    %1475 = vsyncpa %s1474, 1

</llo_original>
